<compile_context>
chip_gen: v5e
topology: v5e:2x2
jax: 0.10.0
libtpu: 0.0.40
codegen_flags: <defaults>
</compile_context>

<pallas_src>
import jax
import jax.numpy as jnp
from jax import lax
from jax.experimental import pallas as pl
from jax.experimental.pallas import tpu as pltpu


# ---------------------------------------------------------------------------
# Kernel 1: conv1 as im2col matmul (bf16 x bf16 -> f32) + folded BN + ReLU,
# tiled over rows (M).  Output stored bf16 (feeds the pool/matmul of kernel 2).
# ---------------------------------------------------------------------------
def _matmul_bn_relu_kernel(p_ref, w_ref, s_ref, b_ref, o_ref):
    acc = jnp.dot(p_ref[...], w_ref[...], preferred_element_type=jnp.float32)
    o_ref[...] = jnp.maximum(acc * s_ref[...] + b_ref[...], 0.0).astype(o_ref.dtype)


def conv1_bn_relu(patches, w_flat, scale, bias, tm=512):
    # patches: (M, K) bf16, w_flat: (K, N) bf16, scale/bias: (1, N) f32 -> (M, N) bf16
    M, K = patches.shape
    N = w_flat.shape[1]
    tm = min(tm, ((M + 15) // 16) * 16)       # never bigger than needed, 16-row aligned
    return pl.pallas_call(
        _matmul_bn_relu_kernel,
        out_shape=jax.ShapeDtypeStruct((M, N), jnp.bfloat16),
        grid=(pl.cdiv(M, tm),),
        in_specs=[
            pl.BlockSpec((tm, K), lambda i: (i, 0)),
            pl.BlockSpec((K, N), lambda i: (0, 0)),
            pl.BlockSpec((1, N), lambda i: (0, 0)),
            pl.BlockSpec((1, N), lambda i: (0, 0)),
        ],
        out_specs=pl.BlockSpec((tm, N), lambda i: (i, 0)),
        compiler_params=pltpu.CompilerParams(dimension_semantics=("parallel",)),
    )(patches, w_flat, scale, bias)


# ---------------------------------------------------------------------------
# Kernel 2: fused  max_pool1 -> (conv2 BN ReLU) -> (conv3 BN ReLU) -> (conv4 BN ReLU)
#                 -> max_pool2
# Each conv (k=8, stride=1, pad (3,4)) is 8 shifted (19,150)@(150,150) bf16 matmuls
# accumulated in f32; the activation never leaves VMEM between layers, and only the
# (5,150) pooled result is written to HBM.
# ---------------------------------------------------------------------------
def _conv234_kernel(y_ref, w_ref, s_ref, b_ref, o_ref, pad_scr):
    # y_ref : (Lin=149, C=150) bf16  -- conv1 output (pre max_pool1), batch dim squeezed
    # w_ref : (3, KS=8, C, C) bf16   -- [layer, tap, c_in, c_out]
    # s_ref/b_ref : (3, C) f32       -- folded BN scale / bias
    # o_ref : (5, C) f32             -- after fused max_pool2, batch dim squeezed
    # pad_scr: (L + KS - 1 = 26, C) f32 -- zero-padded layer input (ConstantPad1d((3,4),0))
    Lin = y_ref.shape[0]
    C = y_ref.shape[1]
    KS = w_ref.shape[1]
    L = pad_scr.shape[0] - KS + 1          # 19
    PAD_L = 3

    # Zero only the pad rows; rows [PAD_L, PAD_L+L) are fully rewritten below every call
    # (safe under megacore "parallel" splitting, unlike a once-only program_id==0 init).
    pad_scr[0:PAD_L, :] = jnp.zeros((PAD_L, C), pad_scr.dtype)
    pad_scr[PAD_L + L:, :] = jnp.zeros((pad_scr.shape[0] - PAD_L - L, C), pad_scr.dtype)

    # Fused max_pool1: ConstantPad1d((2,2),0) + MaxPool1d(8,8).  The explicit pad value 0
    # never exceeds the ReLU-nonnegative data, so clipping edge windows is exact.
    for w in range(L):                                       # 19 pooled rows
        lo, hi = max(0, 8 * w - 2), min(Lin, 8 * w + 6)
        v = jnp.max(y_ref[lo:hi, :].astype(jnp.float32), axis=0, keepdims=True)
        pad_scr[PAD_L + w:PAD_L + w + 1, :] = v              # straight into padded buffer

    # conv2 -> BN -> ReLU -> conv3 -> BN -> ReLU -> conv4 -> BN -> ReLU, VMEM-resident.
    cur = None
    for n in range(3):                                       # static layer loop
        if n > 0:
            pad_scr[PAD_L:PAD_L + L, :] = cur
        acc = jnp.dot(pad_scr[0:L, :].astype(jnp.bfloat16), w_ref[n, 0],
                      preferred_element_type=jnp.float32)
        for k in range(1, KS):                               # shifted-tap accumulation
            acc = acc + jnp.dot(pad_scr[k:k + L, :].astype(jnp.bfloat16), w_ref[n, k],
                                preferred_element_type=jnp.float32)
        cur = jnp.maximum(acc * s_ref[n:n + 1, :] + b_ref[n:n + 1, :], 0.0)   # (L, C) f32

    # Fused max_pool2: ConstantPad1d((0,1),0) + MaxPool1d(4,4) -> (5, C).
    pooled = [jnp.max(cur[4 * w:min(L, 4 * w + 4), :], axis=0, keepdims=True)
              for w in range(5)]
    o_ref[...] = jnp.concatenate(pooled, axis=0)


def conv234_pool_fused(y, w_all, s_all, b_all):
    # y: (B, 149, 150) bf16 conv1 output (pre max_pool1) -> (B, 5, 150) f32 (post pools)
    B, Lin, C = y.shape
    KS = w_all.shape[1]
    L = 19
    return pl.pallas_call(
        _conv234_kernel,
        out_shape=jax.ShapeDtypeStruct((B, 5, C), jnp.float32),
        grid=(B,),
        in_specs=[
            pl.BlockSpec((None, Lin, C), lambda b: (b, 0, 0)),
            pl.BlockSpec(w_all.shape, lambda b: (0, 0, 0, 0)),
            pl.BlockSpec(s_all.shape, lambda b: (0, 0)),
            pl.BlockSpec(b_all.shape, lambda b: (0, 0)),
        ],
        out_specs=pl.BlockSpec((None, 5, C), lambda b: (b, 0, 0)),
        scratch_shapes=[pltpu.VMEM((L + KS - 1, C), jnp.float32)],
        compiler_params=pltpu.CompilerParams(dimension_semantics=("parallel",)),
    )(y, w_all, s_all, b_all)


# ---------------------------------------------------------------------------
# Kernel 3: batched LSTM recurrence (input projection hoisted to the wrapper) with
# fused fc(32 -> 1).  Gate columns are pre-permuted to (i, f, o, g): one sigmoid over
# 3H lanes + one tanh per step.  Per 8-step group: one aligned xg slab load and one
# grouped output store.
# ---------------------------------------------------------------------------
def _make_lstm_fc_kernel(Bs, H, U, n_groups):
    GROUP = U * Bs                         # multiple of 8 when U == 8

    def kernel(xg_ref, whh_ref, fcw_ref, fcb_ref, out_ref):
        # xg_ref : (T_pad*Bs, 4H) f32  precomputed x@Wih^T + b, time-major rows (t*Bs + b)
        # whh_ref: (H, 4H) f32, fcw_ref: (1, H), fcb_ref: (1, 1)
        # out_ref: (n_groups*Bs, U) f32  -- out[j*Bs + b, u] = fc output at t = j*U + u
        whh = whh_ref[...]                 # held in vregs across the whole loop
        fcw = fcw_ref[...]
        fcb = fcb_ref[...]

        def body(j, carry):
            h, c = carry
            base = pl.multiple_of(j * GROUP, 8)
            xg = xg_ref[pl.ds(base, GROUP), :]               # one aligned (GROUP,4H) load
            fcs = []
            for u in range(U):                               # manual unroll
                g = xg[u * Bs:(u + 1) * Bs, :] + jnp.dot(
                    h, whh, preferred_element_type=jnp.float32)      # (Bs, 4H)
                sig = jax.nn.sigmoid(g[:, :3 * H])                   # i | f | o
                gg = jnp.tanh(g[:, 3 * H:])                          # g
                c = sig[:, H:2 * H] * c + sig[:, :H] * gg
                h = sig[:, 2 * H:3 * H] * jnp.tanh(c)
                # fused fc Linear(H,1); lane reduce is off the recurrent critical path
                fcs.append(jnp.sum(h * fcw, axis=1, keepdims=True))  # (Bs, 1)
            out_ref[pl.ds(j * Bs, Bs), :] = jnp.concatenate(fcs, axis=1) + fcb
            return h, c

        h0 = jnp.zeros((Bs, H), jnp.float32)
        c0 = jnp.zeros((Bs, H), jnp.float32)
        lax.fori_loop(0, n_groups, body, (h0, c0))

    return kernel


def lstm_fc_forward(xg, whh_t, fc_w, fc_b, *, T_pad, Bs, H, unroll):
    # xg: (T_pad*Bs, 4H) f32 time-major precomputed input projection.
    n_groups = T_pad // unroll
    M = T_pad * Bs
    kernel = _make_lstm_fc_kernel(Bs, H, unroll, n_groups)
    return pl.pallas_call(
        kernel,
        out_shape=jax.ShapeDtypeStruct((n_groups * Bs, unroll), jnp.float32),
        grid=(1,),
        in_specs=[
            pl.BlockSpec((M, 4 * H), lambda i: (0, 0)),
            pl.BlockSpec(whh_t.shape, lambda i: (0, 0)),
            pl.BlockSpec(fc_w.shape, lambda i: (0, 0)),
            pl.BlockSpec(fc_b.shape, lambda i: (0, 0)),
        ],
        out_specs=pl.BlockSpec((n_groups * Bs, unroll), lambda i: (0, 0)),
        compiler_params=pltpu.CompilerParams(dimension_semantics=("arbitrary",)),
    )(xg, whh_t, fc_w, fc_b)


# ---------------------------------------------------------------------------
# JAX glue (padding, im2col for conv1, reshapes)
# ---------------------------------------------------------------------------
def im2col_cl(x, ksize, stride):
    # x: (B, L, C) channels-last -> (B, P, C*ksize), patch flattened in (c, k) order
    B, L, C = x.shape
    P = (L - ksize) // stride + 1
    idx = jnp.arange(P)[:, None] * stride + jnp.arange(ksize)[None, :]   # (P, K)
    patches = x[:, idx, :]                                               # (B, P, K, C)
    patches = jnp.transpose(patches, (0, 1, 3, 2)).reshape(B, P, C * ksize)
    return patches


def sleepnet_forward(x, params, hidden_size=32, seq_len=750):
    # x: (N, 2, 750) float32 (PyTorch NCL convention)
    x = x.reshape(-1, 2, 750)
    B = x.shape[0]
    y = jnp.transpose(x, (0, 2, 1))                        # (B, 750, 2) channels-last

    # conv1 block: ConstantPad1d(22,22) -> Conv1d(2->150, k=50, s=5) -> BN -> ReLU
    y = jnp.pad(y, ((0, 0), (22, 22), (0, 0))).astype(jnp.bfloat16)
    patches = im2col_cl(y, 50, 5)                          # (B, 149, 100) bf16
    P1 = patches.shape[1]
    y = conv1_bn_relu(patches.reshape(B * P1, 100), params['w1'],
                      params['s1'], params['b1']).reshape(B, P1, 150)     # bf16

    # fused: max_pool1 -> (conv2..4 + BN + ReLU) -> max_pool2, all inside one kernel
    y = conv234_pool_fused(y, params['w234'], params['s234'], params['b234'])  # (B,5,150) f32

    # nn.Flatten flattens PyTorch (B, 150, 5) channel-major -> (B, 750)
    P = y.shape[1]
    y = jnp.transpose(y, (0, 2, 1)).reshape(B, 150 * P)    # (B, 750)

    flat = B * 150 * P
    assert flat % (seq_len * 2) == 0, "CNN output must reshape to (-1, seq_len, 2)"
    seq = y.reshape(-1, seq_len, 2)                        # (Bs, 750, 2)
    Bs = seq.shape[0]
    T = seq_len
    U = 8
    T_pad = ((T + U - 1) // U) * U                         # 752: 8-aligned group offsets

    # LSTM (batch_first, unidirectional) + rnn_dropout(identity) + fc, fused.
    # Hoisted input projection (lane-dense (T*Bs, 4H)); time-major rows (row = t*Bs + b).
    x2d = jnp.transpose(seq, (1, 0, 2)).reshape(T * Bs, 2)
    xg = x2d @ params['wih_t'] + params['lstm_b']          # (T*Bs, 4H) f32, XLA matmul
    xg = jnp.pad(xg, ((0, (T_pad - T) * Bs), (0, 0)))      # padded steps read zeros

    out = lstm_fc_forward(xg, params['whh_t'], params['fc_w'], params['fc_b'],
                          T_pad=T_pad, Bs=Bs, H=hidden_size, unroll=U)  # (n_groups*Bs, U)
    n_groups = T_pad // U
    out = out.reshape(n_groups, Bs, U).transpose(1, 0, 2).reshape(Bs, T_pad)[:, :T]
    return out.reshape(Bs * T, 1)                          # PyTorch (b, t) row order


# ---------------------------------------------------------------------------
# Deterministic parameter init (shapes from SleepNet.__init__)
# ---------------------------------------------------------------------------
def init_params(key, hidden_size=32):
    ks = jax.random.split(key, 16)

    def nrm(k, shape, s=0.05):
        return s * jax.random.normal(k, shape, jnp.float32)

    p = {}
    # conv1 weight (150, 2, 50) flattened (c,k) -> (100, 150), stored bf16 for the MXU
    p['w1'] = nrm(ks[0], (150, 2, 50)).reshape(150, 100).T.astype(jnp.bfloat16)
    # conv2..4 weights (150, 150, 8) [co, ci, k] -> per-tap (k, ci, co), stacked (3,8,150,150)
    w234 = []
    for k in ks[1:4]:
        w = nrm(k, (150, 150, 8))
        w234.append(jnp.transpose(w, (2, 1, 0)))
    p['w234'] = jnp.stack(w234).astype(jnp.bfloat16)

    # BatchNorm1d(150, eps=1e-3): fold (gamma, beta, running_mean, running_var), kept f32
    eps = 1e-3
    s_list, b_list = [], []
    for n, k in zip((1, 2, 3, 4), ks[4:8]):
        kg, kb, km, kv = jax.random.split(k, 4)
        gamma = 1.0 + 0.1 * jax.random.normal(kg, (150,), jnp.float32)
        beta = 0.1 * jax.random.normal(kb, (150,), jnp.float32)
        mean = 0.1 * jax.random.normal(km, (150,), jnp.float32)
        var = 1.0 + 0.1 * jax.random.uniform(kv, (150,), jnp.float32)
        scale = gamma / jnp.sqrt(var + eps)
        bias = beta - mean * scale
        if n == 1:
            p['s1'] = scale.reshape(1, 150)
            p['b1'] = bias.reshape(1, 150)
        else:
            s_list.append(scale)
            b_list.append(bias)
    p['s234'] = jnp.stack(s_list)                          # (3, 150)
    p['b234'] = jnp.stack(b_list)                          # (3, 150)

    # LSTM(input=2, hidden=32); PyTorch gate order (i, f, g, o) -> permuted to (i, f, o, g)
    H = hidden_size
    w_ih = nrm(ks[8], (4 * H, 2), 0.1)
    w_hh = nrm(ks[9], (4 * H, H), 0.1)
    b_ih = 0.1 * jax.random.normal(ks[10], (4 * H,), jnp.float32)
    b_hh = 0.1 * jax.random.normal(ks[11], (4 * H,), jnp.float32)
    perm = jnp.concatenate([jnp.arange(0, H), jnp.arange(H, 2 * H),
                            jnp.arange(3 * H, 4 * H), jnp.arange(2 * H, 3 * H)])
    p['wih_t'] = w_ih[perm].T                              # (2, 128), cols (i,f,o,g)
    p['whh_t'] = w_hh[perm].T                              # (32, 128)
    p['lstm_b'] = (b_ih + b_hh)[perm].reshape(1, 4 * H)

    # fc: Linear(32, 1)
    p['fc_w'] = nrm(ks[12], (1, H), 0.1)                   # (1, 32)
    p['fc_b'] = (0.1 * jax.random.normal(ks[13], (1,), jnp.float32)).reshape(1, 1)
    return p


if __name__ == "__main__":
    key = jax.random.PRNGKey(0)
    kx, kp = jax.random.split(key)
    # batch of 2 epochs, 2 channels, 750 samples (module hard-codes L=750)
    x = jax.random.normal(kx, (2, 2, 750), jnp.float32)
    params = init_params(kp, hidden_size=32)

    fwd = jax.jit(lambda xx, pp: sleepnet_forward(xx, pp, hidden_size=32, seq_len=750))
    out = jax.block_until_ready(fwd(x, params))
    # (batch=2) -> CNN flatten (2, 750) -> reshape (1, 750, 2) -> LSTM+fc -> (750, 1)
    assert out.shape == (750, 1), out.shape
    assert bool(jnp.all(jnp.isfinite(out)))
    print("KERNEL_OK")
</pallas_src>

<mosaic_0001>
module attributes {stable_mosaic.version = 11 : i64} {
  func.func @_matmul_bn_relu_kernel(%arg0: i32, %arg1: memref<304x100xbf16, #tpu.memory_space<vmem>>, %arg2: memref<100x150xbf16, #tpu.memory_space<vmem>>, %arg3: memref<1x150xf32, #tpu.memory_space<vmem>>, %arg4: memref<1x150xf32, #tpu.memory_space<vmem>>, %arg5: memref<304x150xbf16, #tpu.memory_space<vmem>>) attributes {dimension_semantics = [#tpu.dimension_semantics<parallel>], iteration_bounds = array<i64: 1>, scalar_prefetch = 0 : i64, scratch_operands = 0 : i64, tpu.core_type = #tpu.core_type<tc>, window_params = [{transform_indices = @transform_0, window_bounds = array<i64: 304, 100>}, {pipeline_mode = #tpu.pipeline_mode<synchronous>, transform_indices = @transform_1, window_bounds = array<i64: 100, 150>}, {pipeline_mode = #tpu.pipeline_mode<synchronous>, transform_indices = @transform_2, window_bounds = array<i64: 1, 150>}, {pipeline_mode = #tpu.pipeline_mode<synchronous>, transform_indices = @transform_3, window_bounds = array<i64: 1, 150>}, {transform_indices = @transform_4, window_bounds = array<i64: 304, 150>}]} {
    %c0 = arith.constant 0 : index
    %c0_0 = arith.constant 0 : index
    %0 = vector.load %arg1[%c0, %c0_0] : memref<304x100xbf16, #tpu.memory_space<vmem>>, vector<304x100xbf16>
    %c0_1 = arith.constant 0 : index
    %c0_2 = arith.constant 0 : index
    %1 = vector.load %arg2[%c0_1, %c0_2] : memref<100x150xbf16, #tpu.memory_space<vmem>>, vector<100x150xbf16>
    %cst = arith.constant dense<0.000000e+00> : vector<304x150xf32>
    %2 = tpu.matmul %0, %1, %cst {dimension_numbers = #tpu.dot_dimension_numbers<[1], [0], [0], [1], [0, 0, 1, 1], [], []>} : vector<304x100xbf16>, vector<100x150xbf16>, vector<304x150xf32> -> vector<304x150xf32>
    %c0_3 = arith.constant 0 : index
    %c0_4 = arith.constant 0 : index
    %3 = vector.load %arg3[%c0_3, %c0_4] : memref<1x150xf32, #tpu.memory_space<vmem>>, vector<1x150xf32>
    %4 = vector.broadcast %3 : vector<1x150xf32> to vector<304x150xf32>
    %5 = arith.mulf %2, %4 : vector<304x150xf32>
    %c0_5 = arith.constant 0 : index
    %c0_6 = arith.constant 0 : index
    %6 = vector.load %arg4[%c0_5, %c0_6] : memref<1x150xf32, #tpu.memory_space<vmem>>, vector<1x150xf32>
    %7 = vector.broadcast %6 : vector<1x150xf32> to vector<304x150xf32>
    %8 = arith.addf %5, %7 : vector<304x150xf32>
    %cst_7 = arith.constant 0.000000e+00 : f32
    %9 = vector.broadcast %cst_7 : f32 to vector<304x150xf32>
    %10 = arith.maximumf %8, %9 : vector<304x150xf32>
    %11 = arith.truncf %10 : vector<304x150xf32> to vector<304x150xbf16>
    %c0_8 = arith.constant 0 : index
    %c0_9 = arith.constant 0 : index
    %12 = vector.load %arg5[%c0_8, %c0_9] : memref<304x150xbf16, #tpu.memory_space<vmem>>, vector<304x150xbf16>
    tpu.vector_store %arg5[%c0_8, %c0_9], %11 {strides = array<i32>} : memref<304x150xbf16, #tpu.memory_space<vmem>>, vector<304x150xbf16>,
    return
  }
  func.func @transform_0(%arg0: i32) -> (i32, i32) {
    %c0_i32 = arith.constant 0 : i32
    %c0_i32_0 = arith.constant 0 : i32
    return %arg0, %c0_i32 : i32, i32
  }
  func.func @transform_1(%arg0: i32) -> (i32, i32) {
    %c0_i32 = arith.constant 0 : i32
    %c0_i32_0 = arith.constant 0 : i32
    %c0_i32_1 = arith.constant 0 : i32
    return %c0_i32, %c0_i32_0 : i32, i32
  }
  func.func @transform_2(%arg0: i32) -> (i32, i32) {
    %c0_i32 = arith.constant 0 : i32
    %c0_i32_0 = arith.constant 0 : i32
    %c0_i32_1 = arith.constant 0 : i32
    return %c0_i32, %c0_i32_0 : i32, i32
  }
  func.func @transform_3(%arg0: i32) -> (i32, i32) {
    %c0_i32 = arith.constant 0 : i32
    %c0_i32_0 = arith.constant 0 : i32
    %c0_i32_1 = arith.constant 0 : i32
    return %c0_i32, %c0_i32_0 : i32, i32
  }
  func.func @transform_4(%arg0: i32) -> (i32, i32) {
    %c0_i32 = arith.constant 0 : i32
    %c0_i32_0 = arith.constant 0 : i32
    return %arg0, %c0_i32 : i32, i32
  }
}

module attributes {stable_mosaic.version = 11 : i64} {
  func.func @_conv234_kernel(%arg0: i32, %arg1: memref<1x149x150xbf16, #tpu.memory_space<vmem>>, %arg2: memref<3x8x150x150xbf16, #tpu.memory_space<vmem>>, %arg3: memref<3x150xf32, #tpu.memory_space<vmem>>, %arg4: memref<3x150xf32, #tpu.memory_space<vmem>>, %arg5: memref<1x5x150xf32, #tpu.memory_space<vmem>>, %arg6: memref<26x150xf32, #tpu.memory_space<vmem>>) attributes {dimension_semantics = [#tpu.dimension_semantics<parallel>], iteration_bounds = array<i64: 2>, scalar_prefetch = 0 : i64, scratch_operands = 1 : i64, tpu.core_type = #tpu.core_type<tc>, window_params = [{transform_indices = @transform_0, window_bounds = array<i64: 1, 149, 150>}, {pipeline_mode = #tpu.pipeline_mode<synchronous>, transform_indices = @transform_1, window_bounds = array<i64: 3, 8, 150, 150>}, {pipeline_mode = #tpu.pipeline_mode<synchronous>, transform_indices = @transform_2, window_bounds = array<i64: 3, 150>}, {pipeline_mode = #tpu.pipeline_mode<synchronous>, transform_indices = @transform_3, window_bounds = array<i64: 3, 150>}, {transform_indices = @transform_4, window_bounds = array<i64: 1, 5, 150>}]} {
    %cst = arith.constant 0.000000e+00 : f32
    %0 = vector.broadcast %cst : f32 to vector<3x150xf32>
    %c0 = arith.constant 0 : index
    %c0_0 = arith.constant 0 : index
    %1 = vector.load %arg6[%c0, %c0_0] : memref<26x150xf32, #tpu.memory_space<vmem>>, vector<3x150xf32>
    tpu.vector_store %arg6[%c0, %c0_0], %0 {strides = array<i32>} : memref<26x150xf32, #tpu.memory_space<vmem>>, vector<3x150xf32>,
    %cst_1 = arith.constant 0.000000e+00 : f32
    %2 = vector.broadcast %cst_1 : f32 to vector<4x150xf32>
    %c22 = arith.constant 22 : index
    %c0_2 = arith.constant 0 : index
    %3 = vector.load %arg6[%c22, %c0_2] : memref<26x150xf32, #tpu.memory_space<vmem>>, vector<4x150xf32>
    tpu.vector_store %arg6[%c22, %c0_2], %2 {strides = array<i32>} : memref<26x150xf32, #tpu.memory_space<vmem>>, vector<4x150xf32>,
    %c0_3 = arith.constant 0 : index
    %c0_4 = arith.constant 0 : index
    %c0_5 = arith.constant 0 : index
    %4 = vector.load %arg1[%c0_3, %c0_4, %c0_5] : memref<1x149x150xbf16, #tpu.memory_space<vmem>>, vector<1x6x150xbf16>
    %5 = vector.shape_cast %4 : vector<1x6x150xbf16> to vector<6x150xbf16>
    %6 = arith.extf %5 : vector<6x150xbf16> to vector<6x150xf32>
    %cst_6 = arith.constant dense<0xFF800000> : vector<150xf32>
    %7 = vector.multi_reduction <maximumf>, %6, %cst_6 [0] : vector<6x150xf32> to vector<150xf32>
    %8 = vector.shape_cast %7 : vector<150xf32> to vector<1x150xf32>
    %c3 = arith.constant 3 : index
    %c0_7 = arith.constant 0 : index
    %9 = vector.load %arg6[%c3, %c0_7] : memref<26x150xf32, #tpu.memory_space<vmem>>, vector<1x150xf32>
    tpu.vector_store %arg6[%c3, %c0_7], %8 {strides = array<i32>} : memref<26x150xf32, #tpu.memory_space<vmem>>, vector<1x150xf32>,
    %c0_8 = arith.constant 0 : index
    %c6 = arith.constant 6 : index
    %c0_9 = arith.constant 0 : index
    %10 = vector.load %arg1[%c0_8, %c6, %c0_9] : memref<1x149x150xbf16, #tpu.memory_space<vmem>>, vector<1x8x150xbf16>
    %11 = vector.shape_cast %10 : vector<1x8x150xbf16> to vector<8x150xbf16>
    %12 = arith.extf %11 : vector<8x150xbf16> to vector<8x150xf32>
    %cst_10 = arith.constant dense<0xFF800000> : vector<150xf32>
    %13 = vector.multi_reduction <maximumf>, %12, %cst_10 [0] : vector<8x150xf32> to vector<150xf32>
    %14 = vector.shape_cast %13 : vector<150xf32> to vector<1x150xf32>
    %c4 = arith.constant 4 : index
    %c0_11 = arith.constant 0 : index
    %15 = vector.load %arg6[%c4, %c0_11] : memref<26x150xf32, #tpu.memory_space<vmem>>, vector<1x150xf32>
    tpu.vector_store %arg6[%c4, %c0_11], %14 {strides = array<i32>} : memref<26x150xf32, #tpu.memory_space<vmem>>, vector<1x150xf32>,
    %c0_12 = arith.constant 0 : index
    %c14 = arith.constant 14 : index
    %c0_13 = arith.constant 0 : index
    %16 = vector.load %arg1[%c0_12, %c14, %c0_13] : memref<1x149x150xbf16, #tpu.memory_space<vmem>>, vector<1x8x150xbf16>
    %17 = vector.shape_cast %16 : vector<1x8x150xbf16> to vector<8x150xbf16>
    %18 = arith.extf %17 : vector<8x150xbf16> to vector<8x150xf32>
    %cst_14 = arith.constant dense<0xFF800000> : vector<150xf32>
    %19 = vector.multi_reduction <maximumf>, %18, %cst_14 [0] : vector<8x150xf32> to vector<150xf32>
    %20 = vector.shape_cast %19 : vector<150xf32> to vector<1x150xf32>
    %c5 = arith.constant 5 : index
    %c0_15 = arith.constant 0 : index
    %21 = vector.load %arg6[%c5, %c0_15] : memref<26x150xf32, #tpu.memory_space<vmem>>, vector<1x150xf32>
    tpu.vector_store %arg6[%c5, %c0_15], %20 {strides = array<i32>} : memref<26x150xf32, #tpu.memory_space<vmem>>, vector<1x150xf32>,
    %c0_16 = arith.constant 0 : index
    %c22_17 = arith.constant 22 : index
    %c0_18 = arith.constant 0 : index
    %22 = vector.load %arg1[%c0_16, %c22_17, %c0_18] : memref<1x149x150xbf16, #tpu.memory_space<vmem>>, vector<1x8x150xbf16>
    %23 = vector.shape_cast %22 : vector<1x8x150xbf16> to vector<8x150xbf16>
    %24 = arith.extf %23 : vector<8x150xbf16> to vector<8x150xf32>
    %cst_19 = arith.constant dense<0xFF800000> : vector<150xf32>
    %25 = vector.multi_reduction <maximumf>, %24, %cst_19 [0] : vector<8x150xf32> to vector<150xf32>
    %26 = vector.shape_cast %25 : vector<150xf32> to vector<1x150xf32>
    %c6_20 = arith.constant 6 : index
    %c0_21 = arith.constant 0 : index
    %27 = vector.load %arg6[%c6_20, %c0_21] : memref<26x150xf32, #tpu.memory_space<vmem>>, vector<1x150xf32>
    tpu.vector_store %arg6[%c6_20, %c0_21], %26 {strides = array<i32>} : memref<26x150xf32, #tpu.memory_space<vmem>>, vector<1x150xf32>,
    %c0_22 = arith.constant 0 : index
    %c30 = arith.constant 30 : index
    %c0_23 = arith.constant 0 : index
    %28 = vector.load %arg1[%c0_22, %c30, %c0_23] : memref<1x149x150xbf16, #tpu.memory_space<vmem>>, vector<1x8x150xbf16>
    %29 = vector.shape_cast %28 : vector<1x8x150xbf16> to vector<8x150xbf16>
    %30 = arith.extf %29 : vector<8x150xbf16> to vector<8x150xf32>
    %cst_24 = arith.constant dense<0xFF800000> : vector<150xf32>
    %31 = vector.multi_reduction <maximumf>, %30, %cst_24 [0] : vector<8x150xf32> to vector<150xf32>
    %32 = vector.shape_cast %31 : vector<150xf32> to vector<1x150xf32>
    %c7 = arith.constant 7 : index
    %c0_25 = arith.constant 0 : index
    %33 = vector.load %arg6[%c7, %c0_25] : memref<26x150xf32, #tpu.memory_space<vmem>>, vector<1x150xf32>
    tpu.vector_store %arg6[%c7, %c0_25], %32 {strides = array<i32>} : memref<26x150xf32, #tpu.memory_space<vmem>>, vector<1x150xf32>,
    %c0_26 = arith.constant 0 : index
    %c38 = arith.constant 38 : index
    %c0_27 = arith.constant 0 : index
    %34 = vector.load %arg1[%c0_26, %c38, %c0_27] : memref<1x149x150xbf16, #tpu.memory_space<vmem>>, vector<1x8x150xbf16>
    %35 = vector.shape_cast %34 : vector<1x8x150xbf16> to vector<8x150xbf16>
    %36 = arith.extf %35 : vector<8x150xbf16> to vector<8x150xf32>
    %cst_28 = arith.constant dense<0xFF800000> : vector<150xf32>
    %37 = vector.multi_reduction <maximumf>, %36, %cst_28 [0] : vector<8x150xf32> to vector<150xf32>
    %38 = vector.shape_cast %37 : vector<150xf32> to vector<1x150xf32>
    %c8 = arith.constant 8 : index
    %c0_29 = arith.constant 0 : index
    %39 = vector.load %arg6[%c8, %c0_29] : memref<26x150xf32, #tpu.memory_space<vmem>>, vector<1x150xf32>
    tpu.vector_store %arg6[%c8, %c0_29], %38 {strides = array<i32>} : memref<26x150xf32, #tpu.memory_space<vmem>>, vector<1x150xf32>,
    %c0_30 = arith.constant 0 : index
    %c46 = arith.constant 46 : index
    %c0_31 = arith.constant 0 : index
    %40 = vector.load %arg1[%c0_30, %c46, %c0_31] : memref<1x149x150xbf16, #tpu.memory_space<vmem>>, vector<1x8x150xbf16>
    %41 = vector.shape_cast %40 : vector<1x8x150xbf16> to vector<8x150xbf16>
    %42 = arith.extf %41 : vector<8x150xbf16> to vector<8x150xf32>
    %cst_32 = arith.constant dense<0xFF800000> : vector<150xf32>
    %43 = vector.multi_reduction <maximumf>, %42, %cst_32 [0] : vector<8x150xf32> to vector<150xf32>
    %44 = vector.shape_cast %43 : vector<150xf32> to vector<1x150xf32>
    %c9 = arith.constant 9 : index
    %c0_33 = arith.constant 0 : index
    %45 = vector.load %arg6[%c9, %c0_33] : memref<26x150xf32, #tpu.memory_space<vmem>>, vector<1x150xf32>
    tpu.vector_store %arg6[%c9, %c0_33], %44 {strides = array<i32>} : memref<26x150xf32, #tpu.memory_space<vmem>>, vector<1x150xf32>,
    %c0_34 = arith.constant 0 : index
    %c54 = arith.constant 54 : index
    %c0_35 = arith.constant 0 : index
    %46 = vector.load %arg1[%c0_34, %c54, %c0_35] : memref<1x149x150xbf16, #tpu.memory_space<vmem>>, vector<1x8x150xbf16>
    %47 = vector.shape_cast %46 : vector<1x8x150xbf16> to vector<8x150xbf16>
    %48 = arith.extf %47 : vector<8x150xbf16> to vector<8x150xf32>
    %cst_36 = arith.constant dense<0xFF800000> : vector<150xf32>
    %49 = vector.multi_reduction <maximumf>, %48, %cst_36 [0] : vector<8x150xf32> to vector<150xf32>
    %50 = vector.shape_cast %49 : vector<150xf32> to vector<1x150xf32>
    %c10 = arith.constant 10 : index
    %c0_37 = arith.constant 0 : index
    %51 = vector.load %arg6[%c10, %c0_37] : memref<26x150xf32, #tpu.memory_space<vmem>>, vector<1x150xf32>
    tpu.vector_store %arg6[%c10, %c0_37], %50 {strides = array<i32>} : memref<26x150xf32, #tpu.memory_space<vmem>>, vector<1x150xf32>,
    %c0_38 = arith.constant 0 : index
    %c62 = arith.constant 62 : index
    %c0_39 = arith.constant 0 : index
    %52 = vector.load %arg1[%c0_38, %c62, %c0_39] : memref<1x149x150xbf16, #tpu.memory_space<vmem>>, vector<1x8x150xbf16>
    %53 = vector.shape_cast %52 : vector<1x8x150xbf16> to vector<8x150xbf16>
    %54 = arith.extf %53 : vector<8x150xbf16> to vector<8x150xf32>
    %cst_40 = arith.constant dense<0xFF800000> : vector<150xf32>
    %55 = vector.multi_reduction <maximumf>, %54, %cst_40 [0] : vector<8x150xf32> to vector<150xf32>
    %56 = vector.shape_cast %55 : vector<150xf32> to vector<1x150xf32>
    %c11 = arith.constant 11 : index
    %c0_41 = arith.constant 0 : index
    %57 = vector.load %arg6[%c11, %c0_41] : memref<26x150xf32, #tpu.memory_space<vmem>>, vector<1x150xf32>
    tpu.vector_store %arg6[%c11, %c0_41], %56 {strides = array<i32>} : memref<26x150xf32, #tpu.memory_space<vmem>>, vector<1x150xf32>,
    %c0_42 = arith.constant 0 : index
    %c70 = arith.constant 70 : index
    %c0_43 = arith.constant 0 : index
    %58 = vector.load %arg1[%c0_42, %c70, %c0_43] : memref<1x149x150xbf16, #tpu.memory_space<vmem>>, vector<1x8x150xbf16>
    %59 = vector.shape_cast %58 : vector<1x8x150xbf16> to vector<8x150xbf16>
    %60 = arith.extf %59 : vector<8x150xbf16> to vector<8x150xf32>
    %cst_44 = arith.constant dense<0xFF800000> : vector<150xf32>
    %61 = vector.multi_reduction <maximumf>, %60, %cst_44 [0] : vector<8x150xf32> to vector<150xf32>
    %62 = vector.shape_cast %61 : vector<150xf32> to vector<1x150xf32>
    %c12 = arith.constant 12 : index
    %c0_45 = arith.constant 0 : index
    %63 = vector.load %arg6[%c12, %c0_45] : memref<26x150xf32, #tpu.memory_space<vmem>>, vector<1x150xf32>
    tpu.vector_store %arg6[%c12, %c0_45], %62 {strides = array<i32>} : memref<26x150xf32, #tpu.memory_space<vmem>>, vector<1x150xf32>,
    %c0_46 = arith.constant 0 : index
    %c78 = arith.constant 78 : index
    %c0_47 = arith.constant 0 : index
    %64 = vector.load %arg1[%c0_46, %c78, %c0_47] : memref<1x149x150xbf16, #tpu.memory_space<vmem>>, vector<1x8x150xbf16>
    %65 = vector.shape_cast %64 : vector<1x8x150xbf16> to vector<8x150xbf16>
    %66 = arith.extf %65 : vector<8x150xbf16> to vector<8x150xf32>
    %cst_48 = arith.constant dense<0xFF800000> : vector<150xf32>
    %67 = vector.multi_reduction <maximumf>, %66, %cst_48 [0] : vector<8x150xf32> to vector<150xf32>
    %68 = vector.shape_cast %67 : vector<150xf32> to vector<1x150xf32>
    %c13 = arith.constant 13 : index
    %c0_49 = arith.constant 0 : index
    %69 = vector.load %arg6[%c13, %c0_49] : memref<26x150xf32, #tpu.memory_space<vmem>>, vector<1x150xf32>
    tpu.vector_store %arg6[%c13, %c0_49], %68 {strides = array<i32>} : memref<26x150xf32, #tpu.memory_space<vmem>>, vector<1x150xf32>,
    %c0_50 = arith.constant 0 : index
    %c86 = arith.constant 86 : index
    %c0_51 = arith.constant 0 : index
    %70 = vector.load %arg1[%c0_50, %c86, %c0_51] : memref<1x149x150xbf16, #tpu.memory_space<vmem>>, vector<1x8x150xbf16>
    %71 = vector.shape_cast %70 : vector<1x8x150xbf16> to vector<8x150xbf16>
    %72 = arith.extf %71 : vector<8x150xbf16> to vector<8x150xf32>
    %cst_52 = arith.constant dense<0xFF800000> : vector<150xf32>
    %73 = vector.multi_reduction <maximumf>, %72, %cst_52 [0] : vector<8x150xf32> to vector<150xf32>
    %74 = vector.shape_cast %73 : vector<150xf32> to vector<1x150xf32>
    %c14_53 = arith.constant 14 : index
    %c0_54 = arith.constant 0 : index
    %75 = vector.load %arg6[%c14_53, %c0_54] : memref<26x150xf32, #tpu.memory_space<vmem>>, vector<1x150xf32>
    tpu.vector_store %arg6[%c14_53, %c0_54], %74 {strides = array<i32>} : memref<26x150xf32, #tpu.memory_space<vmem>>, vector<1x150xf32>,
    %c0_55 = arith.constant 0 : index
    %c94 = arith.constant 94 : index
    %c0_56 = arith.constant 0 : index
    %76 = vector.load %arg1[%c0_55, %c94, %c0_56] : memref<1x149x150xbf16, #tpu.memory_space<vmem>>, vector<1x8x150xbf16>
    %77 = vector.shape_cast %76 : vector<1x8x150xbf16> to vector<8x150xbf16>
    %78 = arith.extf %77 : vector<8x150xbf16> to vector<8x150xf32>
    %cst_57 = arith.constant dense<0xFF800000> : vector<150xf32>
    %79 = vector.multi_reduction <maximumf>, %78, %cst_57 [0] : vector<8x150xf32> to vector<150xf32>
    %80 = vector.shape_cast %79 : vector<150xf32> to vector<1x150xf32>
    %c15 = arith.constant 15 : index
    %c0_58 = arith.constant 0 : index
    %81 = vector.load %arg6[%c15, %c0_58] : memref<26x150xf32, #tpu.memory_space<vmem>>, vector<1x150xf32>
    tpu.vector_store %arg6[%c15, %c0_58], %80 {strides = array<i32>} : memref<26x150xf32, #tpu.memory_space<vmem>>, vector<1x150xf32>,
    %c0_59 = arith.constant 0 : index
    %c102 = arith.constant 102 : index
    %c0_60 = arith.constant 0 : index
    %82 = vector.load %arg1[%c0_59, %c102, %c0_60] : memref<1x149x150xbf16, #tpu.memory_space<vmem>>, vector<1x8x150xbf16>
    %83 = vector.shape_cast %82 : vector<1x8x150xbf16> to vector<8x150xbf16>
    %84 = arith.extf %83 : vector<8x150xbf16> to vector<8x150xf32>
    %cst_61 = arith.constant dense<0xFF800000> : vector<150xf32>
    %85 = vector.multi_reduction <maximumf>, %84, %cst_61 [0] : vector<8x150xf32> to vector<150xf32>
    %86 = vector.shape_cast %85 : vector<150xf32> to vector<1x150xf32>
    %c16 = arith.constant 16 : index
    %c0_62 = arith.constant 0 : index
    %87 = vector.load %arg6[%c16, %c0_62] : memref<26x150xf32, #tpu.memory_space<vmem>>, vector<1x150xf32>
    tpu.vector_store %arg6[%c16, %c0_62], %86 {strides = array<i32>} : memref<26x150xf32, #tpu.memory_space<vmem>>, vector<1x150xf32>,
    %c0_63 = arith.constant 0 : index
    %c110 = arith.constant 110 : index
    %c0_64 = arith.constant 0 : index
    %88 = vector.load %arg1[%c0_63, %c110, %c0_64] : memref<1x149x150xbf16, #tpu.memory_space<vmem>>, vector<1x8x150xbf16>
    %89 = vector.shape_cast %88 : vector<1x8x150xbf16> to vector<8x150xbf16>
    %90 = arith.extf %89 : vector<8x150xbf16> to vector<8x150xf32>
    %cst_65 = arith.constant dense<0xFF800000> : vector<150xf32>
    %91 = vector.multi_reduction <maximumf>, %90, %cst_65 [0] : vector<8x150xf32> to vector<150xf32>
    %92 = vector.shape_cast %91 : vector<150xf32> to vector<1x150xf32>
    %c17 = arith.constant 17 : index
    %c0_66 = arith.constant 0 : index
    %93 = vector.load %arg6[%c17, %c0_66] : memref<26x150xf32, #tpu.memory_space<vmem>>, vector<1x150xf32>
    tpu.vector_store %arg6[%c17, %c0_66], %92 {strides = array<i32>} : memref<26x150xf32, #tpu.memory_space<vmem>>, vector<1x150xf32>,
    %c0_67 = arith.constant 0 : index
    %c118 = arith.constant 118 : index
    %c0_68 = arith.constant 0 : index
    %94 = vector.load %arg1[%c0_67, %c118, %c0_68] : memref<1x149x150xbf16, #tpu.memory_space<vmem>>, vector<1x8x150xbf16>
    %95 = vector.shape_cast %94 : vector<1x8x150xbf16> to vector<8x150xbf16>
    %96 = arith.extf %95 : vector<8x150xbf16> to vector<8x150xf32>
    %cst_69 = arith.constant dense<0xFF800000> : vector<150xf32>
    %97 = vector.multi_reduction <maximumf>, %96, %cst_69 [0] : vector<8x150xf32> to vector<150xf32>
    %98 = vector.shape_cast %97 : vector<150xf32> to vector<1x150xf32>
    %c18 = arith.constant 18 : index
    %c0_70 = arith.constant 0 : index
    %99 = vector.load %arg6[%c18, %c0_70] : memref<26x150xf32, #tpu.memory_space<vmem>>, vector<1x150xf32>
    tpu.vector_store %arg6[%c18, %c0_70], %98 {strides = array<i32>} : memref<26x150xf32, #tpu.memory_space<vmem>>, vector<1x150xf32>,
    %c0_71 = arith.constant 0 : index
    %c126 = arith.constant 126 : index
    %c0_72 = arith.constant 0 : index
    %100 = vector.load %arg1[%c0_71, %c126, %c0_72] : memref<1x149x150xbf16, #tpu.memory_space<vmem>>, vector<1x8x150xbf16>
    %101 = vector.shape_cast %100 : vector<1x8x150xbf16> to vector<8x150xbf16>
    %102 = arith.extf %101 : vector<8x150xbf16> to vector<8x150xf32>
    %cst_73 = arith.constant dense<0xFF800000> : vector<150xf32>
    %103 = vector.multi_reduction <maximumf>, %102, %cst_73 [0] : vector<8x150xf32> to vector<150xf32>
    %104 = vector.shape_cast %103 : vector<150xf32> to vector<1x150xf32>
    %c19 = arith.constant 19 : index
    %c0_74 = arith.constant 0 : index
    %105 = vector.load %arg6[%c19, %c0_74] : memref<26x150xf32, #tpu.memory_space<vmem>>, vector<1x150xf32>
    tpu.vector_store %arg6[%c19, %c0_74], %104 {strides = array<i32>} : memref<26x150xf32, #tpu.memory_space<vmem>>, vector<1x150xf32>,
    %c0_75 = arith.constant 0 : index
    %c134 = arith.constant 134 : index
    %c0_76 = arith.constant 0 : index
    %106 = vector.load %arg1[%c0_75, %c134, %c0_76] : memref<1x149x150xbf16, #tpu.memory_space<vmem>>, vector<1x8x150xbf16>
    %107 = vector.shape_cast %106 : vector<1x8x150xbf16> to vector<8x150xbf16>
    %108 = arith.extf %107 : vector<8x150xbf16> to vector<8x150xf32>
    %cst_77 = arith.constant dense<0xFF800000> : vector<150xf32>
    %109 = vector.multi_reduction <maximumf>, %108, %cst_77 [0] : vector<8x150xf32> to vector<150xf32>
    %110 = vector.shape_cast %109 : vector<150xf32> to vector<1x150xf32>
    %c20 = arith.constant 20 : index
    %c0_78 = arith.constant 0 : index
    %111 = vector.load %arg6[%c20, %c0_78] : memref<26x150xf32, #tpu.memory_space<vmem>>, vector<1x150xf32>
    tpu.vector_store %arg6[%c20, %c0_78], %110 {strides = array<i32>} : memref<26x150xf32, #tpu.memory_space<vmem>>, vector<1x150xf32>,
    %c0_79 = arith.constant 0 : index
    %c142 = arith.constant 142 : index
    %c0_80 = arith.constant 0 : index
    %112 = vector.load %arg1[%c0_79, %c142, %c0_80] : memref<1x149x150xbf16, #tpu.memory_space<vmem>>, vector<1x7x150xbf16>
    %113 = vector.shape_cast %112 : vector<1x7x150xbf16> to vector<7x150xbf16>
    %114 = arith.extf %113 : vector<7x150xbf16> to vector<7x150xf32>
    %cst_81 = arith.constant dense<0xFF800000> : vector<150xf32>
    %115 = vector.multi_reduction <maximumf>, %114, %cst_81 [0] : vector<7x150xf32> to vector<150xf32>
    %116 = vector.shape_cast %115 : vector<150xf32> to vector<1x150xf32>
    %c21 = arith.constant 21 : index
    %c0_82 = arith.constant 0 : index
    %117 = vector.load %arg6[%c21, %c0_82] : memref<26x150xf32, #tpu.memory_space<vmem>>, vector<1x150xf32>
    tpu.vector_store %arg6[%c21, %c0_82], %116 {strides = array<i32>} : memref<26x150xf32, #tpu.memory_space<vmem>>, vector<1x150xf32>,
    %c0_83 = arith.constant 0 : index
    %c0_84 = arith.constant 0 : index
    %118 = vector.load %arg6[%c0_83, %c0_84] : memref<26x150xf32, #tpu.memory_space<vmem>>, vector<19x150xf32>
    %119 = arith.truncf %118 : vector<19x150xf32> to vector<19x150xbf16>
    %c0_85 = arith.constant 0 : index
    %c0_86 = arith.constant 0 : index
    %c0_87 = arith.constant 0 : index
    %c0_88 = arith.constant 0 : index
    %120 = vector.load %arg2[%c0_85, %c0_86, %c0_87, %c0_88] : memref<3x8x150x150xbf16, #tpu.memory_space<vmem>>, vector<1x1x150x150xbf16>
    %121 = vector.shape_cast %120 : vector<1x1x150x150xbf16> to vector<150x150xbf16>
    %cst_89 = arith.constant dense<0.000000e+00> : vector<19x150xf32>
    %122 = tpu.matmul %119, %121, %cst_89 {dimension_numbers = #tpu.dot_dimension_numbers<[1], [0], [0], [1], [0, 0, 1, 1], [], []>} : vector<19x150xbf16>, vector<150x150xbf16>, vector<19x150xf32> -> vector<19x150xf32>
    %c1 = arith.constant 1 : index
    %c0_90 = arith.constant 0 : index
    %123 = vector.load %arg6[%c1, %c0_90] : memref<26x150xf32, #tpu.memory_space<vmem>>, vector<19x150xf32>
    %124 = arith.truncf %123 : vector<19x150xf32> to vector<19x150xbf16>
    %c0_91 = arith.constant 0 : index
    %c1_92 = arith.constant 1 : index
    %c0_93 = arith.constant 0 : index
    %c0_94 = arith.constant 0 : index
    %125 = vector.load %arg2[%c0_91, %c1_92, %c0_93, %c0_94] : memref<3x8x150x150xbf16, #tpu.memory_space<vmem>>, vector<1x1x150x150xbf16>
    %126 = vector.shape_cast %125 : vector<1x1x150x150xbf16> to vector<150x150xbf16>
    %cst_95 = arith.constant dense<0.000000e+00> : vector<19x150xf32>
    %127 = tpu.matmul %124, %126, %cst_95 {dimension_numbers = #tpu.dot_dimension_numbers<[1], [0], [0], [1], [0, 0, 1, 1], [], []>} : vector<19x150xbf16>, vector<150x150xbf16>, vector<19x150xf32> -> vector<19x150xf32>
    %128 = arith.addf %122, %127 : vector<19x150xf32>
    %c2 = arith.constant 2 : index
    %c0_96 = arith.constant 0 : index
    %129 = vector.load %arg6[%c2, %c0_96] : memref<26x150xf32, #tpu.memory_space<vmem>>, vector<19x150xf32>
    %130 = arith.truncf %129 : vector<19x150xf32> to vector<19x150xbf16>
    %c0_97 = arith.constant 0 : index
    %c2_98 = arith.constant 2 : index
    %c0_99 = arith.constant 0 : index
    %c0_100 = arith.constant 0 : index
    %131 = vector.load %arg2[%c0_97, %c2_98, %c0_99, %c0_100] : memref<3x8x150x150xbf16, #tpu.memory_space<vmem>>, vector<1x1x150x150xbf16>
    %132 = vector.shape_cast %131 : vector<1x1x150x150xbf16> to vector<150x150xbf16>
    %cst_101 = arith.constant dense<0.000000e+00> : vector<19x150xf32>
    %133 = tpu.matmul %130, %132, %cst_101 {dimension_numbers = #tpu.dot_dimension_numbers<[1], [0], [0], [1], [0, 0, 1, 1], [], []>} : vector<19x150xbf16>, vector<150x150xbf16>, vector<19x150xf32> -> vector<19x150xf32>
    %134 = arith.addf %128, %133 : vector<19x150xf32>
    %c3_102 = arith.constant 3 : index
    %c0_103 = arith.constant 0 : index
    %135 = vector.load %arg6[%c3_102, %c0_103] : memref<26x150xf32, #tpu.memory_space<vmem>>, vector<19x150xf32>
    %136 = arith.truncf %135 : vector<19x150xf32> to vector<19x150xbf16>
    %c0_104 = arith.constant 0 : index
    %c3_105 = arith.constant 3 : index
    %c0_106 = arith.constant 0 : index
    %c0_107 = arith.constant 0 : index
    %137 = vector.load %arg2[%c0_104, %c3_105, %c0_106, %c0_107] : memref<3x8x150x150xbf16, #tpu.memory_space<vmem>>, vector<1x1x150x150xbf16>
    %138 = vector.shape_cast %137 : vector<1x1x150x150xbf16> to vector<150x150xbf16>
    %cst_108 = arith.constant dense<0.000000e+00> : vector<19x150xf32>
    %139 = tpu.matmul %136, %138, %cst_108 {dimension_numbers = #tpu.dot_dimension_numbers<[1], [0], [0], [1], [0, 0, 1, 1], [], []>} : vector<19x150xbf16>, vector<150x150xbf16>, vector<19x150xf32> -> vector<19x150xf32>
    %140 = arith.addf %134, %139 : vector<19x150xf32>
    %c4_109 = arith.constant 4 : index
    %c0_110 = arith.constant 0 : index
    %141 = vector.load %arg6[%c4_109, %c0_110] : memref<26x150xf32, #tpu.memory_space<vmem>>, vector<19x150xf32>
    %142 = arith.truncf %141 : vector<19x150xf32> to vector<19x150xbf16>
    %c0_111 = arith.constant 0 : index
    %c4_112 = arith.constant 4 : index
    %c0_113 = arith.constant 0 : index
    %c0_114 = arith.constant 0 : index
    %143 = vector.load %arg2[%c0_111, %c4_112, %c0_113, %c0_114] : memref<3x8x150x150xbf16, #tpu.memory_space<vmem>>, vector<1x1x150x150xbf16>
    %144 = vector.shape_cast %143 : vector<1x1x150x150xbf16> to vector<150x150xbf16>
    %cst_115 = arith.constant dense<0.000000e+00> : vector<19x150xf32>
    %145 = tpu.matmul %142, %144, %cst_115 {dimension_numbers = #tpu.dot_dimension_numbers<[1], [0], [0], [1], [0, 0, 1, 1], [], []>} : vector<19x150xbf16>, vector<150x150xbf16>, vector<19x150xf32> -> vector<19x150xf32>
    %146 = arith.addf %140, %145 : vector<19x150xf32>
    %c5_116 = arith.constant 5 : index
    %c0_117 = arith.constant 0 : index
    %147 = vector.load %arg6[%c5_116, %c0_117] : memref<26x150xf32, #tpu.memory_space<vmem>>, vector<19x150xf32>
    %148 = arith.truncf %147 : vector<19x150xf32> to vector<19x150xbf16>
    %c0_118 = arith.constant 0 : index
    %c5_119 = arith.constant 5 : index
    %c0_120 = arith.constant 0 : index
    %c0_121 = arith.constant 0 : index
    %149 = vector.load %arg2[%c0_118, %c5_119, %c0_120, %c0_121] : memref<3x8x150x150xbf16, #tpu.memory_space<vmem>>, vector<1x1x150x150xbf16>
    %150 = vector.shape_cast %149 : vector<1x1x150x150xbf16> to vector<150x150xbf16>
    %cst_122 = arith.constant dense<0.000000e+00> : vector<19x150xf32>
    %151 = tpu.matmul %148, %150, %cst_122 {dimension_numbers = #tpu.dot_dimension_numbers<[1], [0], [0], [1], [0, 0, 1, 1], [], []>} : vector<19x150xbf16>, vector<150x150xbf16>, vector<19x150xf32> -> vector<19x150xf32>
    %152 = arith.addf %146, %151 : vector<19x150xf32>
    %c6_123 = arith.constant 6 : index
    %c0_124 = arith.constant 0 : index
    %153 = vector.load %arg6[%c6_123, %c0_124] : memref<26x150xf32, #tpu.memory_space<vmem>>, vector<19x150xf32>
    %154 = arith.truncf %153 : vector<19x150xf32> to vector<19x150xbf16>
    %c0_125 = arith.constant 0 : index
    %c6_126 = arith.constant 6 : index
    %c0_127 = arith.constant 0 : index
    %c0_128 = arith.constant 0 : index
    %155 = vector.load %arg2[%c0_125, %c6_126, %c0_127, %c0_128] : memref<3x8x150x150xbf16, #tpu.memory_space<vmem>>, vector<1x1x150x150xbf16>
    %156 = vector.shape_cast %155 : vector<1x1x150x150xbf16> to vector<150x150xbf16>
    %cst_129 = arith.constant dense<0.000000e+00> : vector<19x150xf32>
    %157 = tpu.matmul %154, %156, %cst_129 {dimension_numbers = #tpu.dot_dimension_numbers<[1], [0], [0], [1], [0, 0, 1, 1], [], []>} : vector<19x150xbf16>, vector<150x150xbf16>, vector<19x150xf32> -> vector<19x150xf32>
    %158 = arith.addf %152, %157 : vector<19x150xf32>
    %c7_130 = arith.constant 7 : index
    %c0_131 = arith.constant 0 : index
    %159 = vector.load %arg6[%c7_130, %c0_131] : memref<26x150xf32, #tpu.memory_space<vmem>>, vector<19x150xf32>
    %160 = arith.truncf %159 : vector<19x150xf32> to vector<19x150xbf16>
    %c0_132 = arith.constant 0 : index
    %c7_133 = arith.constant 7 : index
    %c0_134 = arith.constant 0 : index
    %c0_135 = arith.constant 0 : index
    %161 = vector.load %arg2[%c0_132, %c7_133, %c0_134, %c0_135] : memref<3x8x150x150xbf16, #tpu.memory_space<vmem>>, vector<1x1x150x150xbf16>
    %162 = vector.shape_cast %161 : vector<1x1x150x150xbf16> to vector<150x150xbf16>
    %cst_136 = arith.constant dense<0.000000e+00> : vector<19x150xf32>
    %163 = tpu.matmul %160, %162, %cst_136 {dimension_numbers = #tpu.dot_dimension_numbers<[1], [0], [0], [1], [0, 0, 1, 1], [], []>} : vector<19x150xbf16>, vector<150x150xbf16>, vector<19x150xf32> -> vector<19x150xf32>
    %164 = arith.addf %158, %163 : vector<19x150xf32>
    %c0_137 = arith.constant 0 : index
    %c0_138 = arith.constant 0 : index
    %165 = vector.load %arg3[%c0_137, %c0_138] : memref<3x150xf32, #tpu.memory_space<vmem>>, vector<1x150xf32>
    %166 = vector.broadcast %165 : vector<1x150xf32> to vector<19x150xf32>
    %167 = arith.mulf %164, %166 : vector<19x150xf32>
    %c0_139 = arith.constant 0 : index
    %c0_140 = arith.constant 0 : index
    %168 = vector.load %arg4[%c0_139, %c0_140] : memref<3x150xf32, #tpu.memory_space<vmem>>, vector<1x150xf32>
    %169 = vector.broadcast %168 : vector<1x150xf32> to vector<19x150xf32>
    %170 = arith.addf %167, %169 : vector<19x150xf32>
    %cst_141 = arith.constant 0.000000e+00 : f32
    %171 = vector.broadcast %cst_141 : f32 to vector<19x150xf32>
    %172 = arith.maximumf %170, %171 : vector<19x150xf32>
    %c3_142 = arith.constant 3 : index
    %c0_143 = arith.constant 0 : index
    %173 = vector.load %arg6[%c3_142, %c0_143] : memref<26x150xf32, #tpu.memory_space<vmem>>, vector<19x150xf32>
    tpu.vector_store %arg6[%c3_142, %c0_143], %172 {strides = array<i32>} : memref<26x150xf32, #tpu.memory_space<vmem>>, vector<19x150xf32>,
    %c0_144 = arith.constant 0 : index
    %c0_145 = arith.constant 0 : index
    %174 = vector.load %arg6[%c0_144, %c0_145] : memref<26x150xf32, #tpu.memory_space<vmem>>, vector<19x150xf32>
    %175 = arith.truncf %174 : vector<19x150xf32> to vector<19x150xbf16>
    %c1_146 = arith.constant 1 : index
    %c0_147 = arith.constant 0 : index
    %c0_148 = arith.constant 0 : index
    %c0_149 = arith.constant 0 : index
    %176 = vector.load %arg2[%c1_146, %c0_147, %c0_148, %c0_149] : memref<3x8x150x150xbf16, #tpu.memory_space<vmem>>, vector<1x1x150x150xbf16>
    %177 = vector.shape_cast %176 : vector<1x1x150x150xbf16> to vector<150x150xbf16>
    %cst_150 = arith.constant dense<0.000000e+00> : vector<19x150xf32>
    %178 = tpu.matmul %175, %177, %cst_150 {dimension_numbers = #tpu.dot_dimension_numbers<[1], [0], [0], [1], [0, 0, 1, 1], [], []>} : vector<19x150xbf16>, vector<150x150xbf16>, vector<19x150xf32> -> vector<19x150xf32>
    %c1_151 = arith.constant 1 : index
    %c0_152 = arith.constant 0 : index
    %179 = vector.load %arg6[%c1_151, %c0_152] : memref<26x150xf32, #tpu.memory_space<vmem>>, vector<19x150xf32>
    %180 = arith.truncf %179 : vector<19x150xf32> to vector<19x150xbf16>
    %c1_153 = arith.constant 1 : index
    %c1_154 = arith.constant 1 : index
    %c0_155 = arith.constant 0 : index
    %c0_156 = arith.constant 0 : index
    %181 = vector.load %arg2[%c1_153, %c1_154, %c0_155, %c0_156] : memref<3x8x150x150xbf16, #tpu.memory_space<vmem>>, vector<1x1x150x150xbf16>
    %182 = vector.shape_cast %181 : vector<1x1x150x150xbf16> to vector<150x150xbf16>
    %cst_157 = arith.constant dense<0.000000e+00> : vector<19x150xf32>
    %183 = tpu.matmul %180, %182, %cst_157 {dimension_numbers = #tpu.dot_dimension_numbers<[1], [0], [0], [1], [0, 0, 1, 1], [], []>} : vector<19x150xbf16>, vector<150x150xbf16>, vector<19x150xf32> -> vector<19x150xf32>
    %184 = arith.addf %178, %183 : vector<19x150xf32>
    %c2_158 = arith.constant 2 : index
    %c0_159 = arith.constant 0 : index
    %185 = vector.load %arg6[%c2_158, %c0_159] : memref<26x150xf32, #tpu.memory_space<vmem>>, vector<19x150xf32>
    %186 = arith.truncf %185 : vector<19x150xf32> to vector<19x150xbf16>
    %c1_160 = arith.constant 1 : index
    %c2_161 = arith.constant 2 : index
    %c0_162 = arith.constant 0 : index
    %c0_163 = arith.constant 0 : index
    %187 = vector.load %arg2[%c1_160, %c2_161, %c0_162, %c0_163] : memref<3x8x150x150xbf16, #tpu.memory_space<vmem>>, vector<1x1x150x150xbf16>
    %188 = vector.shape_cast %187 : vector<1x1x150x150xbf16> to vector<150x150xbf16>
    %cst_164 = arith.constant dense<0.000000e+00> : vector<19x150xf32>
    %189 = tpu.matmul %186, %188, %cst_164 {dimension_numbers = #tpu.dot_dimension_numbers<[1], [0], [0], [1], [0, 0, 1, 1], [], []>} : vector<19x150xbf16>, vector<150x150xbf16>, vector<19x150xf32> -> vector<19x150xf32>
    %190 = arith.addf %184, %189 : vector<19x150xf32>
    %c3_165 = arith.constant 3 : index
    %c0_166 = arith.constant 0 : index
    %191 = vector.load %arg6[%c3_165, %c0_166] : memref<26x150xf32, #tpu.memory_space<vmem>>, vector<19x150xf32>
    %192 = arith.truncf %191 : vector<19x150xf32> to vector<19x150xbf16>
    %c1_167 = arith.constant 1 : index
    %c3_168 = arith.constant 3 : index
    %c0_169 = arith.constant 0 : index
    %c0_170 = arith.constant 0 : index
    %193 = vector.load %arg2[%c1_167, %c3_168, %c0_169, %c0_170] : memref<3x8x150x150xbf16, #tpu.memory_space<vmem>>, vector<1x1x150x150xbf16>
    %194 = vector.shape_cast %193 : vector<1x1x150x150xbf16> to vector<150x150xbf16>
    %cst_171 = arith.constant dense<0.000000e+00> : vector<19x150xf32>
    %195 = tpu.matmul %192, %194, %cst_171 {dimension_numbers = #tpu.dot_dimension_numbers<[1], [0], [0], [1], [0, 0, 1, 1], [], []>} : vector<19x150xbf16>, vector<150x150xbf16>, vector<19x150xf32> -> vector<19x150xf32>
    %196 = arith.addf %190, %195 : vector<19x150xf32>
    %c4_172 = arith.constant 4 : index
    %c0_173 = arith.constant 0 : index
    %197 = vector.load %arg6[%c4_172, %c0_173] : memref<26x150xf32, #tpu.memory_space<vmem>>, vector<19x150xf32>
    %198 = arith.truncf %197 : vector<19x150xf32> to vector<19x150xbf16>
    %c1_174 = arith.constant 1 : index
    %c4_175 = arith.constant 4 : index
    %c0_176 = arith.constant 0 : index
    %c0_177 = arith.constant 0 : index
    %199 = vector.load %arg2[%c1_174, %c4_175, %c0_176, %c0_177] : memref<3x8x150x150xbf16, #tpu.memory_space<vmem>>, vector<1x1x150x150xbf16>
    %200 = vector.shape_cast %199 : vector<1x1x150x150xbf16> to vector<150x150xbf16>
    %cst_178 = arith.constant dense<0.000000e+00> : vector<19x150xf32>
    %201 = tpu.matmul %198, %200, %cst_178 {dimension_numbers = #tpu.dot_dimension_numbers<[1], [0], [0], [1], [0, 0, 1, 1], [], []>} : vector<19x150xbf16>, vector<150x150xbf16>, vector<19x150xf32> -> vector<19x150xf32>
    %202 = arith.addf %196, %201 : vector<19x150xf32>
    %c5_179 = arith.constant 5 : index
    %c0_180 = arith.constant 0 : index
    %203 = vector.load %arg6[%c5_179, %c0_180] : memref<26x150xf32, #tpu.memory_space<vmem>>, vector<19x150xf32>
    %204 = arith.truncf %203 : vector<19x150xf32> to vector<19x150xbf16>
    %c1_181 = arith.constant 1 : index
    %c5_182 = arith.constant 5 : index
    %c0_183 = arith.constant 0 : index
    %c0_184 = arith.constant 0 : index
    %205 = vector.load %arg2[%c1_181, %c5_182, %c0_183, %c0_184] : memref<3x8x150x150xbf16, #tpu.memory_space<vmem>>, vector<1x1x150x150xbf16>
    %206 = vector.shape_cast %205 : vector<1x1x150x150xbf16> to vector<150x150xbf16>
    %cst_185 = arith.constant dense<0.000000e+00> : vector<19x150xf32>
    %207 = tpu.matmul %204, %206, %cst_185 {dimension_numbers = #tpu.dot_dimension_numbers<[1], [0], [0], [1], [0, 0, 1, 1], [], []>} : vector<19x150xbf16>, vector<150x150xbf16>, vector<19x150xf32> -> vector<19x150xf32>
    %208 = arith.addf %202, %207 : vector<19x150xf32>
    %c6_186 = arith.constant 6 : index
    %c0_187 = arith.constant 0 : index
    %209 = vector.load %arg6[%c6_186, %c0_187] : memref<26x150xf32, #tpu.memory_space<vmem>>, vector<19x150xf32>
    %210 = arith.truncf %209 : vector<19x150xf32> to vector<19x150xbf16>
    %c1_188 = arith.constant 1 : index
    %c6_189 = arith.constant 6 : index
    %c0_190 = arith.constant 0 : index
    %c0_191 = arith.constant 0 : index
    %211 = vector.load %arg2[%c1_188, %c6_189, %c0_190, %c0_191] : memref<3x8x150x150xbf16, #tpu.memory_space<vmem>>, vector<1x1x150x150xbf16>
    %212 = vector.shape_cast %211 : vector<1x1x150x150xbf16> to vector<150x150xbf16>
    %cst_192 = arith.constant dense<0.000000e+00> : vector<19x150xf32>
    %213 = tpu.matmul %210, %212, %cst_192 {dimension_numbers = #tpu.dot_dimension_numbers<[1], [0], [0], [1], [0, 0, 1, 1], [], []>} : vector<19x150xbf16>, vector<150x150xbf16>, vector<19x150xf32> -> vector<19x150xf32>
    %214 = arith.addf %208, %213 : vector<19x150xf32>
    %c7_193 = arith.constant 7 : index
    %c0_194 = arith.constant 0 : index
    %215 = vector.load %arg6[%c7_193, %c0_194] : memref<26x150xf32, #tpu.memory_space<vmem>>, vector<19x150xf32>
    %216 = arith.truncf %215 : vector<19x150xf32> to vector<19x150xbf16>
    %c1_195 = arith.constant 1 : index
    %c7_196 = arith.constant 7 : index
    %c0_197 = arith.constant 0 : index
    %c0_198 = arith.constant 0 : index
    %217 = vector.load %arg2[%c1_195, %c7_196, %c0_197, %c0_198] : memref<3x8x150x150xbf16, #tpu.memory_space<vmem>>, vector<1x1x150x150xbf16>
    %218 = vector.shape_cast %217 : vector<1x1x150x150xbf16> to vector<150x150xbf16>
    %cst_199 = arith.constant dense<0.000000e+00> : vector<19x150xf32>
    %219 = tpu.matmul %216, %218, %cst_199 {dimension_numbers = #tpu.dot_dimension_numbers<[1], [0], [0], [1], [0, 0, 1, 1], [], []>} : vector<19x150xbf16>, vector<150x150xbf16>, vector<19x150xf32> -> vector<19x150xf32>
    %220 = arith.addf %214, %219 : vector<19x150xf32>
    %c1_200 = arith.constant 1 : index
    %c0_201 = arith.constant 0 : index
    %221 = vector.load %arg3[%c1_200, %c0_201] : memref<3x150xf32, #tpu.memory_space<vmem>>, vector<1x150xf32>
    %222 = vector.broadcast %221 : vector<1x150xf32> to vector<19x150xf32>
    %223 = arith.mulf %220, %222 : vector<19x150xf32>
    %c1_202 = arith.constant 1 : index
    %c0_203 = arith.constant 0 : index
    %224 = vector.load %arg4[%c1_202, %c0_203] : memref<3x150xf32, #tpu.memory_space<vmem>>, vector<1x150xf32>
    %225 = vector.broadcast %224 : vector<1x150xf32> to vector<19x150xf32>
    %226 = arith.addf %223, %225 : vector<19x150xf32>
    %cst_204 = arith.constant 0.000000e+00 : f32
    %227 = vector.broadcast %cst_204 : f32 to vector<19x150xf32>
    %228 = arith.maximumf %226, %227 : vector<19x150xf32>
    %c3_205 = arith.constant 3 : index
    %c0_206 = arith.constant 0 : index
    %229 = vector.load %arg6[%c3_205, %c0_206] : memref<26x150xf32, #tpu.memory_space<vmem>>, vector<19x150xf32>
    tpu.vector_store %arg6[%c3_205, %c0_206], %228 {strides = array<i32>} : memref<26x150xf32, #tpu.memory_space<vmem>>, vector<19x150xf32>,
    %c0_207 = arith.constant 0 : index
    %c0_208 = arith.constant 0 : index
    %230 = vector.load %arg6[%c0_207, %c0_208] : memref<26x150xf32, #tpu.memory_space<vmem>>, vector<19x150xf32>
    %231 = arith.truncf %230 : vector<19x150xf32> to vector<19x150xbf16>
    %c2_209 = arith.constant 2 : index
    %c0_210 = arith.constant 0 : index
    %c0_211 = arith.constant 0 : index
    %c0_212 = arith.constant 0 : index
    %232 = vector.load %arg2[%c2_209, %c0_210, %c0_211, %c0_212] : memref<3x8x150x150xbf16, #tpu.memory_space<vmem>>, vector<1x1x150x150xbf16>
    %233 = vector.shape_cast %232 : vector<1x1x150x150xbf16> to vector<150x150xbf16>
    %cst_213 = arith.constant dense<0.000000e+00> : vector<19x150xf32>
    %234 = tpu.matmul %231, %233, %cst_213 {dimension_numbers = #tpu.dot_dimension_numbers<[1], [0], [0], [1], [0, 0, 1, 1], [], []>} : vector<19x150xbf16>, vector<150x150xbf16>, vector<19x150xf32> -> vector<19x150xf32>
    %c1_214 = arith.constant 1 : index
    %c0_215 = arith.constant 0 : index
    %235 = vector.load %arg6[%c1_214, %c0_215] : memref<26x150xf32, #tpu.memory_space<vmem>>, vector<19x150xf32>
    %236 = arith.truncf %235 : vector<19x150xf32> to vector<19x150xbf16>
    %c2_216 = arith.constant 2 : index
    %c1_217 = arith.constant 1 : index
    %c0_218 = arith.constant 0 : index
    %c0_219 = arith.constant 0 : index
    %237 = vector.load %arg2[%c2_216, %c1_217, %c0_218, %c0_219] : memref<3x8x150x150xbf16, #tpu.memory_space<vmem>>, vector<1x1x150x150xbf16>
    %238 = vector.shape_cast %237 : vector<1x1x150x150xbf16> to vector<150x150xbf16>
    %cst_220 = arith.constant dense<0.000000e+00> : vector<19x150xf32>
    %239 = tpu.matmul %236, %238, %cst_220 {dimension_numbers = #tpu.dot_dimension_numbers<[1], [0], [0], [1], [0, 0, 1, 1], [], []>} : vector<19x150xbf16>, vector<150x150xbf16>, vector<19x150xf32> -> vector<19x150xf32>
    %240 = arith.addf %234, %239 : vector<19x150xf32>
    %c2_221 = arith.constant 2 : index
    %c0_222 = arith.constant 0 : index
    %241 = vector.load %arg6[%c2_221, %c0_222] : memref<26x150xf32, #tpu.memory_space<vmem>>, vector<19x150xf32>
    %242 = arith.truncf %241 : vector<19x150xf32> to vector<19x150xbf16>
    %c2_223 = arith.constant 2 : index
    %c2_224 = arith.constant 2 : index
    %c0_225 = arith.constant 0 : index
    %c0_226 = arith.constant 0 : index
    %243 = vector.load %arg2[%c2_223, %c2_224, %c0_225, %c0_226] : memref<3x8x150x150xbf16, #tpu.memory_space<vmem>>, vector<1x1x150x150xbf16>
    %244 = vector.shape_cast %243 : vector<1x1x150x150xbf16> to vector<150x150xbf16>
    %cst_227 = arith.constant dense<0.000000e+00> : vector<19x150xf32>
    %245 = tpu.matmul %242, %244, %cst_227 {dimension_numbers = #tpu.dot_dimension_numbers<[1], [0], [0], [1], [0, 0, 1, 1], [], []>} : vector<19x150xbf16>, vector<150x150xbf16>, vector<19x150xf32> -> vector<19x150xf32>
    %246 = arith.addf %240, %245 : vector<19x150xf32>
    %c3_228 = arith.constant 3 : index
    %c0_229 = arith.constant 0 : index
    %247 = vector.load %arg6[%c3_228, %c0_229] : memref<26x150xf32, #tpu.memory_space<vmem>>, vector<19x150xf32>
    %248 = arith.truncf %247 : vector<19x150xf32> to vector<19x150xbf16>
    %c2_230 = arith.constant 2 : index
    %c3_231 = arith.constant 3 : index
    %c0_232 = arith.constant 0 : index
    %c0_233 = arith.constant 0 : index
    %249 = vector.load %arg2[%c2_230, %c3_231, %c0_232, %c0_233] : memref<3x8x150x150xbf16, #tpu.memory_space<vmem>>, vector<1x1x150x150xbf16>
    %250 = vector.shape_cast %249 : vector<1x1x150x150xbf16> to vector<150x150xbf16>
    %cst_234 = arith.constant dense<0.000000e+00> : vector<19x150xf32>
    %251 = tpu.matmul %248, %250, %cst_234 {dimension_numbers = #tpu.dot_dimension_numbers<[1], [0], [0], [1], [0, 0, 1, 1], [], []>} : vector<19x150xbf16>, vector<150x150xbf16>, vector<19x150xf32> -> vector<19x150xf32>
    %252 = arith.addf %246, %251 : vector<19x150xf32>
    %c4_235 = arith.constant 4 : index
    %c0_236 = arith.constant 0 : index
    %253 = vector.load %arg6[%c4_235, %c0_236] : memref<26x150xf32, #tpu.memory_space<vmem>>, vector<19x150xf32>
    %254 = arith.truncf %253 : vector<19x150xf32> to vector<19x150xbf16>
    %c2_237 = arith.constant 2 : index
    %c4_238 = arith.constant 4 : index
    %c0_239 = arith.constant 0 : index
    %c0_240 = arith.constant 0 : index
    %255 = vector.load %arg2[%c2_237, %c4_238, %c0_239, %c0_240] : memref<3x8x150x150xbf16, #tpu.memory_space<vmem>>, vector<1x1x150x150xbf16>
    %256 = vector.shape_cast %255 : vector<1x1x150x150xbf16> to vector<150x150xbf16>
    %cst_241 = arith.constant dense<0.000000e+00> : vector<19x150xf32>
    %257 = tpu.matmul %254, %256, %cst_241 {dimension_numbers = #tpu.dot_dimension_numbers<[1], [0], [0], [1], [0, 0, 1, 1], [], []>} : vector<19x150xbf16>, vector<150x150xbf16>, vector<19x150xf32> -> vector<19x150xf32>
    %258 = arith.addf %252, %257 : vector<19x150xf32>
    %c5_242 = arith.constant 5 : index
    %c0_243 = arith.constant 0 : index
    %259 = vector.load %arg6[%c5_242, %c0_243] : memref<26x150xf32, #tpu.memory_space<vmem>>, vector<19x150xf32>
    %260 = arith.truncf %259 : vector<19x150xf32> to vector<19x150xbf16>
    %c2_244 = arith.constant 2 : index
    %c5_245 = arith.constant 5 : index
    %c0_246 = arith.constant 0 : index
    %c0_247 = arith.constant 0 : index
    %261 = vector.load %arg2[%c2_244, %c5_245, %c0_246, %c0_247] : memref<3x8x150x150xbf16, #tpu.memory_space<vmem>>, vector<1x1x150x150xbf16>
    %262 = vector.shape_cast %261 : vector<1x1x150x150xbf16> to vector<150x150xbf16>
    %cst_248 = arith.constant dense<0.000000e+00> : vector<19x150xf32>
    %263 = tpu.matmul %260, %262, %cst_248 {dimension_numbers = #tpu.dot_dimension_numbers<[1], [0], [0], [1], [0, 0, 1, 1], [], []>} : vector<19x150xbf16>, vector<150x150xbf16>, vector<19x150xf32> -> vector<19x150xf32>
    %264 = arith.addf %258, %263 : vector<19x150xf32>
    %c6_249 = arith.constant 6 : index
    %c0_250 = arith.constant 0 : index
    %265 = vector.load %arg6[%c6_249, %c0_250] : memref<26x150xf32, #tpu.memory_space<vmem>>, vector<19x150xf32>
    %266 = arith.truncf %265 : vector<19x150xf32> to vector<19x150xbf16>
    %c2_251 = arith.constant 2 : index
    %c6_252 = arith.constant 6 : index
    %c0_253 = arith.constant 0 : index
    %c0_254 = arith.constant 0 : index
    %267 = vector.load %arg2[%c2_251, %c6_252, %c0_253, %c0_254] : memref<3x8x150x150xbf16, #tpu.memory_space<vmem>>, vector<1x1x150x150xbf16>
    %268 = vector.shape_cast %267 : vector<1x1x150x150xbf16> to vector<150x150xbf16>
    %cst_255 = arith.constant dense<0.000000e+00> : vector<19x150xf32>
    %269 = tpu.matmul %266, %268, %cst_255 {dimension_numbers = #tpu.dot_dimension_numbers<[1], [0], [0], [1], [0, 0, 1, 1], [], []>} : vector<19x150xbf16>, vector<150x150xbf16>, vector<19x150xf32> -> vector<19x150xf32>
    %270 = arith.addf %264, %269 : vector<19x150xf32>
    %c7_256 = arith.constant 7 : index
    %c0_257 = arith.constant 0 : index
    %271 = vector.load %arg6[%c7_256, %c0_257] : memref<26x150xf32, #tpu.memory_space<vmem>>, vector<19x150xf32>
    %272 = arith.truncf %271 : vector<19x150xf32> to vector<19x150xbf16>
    %c2_258 = arith.constant 2 : index
    %c7_259 = arith.constant 7 : index
    %c0_260 = arith.constant 0 : index
    %c0_261 = arith.constant 0 : index
    %273 = vector.load %arg2[%c2_258, %c7_259, %c0_260, %c0_261] : memref<3x8x150x150xbf16, #tpu.memory_space<vmem>>, vector<1x1x150x150xbf16>
    %274 = vector.shape_cast %273 : vector<1x1x150x150xbf16> to vector<150x150xbf16>
    %cst_262 = arith.constant dense<0.000000e+00> : vector<19x150xf32>
    %275 = tpu.matmul %272, %274, %cst_262 {dimension_numbers = #tpu.dot_dimension_numbers<[1], [0], [0], [1], [0, 0, 1, 1], [], []>} : vector<19x150xbf16>, vector<150x150xbf16>, vector<19x150xf32> -> vector<19x150xf32>
    %276 = arith.addf %270, %275 : vector<19x150xf32>
    %c2_263 = arith.constant 2 : index
    %c0_264 = arith.constant 0 : index
    %277 = vector.load %arg3[%c2_263, %c0_264] : memref<3x150xf32, #tpu.memory_space<vmem>>, vector<1x150xf32>
    %278 = vector.broadcast %277 : vector<1x150xf32> to vector<19x150xf32>
    %279 = arith.mulf %276, %278 : vector<19x150xf32>
    %c2_265 = arith.constant 2 : index
    %c0_266 = arith.constant 0 : index
    %280 = vector.load %arg4[%c2_265, %c0_266] : memref<3x150xf32, #tpu.memory_space<vmem>>, vector<1x150xf32>
    %281 = vector.broadcast %280 : vector<1x150xf32> to vector<19x150xf32>
    %282 = arith.addf %279, %281 : vector<19x150xf32>
    %cst_267 = arith.constant 0.000000e+00 : f32
    %283 = vector.broadcast %cst_267 : f32 to vector<19x150xf32>
    %284 = arith.maximumf %282, %283 : vector<19x150xf32>
    %285 = vector.extract_strided_slice %284 {offsets = [0, 0], sizes = [4, 150], strides = [1, 1]} : vector<19x150xf32> to vector<4x150xf32>
    %cst_268 = arith.constant dense<0xFF800000> : vector<150xf32>
    %286 = vector.multi_reduction <maximumf>, %285, %cst_268 [0] : vector<4x150xf32> to vector<150xf32>
    %287 = vector.shape_cast %286 : vector<150xf32> to vector<1x150xf32>
    %288 = vector.extract_strided_slice %284 {offsets = [4, 0], sizes = [4, 150], strides = [1, 1]} : vector<19x150xf32> to vector<4x150xf32>
    %cst_269 = arith.constant dense<0xFF800000> : vector<150xf32>
    %289 = vector.multi_reduction <maximumf>, %288, %cst_269 [0] : vector<4x150xf32> to vector<150xf32>
    %290 = vector.shape_cast %289 : vector<150xf32> to vector<1x150xf32>
    %291 = vector.extract_strided_slice %284 {offsets = [8, 0], sizes = [4, 150], strides = [1, 1]} : vector<19x150xf32> to vector<4x150xf32>
    %cst_270 = arith.constant dense<0xFF800000> : vector<150xf32>
    %292 = vector.multi_reduction <maximumf>, %291, %cst_270 [0] : vector<4x150xf32> to vector<150xf32>
    %293 = vector.shape_cast %292 : vector<150xf32> to vector<1x150xf32>
    %294 = vector.extract_strided_slice %284 {offsets = [12, 0], sizes = [4, 150], strides = [1, 1]} : vector<19x150xf32> to vector<4x150xf32>
    %cst_271 = arith.constant dense<0xFF800000> : vector<150xf32>
    %295 = vector.multi_reduction <maximumf>, %294, %cst_271 [0] : vector<4x150xf32> to vector<150xf32>
    %296 = vector.shape_cast %295 : vector<150xf32> to vector<1x150xf32>
    %297 = vector.extract_strided_slice %284 {offsets = [16, 0], sizes = [3, 150], strides = [1, 1]} : vector<19x150xf32> to vector<3x150xf32>
    %cst_272 = arith.constant dense<0xFF800000> : vector<150xf32>
    %298 = vector.multi_reduction <maximumf>, %297, %cst_272 [0] : vector<3x150xf32> to vector<150xf32>
    %299 = vector.shape_cast %298 : vector<150xf32> to vector<1x150xf32>
    %300 = tpu.concatenate %287, %290, %293, %296, %299 in 0 : vector<1x150xf32>, vector<1x150xf32>, vector<1x150xf32>, vector<1x150xf32>, vector<1x150xf32> -> vector<5x150xf32>
    %c0_273 = arith.constant 0 : index
    %c0_274 = arith.constant 0 : index
    %c0_275 = arith.constant 0 : index
    %301 = vector.load %arg5[%c0_273, %c0_274, %c0_275] : memref<1x5x150xf32, #tpu.memory_space<vmem>>, vector<1x5x150xf32>
    %302 = vector.shape_cast %301 : vector<1x5x150xf32> to vector<5x150xf32>
    %303 = vector.shape_cast %300 : vector<5x150xf32> to vector<1x5x150xf32>
    tpu.vector_store %arg5[%c0_273, %c0_274, %c0_275], %303 {strides = array<i32>} : memref<1x5x150xf32, #tpu.memory_space<vmem>>, vector<1x5x150xf32>,
    return
  }
  func.func @transform_0(%arg0: i32) -> (i32, i32, i32) {
    %c0_i32 = arith.constant 0 : i32
    %c0_i32_0 = arith.constant 0 : i32
    %c0_i32_1 = arith.constant 0 : i32
    return %arg0, %c0_i32, %c0_i32_0 : i32, i32, i32
  }
  func.func @transform_1(%arg0: i32) -> (i32, i32, i32, i32) {
    %c0_i32 = arith.constant 0 : i32
    %c0_i32_0 = arith.constant 0 : i32
    %c0_i32_1 = arith.constant 0 : i32
    %c0_i32_2 = arith.constant 0 : i32
    %c0_i32_3 = arith.constant 0 : i32
    return %c0_i32, %c0_i32_0, %c0_i32_1, %c0_i32_2 : i32, i32, i32, i32
  }
  func.func @transform_2(%arg0: i32) -> (i32, i32) {
    %c0_i32 = arith.constant 0 : i32
    %c0_i32_0 = arith.constant 0 : i32
    %c0_i32_1 = arith.constant 0 : i32
    return %c0_i32, %c0_i32_0 : i32, i32
  }
  func.func @transform_3(%arg0: i32) -> (i32, i32) {
    %c0_i32 = arith.constant 0 : i32
    %c0_i32_0 = arith.constant 0 : i32
    %c0_i32_1 = arith.constant 0 : i32
    return %c0_i32, %c0_i32_0 : i32, i32
  }
  func.func @transform_4(%arg0: i32) -> (i32, i32, i32) {
    %c0_i32 = arith.constant 0 : i32
    %c0_i32_0 = arith.constant 0 : i32
    %c0_i32_1 = arith.constant 0 : i32
    return %arg0, %c0_i32, %c0_i32_0 : i32, i32, i32
  }
}

module attributes {stable_mosaic.version = 11 : i64} {
  func.func @kernel(%arg0: i32, %arg1: memref<752x128xf32, #tpu.memory_space<vmem>>, %arg2: memref<32x128xf32, #tpu.memory_space<vmem>>, %arg3: memref<1x32xf32, #tpu.memory_space<vmem>>, %arg4: memref<1x1xf32, #tpu.memory_space<vmem>>, %arg5: memref<94x8xf32, #tpu.memory_space<vmem>>) attributes {dimension_semantics = [#tpu.dimension_semantics<arbitrary>], iteration_bounds = array<i64: 1>, scalar_prefetch = 0 : i64, scratch_operands = 0 : i64, tpu.core_type = #tpu.core_type<tc>, window_params = [{pipeline_mode = #tpu.pipeline_mode<synchronous>, transform_indices = @transform_0, window_bounds = array<i64: 752, 128>}, {pipeline_mode = #tpu.pipeline_mode<synchronous>, transform_indices = @transform_1, window_bounds = array<i64: 32, 128>}, {pipeline_mode = #tpu.pipeline_mode<synchronous>, transform_indices = @transform_2, window_bounds = array<i64: 1, 32>}, {pipeline_mode = #tpu.pipeline_mode<synchronous>, transform_indices = @transform_3, window_bounds = array<i64: 1, 1>}, {pipeline_mode = #tpu.pipeline_mode<synchronous>, transform_indices = @transform_4, window_bounds = array<i64: 94, 8>}]} {
    %c0 = arith.constant 0 : index
    %c0_0 = arith.constant 0 : index
    %0 = vector.load %arg2[%c0, %c0_0] : memref<32x128xf32, #tpu.memory_space<vmem>>, vector<32x128xf32>
    %c0_1 = arith.constant 0 : index
    %c0_2 = arith.constant 0 : index
    %1 = vector.load %arg3[%c0_1, %c0_2] : memref<1x32xf32, #tpu.memory_space<vmem>>, vector<1x32xf32>
    %c0_3 = arith.constant 0 : index
    %c0_4 = arith.constant 0 : index
    %2 = vector.load %arg4[%c0_3, %c0_4] : memref<1x1xf32, #tpu.memory_space<vmem>>, vector<1x1xf32>
    %cst = arith.constant 0.000000e+00 : f32
    %3 = vector.broadcast %cst : f32 to vector<1x32xf32>
    %cst_5 = arith.constant 0.000000e+00 : f32
    %4 = vector.broadcast %cst_5 : f32 to vector<1x32xf32>
    %c0_i32 = arith.constant 0 : i32
    %c94_i32 = arith.constant 94 : i32
    %5 = arith.addi %c0_i32, %c94_i32 : i32
    %c1_i32 = arith.constant 1 : i32
    %6:2 = scf.for %arg6 = %c0_i32 to %5 step %c1_i32 iter_args(%arg7 = %3, %arg8 = %4) -> (vector<1x32xf32>, vector<1x32xf32>)  : i32 {
      %c8_i32 = arith.constant 8 : i32
      %7 = arith.muli %arg6, %c8_i32 : i32
      %8 = tpu.assume_multiple %7, 8 : i32
      %9 = arith.index_cast %8 : i32 to index
      %c0_7 = arith.constant 0 : index
      %10 = vector.load %arg1[%9, %c0_7] : memref<752x128xf32, #tpu.memory_space<vmem>>, vector<8x128xf32>
      %11 = vector.extract_strided_slice %10 {offsets = [0, 0], sizes = [1, 128], strides = [1, 1]} : vector<8x128xf32> to vector<1x128xf32>
      %cst_8 = arith.constant dense<0.000000e+00> : vector<1x128xf32>
      %12 = tpu.matmul %arg7, %0, %cst_8 {dimension_numbers = #tpu.dot_dimension_numbers<[1], [0], [0], [1], [0, 0, 1, 1], [], []>} : vector<1x32xf32>, vector<32x128xf32>, vector<1x128xf32> -> vector<1x128xf32>
      %13 = arith.addf %11, %12 : vector<1x128xf32>
      %14 = vector.extract_strided_slice %13 {offsets = [0, 0], sizes = [1, 96], strides = [1, 1]} : vector<1x128xf32> to vector<1x96xf32>
      %15 = arith.negf %14 : vector<1x96xf32>
      %16 = math.exp %15 : vector<1x96xf32>
      %cst_9 = arith.constant 1.000000e+00 : f32
      %17 = vector.broadcast %cst_9 : f32 to vector<1x96xf32>
      %18 = arith.addf %17, %16 : vector<1x96xf32>
      %19 = arith.divf %17, %18 : vector<1x96xf32>
      %20 = vector.extract_strided_slice %13 {offsets = [0, 96], sizes = [1, 32], strides = [1, 1]} : vector<1x128xf32> to vector<1x32xf32>
      %21 = math.tanh %20 : vector<1x32xf32>
      %22 = vector.extract_strided_slice %19 {offsets = [0, 32], sizes = [1, 32], strides = [1, 1]} : vector<1x96xf32> to vector<1x32xf32>
      %23 = arith.mulf %22, %arg8 : vector<1x32xf32>
      %24 = vector.extract_strided_slice %19 {offsets = [0, 0], sizes = [1, 32], strides = [1, 1]} : vector<1x96xf32> to vector<1x32xf32>
      %25 = arith.mulf %24, %21 : vector<1x32xf32>
      %26 = arith.addf %23, %25 : vector<1x32xf32>
      %27 = vector.extract_strided_slice %19 {offsets = [0, 64], sizes = [1, 32], strides = [1, 1]} : vector<1x96xf32> to vector<1x32xf32>
      %28 = math.tanh %26 : vector<1x32xf32>
      %29 = arith.mulf %27, %28 : vector<1x32xf32>
      %30 = arith.mulf %29, %1 : vector<1x32xf32>
      %cst_10 = arith.constant dense<0.000000e+00> : vector<1xf32>
      %31 = vector.multi_reduction <add>, %30, %cst_10 [1] : vector<1x32xf32> to vector<1xf32>
      %32 = vector.shape_cast %31 : vector<1xf32> to vector<1x1xf32>
      %33 = vector.extract_strided_slice %10 {offsets = [1, 0], sizes = [1, 128], strides = [1, 1]} : vector<8x128xf32> to vector<1x128xf32>
      %cst_11 = arith.constant dense<0.000000e+00> : vector<1x128xf32>
      %34 = tpu.matmul %29, %0, %cst_11 {dimension_numbers = #tpu.dot_dimension_numbers<[1], [0], [0], [1], [0, 0, 1, 1], [], []>} : vector<1x32xf32>, vector<32x128xf32>, vector<1x128xf32> -> vector<1x128xf32>
      %35 = arith.addf %33, %34 : vector<1x128xf32>
      %36 = vector.extract_strided_slice %35 {offsets = [0, 0], sizes = [1, 96], strides = [1, 1]} : vector<1x128xf32> to vector<1x96xf32>
      %37 = arith.negf %36 : vector<1x96xf32>
      %38 = math.exp %37 : vector<1x96xf32>
      %cst_12 = arith.constant 1.000000e+00 : f32
      %39 = vector.broadcast %cst_12 : f32 to vector<1x96xf32>
      %40 = arith.addf %39, %38 : vector<1x96xf32>
      %41 = arith.divf %39, %40 : vector<1x96xf32>
      %42 = vector.extract_strided_slice %35 {offsets = [0, 96], sizes = [1, 32], strides = [1, 1]} : vector<1x128xf32> to vector<1x32xf32>
      %43 = math.tanh %42 : vector<1x32xf32>
      %44 = vector.extract_strided_slice %41 {offsets = [0, 32], sizes = [1, 32], strides = [1, 1]} : vector<1x96xf32> to vector<1x32xf32>
      %45 = arith.mulf %44, %26 : vector<1x32xf32>
      %46 = vector.extract_strided_slice %41 {offsets = [0, 0], sizes = [1, 32], strides = [1, 1]} : vector<1x96xf32> to vector<1x32xf32>
      %47 = arith.mulf %46, %43 : vector<1x32xf32>
      %48 = arith.addf %45, %47 : vector<1x32xf32>
      %49 = vector.extract_strided_slice %41 {offsets = [0, 64], sizes = [1, 32], strides = [1, 1]} : vector<1x96xf32> to vector<1x32xf32>
      %50 = math.tanh %48 : vector<1x32xf32>
      %51 = arith.mulf %49, %50 : vector<1x32xf32>
      %52 = arith.mulf %51, %1 : vector<1x32xf32>
      %cst_13 = arith.constant dense<0.000000e+00> : vector<1xf32>
      %53 = vector.multi_reduction <add>, %52, %cst_13 [1] : vector<1x32xf32> to vector<1xf32>
      %54 = vector.shape_cast %53 : vector<1xf32> to vector<1x1xf32>
      %55 = vector.extract_strided_slice %10 {offsets = [2, 0], sizes = [1, 128], strides = [1, 1]} : vector<8x128xf32> to vector<1x128xf32>
      %cst_14 = arith.constant dense<0.000000e+00> : vector<1x128xf32>
      %56 = tpu.matmul %51, %0, %cst_14 {dimension_numbers = #tpu.dot_dimension_numbers<[1], [0], [0], [1], [0, 0, 1, 1], [], []>} : vector<1x32xf32>, vector<32x128xf32>, vector<1x128xf32> -> vector<1x128xf32>
      %57 = arith.addf %55, %56 : vector<1x128xf32>
      %58 = vector.extract_strided_slice %57 {offsets = [0, 0], sizes = [1, 96], strides = [1, 1]} : vector<1x128xf32> to vector<1x96xf32>
      %59 = arith.negf %58 : vector<1x96xf32>
      %60 = math.exp %59 : vector<1x96xf32>
      %cst_15 = arith.constant 1.000000e+00 : f32
      %61 = vector.broadcast %cst_15 : f32 to vector<1x96xf32>
      %62 = arith.addf %61, %60 : vector<1x96xf32>
      %63 = arith.divf %61, %62 : vector<1x96xf32>
      %64 = vector.extract_strided_slice %57 {offsets = [0, 96], sizes = [1, 32], strides = [1, 1]} : vector<1x128xf32> to vector<1x32xf32>
      %65 = math.tanh %64 : vector<1x32xf32>
      %66 = vector.extract_strided_slice %63 {offsets = [0, 32], sizes = [1, 32], strides = [1, 1]} : vector<1x96xf32> to vector<1x32xf32>
      %67 = arith.mulf %66, %48 : vector<1x32xf32>
      %68 = vector.extract_strided_slice %63 {offsets = [0, 0], sizes = [1, 32], strides = [1, 1]} : vector<1x96xf32> to vector<1x32xf32>
      %69 = arith.mulf %68, %65 : vector<1x32xf32>
      %70 = arith.addf %67, %69 : vector<1x32xf32>
      %71 = vector.extract_strided_slice %63 {offsets = [0, 64], sizes = [1, 32], strides = [1, 1]} : vector<1x96xf32> to vector<1x32xf32>
      %72 = math.tanh %70 : vector<1x32xf32>
      %73 = arith.mulf %71, %72 : vector<1x32xf32>
      %74 = arith.mulf %73, %1 : vector<1x32xf32>
      %cst_16 = arith.constant dense<0.000000e+00> : vector<1xf32>
      %75 = vector.multi_reduction <add>, %74, %cst_16 [1] : vector<1x32xf32> to vector<1xf32>
      %76 = vector.shape_cast %75 : vector<1xf32> to vector<1x1xf32>
      %77 = vector.extract_strided_slice %10 {offsets = [3, 0], sizes = [1, 128], strides = [1, 1]} : vector<8x128xf32> to vector<1x128xf32>
      %cst_17 = arith.constant dense<0.000000e+00> : vector<1x128xf32>
      %78 = tpu.matmul %73, %0, %cst_17 {dimension_numbers = #tpu.dot_dimension_numbers<[1], [0], [0], [1], [0, 0, 1, 1], [], []>} : vector<1x32xf32>, vector<32x128xf32>, vector<1x128xf32> -> vector<1x128xf32>
      %79 = arith.addf %77, %78 : vector<1x128xf32>
      %80 = vector.extract_strided_slice %79 {offsets = [0, 0], sizes = [1, 96], strides = [1, 1]} : vector<1x128xf32> to vector<1x96xf32>
      %81 = arith.negf %80 : vector<1x96xf32>
      %82 = math.exp %81 : vector<1x96xf32>
      %cst_18 = arith.constant 1.000000e+00 : f32
      %83 = vector.broadcast %cst_18 : f32 to vector<1x96xf32>
      %84 = arith.addf %83, %82 : vector<1x96xf32>
      %85 = arith.divf %83, %84 : vector<1x96xf32>
      %86 = vector.extract_strided_slice %79 {offsets = [0, 96], sizes = [1, 32], strides = [1, 1]} : vector<1x128xf32> to vector<1x32xf32>
      %87 = math.tanh %86 : vector<1x32xf32>
      %88 = vector.extract_strided_slice %85 {offsets = [0, 32], sizes = [1, 32], strides = [1, 1]} : vector<1x96xf32> to vector<1x32xf32>
      %89 = arith.mulf %88, %70 : vector<1x32xf32>
      %90 = vector.extract_strided_slice %85 {offsets = [0, 0], sizes = [1, 32], strides = [1, 1]} : vector<1x96xf32> to vector<1x32xf32>
      %91 = arith.mulf %90, %87 : vector<1x32xf32>
      %92 = arith.addf %89, %91 : vector<1x32xf32>
      %93 = vector.extract_strided_slice %85 {offsets = [0, 64], sizes = [1, 32], strides = [1, 1]} : vector<1x96xf32> to vector<1x32xf32>
      %94 = math.tanh %92 : vector<1x32xf32>
      %95 = arith.mulf %93, %94 : vector<1x32xf32>
      %96 = arith.mulf %95, %1 : vector<1x32xf32>
      %cst_19 = arith.constant dense<0.000000e+00> : vector<1xf32>
      %97 = vector.multi_reduction <add>, %96, %cst_19 [1] : vector<1x32xf32> to vector<1xf32>
      %98 = vector.shape_cast %97 : vector<1xf32> to vector<1x1xf32>
      %99 = vector.extract_strided_slice %10 {offsets = [4, 0], sizes = [1, 128], strides = [1, 1]} : vector<8x128xf32> to vector<1x128xf32>
      %cst_20 = arith.constant dense<0.000000e+00> : vector<1x128xf32>
      %100 = tpu.matmul %95, %0, %cst_20 {dimension_numbers = #tpu.dot_dimension_numbers<[1], [0], [0], [1], [0, 0, 1, 1], [], []>} : vector<1x32xf32>, vector<32x128xf32>, vector<1x128xf32> -> vector<1x128xf32>
      %101 = arith.addf %99, %100 : vector<1x128xf32>
      %102 = vector.extract_strided_slice %101 {offsets = [0, 0], sizes = [1, 96], strides = [1, 1]} : vector<1x128xf32> to vector<1x96xf32>
      %103 = arith.negf %102 : vector<1x96xf32>
      %104 = math.exp %103 : vector<1x96xf32>
      %cst_21 = arith.constant 1.000000e+00 : f32
      %105 = vector.broadcast %cst_21 : f32 to vector<1x96xf32>
      %106 = arith.addf %105, %104 : vector<1x96xf32>
      %107 = arith.divf %105, %106 : vector<1x96xf32>
      %108 = vector.extract_strided_slice %101 {offsets = [0, 96], sizes = [1, 32], strides = [1, 1]} : vector<1x128xf32> to vector<1x32xf32>
      %109 = math.tanh %108 : vector<1x32xf32>
      %110 = vector.extract_strided_slice %107 {offsets = [0, 32], sizes = [1, 32], strides = [1, 1]} : vector<1x96xf32> to vector<1x32xf32>
      %111 = arith.mulf %110, %92 : vector<1x32xf32>
      %112 = vector.extract_strided_slice %107 {offsets = [0, 0], sizes = [1, 32], strides = [1, 1]} : vector<1x96xf32> to vector<1x32xf32>
      %113 = arith.mulf %112, %109 : vector<1x32xf32>
      %114 = arith.addf %111, %113 : vector<1x32xf32>
      %115 = vector.extract_strided_slice %107 {offsets = [0, 64], sizes = [1, 32], strides = [1, 1]} : vector<1x96xf32> to vector<1x32xf32>
      %116 = math.tanh %114 : vector<1x32xf32>
      %117 = arith.mulf %115, %116 : vector<1x32xf32>
      %118 = arith.mulf %117, %1 : vector<1x32xf32>
      %cst_22 = arith.constant dense<0.000000e+00> : vector<1xf32>
      %119 = vector.multi_reduction <add>, %118, %cst_22 [1] : vector<1x32xf32> to vector<1xf32>
      %120 = vector.shape_cast %119 : vector<1xf32> to vector<1x1xf32>
      %121 = vector.extract_strided_slice %10 {offsets = [5, 0], sizes = [1, 128], strides = [1, 1]} : vector<8x128xf32> to vector<1x128xf32>
      %cst_23 = arith.constant dense<0.000000e+00> : vector<1x128xf32>
      %122 = tpu.matmul %117, %0, %cst_23 {dimension_numbers = #tpu.dot_dimension_numbers<[1], [0], [0], [1], [0, 0, 1, 1], [], []>} : vector<1x32xf32>, vector<32x128xf32>, vector<1x128xf32> -> vector<1x128xf32>
      %123 = arith.addf %121, %122 : vector<1x128xf32>
      %124 = vector.extract_strided_slice %123 {offsets = [0, 0], sizes = [1, 96], strides = [1, 1]} : vector<1x128xf32> to vector<1x96xf32>
      %125 = arith.negf %124 : vector<1x96xf32>
      %126 = math.exp %125 : vector<1x96xf32>
      %cst_24 = arith.constant 1.000000e+00 : f32
      %127 = vector.broadcast %cst_24 : f32 to vector<1x96xf32>
      %128 = arith.addf %127, %126 : vector<1x96xf32>
      %129 = arith.divf %127, %128 : vector<1x96xf32>
      %130 = vector.extract_strided_slice %123 {offsets = [0, 96], sizes = [1, 32], strides = [1, 1]} : vector<1x128xf32> to vector<1x32xf32>
      %131 = math.tanh %130 : vector<1x32xf32>
      %132 = vector.extract_strided_slice %129 {offsets = [0, 32], sizes = [1, 32], strides = [1, 1]} : vector<1x96xf32> to vector<1x32xf32>
      %133 = arith.mulf %132, %114 : vector<1x32xf32>
      %134 = vector.extract_strided_slice %129 {offsets = [0, 0], sizes = [1, 32], strides = [1, 1]} : vector<1x96xf32> to vector<1x32xf32>
      %135 = arith.mulf %134, %131 : vector<1x32xf32>
      %136 = arith.addf %133, %135 : vector<1x32xf32>
      %137 = vector.extract_strided_slice %129 {offsets = [0, 64], sizes = [1, 32], strides = [1, 1]} : vector<1x96xf32> to vector<1x32xf32>
      %138 = math.tanh %136 : vector<1x32xf32>
      %139 = arith.mulf %137, %138 : vector<1x32xf32>
      %140 = arith.mulf %139, %1 : vector<1x32xf32>
      %cst_25 = arith.constant dense<0.000000e+00> : vector<1xf32>
      %141 = vector.multi_reduction <add>, %140, %cst_25 [1] : vector<1x32xf32> to vector<1xf32>
      %142 = vector.shape_cast %141 : vector<1xf32> to vector<1x1xf32>
      %143 = vector.extract_strided_slice %10 {offsets = [6, 0], sizes = [1, 128], strides = [1, 1]} : vector<8x128xf32> to vector<1x128xf32>
      %cst_26 = arith.constant dense<0.000000e+00> : vector<1x128xf32>
      %144 = tpu.matmul %139, %0, %cst_26 {dimension_numbers = #tpu.dot_dimension_numbers<[1], [0], [0], [1], [0, 0, 1, 1], [], []>} : vector<1x32xf32>, vector<32x128xf32>, vector<1x128xf32> -> vector<1x128xf32>
      %145 = arith.addf %143, %144 : vector<1x128xf32>
      %146 = vector.extract_strided_slice %145 {offsets = [0, 0], sizes = [1, 96], strides = [1, 1]} : vector<1x128xf32> to vector<1x96xf32>
      %147 = arith.negf %146 : vector<1x96xf32>
      %148 = math.exp %147 : vector<1x96xf32>
      %cst_27 = arith.constant 1.000000e+00 : f32
      %149 = vector.broadcast %cst_27 : f32 to vector<1x96xf32>
      %150 = arith.addf %149, %148 : vector<1x96xf32>
      %151 = arith.divf %149, %150 : vector<1x96xf32>
      %152 = vector.extract_strided_slice %145 {offsets = [0, 96], sizes = [1, 32], strides = [1, 1]} : vector<1x128xf32> to vector<1x32xf32>
      %153 = math.tanh %152 : vector<1x32xf32>
      %154 = vector.extract_strided_slice %151 {offsets = [0, 32], sizes = [1, 32], strides = [1, 1]} : vector<1x96xf32> to vector<1x32xf32>
      %155 = arith.mulf %154, %136 : vector<1x32xf32>
      %156 = vector.extract_strided_slice %151 {offsets = [0, 0], sizes = [1, 32], strides = [1, 1]} : vector<1x96xf32> to vector<1x32xf32>
      %157 = arith.mulf %156, %153 : vector<1x32xf32>
      %158 = arith.addf %155, %157 : vector<1x32xf32>
      %159 = vector.extract_strided_slice %151 {offsets = [0, 64], sizes = [1, 32], strides = [1, 1]} : vector<1x96xf32> to vector<1x32xf32>
      %160 = math.tanh %158 : vector<1x32xf32>
      %161 = arith.mulf %159, %160 : vector<1x32xf32>
      %162 = arith.mulf %161, %1 : vector<1x32xf32>
      %cst_28 = arith.constant dense<0.000000e+00> : vector<1xf32>
      %163 = vector.multi_reduction <add>, %162, %cst_28 [1] : vector<1x32xf32> to vector<1xf32>
      %164 = vector.shape_cast %163 : vector<1xf32> to vector<1x1xf32>
      %165 = vector.extract_strided_slice %10 {offsets = [7, 0], sizes = [1, 128], strides = [1, 1]} : vector<8x128xf32> to vector<1x128xf32>
      %cst_29 = arith.constant dense<0.000000e+00> : vector<1x128xf32>
      %166 = tpu.matmul %161, %0, %cst_29 {dimension_numbers = #tpu.dot_dimension_numbers<[1], [0], [0], [1], [0, 0, 1, 1], [], []>} : vector<1x32xf32>, vector<32x128xf32>, vector<1x128xf32> -> vector<1x128xf32>
      %167 = arith.addf %165, %166 : vector<1x128xf32>
      %168 = vector.extract_strided_slice %167 {offsets = [0, 0], sizes = [1, 96], strides = [1, 1]} : vector<1x128xf32> to vector<1x96xf32>
      %169 = arith.negf %168 : vector<1x96xf32>
      %170 = math.exp %169 : vector<1x96xf32>
      %cst_30 = arith.constant 1.000000e+00 : f32
      %171 = vector.broadcast %cst_30 : f32 to vector<1x96xf32>
      %172 = arith.addf %171, %170 : vector<1x96xf32>
      %173 = arith.divf %171, %172 : vector<1x96xf32>
      %174 = vector.extract_strided_slice %167 {offsets = [0, 96], sizes = [1, 32], strides = [1, 1]} : vector<1x128xf32> to vector<1x32xf32>
      %175 = math.tanh %174 : vector<1x32xf32>
      %176 = vector.extract_strided_slice %173 {offsets = [0, 32], sizes = [1, 32], strides = [1, 1]} : vector<1x96xf32> to vector<1x32xf32>
      %177 = arith.mulf %176, %158 : vector<1x32xf32>
      %178 = vector.extract_strided_slice %173 {offsets = [0, 0], sizes = [1, 32], strides = [1, 1]} : vector<1x96xf32> to vector<1x32xf32>
      %179 = arith.mulf %178, %175 : vector<1x32xf32>
      %180 = arith.addf %177, %179 : vector<1x32xf32>
      %181 = vector.extract_strided_slice %173 {offsets = [0, 64], sizes = [1, 32], strides = [1, 1]} : vector<1x96xf32> to vector<1x32xf32>
      %182 = math.tanh %180 : vector<1x32xf32>
      %183 = arith.mulf %181, %182 : vector<1x32xf32>
      %184 = arith.mulf %183, %1 : vector<1x32xf32>
      %cst_31 = arith.constant dense<0.000000e+00> : vector<1xf32>
      %185 = vector.multi_reduction <add>, %184, %cst_31 [1] : vector<1x32xf32> to vector<1xf32>
      %186 = vector.shape_cast %185 : vector<1xf32> to vector<1x1xf32>
      %187 = tpu.concatenate %32, %54, %76, %98, %120, %142, %164, %186 in 1 : vector<1x1xf32>, vector<1x1xf32>, vector<1x1xf32>, vector<1x1xf32>, vector<1x1xf32>, vector<1x1xf32>, vector<1x1xf32>, vector<1x1xf32> -> vector<1x8xf32>
      %188 = vector.broadcast %2 : vector<1x1xf32> to vector<1x8xf32>
      %189 = arith.addf %187, %188 : vector<1x8xf32>
      %c1_i32_32 = arith.constant 1 : i32
      %190 = arith.muli %arg6, %c1_i32_32 : i32
      %191 = arith.index_cast %190 : i32 to index
      %c0_33 = arith.constant 0 : index
      %192 = vector.load %arg5[%191, %c0_33] : memref<94x8xf32, #tpu.memory_space<vmem>>, vector<1x8xf32>
      tpu.vector_store %arg5[%191, %c0_33], %189 {strides = array<i32>} : memref<94x8xf32, #tpu.memory_space<vmem>>, vector<1x8xf32>,
      scf.yield %183, %180 : vector<1x32xf32>, vector<1x32xf32>
    }
    %c94_i32_6 = arith.constant 94 : i32
    return
  }
  func.func @transform_0(%arg0: i32) -> (i32, i32) {
    %c0_i32 = arith.constant 0 : i32
    %c0_i32_0 = arith.constant 0 : i32
    %c0_i32_1 = arith.constant 0 : i32
    return %c0_i32, %c0_i32_0 : i32, i32
  }
  func.func @transform_1(%arg0: i32) -> (i32, i32) {
    %c0_i32 = arith.constant 0 : i32
    %c0_i32_0 = arith.constant 0 : i32
    %c0_i32_1 = arith.constant 0 : i32
    return %c0_i32, %c0_i32_0 : i32, i32
  }
  func.func @transform_2(%arg0: i32) -> (i32, i32) {
    %c0_i32 = arith.constant 0 : i32
    %c0_i32_0 = arith.constant 0 : i32
    %c0_i32_1 = arith.constant 0 : i32
    return %c0_i32, %c0_i32_0 : i32, i32
  }
  func.func @transform_3(%arg0: i32) -> (i32, i32) {
    %c0_i32 = arith.constant 0 : i32
    %c0_i32_0 = arith.constant 0 : i32
    %c0_i32_1 = arith.constant 0 : i32
    return %c0_i32, %c0_i32_0 : i32, i32
  }
  func.func @transform_4(%arg0: i32) -> (i32, i32) {
    %c0_i32 = arith.constant 0 : i32
    %c0_i32_0 = arith.constant 0 : i32
    %c0_i32_1 = arith.constant 0 : i32
    return %c0_i32, %c0_i32_0 : i32, i32
  }
}

</mosaic_0001>

<llo_original>
// kernel: _lambda_.3
$region0: #{_lambda_.3}
  #allocation0 [shape = 'u32[]', space=smem, size = 0x4, offset = 0x4, fixed_abs, tag = 'smem constant byte address 0x4 - core index']
  #allocation1 [shape = 'u32[72,128]{1,0:T(1,128)}', space=vmem, size = 0x9000, scoped, tag = 'internal scratch']
  %s0 = inlined_call_operand.vmem [shape: bf16[298,100], index: 0, kind: input, shape index: {}]
  %s1 = inlined_call_operand.vmem [shape: bf16[100,150], index: 1, kind: input, shape index: {}]
  %s2 = inlined_call_operand.vmem [shape: f32[1,150], index: 2, kind: input, shape index: {}]
  %s3 = inlined_call_operand.vmem [shape: f32[1,150], index: 3, kind: input, shape index: {}]
  %s4 = inlined_call_operand.vmem [shape: bf16[298,150], index: 4, kind: output, shape index: {}]
  %s5 = sld [smem:[#allocation0]]
  $region26: #{_lambda_.3} parent=0
    _
  %s7 = ssub.s32 1, %s5
  %s8 = scalar_select 0, %s7, %s5
  // Predicated region
  $region2: #{_lambda_.3} parent=0 // pred_check
    _
  $region3: #{_lambda_.3} parent=0 // pred_check_branch
    %10 = sbr.rel (0) target = $region5
  $region4: #{_lambda_.3} parent=0 // pred_region
    _
  $region5: #{_lambda_.3} parent=0 // pred_fallthru
    _
  // Predicated region
  $region6: #{_lambda_.3} parent=0 // pred_check
    _
  $region7: #{_lambda_.3} parent=0 // pred_check_branch
    %12 = sbr.rel (0) target = $region9
  $region8: #{_lambda_.3} parent=0 // pred_region
    _
  $region9: #{_lambda_.3} parent=0 // pred_fallthru
    _
  // Predicated region
  $region10: #{_lambda_.3} parent=0 // pred_check
    _
  $region11: #{_lambda_.3} parent=0 // pred_check_branch
    %14 = sbr.rel (0) target = $region13
  $region12: #{_lambda_.3} parent=0 // pred_region
    _
  $region13: #{_lambda_.3} parent=0 // pred_fallthru
    _
  // Predicated region
  $region14: #{_lambda_.3} parent=0 // pred_check
    _
  $region15: #{_lambda_.3} parent=0 // pred_check_branch
    %16 = sbr.rel (0) target = $region17
  $region16: #{_lambda_.3} parent=0 // pred_region
    _
  $region17: #{_lambda_.3} parent=0 // pred_fallthru
    _
  %v18 = vld [vmem:[%s0] sm:$0xf]
  %v19 = vld [vmem:[%s0 + $0x4] sm:$0xf]
  %v20 = vld [vmem:[%s0 + $0x8] sm:$0xf]
  %v21 = vld [vmem:[%s0 + $0xc] sm:$0xf]
  %v22 = vld [vmem:[%s0 + $0x10] sm:$0xf]
  %v23 = vld [vmem:[%s0 + $0x14] sm:$0xf]
  %v24 = vld [vmem:[%s0 + $0x18] sm:$0xf]
  %v25 = vld [vmem:[%s0 + $0x1c] sm:$0xf]
  %v26 = vld [vmem:[%s0 + $0x20] sm:$0xf]
  %v27 = vld [vmem:[%s0 + $0x24] sm:$0xf]
  %v28 = vld [vmem:[%s0 + $0x28] sm:$0xf]
  %v29 = vld [vmem:[%s0 + $0x2c] sm:$0xf]
  %v30 = vld [vmem:[%s0 + $0x30] sm:$0xf]
  %v31 = vld [vmem:[%s0 + $0x34] sm:$0xf]
  %v32 = vld [vmem:[%s0 + $0x38] sm:$0xf]
  %v33 = vld [vmem:[%s0 + $0x3c] sm:$0xf]
  %v34 = vld [vmem:[%s0 + $0x40] sm:$0xf]
  %v35 = vld [vmem:[%s0 + $0x44] sm:$0xf]
  %v36 = vld [vmem:[%s0 + $0x48] sm:$0xf]
  %v37 = vld [vmem:[%s0 + $0x4c] sm:$0xf]
  %v38 = vld [vmem:[%s0 + $0x50] sm:$0xf]
  %v39 = vld [vmem:[%s0 + $0x54] sm:$0xf]
  %v40 = vld [vmem:[%s0 + $0x58] sm:$0xf]
  %v41 = vld [vmem:[%s0 + $0x5c] sm:$0xf]
  %v42 = vld [vmem:[%s0 + $0x60] sm:$0xf]
  %v43 = vld [vmem:[%s0 + $0x64] sm:$0xf]
  %v44 = vld [vmem:[%s0 + $0x68] sm:$0xf]
  %v45 = vld [vmem:[%s0 + $0x6c] sm:$0xf]
  %v46 = vld [vmem:[%s0 + $0x70] sm:$0xf]
  %v47 = vld [vmem:[%s0 + $0x74] sm:$0xf]
  %v48 = vld [vmem:[%s0 + $0x78] sm:$0xf]
  %v49 = vld [vmem:[%s0 + $0x7c] sm:$0xf]
  %v50 = vld [vmem:[%s0 + $0x80] sm:$0xf]
  %v51 = vld [vmem:[%s0 + $0x84] sm:$0xf]
  %v52 = vld [vmem:[%s0 + $0x88] sm:$0xf]
  %v53 = vld [vmem:[%s0 + $0x8c] sm:$0xf]
  %v54 = vld [vmem:[%s0 + $0x90] sm:$0xf]
  %v55 = vld [vmem:[%s0 + $0x94] sm:$0xf]
  %v56 = vld [vmem:[%s1] sm:$0xff]
  %v57 = vld [vmem:[%s1 + $0x8] sm:$0xff]
  %v58 = vld [vmem:[%s1 + $0x10] sm:$0xff]
  %v59 = vld [vmem:[%s1 + $0x18] sm:$0xff]
  %v60 = vld [vmem:[%s1 + $0x20] sm:$0xff]
  %v61 = vld [vmem:[%s1 + $0x28] sm:$0xff]
  %v62 = vld [vmem:[%s1 + $0x30] sm:$0xff]
  %v63 = vld [vmem:[%s1 + $0x38] sm:$0xff]
  %v64 = vld [vmem:[%s1 + $0x40] sm:$0xff]
  %v65 = vld [vmem:[%s1 + $0x48] sm:$0xff]
  %v66 = vld [vmem:[%s1 + $0x50] sm:$0xff]
  %v67 = vld [vmem:[%s1 + $0x58] sm:$0xff]
  %v68 = vld [vmem:[%s1 + $0x60] sm:$0x33]
  %v107 = vunpack.c.l.b16 %v18
  %v108 = vunpack.c.l.b16 %v19
  %v109 = vunpack.c.l.b16 %v20
  %v110 = vunpack.c.l.b16 %v21
  %v111 = vunpack.c.l.b16 %v22
  %v112 = vunpack.c.l.b16 %v23
  %v113 = vunpack.c.l.b16 %v24
  %v114 = vunpack.c.l.b16 %v25
  %v115 = vunpack.c.l.b16 %v26
  %v116 = vunpack.c.l.b16 %v27
  %v117 = vunpack.c.l.b16 %v28
  %v118 = vunpack.c.l.b16 %v29
  %v119 = vunpack.c.l.b16 %v30
  %v120 = vunpack.c.l.b16 %v31
  %v121 = vunpack.c.l.b16 %v32
  %v122 = vunpack.c.l.b16 %v33
  %v123 = vunpack.c.l.b16 %v34
  %v124 = vunpack.c.l.b16 %v35
  %v125 = vunpack.c.l.b16 %v36
  %v126 = vunpack.c.l.b16 %v37
  %v127 = vunpack.c.l.b16 %v38
  %v128 = vunpack.c.l.b16 %v39
  %v129 = vunpack.c.l.b16 %v40
  %v130 = vunpack.c.l.b16 %v41
  %v131 = vunpack.c.l.b16 %v42
  %v132 = vunpack.c.l.b16 %v43
  %v133 = vunpack.c.l.b16 %v44
  %v134 = vunpack.c.l.b16 %v45
  %v135 = vunpack.c.l.b16 %v46
  %v136 = vunpack.c.l.b16 %v47
  %v137 = vunpack.c.l.b16 %v48
  %v138 = vunpack.c.l.b16 %v49
  %v139 = vunpack.c.l.b16 %v50
  %v140 = vunpack.c.l.b16 %v51
  %v141 = vunpack.c.l.b16 %v52
  %v142 = vunpack.c.l.b16 %v53
  %v143 = vunpack.c.l.b16 %v54
  %v144 = vunpack.c.l.b16 %v55
  %v145 = vpack.c.b16 %v108, %v107
  %v146 = vpack.c.b16 %v110, %v109
  %v147 = vpack.c.b16 %v112, %v111
  %v148 = vpack.c.b16 %v114, %v113
  %v149 = vpack.c.b16 %v116, %v115
  %v150 = vpack.c.b16 %v118, %v117
  %v151 = vpack.c.b16 %v120, %v119
  %v152 = vpack.c.b16 %v122, %v121
  %v153 = vpack.c.b16 %v124, %v123
  %v154 = vpack.c.b16 %v126, %v125
  %v155 = vpack.c.b16 %v128, %v127
  %v156 = vpack.c.b16 %v130, %v129
  %v157 = vpack.c.b16 %v132, %v131
  %v158 = vpack.c.b16 %v134, %v133
  %v159 = vpack.c.b16 %v136, %v135
  %v160 = vpack.c.b16 %v138, %v137
  %v161 = vpack.c.b16 %v140, %v139
  %v162 = vpack.c.b16 %v142, %v141
  %v163 = vpack.c.b16 %v144, %v143
  %v177 = vunpack.c.l.b16 %v56
  %v178 = vunpack.c.h.b16 %v56
  %v179 = vunpack.c.l.b16 %v57
  %v180 = vunpack.c.h.b16 %v57
  %v181 = vunpack.c.l.b16 %v58
  %v182 = vunpack.c.h.b16 %v58
  %v183 = vunpack.c.l.b16 %v59
  %v184 = vunpack.c.h.b16 %v59
  %v185 = vunpack.c.l.b16 %v60
  %v186 = vunpack.c.h.b16 %v60
  %v187 = vunpack.c.l.b16 %v61
  %v188 = vunpack.c.h.b16 %v61
  %v189 = vunpack.c.l.b16 %v62
  %v190 = vunpack.c.h.b16 %v62
  %v191 = vunpack.c.l.b16 %v63
  %v192 = vunpack.c.h.b16 %v63
  %v193 = vunpack.c.l.b16 %v64
  %v194 = vunpack.c.h.b16 %v64
  %v195 = vunpack.c.l.b16 %v65
  %v196 = vunpack.c.h.b16 %v65
  %v197 = vunpack.c.l.b16 %v66
  %v198 = vunpack.c.h.b16 %v66
  %v199 = vunpack.c.l.b16 %v67
  %v200 = vunpack.c.h.b16 %v67
  %v201 = vunpack.c.l.b16 %v68
  %v202 = vunpack.c.h.b16 %v68
  %v203 = vpack.c.b16 %v179, %v177
  %v204 = vpack.c.b16 %v180, %v178
  %v205 = vpack.c.b16 %v183, %v181
  %v206 = vpack.c.b16 %v184, %v182
  %v207 = vpack.c.b16 %v187, %v185
  %v208 = vpack.c.b16 %v188, %v186
  %v209 = vpack.c.b16 %v191, %v189
  %v210 = vpack.c.b16 %v192, %v190
  %v211 = vpack.c.b16 %v195, %v193
  %v212 = vpack.c.b16 %v196, %v194
  %v213 = vpack.c.b16 %v199, %v197
  %v214 = vpack.c.b16 %v200, %v198
  %v215 = vpack.c.b16 %v201, %v201
  %v216 = vpack.c.b16 %v202, %v202
  %vm229 = vcmask 818176
  %v231 = vsel %vm229, %v145, 0
  %v234 = vsel %vm229, %v146, 0
  %v237 = vsel %vm229, %v147, 0
  %v240 = vsel %vm229, %v148, 0
  %v243 = vsel %vm229, %v149, 0
  %v246 = vsel %vm229, %v150, 0
  %v249 = vsel %vm229, %v151, 0
  %v252 = vsel %vm229, %v152, 0
  %v255 = vsel %vm229, %v153, 0
  %v258 = vsel %vm229, %v154, 0
  %v261 = vsel %vm229, %v155, 0
  %v264 = vsel %vm229, %v156, 0
  %v267 = vsel %vm229, %v157, 0
  %v270 = vsel %vm229, %v158, 0
  %v273 = vsel %vm229, %v159, 0
  %v276 = vsel %vm229, %v160, 0
  %v279 = vsel %vm229, %v161, 0
  %v282 = vsel %vm229, %v162, 0
  %v285 = vsel %vm229, %v163, 0
  %vm287 = vcmask 1041408
  %v289 = vsel %vm287, %v215, 0
  %v292 = vsel %vm287, %v216, 0
  %294 = vmatpush.bf16.msra.mxu0 0
  %295 = vmatpush.bf16.msra.mxu0 %v289
  %296 = vmatpush.bf16.msra.mxu0 %v213
  %297 = vmatpush.bf16.msra.mxu0 %v211
  %298 = vmatpush.bf16.msra.mxu0 %v209
  %299 = vmatpush.bf16.msra.mxu0 %v207
  %300 = vmatpush.bf16.msra.mxu0 %v205
  %301 = vmatpush.bf16.msra.mxu0 %v203
  %302 = vmatmul.bf16.gmra.mxu0 %v231
  %v303 = vpop.f32.mrf.mxu0
  %v304 = vadd.f32 0.0, %v303
  %v305 = vpop.f32.mrf.mxu0
  %v306 = vadd.f32 0.0, %v305
  %307 = vmatmul.bf16.gmra.mxu0 %v234
  %v308 = vpop.f32.mrf.mxu0
  %v309 = vadd.f32 0.0, %v308
  %v310 = vpop.f32.mrf.mxu0
  %v311 = vadd.f32 0.0, %v310
  %312 = vmatmul.bf16.gmra.mxu0 %v237
  %v313 = vpop.f32.mrf.mxu0
  %v314 = vadd.f32 0.0, %v313
  %v315 = vpop.f32.mrf.mxu0
  %v316 = vadd.f32 0.0, %v315
  %317 = vmatmul.bf16.gmra.mxu0 %v240
  %v318 = vpop.f32.mrf.mxu0
  %v319 = vadd.f32 0.0, %v318
  %v320 = vpop.f32.mrf.mxu0
  %v321 = vadd.f32 0.0, %v320
  %322 = vmatmul.bf16.gmra.mxu0 %v243
  %v323 = vpop.f32.mrf.mxu0
  %v324 = vadd.f32 0.0, %v323
  %v325 = vpop.f32.mrf.mxu0
  %v326 = vadd.f32 0.0, %v325
  %327 = vmatmul.bf16.gmra.mxu0 %v246
  %v328 = vpop.f32.mrf.mxu0
  %v329 = vadd.f32 0.0, %v328
  %v330 = vpop.f32.mrf.mxu0
  %v331 = vadd.f32 0.0, %v330
  %332 = vmatmul.bf16.gmra.mxu0 %v249
  %v333 = vpop.f32.mrf.mxu0
  %v334 = vadd.f32 0.0, %v333
  %v335 = vpop.f32.mrf.mxu0
  %v336 = vadd.f32 0.0, %v335
  %337 = vmatmul.bf16.gmra.mxu0 %v252
  %v338 = vpop.f32.mrf.mxu0
  %v339 = vadd.f32 0.0, %v338
  %v340 = vpop.f32.mrf.mxu0
  %v341 = vadd.f32 0.0, %v340
  %342 = vmatmul.bf16.gmra.mxu0 %v255
  %v343 = vpop.f32.mrf.mxu0
  %v344 = vadd.f32 0.0, %v343
  %v345 = vpop.f32.mrf.mxu0
  %v346 = vadd.f32 0.0, %v345
  %347 = vmatmul.bf16.gmra.mxu0 %v258
  %v348 = vpop.f32.mrf.mxu0
  %v349 = vadd.f32 0.0, %v348
  %v350 = vpop.f32.mrf.mxu0
  %v351 = vadd.f32 0.0, %v350
  %352 = vmatmul.bf16.gmra.mxu0 %v261
  %v353 = vpop.f32.mrf.mxu0
  %v354 = vadd.f32 0.0, %v353
  %v355 = vpop.f32.mrf.mxu0
  %v356 = vadd.f32 0.0, %v355
  %357 = vmatmul.bf16.gmra.mxu0 %v264
  %v358 = vpop.f32.mrf.mxu0
  %v359 = vadd.f32 0.0, %v358
  %v360 = vpop.f32.mrf.mxu0
  %v361 = vadd.f32 0.0, %v360
  %362 = vmatmul.bf16.gmra.mxu0 %v267
  %v363 = vpop.f32.mrf.mxu0
  %v364 = vadd.f32 0.0, %v363
  %v365 = vpop.f32.mrf.mxu0
  %v366 = vadd.f32 0.0, %v365
  %367 = vmatmul.bf16.gmra.mxu0 %v270
  %v368 = vpop.f32.mrf.mxu0
  %v369 = vadd.f32 0.0, %v368
  %v370 = vpop.f32.mrf.mxu0
  %v371 = vadd.f32 0.0, %v370
  %372 = vmatmul.bf16.gmra.mxu0 %v273
  %v373 = vpop.f32.mrf.mxu0
  %v374 = vadd.f32 0.0, %v373
  %v375 = vpop.f32.mrf.mxu0
  %v376 = vadd.f32 0.0, %v375
  %377 = vmatmul.bf16.gmra.mxu0 %v276
  %v378 = vpop.f32.mrf.mxu0
  %v379 = vadd.f32 0.0, %v378
  %v380 = vpop.f32.mrf.mxu0
  %v381 = vadd.f32 0.0, %v380
  %382 = vmatmul.bf16.gmra.mxu0 %v279
  %v383 = vpop.f32.mrf.mxu0
  %v384 = vadd.f32 0.0, %v383
  %v385 = vpop.f32.mrf.mxu0
  %v386 = vadd.f32 0.0, %v385
  %387 = vmatmul.bf16.gmra.mxu0 %v282
  %v388 = vpop.f32.mrf.mxu0
  %v389 = vadd.f32 0.0, %v388
  %v390 = vpop.f32.mrf.mxu0
  %v391 = vadd.f32 0.0, %v390
  %392 = vmatmul.bf16.gmra.mxu0 %v285
  %v393 = vpop.f32.mrf.mxu0
  %v394 = vadd.f32 0.0, %v393
  %v395 = vpop.f32.mrf.mxu0
  %v396 = vadd.f32 0.0, %v395
  %397 = vdwg.mxu0
  %398 = vmatpush.bf16.msra.mxu0 0
  %399 = vmatpush.bf16.msra.mxu0 %v292
  %400 = vmatpush.bf16.msra.mxu0 %v214
  %401 = vmatpush.bf16.msra.mxu0 %v212
  %402 = vmatpush.bf16.msra.mxu0 %v210
  %403 = vmatpush.bf16.msra.mxu0 %v208
  %404 = vmatpush.bf16.msra.mxu0 %v206
  %405 = vmatpush.bf16.msra.mxu0 %v204
  %406 = vmatmul.bf16.gmra.mxu0 %v231
  %v407 = vpop.f32.mrf.mxu0
  %v408 = vadd.f32 0.0, %v407
  %v409 = vpop.f32.mrf.mxu0
  %v410 = vadd.f32 0.0, %v409
  %411 = vmatmul.bf16.gmra.mxu0 %v234
  %v412 = vpop.f32.mrf.mxu0
  %v413 = vadd.f32 0.0, %v412
  %v414 = vpop.f32.mrf.mxu0
  %v415 = vadd.f32 0.0, %v414
  %416 = vmatmul.bf16.gmra.mxu0 %v237
  %v417 = vpop.f32.mrf.mxu0
  %v418 = vadd.f32 0.0, %v417
  %v419 = vpop.f32.mrf.mxu0
  %v420 = vadd.f32 0.0, %v419
  %421 = vmatmul.bf16.gmra.mxu0 %v240
  %v422 = vpop.f32.mrf.mxu0
  %v423 = vadd.f32 0.0, %v422
  %v424 = vpop.f32.mrf.mxu0
  %v425 = vadd.f32 0.0, %v424
  %426 = vmatmul.bf16.gmra.mxu0 %v243
  %v427 = vpop.f32.mrf.mxu0
  %v428 = vadd.f32 0.0, %v427
  %v429 = vpop.f32.mrf.mxu0
  %v430 = vadd.f32 0.0, %v429
  %431 = vmatmul.bf16.gmra.mxu0 %v246
  %v432 = vpop.f32.mrf.mxu0
  %v433 = vadd.f32 0.0, %v432
  %v434 = vpop.f32.mrf.mxu0
  %v435 = vadd.f32 0.0, %v434
  %436 = vmatmul.bf16.gmra.mxu0 %v249
  %v437 = vpop.f32.mrf.mxu0
  %v438 = vadd.f32 0.0, %v437
  %v439 = vpop.f32.mrf.mxu0
  %v440 = vadd.f32 0.0, %v439
  %441 = vmatmul.bf16.gmra.mxu0 %v252
  %v442 = vpop.f32.mrf.mxu0
  %v443 = vadd.f32 0.0, %v442
  %v444 = vpop.f32.mrf.mxu0
  %v445 = vadd.f32 0.0, %v444
  %446 = vmatmul.bf16.gmra.mxu0 %v255
  %v447 = vpop.f32.mrf.mxu0
  %v448 = vadd.f32 0.0, %v447
  %v449 = vpop.f32.mrf.mxu0
  %v450 = vadd.f32 0.0, %v449
  %451 = vmatmul.bf16.gmra.mxu0 %v258
  %v452 = vpop.f32.mrf.mxu0
  %v453 = vadd.f32 0.0, %v452
  %v454 = vpop.f32.mrf.mxu0
  %v455 = vadd.f32 0.0, %v454
  %456 = vmatmul.bf16.gmra.mxu0 %v261
  %v457 = vpop.f32.mrf.mxu0
  %v458 = vadd.f32 0.0, %v457
  %v459 = vpop.f32.mrf.mxu0
  %v460 = vadd.f32 0.0, %v459
  %461 = vmatmul.bf16.gmra.mxu0 %v264
  %v462 = vpop.f32.mrf.mxu0
  %v463 = vadd.f32 0.0, %v462
  %v464 = vpop.f32.mrf.mxu0
  %v465 = vadd.f32 0.0, %v464
  %466 = vmatmul.bf16.gmra.mxu0 %v267
  %v467 = vpop.f32.mrf.mxu0
  %v468 = vadd.f32 0.0, %v467
  %v469 = vpop.f32.mrf.mxu0
  %v470 = vadd.f32 0.0, %v469
  %471 = vmatmul.bf16.gmra.mxu0 %v270
  %v472 = vpop.f32.mrf.mxu0
  %v473 = vadd.f32 0.0, %v472
  %v474 = vpop.f32.mrf.mxu0
  %v475 = vadd.f32 0.0, %v474
  %476 = vmatmul.bf16.gmra.mxu0 %v273
  %v477 = vpop.f32.mrf.mxu0
  %v478 = vadd.f32 0.0, %v477
  %v479 = vpop.f32.mrf.mxu0
  %v480 = vadd.f32 0.0, %v479
  %481 = vmatmul.bf16.gmra.mxu0 %v276
  %v482 = vpop.f32.mrf.mxu0
  %v483 = vadd.f32 0.0, %v482
  %v484 = vpop.f32.mrf.mxu0
  %v485 = vadd.f32 0.0, %v484
  %486 = vmatmul.bf16.gmra.mxu0 %v279
  %v487 = vpop.f32.mrf.mxu0
  %v488 = vadd.f32 0.0, %v487
  %v489 = vpop.f32.mrf.mxu0
  %v490 = vadd.f32 0.0, %v489
  %491 = vmatmul.bf16.gmra.mxu0 %v282
  %v492 = vpop.f32.mrf.mxu0
  %v493 = vadd.f32 0.0, %v492
  %v494 = vpop.f32.mrf.mxu0
  %v495 = vadd.f32 0.0, %v494
  %496 = vmatmul.bf16.gmra.mxu0 %v285
  %v497 = vpop.f32.mrf.mxu0
  %v498 = vadd.f32 0.0, %v497
  %v499 = vpop.f32.mrf.mxu0
  %v500 = vadd.f32 0.0, %v499
  %501 = vdwg.mxu0
  %v502 = vld [vmem:[%s2] sm:$0x3]
  %v504 = vperm.slane %v502, 0
  %v505 = vperm.slane %v502, 1
  %v508 = vmul.f32 %v304, %v504
  %v509 = vmul.f32 %v408, %v505
  %v510 = vmul.f32 %v306, %v504
  %v511 = vmul.f32 %v410, %v505
  %v512 = vmul.f32 %v309, %v504
  %v513 = vmul.f32 %v413, %v505
  %v514 = vmul.f32 %v311, %v504
  %v515 = vmul.f32 %v415, %v505
  %v516 = vmul.f32 %v314, %v504
  %v517 = vmul.f32 %v418, %v505
  %v518 = vmul.f32 %v316, %v504
  %v519 = vmul.f32 %v420, %v505
  %v520 = vmul.f32 %v319, %v504
  %v521 = vmul.f32 %v423, %v505
  %v522 = vmul.f32 %v321, %v504
  %v523 = vmul.f32 %v425, %v505
  %v524 = vmul.f32 %v324, %v504
  %v525 = vmul.f32 %v428, %v505
  %v526 = vmul.f32 %v326, %v504
  %v527 = vmul.f32 %v430, %v505
  %v528 = vmul.f32 %v329, %v504
  %v529 = vmul.f32 %v433, %v505
  %v530 = vmul.f32 %v331, %v504
  %v531 = vmul.f32 %v435, %v505
  %v532 = vmul.f32 %v334, %v504
  %v533 = vmul.f32 %v438, %v505
  %v534 = vmul.f32 %v336, %v504
  %v535 = vmul.f32 %v440, %v505
  %v536 = vmul.f32 %v339, %v504
  %v537 = vmul.f32 %v443, %v505
  %v538 = vmul.f32 %v341, %v504
  %v539 = vmul.f32 %v445, %v505
  %v540 = vmul.f32 %v344, %v504
  %v541 = vmul.f32 %v448, %v505
  %v542 = vmul.f32 %v346, %v504
  %v543 = vmul.f32 %v450, %v505
  %v544 = vmul.f32 %v349, %v504
  %v545 = vmul.f32 %v453, %v505
  %v546 = vmul.f32 %v351, %v504
  %v547 = vmul.f32 %v455, %v505
  %v548 = vmul.f32 %v354, %v504
  %v549 = vmul.f32 %v458, %v505
  %v550 = vmul.f32 %v356, %v504
  %v551 = vmul.f32 %v460, %v505
  %v552 = vmul.f32 %v359, %v504
  %v553 = vmul.f32 %v463, %v505
  %v554 = vmul.f32 %v361, %v504
  %v555 = vmul.f32 %v465, %v505
  %v556 = vmul.f32 %v364, %v504
  %v557 = vmul.f32 %v468, %v505
  %v558 = vmul.f32 %v366, %v504
  %v559 = vmul.f32 %v470, %v505
  %v560 = vmul.f32 %v369, %v504
  %v561 = vmul.f32 %v473, %v505
  %v562 = vmul.f32 %v371, %v504
  %v563 = vmul.f32 %v475, %v505
  %v564 = vmul.f32 %v374, %v504
  %v565 = vmul.f32 %v478, %v505
  %v566 = vmul.f32 %v376, %v504
  %v567 = vmul.f32 %v480, %v505
  %v568 = vmul.f32 %v379, %v504
  %v569 = vmul.f32 %v483, %v505
  %v570 = vmul.f32 %v381, %v504
  %v571 = vmul.f32 %v485, %v505
  %v572 = vmul.f32 %v384, %v504
  %v573 = vmul.f32 %v488, %v505
  %v574 = vmul.f32 %v386, %v504
  %v575 = vmul.f32 %v490, %v505
  %v576 = vmul.f32 %v389, %v504
  %v577 = vmul.f32 %v493, %v505
  %v578 = vmul.f32 %v391, %v504
  %v579 = vmul.f32 %v495, %v505
  %v580 = vmul.f32 %v394, %v504
  %v581 = vmul.f32 %v498, %v505
  %v582 = vmul.f32 %v396, %v504
  %v583 = vmul.f32 %v500, %v505
  %v584 = vld [vmem:[%s3] sm:$0x3]
  %v586 = vperm.slane %v584, 0
  %v587 = vperm.slane %v584, 1
  %v590 = vadd.f32 %v508, %v586
  %v591 = vadd.f32 %v509, %v587
  %v592 = vadd.f32 %v510, %v586
  %v593 = vadd.f32 %v511, %v587
  %v594 = vadd.f32 %v512, %v586
  %v595 = vadd.f32 %v513, %v587
  %v596 = vadd.f32 %v514, %v586
  %v597 = vadd.f32 %v515, %v587
  %v598 = vadd.f32 %v516, %v586
  %v599 = vadd.f32 %v517, %v587
  %v600 = vadd.f32 %v518, %v586
  %v601 = vadd.f32 %v519, %v587
  %v602 = vadd.f32 %v520, %v586
  %v603 = vadd.f32 %v521, %v587
  %v604 = vadd.f32 %v522, %v586
  %v605 = vadd.f32 %v523, %v587
  %v606 = vadd.f32 %v524, %v586
  %v607 = vadd.f32 %v525, %v587
  %v608 = vadd.f32 %v526, %v586
  %v609 = vadd.f32 %v527, %v587
  %v610 = vadd.f32 %v528, %v586
  %v611 = vadd.f32 %v529, %v587
  %v612 = vadd.f32 %v530, %v586
  %v613 = vadd.f32 %v531, %v587
  %v614 = vadd.f32 %v532, %v586
  %v615 = vadd.f32 %v533, %v587
  %v616 = vadd.f32 %v534, %v586
  %v617 = vadd.f32 %v535, %v587
  %v618 = vadd.f32 %v536, %v586
  %v619 = vadd.f32 %v537, %v587
  %v620 = vadd.f32 %v538, %v586
  %v621 = vadd.f32 %v539, %v587
  %v622 = vadd.f32 %v540, %v586
  %v623 = vadd.f32 %v541, %v587
  %v624 = vadd.f32 %v542, %v586
  %v625 = vadd.f32 %v543, %v587
  %v626 = vadd.f32 %v544, %v586
  %v627 = vadd.f32 %v545, %v587
  %v628 = vadd.f32 %v546, %v586
  %v629 = vadd.f32 %v547, %v587
  %v630 = vadd.f32 %v548, %v586
  %v631 = vadd.f32 %v549, %v587
  %v632 = vadd.f32 %v550, %v586
  %v633 = vadd.f32 %v551, %v587
  %v634 = vadd.f32 %v552, %v586
  %v635 = vadd.f32 %v553, %v587
  %v636 = vadd.f32 %v554, %v586
  %v637 = vadd.f32 %v555, %v587
  %v638 = vadd.f32 %v556, %v586
  %v639 = vadd.f32 %v557, %v587
  %v640 = vadd.f32 %v558, %v586
  %v641 = vadd.f32 %v559, %v587
  %v642 = vadd.f32 %v560, %v586
  %v643 = vadd.f32 %v561, %v587
  %v644 = vadd.f32 %v562, %v586
  %v645 = vadd.f32 %v563, %v587
  %v646 = vadd.f32 %v564, %v586
  %v647 = vadd.f32 %v565, %v587
  %v648 = vadd.f32 %v566, %v586
  %v649 = vadd.f32 %v567, %v587
  %v650 = vadd.f32 %v568, %v586
  %v651 = vadd.f32 %v569, %v587
  %v652 = vadd.f32 %v570, %v586
  %v653 = vadd.f32 %v571, %v587
  %v654 = vadd.f32 %v572, %v586
  %v655 = vadd.f32 %v573, %v587
  %v656 = vadd.f32 %v574, %v586
  %v657 = vadd.f32 %v575, %v587
  %v658 = vadd.f32 %v576, %v586
  %v659 = vadd.f32 %v577, %v587
  %v660 = vadd.f32 %v578, %v586
  %v661 = vadd.f32 %v579, %v587
  %v662 = vadd.f32 %v580, %v586
  %v663 = vadd.f32 %v581, %v587
  %v664 = vadd.f32 %v582, %v586
  %v665 = vadd.f32 %v583, %v587
  %v666 = vmax.f32 %v590, 0.0
  %v667 = vmax.f32 %v591, 0.0
  %v668 = vmax.f32 %v592, 0.0
  %v669 = vmax.f32 %v593, 0.0
  %v670 = vmax.f32 %v594, 0.0
  %v671 = vmax.f32 %v595, 0.0
  %v672 = vmax.f32 %v596, 0.0
  %v673 = vmax.f32 %v597, 0.0
  %v674 = vmax.f32 %v598, 0.0
  %v675 = vmax.f32 %v599, 0.0
  %v676 = vmax.f32 %v600, 0.0
  %v677 = vmax.f32 %v601, 0.0
  %v678 = vmax.f32 %v602, 0.0
  %v679 = vmax.f32 %v603, 0.0
  %v680 = vmax.f32 %v604, 0.0
  %v681 = vmax.f32 %v605, 0.0
  %v682 = vmax.f32 %v606, 0.0
  %v683 = vmax.f32 %v607, 0.0
  %v684 = vmax.f32 %v608, 0.0
  %v685 = vmax.f32 %v609, 0.0
  %v686 = vmax.f32 %v610, 0.0
  %v687 = vmax.f32 %v611, 0.0
  %v688 = vmax.f32 %v612, 0.0
  %v689 = vmax.f32 %v613, 0.0
  %v690 = vmax.f32 %v614, 0.0
  %v691 = vmax.f32 %v615, 0.0
  %v692 = vmax.f32 %v616, 0.0
  %v693 = vmax.f32 %v617, 0.0
  %v694 = vmax.f32 %v618, 0.0
  %v695 = vmax.f32 %v619, 0.0
  %v696 = vmax.f32 %v620, 0.0
  %v697 = vmax.f32 %v621, 0.0
  %v698 = vmax.f32 %v622, 0.0
  %v699 = vmax.f32 %v623, 0.0
  %v700 = vmax.f32 %v624, 0.0
  %v701 = vmax.f32 %v625, 0.0
  %v702 = vmax.f32 %v626, 0.0
  %v703 = vmax.f32 %v627, 0.0
  %v704 = vmax.f32 %v628, 0.0
  %v705 = vmax.f32 %v629, 0.0
  %v706 = vmax.f32 %v630, 0.0
  %v707 = vmax.f32 %v631, 0.0
  %v708 = vmax.f32 %v632, 0.0
  %v709 = vmax.f32 %v633, 0.0
  %v710 = vmax.f32 %v634, 0.0
  %v711 = vmax.f32 %v635, 0.0
  %v712 = vmax.f32 %v636, 0.0
  %v713 = vmax.f32 %v637, 0.0
  %v714 = vmax.f32 %v638, 0.0
  %v715 = vmax.f32 %v639, 0.0
  %v716 = vmax.f32 %v640, 0.0
  %v717 = vmax.f32 %v641, 0.0
  %v718 = vmax.f32 %v642, 0.0
  %v719 = vmax.f32 %v643, 0.0
  %v720 = vmax.f32 %v644, 0.0
  %v721 = vmax.f32 %v645, 0.0
  %v722 = vmax.f32 %v646, 0.0
  %v723 = vmax.f32 %v647, 0.0
  %v724 = vmax.f32 %v648, 0.0
  %v725 = vmax.f32 %v649, 0.0
  %v726 = vmax.f32 %v650, 0.0
  %v727 = vmax.f32 %v651, 0.0
  %v728 = vmax.f32 %v652, 0.0
  %v729 = vmax.f32 %v653, 0.0
  %v730 = vmax.f32 %v654, 0.0
  %v731 = vmax.f32 %v655, 0.0
  %v732 = vmax.f32 %v656, 0.0
  %v733 = vmax.f32 %v657, 0.0
  %v734 = vmax.f32 %v658, 0.0
  %v735 = vmax.f32 %v659, 0.0
  %v736 = vmax.f32 %v660, 0.0
  %v737 = vmax.f32 %v661, 0.0
  %v738 = vmax.f32 %v662, 0.0
  %v739 = vmax.f32 %v663, 0.0
  %v740 = vmax.f32 %v664, 0.0
  %v741 = vmax.f32 %v665, 0.0
  %v742 = vpack.c.bf16 %v667, %v666
  %v743 = vpack.c.bf16 %v669, %v668
  %v744 = vpack.c.bf16 %v671, %v670
  %v745 = vpack.c.bf16 %v673, %v672
  %v746 = vpack.c.bf16 %v675, %v674
  %v747 = vpack.c.bf16 %v677, %v676
  %v748 = vpack.c.bf16 %v679, %v678
  %v749 = vpack.c.bf16 %v681, %v680
  %v750 = vpack.c.bf16 %v683, %v682
  %v751 = vpack.c.bf16 %v685, %v684
  %v752 = vpack.c.bf16 %v687, %v686
  %v753 = vpack.c.bf16 %v689, %v688
  %v754 = vpack.c.bf16 %v691, %v690
  %v755 = vpack.c.bf16 %v693, %v692
  %v756 = vpack.c.bf16 %v695, %v694
  %v757 = vpack.c.bf16 %v697, %v696
  %v758 = vpack.c.bf16 %v699, %v698
  %v759 = vpack.c.bf16 %v701, %v700
  %v760 = vpack.c.bf16 %v703, %v702
  %v761 = vpack.c.bf16 %v705, %v704
  %v762 = vpack.c.bf16 %v707, %v706
  %v763 = vpack.c.bf16 %v709, %v708
  %v764 = vpack.c.bf16 %v711, %v710
  %v765 = vpack.c.bf16 %v713, %v712
  %v766 = vpack.c.bf16 %v715, %v714
  %v767 = vpack.c.bf16 %v717, %v716
  %v768 = vpack.c.bf16 %v719, %v718
  %v769 = vpack.c.bf16 %v721, %v720
  %v770 = vpack.c.bf16 %v723, %v722
  %v771 = vpack.c.bf16 %v725, %v724
  %v772 = vpack.c.bf16 %v727, %v726
  %v773 = vpack.c.bf16 %v729, %v728
  %v774 = vpack.c.bf16 %v731, %v730
  %v775 = vpack.c.bf16 %v733, %v732
  %v776 = vpack.c.bf16 %v735, %v734
  %v777 = vpack.c.bf16 %v737, %v736
  %v778 = vpack.c.bf16 %v739, %v738
  %v779 = vpack.c.bf16 %v741, %v740
  %vm780 = vcmask 1043456
  %vm781 = vcmask 179204
  %vm782 = vmor %vm781, %vm780
  %783 = vst.msk [vmem:[%s4] sm:$0xff] %vm782, %v742
  %784 = vst.msk [vmem:[%s4 + $0x8] sm:$0xff] %vm782, %v743
  %785 = vst.msk [vmem:[%s4 + $0x10] sm:$0xff] %vm782, %v744
  %786 = vst.msk [vmem:[%s4 + $0x18] sm:$0xff] %vm782, %v745
  %787 = vst.msk [vmem:[%s4 + $0x20] sm:$0xff] %vm782, %v746
  %788 = vst.msk [vmem:[%s4 + $0x28] sm:$0xff] %vm782, %v747
  %789 = vst.msk [vmem:[%s4 + $0x30] sm:$0xff] %vm782, %v748
  %790 = vst.msk [vmem:[%s4 + $0x38] sm:$0xff] %vm782, %v749
  %791 = vst.msk [vmem:[%s4 + $0x40] sm:$0xff] %vm782, %v750
  %792 = vst.msk [vmem:[%s4 + $0x48] sm:$0xff] %vm782, %v751
  %793 = vst.msk [vmem:[%s4 + $0x50] sm:$0xff] %vm782, %v752
  %794 = vst.msk [vmem:[%s4 + $0x58] sm:$0xff] %vm782, %v753
  %795 = vst.msk [vmem:[%s4 + $0x60] sm:$0xff] %vm782, %v754
  %796 = vst.msk [vmem:[%s4 + $0x68] sm:$0xff] %vm782, %v755
  %797 = vst.msk [vmem:[%s4 + $0x70] sm:$0xff] %vm782, %v756
  %798 = vst.msk [vmem:[%s4 + $0x78] sm:$0xff] %vm782, %v757
  %799 = vst.msk [vmem:[%s4 + $0x80] sm:$0xff] %vm782, %v758
  %800 = vst.msk [vmem:[%s4 + $0x88] sm:$0xff] %vm782, %v759
  %801 = vst.msk [vmem:[%s4 + $0x90] sm:$0xff] %vm782, %v760
  %802 = vst.msk [vmem:[%s4 + $0x98] sm:$0xff] %vm782, %v761
  %803 = vst.msk [vmem:[%s4 + $0xa0] sm:$0xff] %vm782, %v762
  %804 = vst.msk [vmem:[%s4 + $0xa8] sm:$0xff] %vm782, %v763
  %805 = vst.msk [vmem:[%s4 + $0xb0] sm:$0xff] %vm782, %v764
  %806 = vst.msk [vmem:[%s4 + $0xb8] sm:$0xff] %vm782, %v765
  %807 = vst.msk [vmem:[%s4 + $0xc0] sm:$0xff] %vm782, %v766
  %808 = vst.msk [vmem:[%s4 + $0xc8] sm:$0xff] %vm782, %v767
  %809 = vst.msk [vmem:[%s4 + $0xd0] sm:$0xff] %vm782, %v768
  %810 = vst.msk [vmem:[%s4 + $0xd8] sm:$0xff] %vm782, %v769
  %811 = vst.msk [vmem:[%s4 + $0xe0] sm:$0xff] %vm782, %v770
  %812 = vst.msk [vmem:[%s4 + $0xe8] sm:$0xff] %vm782, %v771
  %813 = vst.msk [vmem:[%s4 + $0xf0] sm:$0xff] %vm782, %v772
  %814 = vst.msk [vmem:[%s4 + $0xf8] sm:$0xff] %vm782, %v773
  %815 = vst.msk [vmem:[%s4 + $0x100] sm:$0xff] %vm782, %v774
  %816 = vst.msk [vmem:[%s4 + $0x108] sm:$0xff] %vm782, %v775
  %817 = vst.msk [vmem:[%s4 + $0x110] sm:$0xff] %vm782, %v776
  %818 = vst.msk [vmem:[%s4 + $0x118] sm:$0xff] %vm782, %v777
  %819 = vst.msk [vmem:[%s4 + $0x120] sm:$0xff] %vm782, %v778
  %820 = vst.msk [vmem:[%s4 + $0x128] sm:$0xff] %vm782, %v779
  // Predicated region
  $region18: #{_lambda_.3} parent=0 // pred_check
    _
  $region19: #{_lambda_.3} parent=0 // pred_check_branch
    %822 = sbr.rel (0) target = $region21
  $region20: #{_lambda_.3} parent=0 // pred_region
    _
  $region21: #{_lambda_.3} parent=0 // pred_fallthru
    _
  // Predicated region
  $region22: #{_lambda_.3} parent=0 // pred_check
    _
  $region23: #{_lambda_.3} parent=0 // pred_check_branch
    %824 = sbr.rel (0) target = $region25
  $region24: #{_lambda_.3} parent=0 // pred_region
    _
  $region25: #{_lambda_.3} parent=0 // pred_fallthru
    _

// kernel: _lambda_.5
$region0: #{_lambda_.5}
  #allocation0 [shape = 'u32[]', space=smem, size = 0x4, offset = 0x4, fixed_abs, tag = 'smem constant byte address 0x4 - core index']
  #allocation1 [shape = 'u32[72,128]{1,0:T(1,128)}', space=vmem, size = 0x9000, scoped, tag = 'internal scratch']
  #allocation2 [shape = 'f32[1,1]{1,0:T(1,128)S(1)}', space=vmem, size = 0x200, scoped, tag = 'scoped memory for _lambda_.5']
  %s0 = inlined_call_operand.vmem [shape: f32[752,128], index: 0, kind: input, shape index: {}]
  %s1 = inlined_call_operand.vmem [shape: f32[32,128], index: 1, kind: input, shape index: {}]
  %s2 = inlined_call_operand.vmem [shape: f32[1,32], index: 2, kind: input, shape index: {}]
  %s3 = inlined_call_operand.<no memory space> [shape: f32[1,1], index: 3, kind: input, shape index: {}]
  %s4 = inlined_call_operand.vmem [shape: f32[94,8], index: 4, kind: output, shape index: {}]
  %s5 = sld [smem:[#allocation0]]
  $region33: #{_lambda_.5} parent=0
    _
  %s7 = ssub.s32 1, %s5
  %s8 = scalar_select 0, %s7, %s5
  %v9 = vstv %s3
  %10 = vst [vmem:[#allocation2] sm:$0x1] %v9
  // Predicated region
  $region2: #{_lambda_.5} parent=0 // pred_check
    _
  $region3: #{_lambda_.5} parent=0 // pred_check_branch
    %12 = sbr.rel (0) target = $region5
  $region4: #{_lambda_.5} parent=0 // pred_region
    _
  $region5: #{_lambda_.5} parent=0 // pred_fallthru
    _
  // Predicated region
  $region6: #{_lambda_.5} parent=0 // pred_check
    _
  $region7: #{_lambda_.5} parent=0 // pred_check_branch
    %14 = sbr.rel (0) target = $region9
  $region8: #{_lambda_.5} parent=0 // pred_region
    _
  $region9: #{_lambda_.5} parent=0 // pred_fallthru
    _
  // Predicated region
  $region10: #{_lambda_.5} parent=0 // pred_check
    _
  $region11: #{_lambda_.5} parent=0 // pred_check_branch
    %16 = sbr.rel (0) target = $region13
  $region12: #{_lambda_.5} parent=0 // pred_region
    _
  $region13: #{_lambda_.5} parent=0 // pred_fallthru
    _
  // Predicated region
  $region14: #{_lambda_.5} parent=0 // pred_check
    _
  $region15: #{_lambda_.5} parent=0 // pred_check_branch
    %18 = sbr.rel (0) target = $region17
  $region16: #{_lambda_.5} parent=0 // pred_region
    _
  $region17: #{_lambda_.5} parent=0 // pred_fallthru
    _
  %v19 = vld [vmem:[%s1] sm:$0xff]
  %v20 = vld [vmem:[%s1 + $0x8] sm:$0xff]
  %v21 = vld [vmem:[%s1 + $0x10] sm:$0xff]
  %v22 = vld [vmem:[%s1 + $0x18] sm:$0xff]
  %v23 = vld [vmem:[%s2] sm:$0x1]
  %v24 = vld [vmem:[#allocation2] sm:$0x1]
  loop: start=0, step=1, limit=94
  $region18: #{_lambda_.5} parent=0 // loop_pre_header
    _
  $region19: #{_lambda_.5} parent=0 // loop_header
    %s26 = sphi 0, %s30
    %p27 = scmp.ge.s32.totalorder %s26, 94
    %v31 = vphi 0.0, %v660
    %v32 = vphi 0.0, %v654
  $region20: #{_lambda_.5} parent=0 // loop_header_branch
    %29 = sbr.rel (%p27) target = $region24
  $region21: #{_lambda_.5} parent=0 // loop_body
    %s33 = smul.u32 %s26, 8
    %s34 = scalar_lea.vmem %s0, %s33
    %v35 = vld [vmem:[%s34] sm:$0xff]
    %v37 = vrot.slane %v31, 7
    %38 = vrot.lane.b32.xlu0 %v37, 64
    %v39 = vpop.permute.xlu0 %38
    %vm40 = vcmask 261120
    %v41 = vsel %vm40, %v39, 0
    %43 = vmatpush.msra.mxu0 0.0
    %44 = vmatpush.msra.mxu0 0.0
    %45 = vmatpush.msra.mxu0 0.0
    %46 = vmatpush.msra.mxu0 0.0
    %47 = vmatpush.msra.mxu0 0.0
    %48 = vmatpush.msra.mxu0 0.0
    %49 = vmatpush.msra.mxu0 0.0
    %50 = vmatpush.msra.mxu0 0.0
    %51 = vmatpush.msra.mxu0 0.0
    %52 = vmatpush.msra.mxu0 0.0
    %53 = vmatpush.msra.mxu0 0.0
    %54 = vmatpush.msra.mxu0 0.0
    %55 = vmatpush.msra.mxu0 %v22
    %56 = vmatpush.msra.mxu0 %v21
    %57 = vmatpush.msra.mxu0 %v20
    %58 = vmatpush.msra.mxu0 %v19
    %59 = vmatmul.f32.gmra.mxu0 %v41
    %v60 = vpop.f32.mrf.mxu0
    %v61 = vadd.f32 0.0, %v60
    %62 = vdwg.mxu0
    %v63 = vadd.f32 %v35, %v61
    %v64 = vxor.u32 %v63, 2147483648
    %v65 = vmul.f32 %v64, 1.442695
    %v66 = vpow.pop %v65
    %v67 = vadd.f32 %v66, 1.0
    %v68 = vrcp.pop %v67
    %v69 = vmul.f32 %v67, %v68
    %v70 = vsub.f32 1.0, %v69
    %v71 = vmul.f32 %v68, %v70
    %v72 = vadd.f32 %v68, %v71
    %vm73 = vweird.f32 %v67
    %vm74 = vweird.f32 %v68
    %vm75 = vmor %vm73, %vm74
    %v76 = vsel %vm75, %v68, %v72
    %v77 = vand.u32 2147483647, %v67
    %vm78 = vcmp.eq.f32.partialorder %v77, 8.507059e+37
    %v79 = vand.u32 %v67, 2147483648
    %v80 = vor.u32 1.1754944e-38, %v79
    %v81 = vsel %vm78, %v80, %v76
    %v82 = vmul.f32 1.0, %v81
    %v83 = vtanh.pop %v63
    %v85 = vrot.slane %v32, 7
    %v87 = vmul.f32 %v82, %v85
    %89 = vrot.lane.b32.xlu0 %v83, 32
    %v90 = vpop.permute.xlu0 %89
    %v92 = vmul.f32 %v82, %v90
    %94 = vrot.lane.b32.xlu0 %v92, 32
    %v95 = vpop.permute.xlu0 %94
    %v97 = vadd.f32 %v87, %v95
    %v98 = vtanh.pop %v97
    %100 = vrot.lane.b32.xlu0 %v98, 32
    %v101 = vpop.permute.xlu0 %100
    %v103 = vmul.f32 %v82, %v101
    %v105 = vperm.slane %v23, 0
    %106 = vrot.lane.b32.xlu0 %v105, 64
    %v107 = vpop.permute.xlu0 %106
    %v109 = vmul.f32 %v103, %v107
    %111 = vrot.lane.b32.xlu0 %v109, 64
    %v112 = vpop.permute.xlu0 %111
    %vm114 = vcmask 253952
    %v115 = vsel %vm114, %v112, 0.0
    %116 = vadd.xlane.f32.xlu0 %v115
    %v117 = vpop.xlane.xlu0 %116
    %119 = vrot.lane.b32.xlu0 %v103, 64
    %v120 = vpop.permute.xlu0 %119
    %v121 = vsel %vm40, %v120, 0
    %123 = vmatpush.msra.mxu0 0.0
    %124 = vmatpush.msra.mxu0 0.0
    %125 = vmatpush.msra.mxu0 0.0
    %126 = vmatpush.msra.mxu0 0.0
    %127 = vmatpush.msra.mxu0 0.0
    %128 = vmatpush.msra.mxu0 0.0
    %129 = vmatpush.msra.mxu0 0.0
    %130 = vmatpush.msra.mxu0 0.0
    %131 = vmatpush.msra.mxu0 0.0
    %132 = vmatpush.msra.mxu0 0.0
    %133 = vmatpush.msra.mxu0 0.0
    %134 = vmatpush.msra.mxu0 0.0
    %135 = vmatpush.msra.mxu0 %v22
    %136 = vmatpush.msra.mxu0 %v21
    %137 = vmatpush.msra.mxu0 %v20
    %138 = vmatpush.msra.mxu0 %v19
    %139 = vmatmul.f32.gmra.mxu0 %v121
    %v140 = vpop.f32.mrf.mxu0
    %v141 = vadd.f32 0.0, %v140
    %142 = vdwg.mxu0
    %v144 = vrot.slane %v141, 7
    %v146 = vadd.f32 %v35, %v144
    %v147 = vxor.u32 %v146, 2147483648
    %v148 = vmul.f32 %v147, 1.442695
    %v149 = vpow.pop %v148
    %v150 = vadd.f32 %v149, 1.0
    %v151 = vrcp.pop %v150
    %v152 = vmul.f32 %v150, %v151
    %v153 = vsub.f32 1.0, %v152
    %v154 = vmul.f32 %v151, %v153
    %v155 = vadd.f32 %v151, %v154
    %vm156 = vweird.f32 %v150
    %vm157 = vweird.f32 %v151
    %vm158 = vmor %vm156, %vm157
    %v159 = vsel %vm158, %v151, %v155
    %v160 = vand.u32 2147483647, %v150
    %vm161 = vcmp.eq.f32.partialorder %v160, 8.507059e+37
    %v162 = vand.u32 %v150, 2147483648
    %v163 = vor.u32 1.1754944e-38, %v162
    %v164 = vsel %vm161, %v163, %v159
    %v165 = vmul.f32 1.0, %v164
    %v166 = vtanh.pop %v146
    %v168 = vrot.slane %v97, 7
    %v170 = vmul.f32 %v165, %v168
    %172 = vrot.lane.b32.xlu0 %v166, 32
    %v173 = vpop.permute.xlu0 %172
    %v175 = vmul.f32 %v165, %v173
    %177 = vrot.lane.b32.xlu0 %v175, 32
    %v178 = vpop.permute.xlu0 %177
    %v180 = vadd.f32 %v170, %v178
    %v181 = vtanh.pop %v180
    %183 = vrot.lane.b32.xlu0 %v181, 32
    %v184 = vpop.permute.xlu0 %183
    %v186 = vmul.f32 %v165, %v184
    %v187 = vmul.f32 %v186, %v107
    %189 = vrot.lane.b32.xlu0 %v187, 64
    %v190 = vpop.permute.xlu0 %189
    %vm192 = vcmask 254977
    %v193 = vsel %vm192, %v190, 0.0
    %194 = vadd.xlane.f32.xlu0 %v193
    %v195 = vpop.xlane.xlu0 %194
    %v197 = vrot.slane %v186, 1
    %198 = vrot.lane.b32.xlu0 %v197, 64
    %v199 = vpop.permute.xlu0 %198
    %v200 = vsel %vm40, %v199, 0
    %202 = vmatpush.msra.mxu0 0.0
    %203 = vmatpush.msra.mxu0 0.0
    %204 = vmatpush.msra.mxu0 0.0
    %205 = vmatpush.msra.mxu0 0.0
    %206 = vmatpush.msra.mxu0 0.0
    %207 = vmatpush.msra.mxu0 0.0
    %208 = vmatpush.msra.mxu0 0.0
    %209 = vmatpush.msra.mxu0 0.0
    %210 = vmatpush.msra.mxu0 0.0
    %211 = vmatpush.msra.mxu0 0.0
    %212 = vmatpush.msra.mxu0 0.0
    %213 = vmatpush.msra.mxu0 0.0
    %214 = vmatpush.msra.mxu0 %v22
    %215 = vmatpush.msra.mxu0 %v21
    %216 = vmatpush.msra.mxu0 %v20
    %217 = vmatpush.msra.mxu0 %v19
    %218 = vmatmul.f32.gmra.mxu0 %v200
    %v219 = vpop.f32.mrf.mxu0
    %v220 = vadd.f32 0.0, %v219
    %221 = vdwg.mxu0
    %v223 = vrot.slane %v220, 6
    %v225 = vadd.f32 %v35, %v223
    %v226 = vxor.u32 %v225, 2147483648
    %v227 = vmul.f32 %v226, 1.442695
    %v228 = vpow.pop %v227
    %v229 = vadd.f32 %v228, 1.0
    %v230 = vrcp.pop %v229
    %v231 = vmul.f32 %v229, %v230
    %v232 = vsub.f32 1.0, %v231
    %v233 = vmul.f32 %v230, %v232
    %v234 = vadd.f32 %v230, %v233
    %vm235 = vweird.f32 %v229
    %vm236 = vweird.f32 %v230
    %vm237 = vmor %vm235, %vm236
    %v238 = vsel %vm237, %v230, %v234
    %v239 = vand.u32 2147483647, %v229
    %vm240 = vcmp.eq.f32.partialorder %v239, 8.507059e+37
    %v241 = vand.u32 %v229, 2147483648
    %v242 = vor.u32 1.1754944e-38, %v241
    %v243 = vsel %vm240, %v242, %v238
    %v244 = vmul.f32 1.0, %v243
    %v245 = vtanh.pop %v225
    %v247 = vrot.slane %v180, 7
    %v249 = vmul.f32 %v244, %v247
    %251 = vrot.lane.b32.xlu0 %v245, 32
    %v252 = vpop.permute.xlu0 %251
    %v254 = vmul.f32 %v244, %v252
    %256 = vrot.lane.b32.xlu0 %v254, 32
    %v257 = vpop.permute.xlu0 %256
    %v259 = vadd.f32 %v249, %v257
    %v260 = vtanh.pop %v259
    %262 = vrot.lane.b32.xlu0 %v260, 32
    %v263 = vpop.permute.xlu0 %262
    %v265 = vmul.f32 %v244, %v263
    %v266 = vmul.f32 %v265, %v107
    %268 = vrot.lane.b32.xlu0 %v266, 64
    %v269 = vpop.permute.xlu0 %268
    %vm271 = vcmask 256002
    %v272 = vsel %vm271, %v269, 0.0
    %273 = vadd.xlane.f32.xlu0 %v272
    %v274 = vpop.xlane.xlu0 %273
    %v276 = vrot.slane %v265, 2
    %277 = vrot.lane.b32.xlu0 %v276, 64
    %v278 = vpop.permute.xlu0 %277
    %v279 = vsel %vm40, %v278, 0
    %281 = vmatpush.msra.mxu0 0.0
    %282 = vmatpush.msra.mxu0 0.0
    %283 = vmatpush.msra.mxu0 0.0
    %284 = vmatpush.msra.mxu0 0.0
    %285 = vmatpush.msra.mxu0 0.0
    %286 = vmatpush.msra.mxu0 0.0
    %287 = vmatpush.msra.mxu0 0.0
    %288 = vmatpush.msra.mxu0 0.0
    %289 = vmatpush.msra.mxu0 0.0
    %290 = vmatpush.msra.mxu0 0.0
    %291 = vmatpush.msra.mxu0 0.0
    %292 = vmatpush.msra.mxu0 0.0
    %293 = vmatpush.msra.mxu0 %v22
    %294 = vmatpush.msra.mxu0 %v21
    %295 = vmatpush.msra.mxu0 %v20
    %296 = vmatpush.msra.mxu0 %v19
    %297 = vmatmul.f32.gmra.mxu0 %v279
    %v298 = vpop.f32.mrf.mxu0
    %v299 = vadd.f32 0.0, %v298
    %300 = vdwg.mxu0
    %v302 = vrot.slane %v299, 5
    %v304 = vadd.f32 %v35, %v302
    %v305 = vxor.u32 %v304, 2147483648
    %v306 = vmul.f32 %v305, 1.442695
    %v307 = vpow.pop %v306
    %v308 = vadd.f32 %v307, 1.0
    %v309 = vrcp.pop %v308
    %v310 = vmul.f32 %v308, %v309
    %v311 = vsub.f32 1.0, %v310
    %v312 = vmul.f32 %v309, %v311
    %v313 = vadd.f32 %v309, %v312
    %vm314 = vweird.f32 %v308
    %vm315 = vweird.f32 %v309
    %vm316 = vmor %vm314, %vm315
    %v317 = vsel %vm316, %v309, %v313
    %v318 = vand.u32 2147483647, %v308
    %vm319 = vcmp.eq.f32.partialorder %v318, 8.507059e+37
    %v320 = vand.u32 %v308, 2147483648
    %v321 = vor.u32 1.1754944e-38, %v320
    %v322 = vsel %vm319, %v321, %v317
    %v323 = vmul.f32 1.0, %v322
    %v324 = vtanh.pop %v304
    %v326 = vrot.slane %v259, 7
    %v328 = vmul.f32 %v323, %v326
    %330 = vrot.lane.b32.xlu0 %v324, 32
    %v331 = vpop.permute.xlu0 %330
    %v333 = vmul.f32 %v323, %v331
    %335 = vrot.lane.b32.xlu0 %v333, 32
    %v336 = vpop.permute.xlu0 %335
    %v338 = vadd.f32 %v328, %v336
    %v339 = vtanh.pop %v338
    %341 = vrot.lane.b32.xlu0 %v339, 32
    %v342 = vpop.permute.xlu0 %341
    %v344 = vmul.f32 %v323, %v342
    %v345 = vmul.f32 %v344, %v107
    %347 = vrot.lane.b32.xlu0 %v345, 64
    %v348 = vpop.permute.xlu0 %347
    %vm350 = vcmask 257027
    %v351 = vsel %vm350, %v348, 0.0
    %352 = vadd.xlane.f32.xlu0 %v351
    %v353 = vpop.xlane.xlu0 %352
    %v355 = vrot.slane %v344, 3
    %356 = vrot.lane.b32.xlu0 %v355, 64
    %v357 = vpop.permute.xlu0 %356
    %v358 = vsel %vm40, %v357, 0
    %360 = vmatpush.msra.mxu0 0.0
    %361 = vmatpush.msra.mxu0 0.0
    %362 = vmatpush.msra.mxu0 0.0
    %363 = vmatpush.msra.mxu0 0.0
    %364 = vmatpush.msra.mxu0 0.0
    %365 = vmatpush.msra.mxu0 0.0
    %366 = vmatpush.msra.mxu0 0.0
    %367 = vmatpush.msra.mxu0 0.0
    %368 = vmatpush.msra.mxu0 0.0
    %369 = vmatpush.msra.mxu0 0.0
    %370 = vmatpush.msra.mxu0 0.0
    %371 = vmatpush.msra.mxu0 0.0
    %372 = vmatpush.msra.mxu0 %v22
    %373 = vmatpush.msra.mxu0 %v21
    %374 = vmatpush.msra.mxu0 %v20
    %375 = vmatpush.msra.mxu0 %v19
    %376 = vmatmul.f32.gmra.mxu0 %v358
    %v377 = vpop.f32.mrf.mxu0
    %v378 = vadd.f32 0.0, %v377
    %379 = vdwg.mxu0
    %v381 = vrot.slane %v378, 4
    %v383 = vadd.f32 %v35, %v381
    %v384 = vxor.u32 %v383, 2147483648
    %v385 = vmul.f32 %v384, 1.442695
    %v386 = vpow.pop %v385
    %v387 = vadd.f32 %v386, 1.0
    %v388 = vrcp.pop %v387
    %v389 = vmul.f32 %v387, %v388
    %v390 = vsub.f32 1.0, %v389
    %v391 = vmul.f32 %v388, %v390
    %v392 = vadd.f32 %v388, %v391
    %vm393 = vweird.f32 %v387
    %vm394 = vweird.f32 %v388
    %vm395 = vmor %vm393, %vm394
    %v396 = vsel %vm395, %v388, %v392
    %v397 = vand.u32 2147483647, %v387
    %vm398 = vcmp.eq.f32.partialorder %v397, 8.507059e+37
    %v399 = vand.u32 %v387, 2147483648
    %v400 = vor.u32 1.1754944e-38, %v399
    %v401 = vsel %vm398, %v400, %v396
    %v402 = vmul.f32 1.0, %v401
    %v403 = vtanh.pop %v383
    %v405 = vrot.slane %v338, 7
    %v407 = vmul.f32 %v402, %v405
    %409 = vrot.lane.b32.xlu0 %v403, 32
    %v410 = vpop.permute.xlu0 %409
    %v412 = vmul.f32 %v402, %v410
    %414 = vrot.lane.b32.xlu0 %v412, 32
    %v415 = vpop.permute.xlu0 %414
    %v417 = vadd.f32 %v407, %v415
    %v418 = vtanh.pop %v417
    %420 = vrot.lane.b32.xlu0 %v418, 32
    %v421 = vpop.permute.xlu0 %420
    %v423 = vmul.f32 %v402, %v421
    %v424 = vmul.f32 %v423, %v107
    %426 = vrot.lane.b32.xlu0 %v424, 64
    %v427 = vpop.permute.xlu0 %426
    %vm429 = vcmask 258052
    %v430 = vsel %vm429, %v427, 0.0
    %431 = vadd.xlane.f32.xlu0 %v430
    %v432 = vpop.xlane.xlu0 %431
    %v434 = vrot.slane %v423, 4
    %435 = vrot.lane.b32.xlu0 %v434, 64
    %v436 = vpop.permute.xlu0 %435
    %v437 = vsel %vm40, %v436, 0
    %439 = vmatpush.msra.mxu0 0.0
    %440 = vmatpush.msra.mxu0 0.0
    %441 = vmatpush.msra.mxu0 0.0
    %442 = vmatpush.msra.mxu0 0.0
    %443 = vmatpush.msra.mxu0 0.0
    %444 = vmatpush.msra.mxu0 0.0
    %445 = vmatpush.msra.mxu0 0.0
    %446 = vmatpush.msra.mxu0 0.0
    %447 = vmatpush.msra.mxu0 0.0
    %448 = vmatpush.msra.mxu0 0.0
    %449 = vmatpush.msra.mxu0 0.0
    %450 = vmatpush.msra.mxu0 0.0
    %451 = vmatpush.msra.mxu0 %v22
    %452 = vmatpush.msra.mxu0 %v21
    %453 = vmatpush.msra.mxu0 %v20
    %454 = vmatpush.msra.mxu0 %v19
    %455 = vmatmul.f32.gmra.mxu0 %v437
    %v456 = vpop.f32.mrf.mxu0
    %v457 = vadd.f32 0.0, %v456
    %458 = vdwg.mxu0
    %v460 = vrot.slane %v457, 3
    %v462 = vadd.f32 %v35, %v460
    %v463 = vxor.u32 %v462, 2147483648
    %v464 = vmul.f32 %v463, 1.442695
    %v465 = vpow.pop %v464
    %v466 = vadd.f32 %v465, 1.0
    %v467 = vrcp.pop %v466
    %v468 = vmul.f32 %v466, %v467
    %v469 = vsub.f32 1.0, %v468
    %v470 = vmul.f32 %v467, %v469
    %v471 = vadd.f32 %v467, %v470
    %vm472 = vweird.f32 %v466
    %vm473 = vweird.f32 %v467
    %vm474 = vmor %vm472, %vm473
    %v475 = vsel %vm474, %v467, %v471
    %v476 = vand.u32 2147483647, %v466
    %vm477 = vcmp.eq.f32.partialorder %v476, 8.507059e+37
    %v478 = vand.u32 %v466, 2147483648
    %v479 = vor.u32 1.1754944e-38, %v478
    %v480 = vsel %vm477, %v479, %v475
    %v481 = vmul.f32 1.0, %v480
    %v482 = vtanh.pop %v462
    %v484 = vrot.slane %v417, 7
    %v486 = vmul.f32 %v481, %v484
    %488 = vrot.lane.b32.xlu0 %v482, 32
    %v489 = vpop.permute.xlu0 %488
    %v491 = vmul.f32 %v481, %v489
    %493 = vrot.lane.b32.xlu0 %v491, 32
    %v494 = vpop.permute.xlu0 %493
    %v496 = vadd.f32 %v486, %v494
    %v497 = vtanh.pop %v496
    %499 = vrot.lane.b32.xlu0 %v497, 32
    %v500 = vpop.permute.xlu0 %499
    %v502 = vmul.f32 %v481, %v500
    %v503 = vmul.f32 %v502, %v107
    %505 = vrot.lane.b32.xlu0 %v503, 64
    %v506 = vpop.permute.xlu0 %505
    %vm508 = vcmask 259077
    %v509 = vsel %vm508, %v506, 0.0
    %510 = vadd.xlane.f32.xlu0 %v509
    %v511 = vpop.xlane.xlu0 %510
    %v513 = vrot.slane %v502, 5
    %514 = vrot.lane.b32.xlu0 %v513, 64
    %v515 = vpop.permute.xlu0 %514
    %v516 = vsel %vm40, %v515, 0
    %518 = vmatpush.msra.mxu0 0.0
    %519 = vmatpush.msra.mxu0 0.0
    %520 = vmatpush.msra.mxu0 0.0
    %521 = vmatpush.msra.mxu0 0.0
    %522 = vmatpush.msra.mxu0 0.0
    %523 = vmatpush.msra.mxu0 0.0
    %524 = vmatpush.msra.mxu0 0.0
    %525 = vmatpush.msra.mxu0 0.0
    %526 = vmatpush.msra.mxu0 0.0
    %527 = vmatpush.msra.mxu0 0.0
    %528 = vmatpush.msra.mxu0 0.0
    %529 = vmatpush.msra.mxu0 0.0
    %530 = vmatpush.msra.mxu0 %v22
    %531 = vmatpush.msra.mxu0 %v21
    %532 = vmatpush.msra.mxu0 %v20
    %533 = vmatpush.msra.mxu0 %v19
    %534 = vmatmul.f32.gmra.mxu0 %v516
    %v535 = vpop.f32.mrf.mxu0
    %v536 = vadd.f32 0.0, %v535
    %537 = vdwg.mxu0
    %v539 = vrot.slane %v536, 2
    %v541 = vadd.f32 %v35, %v539
    %v542 = vxor.u32 %v541, 2147483648
    %v543 = vmul.f32 %v542, 1.442695
    %v544 = vpow.pop %v543
    %v545 = vadd.f32 %v544, 1.0
    %v546 = vrcp.pop %v545
    %v547 = vmul.f32 %v545, %v546
    %v548 = vsub.f32 1.0, %v547
    %v549 = vmul.f32 %v546, %v548
    %v550 = vadd.f32 %v546, %v549
    %vm551 = vweird.f32 %v545
    %vm552 = vweird.f32 %v546
    %vm553 = vmor %vm551, %vm552
    %v554 = vsel %vm553, %v546, %v550
    %v555 = vand.u32 2147483647, %v545
    %vm556 = vcmp.eq.f32.partialorder %v555, 8.507059e+37
    %v557 = vand.u32 %v545, 2147483648
    %v558 = vor.u32 1.1754944e-38, %v557
    %v559 = vsel %vm556, %v558, %v554
    %v560 = vmul.f32 1.0, %v559
    %v561 = vtanh.pop %v541
    %v563 = vrot.slane %v496, 7
    %v565 = vmul.f32 %v560, %v563
    %567 = vrot.lane.b32.xlu0 %v561, 32
    %v568 = vpop.permute.xlu0 %567
    %v570 = vmul.f32 %v560, %v568
    %572 = vrot.lane.b32.xlu0 %v570, 32
    %v573 = vpop.permute.xlu0 %572
    %v575 = vadd.f32 %v565, %v573
    %v576 = vtanh.pop %v575
    %578 = vrot.lane.b32.xlu0 %v576, 32
    %v579 = vpop.permute.xlu0 %578
    %v581 = vmul.f32 %v560, %v579
    %v582 = vmul.f32 %v581, %v107
    %584 = vrot.lane.b32.xlu0 %v582, 64
    %v585 = vpop.permute.xlu0 %584
    %vm587 = vcmask 260102
    %v588 = vsel %vm587, %v585, 0.0
    %589 = vadd.xlane.f32.xlu0 %v588
    %v590 = vpop.xlane.xlu0 %589
    %v592 = vrot.slane %v581, 6
    %593 = vrot.lane.b32.xlu0 %v592, 64
    %v594 = vpop.permute.xlu0 %593
    %v595 = vsel %vm40, %v594, 0
    %597 = vmatpush.msra.mxu0 0.0
    %598 = vmatpush.msra.mxu0 0.0
    %599 = vmatpush.msra.mxu0 0.0
    %600 = vmatpush.msra.mxu0 0.0
    %601 = vmatpush.msra.mxu0 0.0
    %602 = vmatpush.msra.mxu0 0.0
    %603 = vmatpush.msra.mxu0 0.0
    %604 = vmatpush.msra.mxu0 0.0
    %605 = vmatpush.msra.mxu0 0.0
    %606 = vmatpush.msra.mxu0 0.0
    %607 = vmatpush.msra.mxu0 0.0
    %608 = vmatpush.msra.mxu0 0.0
    %609 = vmatpush.msra.mxu0 %v22
    %610 = vmatpush.msra.mxu0 %v21
    %611 = vmatpush.msra.mxu0 %v20
    %612 = vmatpush.msra.mxu0 %v19
    %613 = vmatmul.f32.gmra.mxu0 %v595
    %v614 = vpop.f32.mrf.mxu0
    %v615 = vadd.f32 0.0, %v614
    %616 = vdwg.mxu0
    %v618 = vrot.slane %v615, 1
    %v620 = vadd.f32 %v35, %v618
    %v621 = vxor.u32 %v620, 2147483648
    %v622 = vmul.f32 %v621, 1.442695
    %v623 = vpow.pop %v622
    %v624 = vadd.f32 %v623, 1.0
    %v625 = vrcp.pop %v624
    %v626 = vmul.f32 %v624, %v625
    %v627 = vsub.f32 1.0, %v626
    %v628 = vmul.f32 %v625, %v627
    %v629 = vadd.f32 %v625, %v628
    %vm630 = vweird.f32 %v624
    %vm631 = vweird.f32 %v625
    %vm632 = vmor %vm630, %vm631
    %v633 = vsel %vm632, %v625, %v629
    %v634 = vand.u32 2147483647, %v624
    %vm635 = vcmp.eq.f32.partialorder %v634, 8.507059e+37
    %v636 = vand.u32 %v624, 2147483648
    %v637 = vor.u32 1.1754944e-38, %v636
    %v638 = vsel %vm635, %v637, %v633
    %v639 = vmul.f32 1.0, %v638
    %v640 = vtanh.pop %v620
    %v642 = vrot.slane %v575, 7
    %v644 = vmul.f32 %v639, %v642
    %646 = vrot.lane.b32.xlu0 %v640, 32
    %v647 = vpop.permute.xlu0 %646
    %v649 = vmul.f32 %v639, %v647
    %651 = vrot.lane.b32.xlu0 %v649, 32
    %v652 = vpop.permute.xlu0 %651
    %v654 = vadd.f32 %v644, %v652
    %v655 = vtanh.pop %v654
    %657 = vrot.lane.b32.xlu0 %v655, 32
    %v658 = vpop.permute.xlu0 %657
    %v660 = vmul.f32 %v639, %v658
    %v661 = vmul.f32 %v660, %v107
    %663 = vrot.lane.b32.xlu0 %v661, 64
    %v664 = vpop.permute.xlu0 %663
    %vm666 = vcmask 261127
    %v667 = vsel %vm666, %v664, 0.0
    %668 = vadd.xlane.f32.xlu0 %v667
    %v669 = vpop.xlane.xlu0 %668
    %v671 = vrot.slane %v195, 1
    %v674 = vrot.slane %v274, 2
    %v677 = vrot.slane %v353, 3
    %v680 = vrot.slane %v432, 4
    %v683 = vrot.slane %v511, 5
    %v686 = vrot.slane %v590, 6
    %v689 = vrot.slane %v669, 7
    %vm691 = vcmask 7168
    %v692 = vsel %vm691, %v117, %v671
    %vm693 = vcmask 15360
    %v694 = vsel %vm693, %v692, %v674
    %vm695 = vcmask 23552
    %v696 = vsel %vm695, %v694, %v677
    %vm697 = vcmask 31744
    %v698 = vsel %vm697, %v696, %v680
    %vm699 = vcmask 39936
    %v700 = vsel %vm699, %v698, %v683
    %vm701 = vcmask 48128
    %v702 = vsel %vm701, %v700, %v686
    %vm703 = vcmask 56320
    %v704 = vsel %vm703, %v702, %v689
    %706 = vset.pattern.permute.xlu0 0
    %707 = vperm.xlu0 %706, %v24
    %v708 = vpop.permute.xlu0 %707
    %v710 = vperm.slane %v708, 0
    %v711 = vadd.f32 %v704, %v710
    %s712 = scalar_lea.vmem %s4, %s26
    %vm713 = vcmask 57344
    %714 = vst.msk [vmem:[%s712] sm:$0x1] %vm713, %v711
  $region22: #{_lambda_.5} parent=0 // loop_footer
    %s30 = sadd.s32 1, %s26
  $region23: #{_lambda_.5} parent=0 // loop_footer_branch
    %25 = sbr.rel target = $region19
  $region24: #{_lambda_.5} parent=0 // loop_exit
    _
  // Predicated region
  $region25: #{_lambda_.5} parent=0 // pred_check
    _
  $region26: #{_lambda_.5} parent=0 // pred_check_branch
    %716 = sbr.rel (0) target = $region28
  $region27: #{_lambda_.5} parent=0 // pred_region
    _
  $region28: #{_lambda_.5} parent=0 // pred_fallthru
    _
  // Predicated region
  $region29: #{_lambda_.5} parent=0 // pred_check
    _
  $region30: #{_lambda_.5} parent=0 // pred_check_branch
    %718 = sbr.rel (0) target = $region32
  $region31: #{_lambda_.5} parent=0 // pred_region
    _
  $region32: #{_lambda_.5} parent=0 // pred_fallthru
    _

// kernel: _lambda_.4
$region0: #{_lambda_.4}
  #allocation0 [shape = 'u32[]', space=smem, size = 0x4, offset = 0x4, fixed_abs, tag = 'smem constant byte address 0x4 - core index']
  #allocation1 [shape = 'u32[72,128]{1,0:T(1,128)}', space=vmem, size = 0x9000, scoped, tag = 'internal scratch']
  #allocation2 [shape = 'f32[26,150]{1,0:T(8,128)}', space=vmem, size = 0x8000, scoped, tag = 'scratch operand']
  %s0 = inlined_call_operand.vmem [shape: bf16[2,149,150], index: 0, kind: input, shape index: {}]
  %s1 = inlined_call_operand.vmem [shape: bf16[3,8,150,150], index: 1, kind: input, shape index: {}]
  %s2 = inlined_call_operand.vmem [shape: f32[3,150], index: 2, kind: input, shape index: {}]
  %s3 = inlined_call_operand.vmem [shape: f32[3,150], index: 3, kind: input, shape index: {}]
  %s4 = inlined_call_operand.vmem [shape: f32[2,5,150], index: 4, kind: output, shape index: {}]
  %s5 = sld [smem:[#allocation0]]
  $region49: #{_lambda_.4} parent=0
    _
  %s7 = ssub.s32 1, %s5
  %s8 = scalar_select 0, %s7, %s5
  loop: start=0, step=1, limit=4
  $region2: #{_lambda_.4} parent=0 // loop_pre_header
    _
  $region3: #{_lambda_.4} parent=0 // loop_header
    %s10 = sphi 0, %s14
    %p11 = scmp.ge.s32.totalorder %s10, 4
    %s20 = sphi 0, %s22
    %s23 = sphi 0, %s20
    %s24 = sphi 0, %s23
    %s40 = sphi 0, %s24
    %s44 = sphi 0, %s44
    %s46 = sphi 0, %s44
    %s47 = sphi 0, %s46
    %s61 = sphi 0, %s47
    %s65 = sphi 0, %s65
    %s67 = sphi 0, %s65
    %s68 = sphi 0, %s67
    %s82 = sphi 0, %s68
    %s86 = sphi 0, %s86
    %s88 = sphi 0, %s86
    %s89 = sphi 0, %s88
    %s103 = sphi 0, %s89
    %s109 = sphi 0, %s111
    %s112 = sphi 0, %s109
    %s113 = sphi 0, %s112
    %s129 = sphi 0, %s113
  $region4: #{_lambda_.4} parent=0 // loop_header_branch
    %13 = sbr.rel (%p11) target = $region8
  $region5: #{_lambda_.4} parent=0 // loop_body
    %s15 = ssub.s32 %s10, 1
    %s16 = ssub.s32 %s10, 2
    %s17 = sadd.s32 %s10, 1
    %s18 = ssub.s32 %s10, %s17
    %p19 = scmp.eq.s32.totalorder %s18, 0
    %s21 = sadd.s32 %s20, 1
    %s22 = scalar_select %p19, %s20, %s21
    %p25 = pneg %p19
    %p26 = scmp.eq.s32.totalorder %s10, 1
    %p27 = por %p25, %p26
    %p28 = scmp.ne.s32.totalorder %s20, %s23
    %p29 = scmp.eq.s32.totalorder %s10, 0
    %p30 = por %p28, %p29
    %p31 = scmp.ne.s32.totalorder %s20, %s23
    %p32 = scmp.eq.s32.totalorder %s15, 1
    %p33 = por %p31, %p32
    %p34 = scmp.ne.s32.totalorder %s23, %s24
    %p35 = scmp.eq.s32.totalorder %s15, 0
    %p36 = por %p34, %p35
    %p37 = scmp.ne.s32.totalorder %s23, %s24
    %p38 = scmp.eq.s32.totalorder %s16, 1
    %p39 = por %p37, %p38
    %p41 = scmp.ne.s32.totalorder %s24, %s40
    %p42 = scmp.eq.s32.totalorder %s16, 0
    %p43 = por %p41, %p42
    %s45 = sadd.s32 %s44, 1
    %p48 = scmp.eq.s32.totalorder %s10, 1
    %p49 = scmp.ne.s32.totalorder %s44, %s46
    %p50 = scmp.eq.s32.totalorder %s10, 0
    %p51 = por %p49, %p50
    %p52 = scmp.ne.s32.totalorder %s44, %s46
    %p53 = scmp.eq.s32.totalorder %s15, 1
    %p54 = por %p52, %p53
    %p55 = scmp.ne.s32.totalorder %s46, %s47
    %p56 = scmp.eq.s32.totalorder %s15, 0
    %p57 = por %p55, %p56
    %p58 = scmp.ne.s32.totalorder %s46, %s47
    %p59 = scmp.eq.s32.totalorder %s16, 1
    %p60 = por %p58, %p59
    %p62 = scmp.ne.s32.totalorder %s47, %s61
    %p63 = scmp.eq.s32.totalorder %s16, 0
    %p64 = por %p62, %p63
    %s66 = sadd.s32 %s65, 1
    %p69 = scmp.eq.s32.totalorder %s10, 1
    %p70 = scmp.ne.s32.totalorder %s65, %s67
    %p71 = scmp.eq.s32.totalorder %s10, 0
    %p72 = por %p70, %p71
    %p73 = scmp.ne.s32.totalorder %s65, %s67
    %p74 = scmp.eq.s32.totalorder %s15, 1
    %p75 = por %p73, %p74
    %p76 = scmp.ne.s32.totalorder %s67, %s68
    %p77 = scmp.eq.s32.totalorder %s15, 0
    %p78 = por %p76, %p77
    %p79 = scmp.ne.s32.totalorder %s67, %s68
    %p80 = scmp.eq.s32.totalorder %s16, 1
    %p81 = por %p79, %p80
    %p83 = scmp.ne.s32.totalorder %s68, %s82
    %p84 = scmp.eq.s32.totalorder %s16, 0
    %p85 = por %p83, %p84
    %s87 = sadd.s32 %s86, 1
    %p90 = scmp.eq.s32.totalorder %s10, 1
    %p91 = scmp.ne.s32.totalorder %s86, %s88
    %p92 = scmp.eq.s32.totalorder %s10, 0
    %p93 = por %p91, %p92
    %p94 = scmp.ne.s32.totalorder %s86, %s88
    %p95 = scmp.eq.s32.totalorder %s15, 1
    %p96 = por %p94, %p95
    %p97 = scmp.ne.s32.totalorder %s88, %s89
    %p98 = scmp.eq.s32.totalorder %s15, 0
    %p99 = por %p97, %p98
    %p100 = scmp.ne.s32.totalorder %s88, %s89
    %p101 = scmp.eq.s32.totalorder %s16, 1
    %p102 = por %p100, %p101
    %p104 = scmp.ne.s32.totalorder %s89, %s103
    %p105 = scmp.eq.s32.totalorder %s16, 0
    %p106 = por %p104, %p105
    %s107 = ssub.s32 %s10, %s17
    %p108 = scmp.eq.s32.totalorder %s107, 0
    %s110 = sadd.s32 %s109, 1
    %s111 = scalar_select %p108, %s109, %s110
    %p114 = pneg %p108
    %p115 = scmp.eq.s32.totalorder %s10, 1
    %p116 = por %p114, %p115
    %p117 = scmp.ne.s32.totalorder %s109, %s112
    %p118 = scmp.eq.s32.totalorder %s10, 0
    %p119 = por %p117, %p118
    %p120 = scmp.ne.s32.totalorder %s109, %s112
    %p121 = scmp.eq.s32.totalorder %s15, 1
    %p122 = por %p120, %p121
    %p123 = scmp.ne.s32.totalorder %s112, %s113
    %p124 = scmp.eq.s32.totalorder %s15, 0
    %p125 = por %p123, %p124
    %p126 = scmp.ne.s32.totalorder %s112, %s113
    %p127 = scmp.eq.s32.totalorder %s16, 1
    %p128 = por %p126, %p127
    %p130 = scmp.ne.s32.totalorder %s113, %s129
    %p131 = scmp.eq.s32.totalorder %s16, 0
    %p132 = por %p130, %p131
    %p133 = scmp.le.s32.totalorder 1, %s10
    %p134 = scmp.lt.s32.totalorder %s10, 3
    %p135 = pnand %p133, %p134
    %p136 = pneg %p135
    // Predicated region
    $region9: #{_lambda_.4} parent=5 // pred_check
      _
    $region10: #{_lambda_.4} parent=5 // pred_check_branch
      %138 = sbr.rel (%p135) target = $region12
    $region11: #{_lambda_.4} parent=5 // pred_region
      %s139 = ssub.s32 %s10, 1
      // Predicated region
      $region13: #{_lambda_.4} parent=11 // pred_check
        %p140 = pneg %p57
      $region14: #{_lambda_.4} parent=11 // pred_check_branch
        %142 = sbr.rel (%p140) target = $region16
      $region15: #{_lambda_.4} parent=11 // pred_region
        _
      $region16: #{_lambda_.4} parent=11 // pred_fallthru
        _
      // Predicated region
      $region17: #{_lambda_.4} parent=11 // pred_check
        %p143 = pneg %p78
      $region18: #{_lambda_.4} parent=11 // pred_check_branch
        %145 = sbr.rel (%p143) target = $region20
      $region19: #{_lambda_.4} parent=11 // pred_region
        _
      $region20: #{_lambda_.4} parent=11 // pred_fallthru
        _
      // Predicated region
      $region21: #{_lambda_.4} parent=11 // pred_check
        %p146 = pneg %p99
      $region22: #{_lambda_.4} parent=11 // pred_check_branch
        %148 = sbr.rel (%p146) target = $region24
      $region23: #{_lambda_.4} parent=11 // pred_region
        _
      $region24: #{_lambda_.4} parent=11 // pred_fallthru
        _
    $region12: #{_lambda_.4} parent=5 // pred_fallthru
      _
    %p149 = scmp.lt.s32.totalorder %s10, 2
    // Predicated region
    $region25: #{_lambda_.4} parent=5 // pred_check
      %p150 = pneg %p149
    $region26: #{_lambda_.4} parent=5 // pred_check_branch
      %152 = sbr.rel (%p150) target = $region28
    $region27: #{_lambda_.4} parent=5 // pred_region
      // Predicated region
      $region29: #{_lambda_.4} parent=27 // pred_check
        %p153 = pneg %p30
      $region30: #{_lambda_.4} parent=27 // pred_check_branch
        %155 = sbr.rel (%p153) target = $region32
      $region31: #{_lambda_.4} parent=27 // pred_region
        %p156 = scmp.lt.s32.totalorder %s10, 1
        %s157 = scalar_select %p156, %s10, 1
        %s158 = smul.addr %s157, 38
        %s159 = smul.addr %s158, 4
        %s160 = scalar_lea.vmem %s0, %s159
      $region32: #{_lambda_.4} parent=27 // pred_fallthru
        _
    $region28: #{_lambda_.4} parent=5 // pred_fallthru
      _
    %p161 = scmp.le.s32.totalorder 1, %s10
    %p162 = scmp.lt.s32.totalorder %s10, 3
    %p163 = pnand %p161, %p162
    %p164 = pneg %p163
    // Predicated region
    $region33: #{_lambda_.4} parent=5 // pred_check
      _
    $region34: #{_lambda_.4} parent=5 // pred_check_branch
      %166 = sbr.rel (%p163) target = $region36
    $region35: #{_lambda_.4} parent=5 // pred_region
      %s167 = ssub.s32 %s10, 1
      %p168 = scmp.lt.s32.totalorder %s15, 1
      %s169 = scalar_select %p168, %s15, 1
      %s170 = smul.addr %s169, 38
      %s171 = smul.addr %s170, 4
      %s172 = scalar_lea.vmem %s0, %s171
      %p173 = pneg %p36
      %p174 = pneg %p33
      %p175 = pneg %p57
      %p176 = pneg %p54
      %p177 = pneg %p78
      %p178 = pneg %p75
      %p179 = pneg %p99
      %p180 = pneg %p96
      %p181 = pneg %p125
      %p182 = pneg %p122
      %p183 = scmp.lt.s32.totalorder %s15, 1
      %s184 = scalar_select %p183, %s15, 1
      %s185 = smul.addr %s184, 2
      %s186 = smul.addr %s185, 8
      %s187 = scalar_lea.vmem %s4, %s186
      %p188 = scmp.lt.s32.totalorder %s15, 1
      %s189 = scalar_select %p188, %s15, 1
      %s190 = smul.addr %s189, 38
      %s191 = smul.addr %s190, 4
      %s192 = scalar_lea.vmem %s0, %s191
      %p193 = scmp.lt.s32.totalorder %s15, 1
      %s194 = scalar_select %p193, %s15, 1
      %s195 = smul.addr %s194, 2
      %s196 = smul.addr %s195, 8
      %s197 = scalar_lea.vmem %s4, %s196
      %199 = vst [vmem:[#allocation2] sm:$0x7] 0.0
      %vm200 = vcmask 174080
      %201 = vst.msk [vmem:[#allocation2 + $0x8] sm:$0x7] %vm200, 0.0
      %202 = vst [vmem:[#allocation2 + $0x20] sm:$0xc0] 0.0
      %vm203 = vcmask 179206
      %204 = vst.msk [vmem:[#allocation2 + $0x28] sm:$0xc0] %vm203, 0.0
      %205 = vst [vmem:[#allocation2 + $0x30] sm:$0x3] 0.0
      %vm206 = vcmask 173056
      %207 = vst.msk [vmem:[#allocation2 + $0x38] sm:$0x3] %vm206, 0.0
      %v208 = vld [vmem:[%s192] sm:$0x77]
      %v209 = vunpack.c.l.bf16 %v208
      %v210 = vunpack.c.h.bf16 %v208
      %vm211 = vcmask 1045504
      %v212 = vsel %vm211, %v209, -inf
      %v213 = vrot.slane %v212, 4
      %v214 = vmax.f32 %v212, %v213
      %v215 = vrot.slane %v214, 2
      %v216 = vmax.f32 %v214, %v215
      %v217 = vrot.slane %v216, 1
      %v218 = vmax.f32 %v216, %v217
      %vm219 = vcmask 177152
      %v220 = vsel %vm219, %v210, -inf
      %v221 = vrot.slane %v220, 4
      %v222 = vmax.f32 %v220, %v221
      %v223 = vrot.slane %v222, 2
      %v224 = vmax.f32 %v222, %v223
      %v225 = vrot.slane %v224, 1
      %v226 = vmax.f32 %v224, %v225
      %v229 = vrot.slane %v226, 7
      %vm230 = vcmask 1040384
      %v231 = vsel %vm230, %v218, %v229
      %v233 = vlaneseq
      %vm234 = vcmp.ge.s32.totalorder %v233, 0
      %vm235 = vcmp.lt.s32.totalorder %v233, 150
      %vm236 = vmand %vm234, %vm235
      %s237 = scalar_lea.vmem [#allocation2], 3
      %238 = vst.msk [vmem:[%s237] ss:$8 sm:$0x3] %vm236, %v231
      %239 = vst.msk [vmem:[%s237] ss:$8 sm:$0x0] %vm236, %v231
      %v240 = vld [vmem:[%s192] sm:$0x88]
      %v241 = vld [vmem:[%s192 + $0x8] sm:$0x77]
      %v242 = vunpack.c.l.bf16 %v240
      %v243 = vunpack.c.h.bf16 %v240
      %v244 = vunpack.c.l.bf16 %v241
      %v245 = vunpack.c.h.bf16 %v241
      %vm246 = vcmask 1047558
      %v247 = vsel %vm246, %v242, -inf
      %v248 = vsel %vm211, %v244, -inf
      %v249 = vmax.f32 %v247, %v248
      %v250 = vrot.slane %v249, 4
      %v251 = vmax.f32 %v249, %v250
      %v252 = vrot.slane %v251, 2
      %v253 = vmax.f32 %v251, %v252
      %v254 = vrot.slane %v253, 1
      %v255 = vmax.f32 %v253, %v254
      %v256 = vsel %vm203, %v243, -inf
      %v257 = vsel %vm219, %v245, -inf
      %v258 = vmax.f32 %v256, %v257
      %v259 = vrot.slane %v258, 4
      %v260 = vmax.f32 %v258, %v259
      %v261 = vrot.slane %v260, 2
      %v262 = vmax.f32 %v260, %v261
      %v263 = vrot.slane %v262, 1
      %v264 = vmax.f32 %v262, %v263
      %v267 = vrot.slane %v264, 7
      %v268 = vsel %vm230, %v255, %v267
      %s270 = scalar_lea.vmem [#allocation2], 4
      %271 = vst.msk [vmem:[%s270] ss:$8 sm:$0x3] %vm236, %v268
      %272 = vst.msk [vmem:[%s270] ss:$8 sm:$0x0] %vm236, %v268
      %v273 = vld [vmem:[%s192 + $0x8] sm:$0x88]
      %v274 = vld [vmem:[%s192 + $0x10] sm:$0x77]
      %v275 = vunpack.c.l.bf16 %v273
      %v276 = vunpack.c.h.bf16 %v273
      %v277 = vunpack.c.l.bf16 %v274
      %v278 = vunpack.c.h.bf16 %v274
      %v279 = vsel %vm246, %v275, -inf
      %v280 = vsel %vm211, %v277, -inf
      %v281 = vmax.f32 %v279, %v280
      %v282 = vrot.slane %v281, 4
      %v283 = vmax.f32 %v281, %v282
      %v284 = vrot.slane %v283, 2
      %v285 = vmax.f32 %v283, %v284
      %v286 = vrot.slane %v285, 1
      %v287 = vmax.f32 %v285, %v286
      %v288 = vsel %vm203, %v276, -inf
      %v289 = vsel %vm219, %v278, -inf
      %v290 = vmax.f32 %v288, %v289
      %v291 = vrot.slane %v290, 4
      %v292 = vmax.f32 %v290, %v291
      %v293 = vrot.slane %v292, 2
      %v294 = vmax.f32 %v292, %v293
      %v295 = vrot.slane %v294, 1
      %v296 = vmax.f32 %v294, %v295
      %v299 = vrot.slane %v296, 7
      %v300 = vsel %vm230, %v287, %v299
      %s302 = scalar_lea.vmem [#allocation2], 5
      %303 = vst.msk [vmem:[%s302] ss:$8 sm:$0x3] %vm236, %v300
      %304 = vst.msk [vmem:[%s302] ss:$8 sm:$0x0] %vm236, %v300
      %v305 = vld [vmem:[%s192 + $0x10] sm:$0x88]
      %v306 = vld [vmem:[%s192 + $0x18] sm:$0x77]
      %v307 = vunpack.c.l.bf16 %v305
      %v308 = vunpack.c.h.bf16 %v305
      %v309 = vunpack.c.l.bf16 %v306
      %v310 = vunpack.c.h.bf16 %v306
      %v311 = vsel %vm246, %v307, -inf
      %v312 = vsel %vm211, %v309, -inf
      %v313 = vmax.f32 %v311, %v312
      %v314 = vrot.slane %v313, 4
      %v315 = vmax.f32 %v313, %v314
      %v316 = vrot.slane %v315, 2
      %v317 = vmax.f32 %v315, %v316
      %v318 = vrot.slane %v317, 1
      %v319 = vmax.f32 %v317, %v318
      %v320 = vsel %vm203, %v308, -inf
      %v321 = vsel %vm219, %v310, -inf
      %v322 = vmax.f32 %v320, %v321
      %v323 = vrot.slane %v322, 4
      %v324 = vmax.f32 %v322, %v323
      %v325 = vrot.slane %v324, 2
      %v326 = vmax.f32 %v324, %v325
      %v327 = vrot.slane %v326, 1
      %v328 = vmax.f32 %v326, %v327
      %v331 = vrot.slane %v328, 7
      %v332 = vsel %vm230, %v319, %v331
      %s334 = scalar_lea.vmem [#allocation2], 6
      %335 = vst.msk [vmem:[%s334] ss:$8 sm:$0x3] %vm236, %v332
      %336 = vst.msk [vmem:[%s334] ss:$8 sm:$0x0] %vm236, %v332
      %v337 = vld [vmem:[%s192 + $0x18] sm:$0x88]
      %v338 = vld [vmem:[%s192 + $0x20] sm:$0x77]
      %v339 = vunpack.c.l.bf16 %v337
      %v340 = vunpack.c.h.bf16 %v337
      %v341 = vunpack.c.l.bf16 %v338
      %v342 = vunpack.c.h.bf16 %v338
      %v343 = vsel %vm246, %v339, -inf
      %v344 = vsel %vm211, %v341, -inf
      %v345 = vmax.f32 %v343, %v344
      %v346 = vrot.slane %v345, 4
      %v347 = vmax.f32 %v345, %v346
      %v348 = vrot.slane %v347, 2
      %v349 = vmax.f32 %v347, %v348
      %v350 = vrot.slane %v349, 1
      %v351 = vmax.f32 %v349, %v350
      %v352 = vsel %vm203, %v340, -inf
      %v353 = vsel %vm219, %v342, -inf
      %v354 = vmax.f32 %v352, %v353
      %v355 = vrot.slane %v354, 4
      %v356 = vmax.f32 %v354, %v355
      %v357 = vrot.slane %v356, 2
      %v358 = vmax.f32 %v356, %v357
      %v359 = vrot.slane %v358, 1
      %v360 = vmax.f32 %v358, %v359
      %v363 = vrot.slane %v360, 7
      %v364 = vsel %vm230, %v351, %v363
      %s366 = scalar_lea.vmem [#allocation2], 7
      %367 = vst.msk [vmem:[%s366] ss:$8 sm:$0x3] %vm236, %v364
      %368 = vst.msk [vmem:[%s366] ss:$8 sm:$0x0] %vm236, %v364
      %v369 = vld [vmem:[%s192 + $0x20] sm:$0x88]
      %v370 = vld [vmem:[%s192 + $0x28] sm:$0x77]
      %v371 = vunpack.c.l.bf16 %v369
      %v372 = vunpack.c.h.bf16 %v369
      %v373 = vunpack.c.l.bf16 %v370
      %v374 = vunpack.c.h.bf16 %v370
      %v375 = vsel %vm246, %v371, -inf
      %v376 = vsel %vm211, %v373, -inf
      %v377 = vmax.f32 %v375, %v376
      %v378 = vrot.slane %v377, 4
      %v379 = vmax.f32 %v377, %v378
      %v380 = vrot.slane %v379, 2
      %v381 = vmax.f32 %v379, %v380
      %v382 = vrot.slane %v381, 1
      %v383 = vmax.f32 %v381, %v382
      %v384 = vsel %vm203, %v372, -inf
      %v385 = vsel %vm219, %v374, -inf
      %v386 = vmax.f32 %v384, %v385
      %v387 = vrot.slane %v386, 4
      %v388 = vmax.f32 %v386, %v387
      %v389 = vrot.slane %v388, 2
      %v390 = vmax.f32 %v388, %v389
      %v391 = vrot.slane %v390, 1
      %v392 = vmax.f32 %v390, %v391
      %v395 = vrot.slane %v392, 7
      %v396 = vsel %vm230, %v383, %v395
      %s398 = scalar_lea.vmem [#allocation2], 16
      %399 = vst.msk [vmem:[%s398] ss:$8 sm:$0x3] %vm236, %v396
      %400 = vst.msk [vmem:[%s398] ss:$8 sm:$0x0] %vm236, %v396
      %v401 = vld [vmem:[%s192 + $0x28] sm:$0x88]
      %v402 = vld [vmem:[%s192 + $0x30] sm:$0x77]
      %v403 = vunpack.c.l.bf16 %v401
      %v404 = vunpack.c.h.bf16 %v401
      %v405 = vunpack.c.l.bf16 %v402
      %v406 = vunpack.c.h.bf16 %v402
      %v407 = vsel %vm246, %v403, -inf
      %v408 = vsel %vm211, %v405, -inf
      %v409 = vmax.f32 %v407, %v408
      %v410 = vrot.slane %v409, 4
      %v411 = vmax.f32 %v409, %v410
      %v412 = vrot.slane %v411, 2
      %v413 = vmax.f32 %v411, %v412
      %v414 = vrot.slane %v413, 1
      %v415 = vmax.f32 %v413, %v414
      %v416 = vsel %vm203, %v404, -inf
      %v417 = vsel %vm219, %v406, -inf
      %v418 = vmax.f32 %v416, %v417
      %v419 = vrot.slane %v418, 4
      %v420 = vmax.f32 %v418, %v419
      %v421 = vrot.slane %v420, 2
      %v422 = vmax.f32 %v420, %v421
      %v423 = vrot.slane %v422, 1
      %v424 = vmax.f32 %v422, %v423
      %v427 = vrot.slane %v424, 7
      %v428 = vsel %vm230, %v415, %v427
      %s430 = scalar_lea.vmem [#allocation2], 17
      %431 = vst.msk [vmem:[%s430] ss:$8 sm:$0x3] %vm236, %v428
      %432 = vst.msk [vmem:[%s430] ss:$8 sm:$0x0] %vm236, %v428
      %v433 = vld [vmem:[%s192 + $0x30] sm:$0x88]
      %v434 = vld [vmem:[%s192 + $0x38] sm:$0x77]
      %v435 = vunpack.c.l.bf16 %v433
      %v436 = vunpack.c.h.bf16 %v433
      %v437 = vunpack.c.l.bf16 %v434
      %v438 = vunpack.c.h.bf16 %v434
      %v439 = vsel %vm246, %v435, -inf
      %v440 = vsel %vm211, %v437, -inf
      %v441 = vmax.f32 %v439, %v440
      %v442 = vrot.slane %v441, 4
      %v443 = vmax.f32 %v441, %v442
      %v444 = vrot.slane %v443, 2
      %v445 = vmax.f32 %v443, %v444
      %v446 = vrot.slane %v445, 1
      %v447 = vmax.f32 %v445, %v446
      %v448 = vsel %vm203, %v436, -inf
      %v449 = vsel %vm219, %v438, -inf
      %v450 = vmax.f32 %v448, %v449
      %v451 = vrot.slane %v450, 4
      %v452 = vmax.f32 %v450, %v451
      %v453 = vrot.slane %v452, 2
      %v454 = vmax.f32 %v452, %v453
      %v455 = vrot.slane %v454, 1
      %v456 = vmax.f32 %v454, %v455
      %v459 = vrot.slane %v456, 7
      %v460 = vsel %vm230, %v447, %v459
      %s462 = scalar_lea.vmem [#allocation2], 18
      %463 = vst.msk [vmem:[%s462] ss:$8 sm:$0x3] %vm236, %v460
      %464 = vst.msk [vmem:[%s462] ss:$8 sm:$0x0] %vm236, %v460
      %v465 = vld [vmem:[%s192 + $0x38] sm:$0x88]
      %v466 = vld [vmem:[%s192 + $0x40] sm:$0x77]
      %v467 = vunpack.c.l.bf16 %v465
      %v468 = vunpack.c.h.bf16 %v465
      %v469 = vunpack.c.l.bf16 %v466
      %v470 = vunpack.c.h.bf16 %v466
      %v471 = vsel %vm246, %v467, -inf
      %v472 = vsel %vm211, %v469, -inf
      %v473 = vmax.f32 %v471, %v472
      %v474 = vrot.slane %v473, 4
      %v475 = vmax.f32 %v473, %v474
      %v476 = vrot.slane %v475, 2
      %v477 = vmax.f32 %v475, %v476
      %v478 = vrot.slane %v477, 1
      %v479 = vmax.f32 %v477, %v478
      %v480 = vsel %vm203, %v468, -inf
      %v481 = vsel %vm219, %v470, -inf
      %v482 = vmax.f32 %v480, %v481
      %v483 = vrot.slane %v482, 4
      %v484 = vmax.f32 %v482, %v483
      %v485 = vrot.slane %v484, 2
      %v486 = vmax.f32 %v484, %v485
      %v487 = vrot.slane %v486, 1
      %v488 = vmax.f32 %v486, %v487
      %v491 = vrot.slane %v488, 7
      %v492 = vsel %vm230, %v479, %v491
      %s494 = scalar_lea.vmem [#allocation2], 19
      %495 = vst.msk [vmem:[%s494] ss:$8 sm:$0x3] %vm236, %v492
      %496 = vst.msk [vmem:[%s494] ss:$8 sm:$0x0] %vm236, %v492
      %v497 = vld [vmem:[%s192 + $0x40] sm:$0x88]
      %v498 = vld [vmem:[%s192 + $0x48] sm:$0x77]
      %v499 = vunpack.c.l.bf16 %v497
      %v500 = vunpack.c.h.bf16 %v497
      %v501 = vunpack.c.l.bf16 %v498
      %v502 = vunpack.c.h.bf16 %v498
      %v503 = vsel %vm246, %v499, -inf
      %v504 = vsel %vm211, %v501, -inf
      %v505 = vmax.f32 %v503, %v504
      %v506 = vrot.slane %v505, 4
      %v507 = vmax.f32 %v505, %v506
      %v508 = vrot.slane %v507, 2
      %v509 = vmax.f32 %v507, %v508
      %v510 = vrot.slane %v509, 1
      %v511 = vmax.f32 %v509, %v510
      %v512 = vsel %vm203, %v500, -inf
      %v513 = vsel %vm219, %v502, -inf
      %v514 = vmax.f32 %v512, %v513
      %v515 = vrot.slane %v514, 4
      %v516 = vmax.f32 %v514, %v515
      %v517 = vrot.slane %v516, 2
      %v518 = vmax.f32 %v516, %v517
      %v519 = vrot.slane %v518, 1
      %v520 = vmax.f32 %v518, %v519
      %v523 = vrot.slane %v520, 7
      %v524 = vsel %vm230, %v511, %v523
      %s526 = scalar_lea.vmem [#allocation2], 20
      %527 = vst.msk [vmem:[%s526] ss:$8 sm:$0x3] %vm236, %v524
      %528 = vst.msk [vmem:[%s526] ss:$8 sm:$0x0] %vm236, %v524
      %v529 = vld [vmem:[%s192 + $0x48] sm:$0x88]
      %v530 = vld [vmem:[%s192 + $0x50] sm:$0x77]
      %v531 = vunpack.c.l.bf16 %v529
      %v532 = vunpack.c.h.bf16 %v529
      %v533 = vunpack.c.l.bf16 %v530
      %v534 = vunpack.c.h.bf16 %v530
      %v535 = vsel %vm246, %v531, -inf
      %v536 = vsel %vm211, %v533, -inf
      %v537 = vmax.f32 %v535, %v536
      %v538 = vrot.slane %v537, 4
      %v539 = vmax.f32 %v537, %v538
      %v540 = vrot.slane %v539, 2
      %v541 = vmax.f32 %v539, %v540
      %v542 = vrot.slane %v541, 1
      %v543 = vmax.f32 %v541, %v542
      %v544 = vsel %vm203, %v532, -inf
      %v545 = vsel %vm219, %v534, -inf
      %v546 = vmax.f32 %v544, %v545
      %v547 = vrot.slane %v546, 4
      %v548 = vmax.f32 %v546, %v547
      %v549 = vrot.slane %v548, 2
      %v550 = vmax.f32 %v548, %v549
      %v551 = vrot.slane %v550, 1
      %v552 = vmax.f32 %v550, %v551
      %v555 = vrot.slane %v552, 7
      %v556 = vsel %vm230, %v543, %v555
      %s558 = scalar_lea.vmem [#allocation2], 21
      %559 = vst.msk [vmem:[%s558] ss:$8 sm:$0x3] %vm236, %v556
      %560 = vst.msk [vmem:[%s558] ss:$8 sm:$0x0] %vm236, %v556
      %v561 = vld [vmem:[%s192 + $0x50] sm:$0x88]
      %v562 = vld [vmem:[%s192 + $0x58] sm:$0x77]
      %v563 = vunpack.c.l.bf16 %v561
      %v564 = vunpack.c.h.bf16 %v561
      %v565 = vunpack.c.l.bf16 %v562
      %v566 = vunpack.c.h.bf16 %v562
      %v567 = vsel %vm246, %v563, -inf
      %v568 = vsel %vm211, %v565, -inf
      %v569 = vmax.f32 %v567, %v568
      %v570 = vrot.slane %v569, 4
      %v571 = vmax.f32 %v569, %v570
      %v572 = vrot.slane %v571, 2
      %v573 = vmax.f32 %v571, %v572
      %v574 = vrot.slane %v573, 1
      %v575 = vmax.f32 %v573, %v574
      %v576 = vsel %vm203, %v564, -inf
      %v577 = vsel %vm219, %v566, -inf
      %v578 = vmax.f32 %v576, %v577
      %v579 = vrot.slane %v578, 4
      %v580 = vmax.f32 %v578, %v579
      %v581 = vrot.slane %v580, 2
      %v582 = vmax.f32 %v580, %v581
      %v583 = vrot.slane %v582, 1
      %v584 = vmax.f32 %v582, %v583
      %v587 = vrot.slane %v584, 7
      %v588 = vsel %vm230, %v575, %v587
      %s590 = scalar_lea.vmem [#allocation2], 22
      %591 = vst.msk [vmem:[%s590] ss:$8 sm:$0x3] %vm236, %v588
      %592 = vst.msk [vmem:[%s590] ss:$8 sm:$0x0] %vm236, %v588
      %v593 = vld [vmem:[%s192 + $0x58] sm:$0x88]
      %v594 = vld [vmem:[%s192 + $0x60] sm:$0x77]
      %v595 = vunpack.c.l.bf16 %v593
      %v596 = vunpack.c.h.bf16 %v593
      %v597 = vunpack.c.l.bf16 %v594
      %v598 = vunpack.c.h.bf16 %v594
      %v599 = vsel %vm246, %v595, -inf
      %v600 = vsel %vm211, %v597, -inf
      %v601 = vmax.f32 %v599, %v600
      %v602 = vrot.slane %v601, 4
      %v603 = vmax.f32 %v601, %v602
      %v604 = vrot.slane %v603, 2
      %v605 = vmax.f32 %v603, %v604
      %v606 = vrot.slane %v605, 1
      %v607 = vmax.f32 %v605, %v606
      %v608 = vsel %vm203, %v596, -inf
      %v609 = vsel %vm219, %v598, -inf
      %v610 = vmax.f32 %v608, %v609
      %v611 = vrot.slane %v610, 4
      %v612 = vmax.f32 %v610, %v611
      %v613 = vrot.slane %v612, 2
      %v614 = vmax.f32 %v612, %v613
      %v615 = vrot.slane %v614, 1
      %v616 = vmax.f32 %v614, %v615
      %v619 = vrot.slane %v616, 7
      %v620 = vsel %vm230, %v607, %v619
      %s622 = scalar_lea.vmem [#allocation2], 23
      %623 = vst.msk [vmem:[%s622] ss:$8 sm:$0x3] %vm236, %v620
      %624 = vst.msk [vmem:[%s622] ss:$8 sm:$0x0] %vm236, %v620
      %v625 = vld [vmem:[%s192 + $0x60] sm:$0x88]
      %v626 = vld [vmem:[%s192 + $0x68] sm:$0x77]
      %v627 = vunpack.c.l.bf16 %v625
      %v628 = vunpack.c.h.bf16 %v625
      %v629 = vunpack.c.l.bf16 %v626
      %v630 = vunpack.c.h.bf16 %v626
      %v631 = vsel %vm246, %v627, -inf
      %v632 = vsel %vm211, %v629, -inf
      %v633 = vmax.f32 %v631, %v632
      %v634 = vrot.slane %v633, 4
      %v635 = vmax.f32 %v633, %v634
      %v636 = vrot.slane %v635, 2
      %v637 = vmax.f32 %v635, %v636
      %v638 = vrot.slane %v637, 1
      %v639 = vmax.f32 %v637, %v638
      %v640 = vsel %vm203, %v628, -inf
      %v641 = vsel %vm219, %v630, -inf
      %v642 = vmax.f32 %v640, %v641
      %v643 = vrot.slane %v642, 4
      %v644 = vmax.f32 %v642, %v643
      %v645 = vrot.slane %v644, 2
      %v646 = vmax.f32 %v644, %v645
      %v647 = vrot.slane %v646, 1
      %v648 = vmax.f32 %v646, %v647
      %v651 = vrot.slane %v648, 7
      %v652 = vsel %vm230, %v639, %v651
      %s654 = scalar_lea.vmem [#allocation2], 32
      %655 = vst.msk [vmem:[%s654] ss:$8 sm:$0x3] %vm236, %v652
      %656 = vst.msk [vmem:[%s654] ss:$8 sm:$0x0] %vm236, %v652
      %v657 = vld [vmem:[%s192 + $0x68] sm:$0x88]
      %v658 = vld [vmem:[%s192 + $0x70] sm:$0x77]
      %v659 = vunpack.c.l.bf16 %v657
      %v660 = vunpack.c.h.bf16 %v657
      %v661 = vunpack.c.l.bf16 %v658
      %v662 = vunpack.c.h.bf16 %v658
      %v663 = vsel %vm246, %v659, -inf
      %v664 = vsel %vm211, %v661, -inf
      %v665 = vmax.f32 %v663, %v664
      %v666 = vrot.slane %v665, 4
      %v667 = vmax.f32 %v665, %v666
      %v668 = vrot.slane %v667, 2
      %v669 = vmax.f32 %v667, %v668
      %v670 = vrot.slane %v669, 1
      %v671 = vmax.f32 %v669, %v670
      %v672 = vsel %vm203, %v660, -inf
      %v673 = vsel %vm219, %v662, -inf
      %v674 = vmax.f32 %v672, %v673
      %v675 = vrot.slane %v674, 4
      %v676 = vmax.f32 %v674, %v675
      %v677 = vrot.slane %v676, 2
      %v678 = vmax.f32 %v676, %v677
      %v679 = vrot.slane %v678, 1
      %v680 = vmax.f32 %v678, %v679
      %v683 = vrot.slane %v680, 7
      %v684 = vsel %vm230, %v671, %v683
      %s686 = scalar_lea.vmem [#allocation2], 33
      %687 = vst.msk [vmem:[%s686] ss:$8 sm:$0x3] %vm236, %v684
      %688 = vst.msk [vmem:[%s686] ss:$8 sm:$0x0] %vm236, %v684
      %v689 = vld [vmem:[%s192 + $0x70] sm:$0x88]
      %v690 = vld [vmem:[%s192 + $0x78] sm:$0x77]
      %v691 = vunpack.c.l.bf16 %v689
      %v692 = vunpack.c.h.bf16 %v689
      %v693 = vunpack.c.l.bf16 %v690
      %v694 = vunpack.c.h.bf16 %v690
      %v695 = vsel %vm246, %v691, -inf
      %v696 = vsel %vm211, %v693, -inf
      %v697 = vmax.f32 %v695, %v696
      %v698 = vrot.slane %v697, 4
      %v699 = vmax.f32 %v697, %v698
      %v700 = vrot.slane %v699, 2
      %v701 = vmax.f32 %v699, %v700
      %v702 = vrot.slane %v701, 1
      %v703 = vmax.f32 %v701, %v702
      %v704 = vsel %vm203, %v692, -inf
      %v705 = vsel %vm219, %v694, -inf
      %v706 = vmax.f32 %v704, %v705
      %v707 = vrot.slane %v706, 4
      %v708 = vmax.f32 %v706, %v707
      %v709 = vrot.slane %v708, 2
      %v710 = vmax.f32 %v708, %v709
      %v711 = vrot.slane %v710, 1
      %v712 = vmax.f32 %v710, %v711
      %v715 = vrot.slane %v712, 7
      %v716 = vsel %vm230, %v703, %v715
      %s718 = scalar_lea.vmem [#allocation2], 34
      %719 = vst.msk [vmem:[%s718] ss:$8 sm:$0x3] %vm236, %v716
      %720 = vst.msk [vmem:[%s718] ss:$8 sm:$0x0] %vm236, %v716
      %v721 = vld [vmem:[%s192 + $0x78] sm:$0x88]
      %v722 = vld [vmem:[%s192 + $0x80] sm:$0x77]
      %v723 = vunpack.c.l.bf16 %v721
      %v724 = vunpack.c.h.bf16 %v721
      %v725 = vunpack.c.l.bf16 %v722
      %v726 = vunpack.c.h.bf16 %v722
      %v727 = vsel %vm246, %v723, -inf
      %v728 = vsel %vm211, %v725, -inf
      %v729 = vmax.f32 %v727, %v728
      %v730 = vrot.slane %v729, 4
      %v731 = vmax.f32 %v729, %v730
      %v732 = vrot.slane %v731, 2
      %v733 = vmax.f32 %v731, %v732
      %v734 = vrot.slane %v733, 1
      %v735 = vmax.f32 %v733, %v734
      %v736 = vsel %vm203, %v724, -inf
      %v737 = vsel %vm219, %v726, -inf
      %v738 = vmax.f32 %v736, %v737
      %v739 = vrot.slane %v738, 4
      %v740 = vmax.f32 %v738, %v739
      %v741 = vrot.slane %v740, 2
      %v742 = vmax.f32 %v740, %v741
      %v743 = vrot.slane %v742, 1
      %v744 = vmax.f32 %v742, %v743
      %v747 = vrot.slane %v744, 7
      %v748 = vsel %vm230, %v735, %v747
      %s750 = scalar_lea.vmem [#allocation2], 35
      %751 = vst.msk [vmem:[%s750] ss:$8 sm:$0x3] %vm236, %v748
      %752 = vst.msk [vmem:[%s750] ss:$8 sm:$0x0] %vm236, %v748
      %v753 = vld [vmem:[%s192 + $0x80] sm:$0x88]
      %v754 = vld [vmem:[%s192 + $0x88] sm:$0x77]
      %v755 = vunpack.c.l.bf16 %v753
      %v756 = vunpack.c.h.bf16 %v753
      %v757 = vunpack.c.l.bf16 %v754
      %v758 = vunpack.c.h.bf16 %v754
      %v759 = vsel %vm246, %v755, -inf
      %v760 = vsel %vm211, %v757, -inf
      %v761 = vmax.f32 %v759, %v760
      %v762 = vrot.slane %v761, 4
      %v763 = vmax.f32 %v761, %v762
      %v764 = vrot.slane %v763, 2
      %v765 = vmax.f32 %v763, %v764
      %v766 = vrot.slane %v765, 1
      %v767 = vmax.f32 %v765, %v766
      %v768 = vsel %vm203, %v756, -inf
      %v769 = vsel %vm219, %v758, -inf
      %v770 = vmax.f32 %v768, %v769
      %v771 = vrot.slane %v770, 4
      %v772 = vmax.f32 %v770, %v771
      %v773 = vrot.slane %v772, 2
      %v774 = vmax.f32 %v772, %v773
      %v775 = vrot.slane %v774, 1
      %v776 = vmax.f32 %v774, %v775
      %v779 = vrot.slane %v776, 7
      %v780 = vsel %vm230, %v767, %v779
      %s782 = scalar_lea.vmem [#allocation2], 36
      %783 = vst.msk [vmem:[%s782] ss:$8 sm:$0x3] %vm236, %v780
      %784 = vst.msk [vmem:[%s782] ss:$8 sm:$0x0] %vm236, %v780
      %v785 = vld [vmem:[%s192 + $0x88] sm:$0x88]
      %v786 = vld [vmem:[%s192 + $0x90] sm:$0x77]
      %v787 = vunpack.c.l.bf16 %v785
      %v788 = vunpack.c.h.bf16 %v785
      %v789 = vunpack.c.l.bf16 %v786
      %v790 = vunpack.c.h.bf16 %v786
      %v791 = vsel %vm246, %v787, -inf
      %vm792 = vcmask 1044480
      %v793 = vsel %vm792, %v789, -inf
      %v794 = vmax.f32 %v791, %v793
      %v795 = vrot.slane %v794, 4
      %v796 = vmax.f32 %v794, %v795
      %v797 = vrot.slane %v796, 2
      %v798 = vmax.f32 %v796, %v797
      %v799 = vrot.slane %v798, 1
      %v800 = vmax.f32 %v798, %v799
      %v801 = vsel %vm203, %v788, -inf
      %vm802 = vcmask 176128
      %v803 = vsel %vm802, %v790, -inf
      %v804 = vmax.f32 %v801, %v803
      %v805 = vrot.slane %v804, 4
      %v806 = vmax.f32 %v804, %v805
      %v807 = vrot.slane %v806, 2
      %v808 = vmax.f32 %v806, %v807
      %v809 = vrot.slane %v808, 1
      %v810 = vmax.f32 %v808, %v809
      %v813 = vrot.slane %v810, 7
      %v814 = vsel %vm230, %v800, %v813
      %s816 = scalar_lea.vmem [#allocation2], 37
      %817 = vst.msk [vmem:[%s816] ss:$8 sm:$0x3] %vm236, %v814
      %818 = vst.msk [vmem:[%s816] ss:$8 sm:$0x0] %vm236, %v814
      %v819 = vld [vmem:[#allocation2] sm:$0xff]
      %v820 = vld [vmem:[#allocation2 + $0x8] sm:$0xff]
      %v821 = vld [vmem:[#allocation2 + $0x10] sm:$0xff]
      %v822 = vld [vmem:[#allocation2 + $0x18] sm:$0xff]
      %v823 = vld [vmem:[#allocation2 + $0x20] sm:$0x7]
      %v824 = vld [vmem:[#allocation2 + $0x28] sm:$0x7]
      %v825 = vpack.c.bf16 %v821, %v819
      %v826 = vpack.c.bf16 %v822, %v820
      %v827 = vpack.c.bf16 %v823, %v823
      %v828 = vpack.c.bf16 %v824, %v824
      %v829 = vld [vmem:[%s1] sm:$0xff]
      %v830 = vld [vmem:[%s1 + $0x8] sm:$0xff]
      %v831 = vld [vmem:[%s1 + $0x10] sm:$0xff]
      %v832 = vld [vmem:[%s1 + $0x18] sm:$0xff]
      %v833 = vld [vmem:[%s1 + $0x20] sm:$0xff]
      %v834 = vld [vmem:[%s1 + $0x28] sm:$0xff]
      %v835 = vld [vmem:[%s1 + $0x30] sm:$0xff]
      %v836 = vld [vmem:[%s1 + $0x38] sm:$0xff]
      %v837 = vld [vmem:[%s1 + $0x40] sm:$0xff]
      %v838 = vld [vmem:[%s1 + $0x48] sm:$0xff]
      %v839 = vld [vmem:[%s1 + $0x50] sm:$0xff]
      %v840 = vld [vmem:[%s1 + $0x58] sm:$0xff]
      %v841 = vld [vmem:[%s1 + $0x60] sm:$0xff]
      %v842 = vld [vmem:[%s1 + $0x68] sm:$0xff]
      %v843 = vld [vmem:[%s1 + $0x70] sm:$0xff]
      %v844 = vld [vmem:[%s1 + $0x78] sm:$0xff]
      %v845 = vld [vmem:[%s1 + $0x80] sm:$0xff]
      %v846 = vld [vmem:[%s1 + $0x88] sm:$0xff]
      %v847 = vld [vmem:[%s1 + $0x90] sm:$0x77]
      %v848 = vld [vmem:[#allocation2] sm:$0xfe]
      %v849 = vld [vmem:[#allocation2 + $0x8] sm:$0xfe]
      %v850 = vld [vmem:[#allocation2 + $0x20] sm:$0xf]
      %v851 = vld [vmem:[#allocation2 + $0x28] sm:$0xf]
      %v852 = vpack.c.bf16 %v821, %v848
      %v853 = vpack.c.bf16 %v822, %v849
      %v854 = vpack.c.bf16 %v850, %v850
      %v855 = vpack.c.bf16 %v851, %v851
      %s856 = scalar_lea.vmem %s1, 152
      %v857 = vld [vmem:[%s856] sm:$0xff]
      %v858 = vld [vmem:[%s856 + $0x8] sm:$0xff]
      %v859 = vld [vmem:[%s856 + $0x10] sm:$0xff]
      %v860 = vld [vmem:[%s856 + $0x18] sm:$0xff]
      %v861 = vld [vmem:[%s856 + $0x20] sm:$0xff]
      %v862 = vld [vmem:[%s856 + $0x28] sm:$0xff]
      %v863 = vld [vmem:[%s856 + $0x30] sm:$0xff]
      %v864 = vld [vmem:[%s856 + $0x38] sm:$0xff]
      %v865 = vld [vmem:[%s856 + $0x40] sm:$0xff]
      %v866 = vld [vmem:[%s856 + $0x48] sm:$0xff]
      %v867 = vld [vmem:[%s856 + $0x50] sm:$0xff]
      %v868 = vld [vmem:[%s856 + $0x58] sm:$0xff]
      %v869 = vld [vmem:[%s856 + $0x60] sm:$0xff]
      %v870 = vld [vmem:[%s856 + $0x68] sm:$0xff]
      %v871 = vld [vmem:[%s856 + $0x70] sm:$0xff]
      %v872 = vld [vmem:[%s856 + $0x78] sm:$0xff]
      %v873 = vld [vmem:[%s856 + $0x80] sm:$0xff]
      %v874 = vld [vmem:[%s856 + $0x88] sm:$0xff]
      %v875 = vld [vmem:[%s856 + $0x90] sm:$0x77]
      %vm876 = vsmask.f32 7424
      %v878 = vshrl.u32 %v852, 16
      %v880 = vshll.u32 %v852, 16
      %v882 = vrot.slane %v880, 1
      %v883 = vor.u32 %v878, %v882
      %v885 = vshll.u32 %v854, 16
      %v887 = vrot.slane %v885, 1
      %v888 = vsel %vm876, %v883, %v887
      %v890 = vshrl.u32 %v853, 16
      %v892 = vshll.u32 %v853, 16
      %v894 = vrot.slane %v892, 1
      %v895 = vor.u32 %v890, %v894
      %v897 = vshll.u32 %v855, 16
      %v899 = vrot.slane %v897, 1
      %v900 = vsel %vm876, %v895, %v899
      %v901 = vshrl.u32 %v854, 16
      %v903 = vor.u32 %v901, %v887
      %v904 = vshrl.u32 %v855, 16
      %v906 = vor.u32 %v904, %v899
      %v928 = vunpack.c.l.b16 %v857
      %v929 = vunpack.c.h.b16 %v857
      %v930 = vunpack.c.l.b16 %v858
      %v931 = vunpack.c.h.b16 %v858
      %v932 = vunpack.c.l.b16 %v859
      %v933 = vunpack.c.h.b16 %v859
      %v934 = vunpack.c.l.b16 %v860
      %v935 = vunpack.c.h.b16 %v860
      %v936 = vunpack.c.l.b16 %v861
      %v937 = vunpack.c.h.b16 %v861
      %v938 = vunpack.c.l.b16 %v862
      %v939 = vunpack.c.h.b16 %v862
      %v940 = vunpack.c.l.b16 %v863
      %v941 = vunpack.c.h.b16 %v863
      %v942 = vunpack.c.l.b16 %v864
      %v943 = vunpack.c.h.b16 %v864
      %v944 = vunpack.c.l.b16 %v865
      %v945 = vunpack.c.h.b16 %v865
      %v946 = vunpack.c.l.b16 %v866
      %v947 = vunpack.c.h.b16 %v866
      %v948 = vunpack.c.l.b16 %v867
      %v949 = vunpack.c.h.b16 %v867
      %v950 = vunpack.c.l.b16 %v868
      %v951 = vunpack.c.h.b16 %v868
      %v952 = vunpack.c.l.b16 %v869
      %v953 = vunpack.c.h.b16 %v869
      %v954 = vunpack.c.l.b16 %v870
      %v955 = vunpack.c.h.b16 %v870
      %v956 = vunpack.c.l.b16 %v871
      %v957 = vunpack.c.h.b16 %v871
      %v958 = vunpack.c.l.b16 %v872
      %v959 = vunpack.c.h.b16 %v872
      %v960 = vunpack.c.l.b16 %v873
      %v961 = vunpack.c.h.b16 %v873
      %v962 = vunpack.c.l.b16 %v874
      %v963 = vunpack.c.h.b16 %v874
      %v964 = vunpack.c.l.b16 %v875
      %v965 = vunpack.c.h.b16 %v875
      %v966 = vpack.c.b16 %v930, %v928
      %v967 = vpack.c.b16 %v931, %v929
      %v968 = vpack.c.b16 %v934, %v932
      %v969 = vpack.c.b16 %v935, %v933
      %v970 = vpack.c.b16 %v938, %v936
      %v971 = vpack.c.b16 %v939, %v937
      %v972 = vpack.c.b16 %v942, %v940
      %v973 = vpack.c.b16 %v943, %v941
      %v974 = vpack.c.b16 %v946, %v944
      %v975 = vpack.c.b16 %v947, %v945
      %v976 = vpack.c.b16 %v950, %v948
      %v977 = vpack.c.b16 %v951, %v949
      %v978 = vpack.c.b16 %v954, %v952
      %v979 = vpack.c.b16 %v955, %v953
      %v980 = vpack.c.b16 %v958, %v956
      %v981 = vpack.c.b16 %v959, %v957
      %v982 = vpack.c.b16 %v962, %v960
      %v983 = vpack.c.b16 %v963, %v961
      %v984 = vpack.c.b16 %v964, %v964
      %v985 = vpack.c.b16 %v965, %v965
      %vm1004 = vcmask 179200
      %v1006 = vsel %vm1004, %v900, 0
      %v1009 = vsel %vm1004, %v906, 0
      %vm1011 = vcmask 1042432
      %v1013 = vsel %vm1011, %v984, 0
      %v1016 = vsel %vm1011, %v985, 0
      %1018 = vmatpush.bf16.msra.mxu0 %v980
      %1019 = vmatpush.bf16.msra.mxu0 %v978
      %1020 = vmatpush.bf16.msra.mxu0 %v976
      %1021 = vmatpush.bf16.msra.mxu0 %v974
      %1022 = vmatpush.bf16.msra.mxu0 %v972
      %1023 = vmatpush.bf16.msra.mxu0 %v970
      %1024 = vmatpush.bf16.msra.mxu0 %v968
      %1025 = vmatpush.bf16.msra.mxu0 %v966
      %1026 = vmatmul.bf16.gmra.mxu0 %v888
      %v1027 = vpop.f32.mrf.mxu0
      %v1028 = vadd.f32 0.0, %v1027
      %v1029 = vpop.f32.mrf.mxu0
      %v1030 = vadd.f32 0.0, %v1029
      %1031 = vmatmul.bf16.gmra.mxu0 %v903
      %v1032 = vpop.f32.mrf.mxu0
      %v1033 = vadd.f32 0.0, %v1032
      %v1034 = vpop.f32.mrf.mxu0
      %1035 = vdwg.mxu0
      %1036 = vmatpush.bf16.msra.mxu0 0
      %1037 = vmatpush.bf16.msra.mxu0 0
      %1038 = vmatpush.bf16.msra.mxu0 0
      %1039 = vmatpush.bf16.msra.mxu0 0
      %1040 = vmatpush.bf16.msra.mxu0 0
      %1041 = vmatpush.bf16.msra.mxu0 0
      %1042 = vmatpush.bf16.msra.mxu0 %v1013
      %1043 = vmatpush.bf16.msra.mxu0 %v982
      %1044 = vmatmul.bf16.gmra.mxu0 %v1006
      %v1045 = vpop.f32.mrf.mxu0
      %v1046 = vadd.f32 %v1028, %v1045
      %v1047 = vpop.f32.mrf.mxu0
      %v1048 = vadd.f32 %v1030, %v1047
      %1049 = vmatmul.bf16.gmra.mxu0 %v1009
      %v1050 = vpop.f32.mrf.mxu0
      %v1051 = vadd.f32 %v1033, %v1050
      %v1052 = vpop.f32.mrf.mxu0
      %1053 = vdwg.mxu0
      %1054 = vmatpush.bf16.msra.mxu0 %v981
      %1055 = vmatpush.bf16.msra.mxu0 %v979
      %1056 = vmatpush.bf16.msra.mxu0 %v977
      %1057 = vmatpush.bf16.msra.mxu0 %v975
      %1058 = vmatpush.bf16.msra.mxu0 %v973
      %1059 = vmatpush.bf16.msra.mxu0 %v971
      %1060 = vmatpush.bf16.msra.mxu0 %v969
      %1061 = vmatpush.bf16.msra.mxu0 %v967
      %1062 = vmatmul.bf16.gmra.mxu0 %v888
      %v1063 = vpop.f32.mrf.mxu0
      %v1064 = vadd.f32 0.0, %v1063
      %v1065 = vpop.f32.mrf.mxu0
      %v1066 = vadd.f32 0.0, %v1065
      %1067 = vmatmul.bf16.gmra.mxu0 %v903
      %v1068 = vpop.f32.mrf.mxu0
      %v1069 = vadd.f32 0.0, %v1068
      %v1070 = vpop.f32.mrf.mxu0
      %1071 = vdwg.mxu0
      %1072 = vmatpush.bf16.msra.mxu0 0
      %1073 = vmatpush.bf16.msra.mxu0 0
      %1074 = vmatpush.bf16.msra.mxu0 0
      %1075 = vmatpush.bf16.msra.mxu0 0
      %1076 = vmatpush.bf16.msra.mxu0 0
      %1077 = vmatpush.bf16.msra.mxu0 0
      %1078 = vmatpush.bf16.msra.mxu0 %v1016
      %1079 = vmatpush.bf16.msra.mxu0 %v983
      %1080 = vmatmul.bf16.gmra.mxu0 %v1006
      %v1081 = vpop.f32.mrf.mxu0
      %v1082 = vadd.f32 %v1064, %v1081
      %v1083 = vpop.f32.mrf.mxu0
      %v1084 = vadd.f32 %v1066, %v1083
      %1085 = vmatmul.bf16.gmra.mxu0 %v1009
      %v1086 = vpop.f32.mrf.mxu0
      %v1087 = vadd.f32 %v1069, %v1086
      %v1088 = vpop.f32.mrf.mxu0
      %1089 = vdwg.mxu0
      %v1109 = vunpack.c.l.b16 %v829
      %v1110 = vunpack.c.h.b16 %v829
      %v1111 = vunpack.c.l.b16 %v830
      %v1112 = vunpack.c.h.b16 %v830
      %v1113 = vunpack.c.l.b16 %v831
      %v1114 = vunpack.c.h.b16 %v831
      %v1115 = vunpack.c.l.b16 %v832
      %v1116 = vunpack.c.h.b16 %v832
      %v1117 = vunpack.c.l.b16 %v833
      %v1118 = vunpack.c.h.b16 %v833
      %v1119 = vunpack.c.l.b16 %v834
      %v1120 = vunpack.c.h.b16 %v834
      %v1121 = vunpack.c.l.b16 %v835
      %v1122 = vunpack.c.h.b16 %v835
      %v1123 = vunpack.c.l.b16 %v836
      %v1124 = vunpack.c.h.b16 %v836
      %v1125 = vunpack.c.l.b16 %v837
      %v1126 = vunpack.c.h.b16 %v837
      %v1127 = vunpack.c.l.b16 %v838
      %v1128 = vunpack.c.h.b16 %v838
      %v1129 = vunpack.c.l.b16 %v839
      %v1130 = vunpack.c.h.b16 %v839
      %v1131 = vunpack.c.l.b16 %v840
      %v1132 = vunpack.c.h.b16 %v840
      %v1133 = vunpack.c.l.b16 %v841
      %v1134 = vunpack.c.h.b16 %v841
      %v1135 = vunpack.c.l.b16 %v842
      %v1136 = vunpack.c.h.b16 %v842
      %v1137 = vunpack.c.l.b16 %v843
      %v1138 = vunpack.c.h.b16 %v843
      %v1139 = vunpack.c.l.b16 %v844
      %v1140 = vunpack.c.h.b16 %v844
      %v1141 = vunpack.c.l.b16 %v845
      %v1142 = vunpack.c.h.b16 %v845
      %v1143 = vunpack.c.l.b16 %v846
      %v1144 = vunpack.c.h.b16 %v846
      %v1145 = vunpack.c.l.b16 %v847
      %v1146 = vunpack.c.h.b16 %v847
      %v1147 = vpack.c.b16 %v1111, %v1109
      %v1148 = vpack.c.b16 %v1112, %v1110
      %v1149 = vpack.c.b16 %v1115, %v1113
      %v1150 = vpack.c.b16 %v1116, %v1114
      %v1151 = vpack.c.b16 %v1119, %v1117
      %v1152 = vpack.c.b16 %v1120, %v1118
      %v1153 = vpack.c.b16 %v1123, %v1121
      %v1154 = vpack.c.b16 %v1124, %v1122
      %v1155 = vpack.c.b16 %v1127, %v1125
      %v1156 = vpack.c.b16 %v1128, %v1126
      %v1157 = vpack.c.b16 %v1131, %v1129
      %v1158 = vpack.c.b16 %v1132, %v1130
      %v1159 = vpack.c.b16 %v1135, %v1133
      %v1160 = vpack.c.b16 %v1136, %v1134
      %v1161 = vpack.c.b16 %v1139, %v1137
      %v1162 = vpack.c.b16 %v1140, %v1138
      %v1163 = vpack.c.b16 %v1143, %v1141
      %v1164 = vpack.c.b16 %v1144, %v1142
      %v1165 = vpack.c.b16 %v1145, %v1145
      %v1166 = vpack.c.b16 %v1146, %v1146
      %v1186 = vsel %vm1004, %v826, 0
      %v1189 = vsel %vm1004, %v828, 0
      %v1192 = vsel %vm1011, %v1165, 0
      %v1195 = vsel %vm1011, %v1166, 0
      %1197 = vmatpush.bf16.msra.mxu0 %v1161
      %1198 = vmatpush.bf16.msra.mxu0 %v1159
      %1199 = vmatpush.bf16.msra.mxu0 %v1157
      %1200 = vmatpush.bf16.msra.mxu0 %v1155
      %1201 = vmatpush.bf16.msra.mxu0 %v1153
      %1202 = vmatpush.bf16.msra.mxu0 %v1151
      %1203 = vmatpush.bf16.msra.mxu0 %v1149
      %1204 = vmatpush.bf16.msra.mxu0 %v1147
      %1205 = vmatmul.bf16.gmra.mxu0 %v825
      %v1206 = vpop.f32.mrf.mxu0
      %v1207 = vadd.f32 %v1046, %v1206
      %v1208 = vpop.f32.mrf.mxu0
      %v1209 = vadd.f32 %v1048, %v1208
      %1210 = vmatmul.bf16.gmra.mxu0 %v827
      %v1211 = vpop.f32.mrf.mxu0
      %v1212 = vadd.f32 %v1051, %v1211
      %v1213 = vpop.f32.mrf.mxu0
      %1214 = vdwg.mxu0
      %1215 = vmatpush.bf16.msra.mxu0 0
      %1216 = vmatpush.bf16.msra.mxu0 0
      %1217 = vmatpush.bf16.msra.mxu0 0
      %1218 = vmatpush.bf16.msra.mxu0 0
      %1219 = vmatpush.bf16.msra.mxu0 0
      %1220 = vmatpush.bf16.msra.mxu0 0
      %1221 = vmatpush.bf16.msra.mxu0 %v1192
      %1222 = vmatpush.bf16.msra.mxu0 %v1163
      %1223 = vmatmul.bf16.gmra.mxu0 %v1186
      %v1224 = vpop.f32.mrf.mxu0
      %v1225 = vadd.f32 %v1207, %v1224
      %v1226 = vpop.f32.mrf.mxu0
      %v1227 = vadd.f32 %v1209, %v1226
      %1228 = vmatmul.bf16.gmra.mxu0 %v1189
      %v1229 = vpop.f32.mrf.mxu0
      %v1230 = vadd.f32 %v1212, %v1229
      %v1231 = vpop.f32.mrf.mxu0
      %1232 = vdwg.mxu0
      %1233 = vmatpush.bf16.msra.mxu0 %v1162
      %1234 = vmatpush.bf16.msra.mxu0 %v1160
      %1235 = vmatpush.bf16.msra.mxu0 %v1158
      %1236 = vmatpush.bf16.msra.mxu0 %v1156
      %1237 = vmatpush.bf16.msra.mxu0 %v1154
      %1238 = vmatpush.bf16.msra.mxu0 %v1152
      %1239 = vmatpush.bf16.msra.mxu0 %v1150
      %1240 = vmatpush.bf16.msra.mxu0 %v1148
      %1241 = vmatmul.bf16.gmra.mxu0 %v825
      %v1242 = vpop.f32.mrf.mxu0
      %v1243 = vadd.f32 %v1082, %v1242
      %v1244 = vpop.f32.mrf.mxu0
      %v1245 = vadd.f32 %v1084, %v1244
      %1246 = vmatmul.bf16.gmra.mxu0 %v827
      %v1247 = vpop.f32.mrf.mxu0
      %v1248 = vadd.f32 %v1087, %v1247
      %v1249 = vpop.f32.mrf.mxu0
      %1250 = vdwg.mxu0
      %1251 = vmatpush.bf16.msra.mxu0 0
      %1252 = vmatpush.bf16.msra.mxu0 0
      %1253 = vmatpush.bf16.msra.mxu0 0
      %1254 = vmatpush.bf16.msra.mxu0 0
      %1255 = vmatpush.bf16.msra.mxu0 0
      %1256 = vmatpush.bf16.msra.mxu0 0
      %1257 = vmatpush.bf16.msra.mxu0 %v1195
      %1258 = vmatpush.bf16.msra.mxu0 %v1164
      %1259 = vmatmul.bf16.gmra.mxu0 %v1186
      %v1260 = vpop.f32.mrf.mxu0
      %v1261 = vadd.f32 %v1243, %v1260
      %v1262 = vpop.f32.mrf.mxu0
      %v1263 = vadd.f32 %v1245, %v1262
      %1264 = vmatmul.bf16.gmra.mxu0 %v1189
      %v1265 = vpop.f32.mrf.mxu0
      %v1266 = vadd.f32 %v1248, %v1265
      %v1267 = vpop.f32.mrf.mxu0
      %1268 = vdwg.mxu0
      %v1269 = vld [vmem:[#allocation2] sm:$0xfc]
      %v1270 = vld [vmem:[#allocation2 + $0x8] sm:$0xfc]
      %v1271 = vld [vmem:[#allocation2 + $0x20] sm:$0x1f]
      %v1272 = vld [vmem:[#allocation2 + $0x28] sm:$0x1f]
      %v1273 = vpack.c.bf16 %v821, %v1269
      %v1274 = vpack.c.bf16 %v822, %v1270
      %v1275 = vpack.c.bf16 %v1271, %v1271
      %v1276 = vpack.c.bf16 %v1272, %v1272
      %s1277 = scalar_lea.vmem %s1, 304
      %v1278 = vld [vmem:[%s1277] sm:$0xff]
      %v1279 = vld [vmem:[%s1277 + $0x8] sm:$0xff]
      %v1280 = vld [vmem:[%s1277 + $0x10] sm:$0xff]
      %v1281 = vld [vmem:[%s1277 + $0x18] sm:$0xff]
      %v1282 = vld [vmem:[%s1277 + $0x20] sm:$0xff]
      %v1283 = vld [vmem:[%s1277 + $0x28] sm:$0xff]
      %v1284 = vld [vmem:[%s1277 + $0x30] sm:$0xff]
      %v1285 = vld [vmem:[%s1277 + $0x38] sm:$0xff]
      %v1286 = vld [vmem:[%s1277 + $0x40] sm:$0xff]
      %v1287 = vld [vmem:[%s1277 + $0x48] sm:$0xff]
      %v1288 = vld [vmem:[%s1277 + $0x50] sm:$0xff]
      %v1289 = vld [vmem:[%s1277 + $0x58] sm:$0xff]
      %v1290 = vld [vmem:[%s1277 + $0x60] sm:$0xff]
      %v1291 = vld [vmem:[%s1277 + $0x68] sm:$0xff]
      %v1292 = vld [vmem:[%s1277 + $0x70] sm:$0xff]
      %v1293 = vld [vmem:[%s1277 + $0x78] sm:$0xff]
      %v1294 = vld [vmem:[%s1277 + $0x80] sm:$0xff]
      %v1295 = vld [vmem:[%s1277 + $0x88] sm:$0xff]
      %v1296 = vld [vmem:[%s1277 + $0x90] sm:$0x77]
      %vm1301 = vcmask 1046528
      %v1302 = vrot.slane %v1273, 1
      %v1303 = vrot.slane %v1275, 1
      %v1304 = vsel %vm1301, %v1302, %v1303
      %v1305 = vrot.slane %v1274, 1
      %v1306 = vrot.slane %v1276, 1
      %v1307 = vsel %vm1301, %v1305, %v1306
      %v1329 = vunpack.c.l.b16 %v1278
      %v1330 = vunpack.c.h.b16 %v1278
      %v1331 = vunpack.c.l.b16 %v1279
      %v1332 = vunpack.c.h.b16 %v1279
      %v1333 = vunpack.c.l.b16 %v1280
      %v1334 = vunpack.c.h.b16 %v1280
      %v1335 = vunpack.c.l.b16 %v1281
      %v1336 = vunpack.c.h.b16 %v1281
      %v1337 = vunpack.c.l.b16 %v1282
      %v1338 = vunpack.c.h.b16 %v1282
      %v1339 = vunpack.c.l.b16 %v1283
      %v1340 = vunpack.c.h.b16 %v1283
      %v1341 = vunpack.c.l.b16 %v1284
      %v1342 = vunpack.c.h.b16 %v1284
      %v1343 = vunpack.c.l.b16 %v1285
      %v1344 = vunpack.c.h.b16 %v1285
      %v1345 = vunpack.c.l.b16 %v1286
      %v1346 = vunpack.c.h.b16 %v1286
      %v1347 = vunpack.c.l.b16 %v1287
      %v1348 = vunpack.c.h.b16 %v1287
      %v1349 = vunpack.c.l.b16 %v1288
      %v1350 = vunpack.c.h.b16 %v1288
      %v1351 = vunpack.c.l.b16 %v1289
      %v1352 = vunpack.c.h.b16 %v1289
      %v1353 = vunpack.c.l.b16 %v1290
      %v1354 = vunpack.c.h.b16 %v1290
      %v1355 = vunpack.c.l.b16 %v1291
      %v1356 = vunpack.c.h.b16 %v1291
      %v1357 = vunpack.c.l.b16 %v1292
      %v1358 = vunpack.c.h.b16 %v1292
      %v1359 = vunpack.c.l.b16 %v1293
      %v1360 = vunpack.c.h.b16 %v1293
      %v1361 = vunpack.c.l.b16 %v1294
      %v1362 = vunpack.c.h.b16 %v1294
      %v1363 = vunpack.c.l.b16 %v1295
      %v1364 = vunpack.c.h.b16 %v1295
      %v1365 = vunpack.c.l.b16 %v1296
      %v1366 = vunpack.c.h.b16 %v1296
      %v1367 = vpack.c.b16 %v1331, %v1329
      %v1368 = vpack.c.b16 %v1332, %v1330
      %v1369 = vpack.c.b16 %v1335, %v1333
      %v1370 = vpack.c.b16 %v1336, %v1334
      %v1371 = vpack.c.b16 %v1339, %v1337
      %v1372 = vpack.c.b16 %v1340, %v1338
      %v1373 = vpack.c.b16 %v1343, %v1341
      %v1374 = vpack.c.b16 %v1344, %v1342
      %v1375 = vpack.c.b16 %v1347, %v1345
      %v1376 = vpack.c.b16 %v1348, %v1346
      %v1377 = vpack.c.b16 %v1351, %v1349
      %v1378 = vpack.c.b16 %v1352, %v1350
      %v1379 = vpack.c.b16 %v1355, %v1353
      %v1380 = vpack.c.b16 %v1356, %v1354
      %v1381 = vpack.c.b16 %v1359, %v1357
      %v1382 = vpack.c.b16 %v1360, %v1358
      %v1383 = vpack.c.b16 %v1363, %v1361
      %v1384 = vpack.c.b16 %v1364, %v1362
      %v1385 = vpack.c.b16 %v1365, %v1365
      %v1386 = vpack.c.b16 %v1366, %v1366
      %v1406 = vsel %vm1004, %v1307, 0
      %v1409 = vsel %vm1004, %v1306, 0
      %v1412 = vsel %vm1011, %v1385, 0
      %v1415 = vsel %vm1011, %v1386, 0
      %1417 = vmatpush.bf16.msra.mxu0 %v1381
      %1418 = vmatpush.bf16.msra.mxu0 %v1379
      %1419 = vmatpush.bf16.msra.mxu0 %v1377
      %1420 = vmatpush.bf16.msra.mxu0 %v1375
      %1421 = vmatpush.bf16.msra.mxu0 %v1373
      %1422 = vmatpush.bf16.msra.mxu0 %v1371
      %1423 = vmatpush.bf16.msra.mxu0 %v1369
      %1424 = vmatpush.bf16.msra.mxu0 %v1367
      %1425 = vmatmul.bf16.gmra.mxu0 %v1304
      %v1426 = vpop.f32.mrf.mxu0
      %v1427 = vadd.f32 0.0, %v1426
      %v1428 = vpop.f32.mrf.mxu0
      %v1429 = vadd.f32 0.0, %v1428
      %1430 = vmatmul.bf16.gmra.mxu0 %v1303
      %v1431 = vpop.f32.mrf.mxu0
      %v1432 = vadd.f32 0.0, %v1431
      %v1433 = vpop.f32.mrf.mxu0
      %1434 = vdwg.mxu0
      %1435 = vmatpush.bf16.msra.mxu0 0
      %1436 = vmatpush.bf16.msra.mxu0 0
      %1437 = vmatpush.bf16.msra.mxu0 0
      %1438 = vmatpush.bf16.msra.mxu0 0
      %1439 = vmatpush.bf16.msra.mxu0 0
      %1440 = vmatpush.bf16.msra.mxu0 0
      %1441 = vmatpush.bf16.msra.mxu0 %v1412
      %1442 = vmatpush.bf16.msra.mxu0 %v1383
      %1443 = vmatmul.bf16.gmra.mxu0 %v1406
      %v1444 = vpop.f32.mrf.mxu0
      %v1445 = vadd.f32 %v1427, %v1444
      %v1446 = vpop.f32.mrf.mxu0
      %v1447 = vadd.f32 %v1429, %v1446
      %1448 = vmatmul.bf16.gmra.mxu0 %v1409
      %v1449 = vpop.f32.mrf.mxu0
      %v1450 = vadd.f32 %v1432, %v1449
      %v1451 = vpop.f32.mrf.mxu0
      %1452 = vdwg.mxu0
      %1453 = vmatpush.bf16.msra.mxu0 %v1382
      %1454 = vmatpush.bf16.msra.mxu0 %v1380
      %1455 = vmatpush.bf16.msra.mxu0 %v1378
      %1456 = vmatpush.bf16.msra.mxu0 %v1376
      %1457 = vmatpush.bf16.msra.mxu0 %v1374
      %1458 = vmatpush.bf16.msra.mxu0 %v1372
      %1459 = vmatpush.bf16.msra.mxu0 %v1370
      %1460 = vmatpush.bf16.msra.mxu0 %v1368
      %1461 = vmatmul.bf16.gmra.mxu0 %v1304
      %v1462 = vpop.f32.mrf.mxu0
      %v1463 = vadd.f32 0.0, %v1462
      %v1464 = vpop.f32.mrf.mxu0
      %v1465 = vadd.f32 0.0, %v1464
      %1466 = vmatmul.bf16.gmra.mxu0 %v1303
      %v1467 = vpop.f32.mrf.mxu0
      %v1468 = vadd.f32 0.0, %v1467
      %v1469 = vpop.f32.mrf.mxu0
      %1470 = vdwg.mxu0
      %1471 = vmatpush.bf16.msra.mxu0 0
      %1472 = vmatpush.bf16.msra.mxu0 0
      %1473 = vmatpush.bf16.msra.mxu0 0
      %1474 = vmatpush.bf16.msra.mxu0 0
      %1475 = vmatpush.bf16.msra.mxu0 0
      %1476 = vmatpush.bf16.msra.mxu0 0
      %1477 = vmatpush.bf16.msra.mxu0 %v1415
      %1478 = vmatpush.bf16.msra.mxu0 %v1384
      %1479 = vmatmul.bf16.gmra.mxu0 %v1406
      %v1480 = vpop.f32.mrf.mxu0
      %v1481 = vadd.f32 %v1463, %v1480
      %v1482 = vpop.f32.mrf.mxu0
      %v1483 = vadd.f32 %v1465, %v1482
      %1484 = vmatmul.bf16.gmra.mxu0 %v1409
      %v1485 = vpop.f32.mrf.mxu0
      %v1486 = vadd.f32 %v1468, %v1485
      %v1487 = vpop.f32.mrf.mxu0
      %1488 = vdwg.mxu0
      %v1489 = vadd.f32 %v1225, %v1445
      %v1490 = vadd.f32 %v1261, %v1481
      %v1491 = vadd.f32 %v1227, %v1447
      %v1492 = vadd.f32 %v1263, %v1483
      %v1493 = vadd.f32 %v1230, %v1450
      %v1494 = vadd.f32 %v1266, %v1486
      %v1495 = vld [vmem:[#allocation2] sm:$0xf8]
      %v1496 = vld [vmem:[#allocation2 + $0x8] sm:$0xf8]
      %v1497 = vld [vmem:[#allocation2 + $0x20] sm:$0x3f]
      %v1498 = vld [vmem:[#allocation2 + $0x28] sm:$0x3f]
      %v1499 = vpack.c.bf16 %v821, %v1495
      %v1500 = vpack.c.bf16 %v822, %v1496
      %v1501 = vpack.c.bf16 %v1497, %v1497
      %v1502 = vpack.c.bf16 %v1498, %v1498
      %s1503 = scalar_lea.vmem %s1, 456
      %v1504 = vld [vmem:[%s1503] sm:$0xff]
      %v1505 = vld [vmem:[%s1503 + $0x8] sm:$0xff]
      %v1506 = vld [vmem:[%s1503 + $0x10] sm:$0xff]
      %v1507 = vld [vmem:[%s1503 + $0x18] sm:$0xff]
      %v1508 = vld [vmem:[%s1503 + $0x20] sm:$0xff]
      %v1509 = vld [vmem:[%s1503 + $0x28] sm:$0xff]
      %v1510 = vld [vmem:[%s1503 + $0x30] sm:$0xff]
      %v1511 = vld [vmem:[%s1503 + $0x38] sm:$0xff]
      %v1512 = vld [vmem:[%s1503 + $0x40] sm:$0xff]
      %v1513 = vld [vmem:[%s1503 + $0x48] sm:$0xff]
      %v1514 = vld [vmem:[%s1503 + $0x50] sm:$0xff]
      %v1515 = vld [vmem:[%s1503 + $0x58] sm:$0xff]
      %v1516 = vld [vmem:[%s1503 + $0x60] sm:$0xff]
      %v1517 = vld [vmem:[%s1503 + $0x68] sm:$0xff]
      %v1518 = vld [vmem:[%s1503 + $0x70] sm:$0xff]
      %v1519 = vld [vmem:[%s1503 + $0x78] sm:$0xff]
      %v1520 = vld [vmem:[%s1503 + $0x80] sm:$0xff]
      %v1521 = vld [vmem:[%s1503 + $0x88] sm:$0xff]
      %v1522 = vld [vmem:[%s1503 + $0x90] sm:$0x77]
      %vm1523 = vsmask.f32 6400
      %v1525 = vshrl.u32 %v1499, 16
      %v1527 = vrot.slane %v1525, 1
      %v1528 = vshll.u32 %v1499, 16
      %v1530 = vrot.slane %v1528, 2
      %v1531 = vor.u32 %v1527, %v1530
      %v1533 = vshrl.u32 %v1501, 16
      %v1535 = vrot.slane %v1533, 1
      %v1536 = vshll.u32 %v1501, 16
      %v1538 = vrot.slane %v1536, 2
      %v1539 = vor.u32 %v1535, %v1538
      %v1540 = vsel %vm1523, %v1531, %v1539
      %v1542 = vshrl.u32 %v1500, 16
      %v1544 = vrot.slane %v1542, 1
      %v1545 = vshll.u32 %v1500, 16
      %v1547 = vrot.slane %v1545, 2
      %v1548 = vor.u32 %v1544, %v1547
      %v1550 = vshrl.u32 %v1502, 16
      %v1552 = vrot.slane %v1550, 1
      %v1553 = vshll.u32 %v1502, 16
      %v1555 = vrot.slane %v1553, 2
      %v1556 = vor.u32 %v1552, %v1555
      %v1557 = vsel %vm1523, %v1548, %v1556
      %v1579 = vunpack.c.l.b16 %v1504
      %v1580 = vunpack.c.h.b16 %v1504
      %v1581 = vunpack.c.l.b16 %v1505
      %v1582 = vunpack.c.h.b16 %v1505
      %v1583 = vunpack.c.l.b16 %v1506
      %v1584 = vunpack.c.h.b16 %v1506
      %v1585 = vunpack.c.l.b16 %v1507
      %v1586 = vunpack.c.h.b16 %v1507
      %v1587 = vunpack.c.l.b16 %v1508
      %v1588 = vunpack.c.h.b16 %v1508
      %v1589 = vunpack.c.l.b16 %v1509
      %v1590 = vunpack.c.h.b16 %v1509
      %v1591 = vunpack.c.l.b16 %v1510
      %v1592 = vunpack.c.h.b16 %v1510
      %v1593 = vunpack.c.l.b16 %v1511
      %v1594 = vunpack.c.h.b16 %v1511
      %v1595 = vunpack.c.l.b16 %v1512
      %v1596 = vunpack.c.h.b16 %v1512
      %v1597 = vunpack.c.l.b16 %v1513
      %v1598 = vunpack.c.h.b16 %v1513
      %v1599 = vunpack.c.l.b16 %v1514
      %v1600 = vunpack.c.h.b16 %v1514
      %v1601 = vunpack.c.l.b16 %v1515
      %v1602 = vunpack.c.h.b16 %v1515
      %v1603 = vunpack.c.l.b16 %v1516
      %v1604 = vunpack.c.h.b16 %v1516
      %v1605 = vunpack.c.l.b16 %v1517
      %v1606 = vunpack.c.h.b16 %v1517
      %v1607 = vunpack.c.l.b16 %v1518
      %v1608 = vunpack.c.h.b16 %v1518
      %v1609 = vunpack.c.l.b16 %v1519
      %v1610 = vunpack.c.h.b16 %v1519
      %v1611 = vunpack.c.l.b16 %v1520
      %v1612 = vunpack.c.h.b16 %v1520
      %v1613 = vunpack.c.l.b16 %v1521
      %v1614 = vunpack.c.h.b16 %v1521
      %v1615 = vunpack.c.l.b16 %v1522
      %v1616 = vunpack.c.h.b16 %v1522
      %v1617 = vpack.c.b16 %v1581, %v1579
      %v1618 = vpack.c.b16 %v1582, %v1580
      %v1619 = vpack.c.b16 %v1585, %v1583
      %v1620 = vpack.c.b16 %v1586, %v1584
      %v1621 = vpack.c.b16 %v1589, %v1587
      %v1622 = vpack.c.b16 %v1590, %v1588
      %v1623 = vpack.c.b16 %v1593, %v1591
      %v1624 = vpack.c.b16 %v1594, %v1592
      %v1625 = vpack.c.b16 %v1597, %v1595
      %v1626 = vpack.c.b16 %v1598, %v1596
      %v1627 = vpack.c.b16 %v1601, %v1599
      %v1628 = vpack.c.b16 %v1602, %v1600
      %v1629 = vpack.c.b16 %v1605, %v1603
      %v1630 = vpack.c.b16 %v1606, %v1604
      %v1631 = vpack.c.b16 %v1609, %v1607
      %v1632 = vpack.c.b16 %v1610, %v1608
      %v1633 = vpack.c.b16 %v1613, %v1611
      %v1634 = vpack.c.b16 %v1614, %v1612
      %v1635 = vpack.c.b16 %v1615, %v1615
      %v1636 = vpack.c.b16 %v1616, %v1616
      %v1656 = vsel %vm1004, %v1557, 0
      %v1659 = vsel %vm1004, %v1556, 0
      %v1662 = vsel %vm1011, %v1635, 0
      %v1665 = vsel %vm1011, %v1636, 0
      %1667 = vmatpush.bf16.msra.mxu0 %v1631
      %1668 = vmatpush.bf16.msra.mxu0 %v1629
      %1669 = vmatpush.bf16.msra.mxu0 %v1627
      %1670 = vmatpush.bf16.msra.mxu0 %v1625
      %1671 = vmatpush.bf16.msra.mxu0 %v1623
      %1672 = vmatpush.bf16.msra.mxu0 %v1621
      %1673 = vmatpush.bf16.msra.mxu0 %v1619
      %1674 = vmatpush.bf16.msra.mxu0 %v1617
      %1675 = vmatmul.bf16.gmra.mxu0 %v1540
      %v1676 = vpop.f32.mrf.mxu0
      %v1677 = vadd.f32 0.0, %v1676
      %v1678 = vpop.f32.mrf.mxu0
      %v1679 = vadd.f32 0.0, %v1678
      %1680 = vmatmul.bf16.gmra.mxu0 %v1539
      %v1681 = vpop.f32.mrf.mxu0
      %v1682 = vadd.f32 0.0, %v1681
      %v1683 = vpop.f32.mrf.mxu0
      %1684 = vdwg.mxu0
      %1685 = vmatpush.bf16.msra.mxu0 0
      %1686 = vmatpush.bf16.msra.mxu0 0
      %1687 = vmatpush.bf16.msra.mxu0 0
      %1688 = vmatpush.bf16.msra.mxu0 0
      %1689 = vmatpush.bf16.msra.mxu0 0
      %1690 = vmatpush.bf16.msra.mxu0 0
      %1691 = vmatpush.bf16.msra.mxu0 %v1662
      %1692 = vmatpush.bf16.msra.mxu0 %v1633
      %1693 = vmatmul.bf16.gmra.mxu0 %v1656
      %v1694 = vpop.f32.mrf.mxu0
      %v1695 = vadd.f32 %v1677, %v1694
      %v1696 = vpop.f32.mrf.mxu0
      %v1697 = vadd.f32 %v1679, %v1696
      %1698 = vmatmul.bf16.gmra.mxu0 %v1659
      %v1699 = vpop.f32.mrf.mxu0
      %v1700 = vadd.f32 %v1682, %v1699
      %v1701 = vpop.f32.mrf.mxu0
      %1702 = vdwg.mxu0
      %1703 = vmatpush.bf16.msra.mxu0 %v1632
      %1704 = vmatpush.bf16.msra.mxu0 %v1630
      %1705 = vmatpush.bf16.msra.mxu0 %v1628
      %1706 = vmatpush.bf16.msra.mxu0 %v1626
      %1707 = vmatpush.bf16.msra.mxu0 %v1624
      %1708 = vmatpush.bf16.msra.mxu0 %v1622
      %1709 = vmatpush.bf16.msra.mxu0 %v1620
      %1710 = vmatpush.bf16.msra.mxu0 %v1618
      %1711 = vmatmul.bf16.gmra.mxu0 %v1540
      %v1712 = vpop.f32.mrf.mxu0
      %v1713 = vadd.f32 0.0, %v1712
      %v1714 = vpop.f32.mrf.mxu0
      %v1715 = vadd.f32 0.0, %v1714
      %1716 = vmatmul.bf16.gmra.mxu0 %v1539
      %v1717 = vpop.f32.mrf.mxu0
      %v1718 = vadd.f32 0.0, %v1717
      %v1719 = vpop.f32.mrf.mxu0
      %1720 = vdwg.mxu0
      %1721 = vmatpush.bf16.msra.mxu0 0
      %1722 = vmatpush.bf16.msra.mxu0 0
      %1723 = vmatpush.bf16.msra.mxu0 0
      %1724 = vmatpush.bf16.msra.mxu0 0
      %1725 = vmatpush.bf16.msra.mxu0 0
      %1726 = vmatpush.bf16.msra.mxu0 0
      %1727 = vmatpush.bf16.msra.mxu0 %v1665
      %1728 = vmatpush.bf16.msra.mxu0 %v1634
      %1729 = vmatmul.bf16.gmra.mxu0 %v1656
      %v1730 = vpop.f32.mrf.mxu0
      %v1731 = vadd.f32 %v1713, %v1730
      %v1732 = vpop.f32.mrf.mxu0
      %v1733 = vadd.f32 %v1715, %v1732
      %1734 = vmatmul.bf16.gmra.mxu0 %v1659
      %v1735 = vpop.f32.mrf.mxu0
      %v1736 = vadd.f32 %v1718, %v1735
      %v1737 = vpop.f32.mrf.mxu0
      %1738 = vdwg.mxu0
      %v1739 = vadd.f32 %v1489, %v1695
      %v1740 = vadd.f32 %v1490, %v1731
      %v1741 = vadd.f32 %v1491, %v1697
      %v1742 = vadd.f32 %v1492, %v1733
      %v1743 = vadd.f32 %v1493, %v1700
      %v1744 = vadd.f32 %v1494, %v1736
      %v1745 = vld [vmem:[#allocation2] sm:$0xf0]
      %v1746 = vld [vmem:[#allocation2 + $0x8] sm:$0xf0]
      %v1747 = vld [vmem:[#allocation2 + $0x20] sm:$0x7f]
      %v1748 = vld [vmem:[#allocation2 + $0x28] sm:$0x7f]
      %v1749 = vpack.c.bf16 %v821, %v1745
      %v1750 = vpack.c.bf16 %v822, %v1746
      %v1751 = vpack.c.bf16 %v1747, %v1747
      %v1752 = vpack.c.bf16 %v1748, %v1748
      %s1753 = scalar_lea.vmem %s1, 608
      %v1754 = vld [vmem:[%s1753] sm:$0xff]
      %v1755 = vld [vmem:[%s1753 + $0x8] sm:$0xff]
      %v1756 = vld [vmem:[%s1753 + $0x10] sm:$0xff]
      %v1757 = vld [vmem:[%s1753 + $0x18] sm:$0xff]
      %v1758 = vld [vmem:[%s1753 + $0x20] sm:$0xff]
      %v1759 = vld [vmem:[%s1753 + $0x28] sm:$0xff]
      %v1760 = vld [vmem:[%s1753 + $0x30] sm:$0xff]
      %v1761 = vld [vmem:[%s1753 + $0x38] sm:$0xff]
      %v1762 = vld [vmem:[%s1753 + $0x40] sm:$0xff]
      %v1763 = vld [vmem:[%s1753 + $0x48] sm:$0xff]
      %v1764 = vld [vmem:[%s1753 + $0x50] sm:$0xff]
      %v1765 = vld [vmem:[%s1753 + $0x58] sm:$0xff]
      %v1766 = vld [vmem:[%s1753 + $0x60] sm:$0xff]
      %v1767 = vld [vmem:[%s1753 + $0x68] sm:$0xff]
      %v1768 = vld [vmem:[%s1753 + $0x70] sm:$0xff]
      %v1769 = vld [vmem:[%s1753 + $0x78] sm:$0xff]
      %v1770 = vld [vmem:[%s1753 + $0x80] sm:$0xff]
      %v1771 = vld [vmem:[%s1753 + $0x88] sm:$0xff]
      %v1772 = vld [vmem:[%s1753 + $0x90] sm:$0x77]
      %vm1777 = vcmask 1045504
      %v1778 = vrot.slane %v1749, 2
      %v1779 = vrot.slane %v1751, 2
      %v1780 = vsel %vm1777, %v1778, %v1779
      %v1781 = vrot.slane %v1750, 2
      %v1782 = vrot.slane %v1752, 2
      %v1783 = vsel %vm1777, %v1781, %v1782
      %v1805 = vunpack.c.l.b16 %v1754
      %v1806 = vunpack.c.h.b16 %v1754
      %v1807 = vunpack.c.l.b16 %v1755
      %v1808 = vunpack.c.h.b16 %v1755
      %v1809 = vunpack.c.l.b16 %v1756
      %v1810 = vunpack.c.h.b16 %v1756
      %v1811 = vunpack.c.l.b16 %v1757
      %v1812 = vunpack.c.h.b16 %v1757
      %v1813 = vunpack.c.l.b16 %v1758
      %v1814 = vunpack.c.h.b16 %v1758
      %v1815 = vunpack.c.l.b16 %v1759
      %v1816 = vunpack.c.h.b16 %v1759
      %v1817 = vunpack.c.l.b16 %v1760
      %v1818 = vunpack.c.h.b16 %v1760
      %v1819 = vunpack.c.l.b16 %v1761
      %v1820 = vunpack.c.h.b16 %v1761
      %v1821 = vunpack.c.l.b16 %v1762
      %v1822 = vunpack.c.h.b16 %v1762
      %v1823 = vunpack.c.l.b16 %v1763
      %v1824 = vunpack.c.h.b16 %v1763
      %v1825 = vunpack.c.l.b16 %v1764
      %v1826 = vunpack.c.h.b16 %v1764
      %v1827 = vunpack.c.l.b16 %v1765
      %v1828 = vunpack.c.h.b16 %v1765
      %v1829 = vunpack.c.l.b16 %v1766
      %v1830 = vunpack.c.h.b16 %v1766
      %v1831 = vunpack.c.l.b16 %v1767
      %v1832 = vunpack.c.h.b16 %v1767
      %v1833 = vunpack.c.l.b16 %v1768
      %v1834 = vunpack.c.h.b16 %v1768
      %v1835 = vunpack.c.l.b16 %v1769
      %v1836 = vunpack.c.h.b16 %v1769
      %v1837 = vunpack.c.l.b16 %v1770
      %v1838 = vunpack.c.h.b16 %v1770
      %v1839 = vunpack.c.l.b16 %v1771
      %v1840 = vunpack.c.h.b16 %v1771
      %v1841 = vunpack.c.l.b16 %v1772
      %v1842 = vunpack.c.h.b16 %v1772
      %v1843 = vpack.c.b16 %v1807, %v1805
      %v1844 = vpack.c.b16 %v1808, %v1806
      %v1845 = vpack.c.b16 %v1811, %v1809
      %v1846 = vpack.c.b16 %v1812, %v1810
      %v1847 = vpack.c.b16 %v1815, %v1813
      %v1848 = vpack.c.b16 %v1816, %v1814
      %v1849 = vpack.c.b16 %v1819, %v1817
      %v1850 = vpack.c.b16 %v1820, %v1818
      %v1851 = vpack.c.b16 %v1823, %v1821
      %v1852 = vpack.c.b16 %v1824, %v1822
      %v1853 = vpack.c.b16 %v1827, %v1825
      %v1854 = vpack.c.b16 %v1828, %v1826
      %v1855 = vpack.c.b16 %v1831, %v1829
      %v1856 = vpack.c.b16 %v1832, %v1830
      %v1857 = vpack.c.b16 %v1835, %v1833
      %v1858 = vpack.c.b16 %v1836, %v1834
      %v1859 = vpack.c.b16 %v1839, %v1837
      %v1860 = vpack.c.b16 %v1840, %v1838
      %v1861 = vpack.c.b16 %v1841, %v1841
      %v1862 = vpack.c.b16 %v1842, %v1842
      %v1882 = vsel %vm1004, %v1783, 0
      %v1885 = vsel %vm1004, %v1782, 0
      %v1888 = vsel %vm1011, %v1861, 0
      %v1891 = vsel %vm1011, %v1862, 0
      %1893 = vmatpush.bf16.msra.mxu0 %v1857
      %1894 = vmatpush.bf16.msra.mxu0 %v1855
      %1895 = vmatpush.bf16.msra.mxu0 %v1853
      %1896 = vmatpush.bf16.msra.mxu0 %v1851
      %1897 = vmatpush.bf16.msra.mxu0 %v1849
      %1898 = vmatpush.bf16.msra.mxu0 %v1847
      %1899 = vmatpush.bf16.msra.mxu0 %v1845
      %1900 = vmatpush.bf16.msra.mxu0 %v1843
      %1901 = vmatmul.bf16.gmra.mxu0 %v1780
      %v1902 = vpop.f32.mrf.mxu0
      %v1903 = vadd.f32 0.0, %v1902
      %v1904 = vpop.f32.mrf.mxu0
      %v1905 = vadd.f32 0.0, %v1904
      %1906 = vmatmul.bf16.gmra.mxu0 %v1779
      %v1907 = vpop.f32.mrf.mxu0
      %v1908 = vadd.f32 0.0, %v1907
      %v1909 = vpop.f32.mrf.mxu0
      %1910 = vdwg.mxu0
      %1911 = vmatpush.bf16.msra.mxu0 0
      %1912 = vmatpush.bf16.msra.mxu0 0
      %1913 = vmatpush.bf16.msra.mxu0 0
      %1914 = vmatpush.bf16.msra.mxu0 0
      %1915 = vmatpush.bf16.msra.mxu0 0
      %1916 = vmatpush.bf16.msra.mxu0 0
      %1917 = vmatpush.bf16.msra.mxu0 %v1888
      %1918 = vmatpush.bf16.msra.mxu0 %v1859
      %1919 = vmatmul.bf16.gmra.mxu0 %v1882
      %v1920 = vpop.f32.mrf.mxu0
      %v1921 = vadd.f32 %v1903, %v1920
      %v1922 = vpop.f32.mrf.mxu0
      %v1923 = vadd.f32 %v1905, %v1922
      %1924 = vmatmul.bf16.gmra.mxu0 %v1885
      %v1925 = vpop.f32.mrf.mxu0
      %v1926 = vadd.f32 %v1908, %v1925
      %v1927 = vpop.f32.mrf.mxu0
      %1928 = vdwg.mxu0
      %1929 = vmatpush.bf16.msra.mxu0 %v1858
      %1930 = vmatpush.bf16.msra.mxu0 %v1856
      %1931 = vmatpush.bf16.msra.mxu0 %v1854
      %1932 = vmatpush.bf16.msra.mxu0 %v1852
      %1933 = vmatpush.bf16.msra.mxu0 %v1850
      %1934 = vmatpush.bf16.msra.mxu0 %v1848
      %1935 = vmatpush.bf16.msra.mxu0 %v1846
      %1936 = vmatpush.bf16.msra.mxu0 %v1844
      %1937 = vmatmul.bf16.gmra.mxu0 %v1780
      %v1938 = vpop.f32.mrf.mxu0
      %v1939 = vadd.f32 0.0, %v1938
      %v1940 = vpop.f32.mrf.mxu0
      %v1941 = vadd.f32 0.0, %v1940
      %1942 = vmatmul.bf16.gmra.mxu0 %v1779
      %v1943 = vpop.f32.mrf.mxu0
      %v1944 = vadd.f32 0.0, %v1943
      %v1945 = vpop.f32.mrf.mxu0
      %1946 = vdwg.mxu0
      %1947 = vmatpush.bf16.msra.mxu0 0
      %1948 = vmatpush.bf16.msra.mxu0 0
      %1949 = vmatpush.bf16.msra.mxu0 0
      %1950 = vmatpush.bf16.msra.mxu0 0
      %1951 = vmatpush.bf16.msra.mxu0 0
      %1952 = vmatpush.bf16.msra.mxu0 0
      %1953 = vmatpush.bf16.msra.mxu0 %v1891
      %1954 = vmatpush.bf16.msra.mxu0 %v1860
      %1955 = vmatmul.bf16.gmra.mxu0 %v1882
      %v1956 = vpop.f32.mrf.mxu0
      %v1957 = vadd.f32 %v1939, %v1956
      %v1958 = vpop.f32.mrf.mxu0
      %v1959 = vadd.f32 %v1941, %v1958
      %1960 = vmatmul.bf16.gmra.mxu0 %v1885
      %v1961 = vpop.f32.mrf.mxu0
      %v1962 = vadd.f32 %v1944, %v1961
      %v1963 = vpop.f32.mrf.mxu0
      %1964 = vdwg.mxu0
      %v1965 = vadd.f32 %v1739, %v1921
      %v1966 = vadd.f32 %v1740, %v1957
      %v1967 = vadd.f32 %v1741, %v1923
      %v1968 = vadd.f32 %v1742, %v1959
      %v1969 = vadd.f32 %v1743, %v1926
      %v1970 = vadd.f32 %v1744, %v1962
      %v1971 = vld [vmem:[#allocation2] sm:$0xe0]
      %v1972 = vld [vmem:[#allocation2 + $0x8] sm:$0xe0]
      %v1973 = vld [vmem:[#allocation2 + $0x20] sm:$0xff]
      %v1974 = vld [vmem:[#allocation2 + $0x28] sm:$0xff]
      %v1975 = vpack.c.bf16 %v821, %v1971
      %v1976 = vpack.c.bf16 %v822, %v1972
      %v1977 = vpack.c.bf16 %v1973, %v1973
      %v1978 = vpack.c.bf16 %v1974, %v1974
      %s1979 = scalar_lea.vmem %s1, 760
      %v1980 = vld [vmem:[%s1979] sm:$0xff]
      %v1981 = vld [vmem:[%s1979 + $0x8] sm:$0xff]
      %v1982 = vld [vmem:[%s1979 + $0x10] sm:$0xff]
      %v1983 = vld [vmem:[%s1979 + $0x18] sm:$0xff]
      %v1984 = vld [vmem:[%s1979 + $0x20] sm:$0xff]
      %v1985 = vld [vmem:[%s1979 + $0x28] sm:$0xff]
      %v1986 = vld [vmem:[%s1979 + $0x30] sm:$0xff]
      %v1987 = vld [vmem:[%s1979 + $0x38] sm:$0xff]
      %v1988 = vld [vmem:[%s1979 + $0x40] sm:$0xff]
      %v1989 = vld [vmem:[%s1979 + $0x48] sm:$0xff]
      %v1990 = vld [vmem:[%s1979 + $0x50] sm:$0xff]
      %v1991 = vld [vmem:[%s1979 + $0x58] sm:$0xff]
      %v1992 = vld [vmem:[%s1979 + $0x60] sm:$0xff]
      %v1993 = vld [vmem:[%s1979 + $0x68] sm:$0xff]
      %v1994 = vld [vmem:[%s1979 + $0x70] sm:$0xff]
      %v1995 = vld [vmem:[%s1979 + $0x78] sm:$0xff]
      %v1996 = vld [vmem:[%s1979 + $0x80] sm:$0xff]
      %v1997 = vld [vmem:[%s1979 + $0x88] sm:$0xff]
      %v1998 = vld [vmem:[%s1979 + $0x90] sm:$0x77]
      %vm1999 = vsmask.f32 5376
      %v2001 = vshrl.u32 %v1975, 16
      %v2003 = vrot.slane %v2001, 2
      %v2004 = vshll.u32 %v1975, 16
      %v2006 = vrot.slane %v2004, 3
      %v2007 = vor.u32 %v2003, %v2006
      %v2009 = vshrl.u32 %v1977, 16
      %v2011 = vrot.slane %v2009, 2
      %v2012 = vshll.u32 %v1977, 16
      %v2014 = vrot.slane %v2012, 3
      %v2015 = vor.u32 %v2011, %v2014
      %v2016 = vsel %vm1999, %v2007, %v2015
      %v2018 = vshrl.u32 %v1976, 16
      %v2020 = vrot.slane %v2018, 2
      %v2021 = vshll.u32 %v1976, 16
      %v2023 = vrot.slane %v2021, 3
      %v2024 = vor.u32 %v2020, %v2023
      %v2026 = vshrl.u32 %v1978, 16
      %v2028 = vrot.slane %v2026, 2
      %v2029 = vshll.u32 %v1978, 16
      %v2031 = vrot.slane %v2029, 3
      %v2032 = vor.u32 %v2028, %v2031
      %v2033 = vsel %vm1999, %v2024, %v2032
      %v2055 = vunpack.c.l.b16 %v1980
      %v2056 = vunpack.c.h.b16 %v1980
      %v2057 = vunpack.c.l.b16 %v1981
      %v2058 = vunpack.c.h.b16 %v1981
      %v2059 = vunpack.c.l.b16 %v1982
      %v2060 = vunpack.c.h.b16 %v1982
      %v2061 = vunpack.c.l.b16 %v1983
      %v2062 = vunpack.c.h.b16 %v1983
      %v2063 = vunpack.c.l.b16 %v1984
      %v2064 = vunpack.c.h.b16 %v1984
      %v2065 = vunpack.c.l.b16 %v1985
      %v2066 = vunpack.c.h.b16 %v1985
      %v2067 = vunpack.c.l.b16 %v1986
      %v2068 = vunpack.c.h.b16 %v1986
      %v2069 = vunpack.c.l.b16 %v1987
      %v2070 = vunpack.c.h.b16 %v1987
      %v2071 = vunpack.c.l.b16 %v1988
      %v2072 = vunpack.c.h.b16 %v1988
      %v2073 = vunpack.c.l.b16 %v1989
      %v2074 = vunpack.c.h.b16 %v1989
      %v2075 = vunpack.c.l.b16 %v1990
      %v2076 = vunpack.c.h.b16 %v1990
      %v2077 = vunpack.c.l.b16 %v1991
      %v2078 = vunpack.c.h.b16 %v1991
      %v2079 = vunpack.c.l.b16 %v1992
      %v2080 = vunpack.c.h.b16 %v1992
      %v2081 = vunpack.c.l.b16 %v1993
      %v2082 = vunpack.c.h.b16 %v1993
      %v2083 = vunpack.c.l.b16 %v1994
      %v2084 = vunpack.c.h.b16 %v1994
      %v2085 = vunpack.c.l.b16 %v1995
      %v2086 = vunpack.c.h.b16 %v1995
      %v2087 = vunpack.c.l.b16 %v1996
      %v2088 = vunpack.c.h.b16 %v1996
      %v2089 = vunpack.c.l.b16 %v1997
      %v2090 = vunpack.c.h.b16 %v1997
      %v2091 = vunpack.c.l.b16 %v1998
      %v2092 = vunpack.c.h.b16 %v1998
      %v2093 = vpack.c.b16 %v2057, %v2055
      %v2094 = vpack.c.b16 %v2058, %v2056
      %v2095 = vpack.c.b16 %v2061, %v2059
      %v2096 = vpack.c.b16 %v2062, %v2060
      %v2097 = vpack.c.b16 %v2065, %v2063
      %v2098 = vpack.c.b16 %v2066, %v2064
      %v2099 = vpack.c.b16 %v2069, %v2067
      %v2100 = vpack.c.b16 %v2070, %v2068
      %v2101 = vpack.c.b16 %v2073, %v2071
      %v2102 = vpack.c.b16 %v2074, %v2072
      %v2103 = vpack.c.b16 %v2077, %v2075
      %v2104 = vpack.c.b16 %v2078, %v2076
      %v2105 = vpack.c.b16 %v2081, %v2079
      %v2106 = vpack.c.b16 %v2082, %v2080
      %v2107 = vpack.c.b16 %v2085, %v2083
      %v2108 = vpack.c.b16 %v2086, %v2084
      %v2109 = vpack.c.b16 %v2089, %v2087
      %v2110 = vpack.c.b16 %v2090, %v2088
      %v2111 = vpack.c.b16 %v2091, %v2091
      %v2112 = vpack.c.b16 %v2092, %v2092
      %v2132 = vsel %vm1004, %v2033, 0
      %v2135 = vsel %vm1004, %v2032, 0
      %v2138 = vsel %vm1011, %v2111, 0
      %v2141 = vsel %vm1011, %v2112, 0
      %2143 = vmatpush.bf16.msra.mxu0 %v2107
      %2144 = vmatpush.bf16.msra.mxu0 %v2105
      %2145 = vmatpush.bf16.msra.mxu0 %v2103
      %2146 = vmatpush.bf16.msra.mxu0 %v2101
      %2147 = vmatpush.bf16.msra.mxu0 %v2099
      %2148 = vmatpush.bf16.msra.mxu0 %v2097
      %2149 = vmatpush.bf16.msra.mxu0 %v2095
      %2150 = vmatpush.bf16.msra.mxu0 %v2093
      %2151 = vmatmul.bf16.gmra.mxu0 %v2016
      %v2152 = vpop.f32.mrf.mxu0
      %v2153 = vadd.f32 0.0, %v2152
      %v2154 = vpop.f32.mrf.mxu0
      %v2155 = vadd.f32 0.0, %v2154
      %2156 = vmatmul.bf16.gmra.mxu0 %v2015
      %v2157 = vpop.f32.mrf.mxu0
      %v2158 = vadd.f32 0.0, %v2157
      %v2159 = vpop.f32.mrf.mxu0
      %2160 = vdwg.mxu0
      %2161 = vmatpush.bf16.msra.mxu0 0
      %2162 = vmatpush.bf16.msra.mxu0 0
      %2163 = vmatpush.bf16.msra.mxu0 0
      %2164 = vmatpush.bf16.msra.mxu0 0
      %2165 = vmatpush.bf16.msra.mxu0 0
      %2166 = vmatpush.bf16.msra.mxu0 0
      %2167 = vmatpush.bf16.msra.mxu0 %v2138
      %2168 = vmatpush.bf16.msra.mxu0 %v2109
      %2169 = vmatmul.bf16.gmra.mxu0 %v2132
      %v2170 = vpop.f32.mrf.mxu0
      %v2171 = vadd.f32 %v2153, %v2170
      %v2172 = vpop.f32.mrf.mxu0
      %v2173 = vadd.f32 %v2155, %v2172
      %2174 = vmatmul.bf16.gmra.mxu0 %v2135
      %v2175 = vpop.f32.mrf.mxu0
      %v2176 = vadd.f32 %v2158, %v2175
      %v2177 = vpop.f32.mrf.mxu0
      %2178 = vdwg.mxu0
      %2179 = vmatpush.bf16.msra.mxu0 %v2108
      %2180 = vmatpush.bf16.msra.mxu0 %v2106
      %2181 = vmatpush.bf16.msra.mxu0 %v2104
      %2182 = vmatpush.bf16.msra.mxu0 %v2102
      %2183 = vmatpush.bf16.msra.mxu0 %v2100
      %2184 = vmatpush.bf16.msra.mxu0 %v2098
      %2185 = vmatpush.bf16.msra.mxu0 %v2096
      %2186 = vmatpush.bf16.msra.mxu0 %v2094
      %2187 = vmatmul.bf16.gmra.mxu0 %v2016
      %v2188 = vpop.f32.mrf.mxu0
      %v2189 = vadd.f32 0.0, %v2188
      %v2190 = vpop.f32.mrf.mxu0
      %v2191 = vadd.f32 0.0, %v2190
      %2192 = vmatmul.bf16.gmra.mxu0 %v2015
      %v2193 = vpop.f32.mrf.mxu0
      %v2194 = vadd.f32 0.0, %v2193
      %v2195 = vpop.f32.mrf.mxu0
      %2196 = vdwg.mxu0
      %2197 = vmatpush.bf16.msra.mxu0 0
      %2198 = vmatpush.bf16.msra.mxu0 0
      %2199 = vmatpush.bf16.msra.mxu0 0
      %2200 = vmatpush.bf16.msra.mxu0 0
      %2201 = vmatpush.bf16.msra.mxu0 0
      %2202 = vmatpush.bf16.msra.mxu0 0
      %2203 = vmatpush.bf16.msra.mxu0 %v2141
      %2204 = vmatpush.bf16.msra.mxu0 %v2110
      %2205 = vmatmul.bf16.gmra.mxu0 %v2132
      %v2206 = vpop.f32.mrf.mxu0
      %v2207 = vadd.f32 %v2189, %v2206
      %v2208 = vpop.f32.mrf.mxu0
      %v2209 = vadd.f32 %v2191, %v2208
      %2210 = vmatmul.bf16.gmra.mxu0 %v2135
      %v2211 = vpop.f32.mrf.mxu0
      %v2212 = vadd.f32 %v2194, %v2211
      %v2213 = vpop.f32.mrf.mxu0
      %2214 = vdwg.mxu0
      %v2215 = vadd.f32 %v1965, %v2171
      %v2216 = vadd.f32 %v1966, %v2207
      %v2217 = vadd.f32 %v1967, %v2173
      %v2218 = vadd.f32 %v1968, %v2209
      %v2219 = vadd.f32 %v1969, %v2176
      %v2220 = vadd.f32 %v1970, %v2212
      %v2221 = vld [vmem:[#allocation2] sm:$0xc0]
      %v2222 = vld [vmem:[#allocation2 + $0x8] sm:$0xc0]
      %v2223 = vld [vmem:[#allocation2 + $0x10] sm:$0xff]
      %v2224 = vld [vmem:[#allocation2 + $0x18] sm:$0xff]
      %v2225 = vld [vmem:[#allocation2 + $0x20] sm:$0xff]
      %v2226 = vld [vmem:[#allocation2 + $0x28] sm:$0xff]
      %v2227 = vld [vmem:[#allocation2 + $0x30] sm:$0x1]
      %v2228 = vld [vmem:[#allocation2 + $0x38] sm:$0x1]
      %v2229 = vpack.c.bf16 %v2223, %v2221
      %v2230 = vpack.c.bf16 %v2224, %v2222
      %v2231 = vpack.c.bf16 %v2227, %v2225
      %v2232 = vpack.c.bf16 %v2228, %v2226
      %s2233 = scalar_lea.vmem %s1, 912
      %v2234 = vld [vmem:[%s2233] sm:$0xff]
      %v2235 = vld [vmem:[%s2233 + $0x8] sm:$0xff]
      %v2236 = vld [vmem:[%s2233 + $0x10] sm:$0xff]
      %v2237 = vld [vmem:[%s2233 + $0x18] sm:$0xff]
      %v2238 = vld [vmem:[%s2233 + $0x20] sm:$0xff]
      %v2239 = vld [vmem:[%s2233 + $0x28] sm:$0xff]
      %v2240 = vld [vmem:[%s2233 + $0x30] sm:$0xff]
      %v2241 = vld [vmem:[%s2233 + $0x38] sm:$0xff]
      %v2242 = vld [vmem:[%s2233 + $0x40] sm:$0xff]
      %v2243 = vld [vmem:[%s2233 + $0x48] sm:$0xff]
      %v2244 = vld [vmem:[%s2233 + $0x50] sm:$0xff]
      %v2245 = vld [vmem:[%s2233 + $0x58] sm:$0xff]
      %v2246 = vld [vmem:[%s2233 + $0x60] sm:$0xff]
      %v2247 = vld [vmem:[%s2233 + $0x68] sm:$0xff]
      %v2248 = vld [vmem:[%s2233 + $0x70] sm:$0xff]
      %v2249 = vld [vmem:[%s2233 + $0x78] sm:$0xff]
      %v2250 = vld [vmem:[%s2233 + $0x80] sm:$0xff]
      %v2251 = vld [vmem:[%s2233 + $0x88] sm:$0xff]
      %v2252 = vld [vmem:[%s2233 + $0x90] sm:$0x77]
      %vm2257 = vcmask 1044480
      %v2258 = vrot.slane %v2229, 3
      %v2259 = vrot.slane %v2231, 3
      %v2260 = vsel %vm2257, %v2258, %v2259
      %v2261 = vrot.slane %v2230, 3
      %v2262 = vrot.slane %v2232, 3
      %v2263 = vsel %vm2257, %v2261, %v2262
      %v2285 = vunpack.c.l.b16 %v2234
      %v2286 = vunpack.c.h.b16 %v2234
      %v2287 = vunpack.c.l.b16 %v2235
      %v2288 = vunpack.c.h.b16 %v2235
      %v2289 = vunpack.c.l.b16 %v2236
      %v2290 = vunpack.c.h.b16 %v2236
      %v2291 = vunpack.c.l.b16 %v2237
      %v2292 = vunpack.c.h.b16 %v2237
      %v2293 = vunpack.c.l.b16 %v2238
      %v2294 = vunpack.c.h.b16 %v2238
      %v2295 = vunpack.c.l.b16 %v2239
      %v2296 = vunpack.c.h.b16 %v2239
      %v2297 = vunpack.c.l.b16 %v2240
      %v2298 = vunpack.c.h.b16 %v2240
      %v2299 = vunpack.c.l.b16 %v2241
      %v2300 = vunpack.c.h.b16 %v2241
      %v2301 = vunpack.c.l.b16 %v2242
      %v2302 = vunpack.c.h.b16 %v2242
      %v2303 = vunpack.c.l.b16 %v2243
      %v2304 = vunpack.c.h.b16 %v2243
      %v2305 = vunpack.c.l.b16 %v2244
      %v2306 = vunpack.c.h.b16 %v2244
      %v2307 = vunpack.c.l.b16 %v2245
      %v2308 = vunpack.c.h.b16 %v2245
      %v2309 = vunpack.c.l.b16 %v2246
      %v2310 = vunpack.c.h.b16 %v2246
      %v2311 = vunpack.c.l.b16 %v2247
      %v2312 = vunpack.c.h.b16 %v2247
      %v2313 = vunpack.c.l.b16 %v2248
      %v2314 = vunpack.c.h.b16 %v2248
      %v2315 = vunpack.c.l.b16 %v2249
      %v2316 = vunpack.c.h.b16 %v2249
      %v2317 = vunpack.c.l.b16 %v2250
      %v2318 = vunpack.c.h.b16 %v2250
      %v2319 = vunpack.c.l.b16 %v2251
      %v2320 = vunpack.c.h.b16 %v2251
      %v2321 = vunpack.c.l.b16 %v2252
      %v2322 = vunpack.c.h.b16 %v2252
      %v2323 = vpack.c.b16 %v2287, %v2285
      %v2324 = vpack.c.b16 %v2288, %v2286
      %v2325 = vpack.c.b16 %v2291, %v2289
      %v2326 = vpack.c.b16 %v2292, %v2290
      %v2327 = vpack.c.b16 %v2295, %v2293
      %v2328 = vpack.c.b16 %v2296, %v2294
      %v2329 = vpack.c.b16 %v2299, %v2297
      %v2330 = vpack.c.b16 %v2300, %v2298
      %v2331 = vpack.c.b16 %v2303, %v2301
      %v2332 = vpack.c.b16 %v2304, %v2302
      %v2333 = vpack.c.b16 %v2307, %v2305
      %v2334 = vpack.c.b16 %v2308, %v2306
      %v2335 = vpack.c.b16 %v2311, %v2309
      %v2336 = vpack.c.b16 %v2312, %v2310
      %v2337 = vpack.c.b16 %v2315, %v2313
      %v2338 = vpack.c.b16 %v2316, %v2314
      %v2339 = vpack.c.b16 %v2319, %v2317
      %v2340 = vpack.c.b16 %v2320, %v2318
      %v2341 = vpack.c.b16 %v2321, %v2321
      %v2342 = vpack.c.b16 %v2322, %v2322
      %v2362 = vsel %vm1004, %v2263, 0
      %v2365 = vsel %vm1004, %v2262, 0
      %v2368 = vsel %vm1011, %v2341, 0
      %v2371 = vsel %vm1011, %v2342, 0
      %2373 = vmatpush.bf16.msra.mxu0 %v2337
      %2374 = vmatpush.bf16.msra.mxu0 %v2335
      %2375 = vmatpush.bf16.msra.mxu0 %v2333
      %2376 = vmatpush.bf16.msra.mxu0 %v2331
      %2377 = vmatpush.bf16.msra.mxu0 %v2329
      %2378 = vmatpush.bf16.msra.mxu0 %v2327
      %2379 = vmatpush.bf16.msra.mxu0 %v2325
      %2380 = vmatpush.bf16.msra.mxu0 %v2323
      %2381 = vmatmul.bf16.gmra.mxu0 %v2260
      %v2382 = vpop.f32.mrf.mxu0
      %v2383 = vadd.f32 0.0, %v2382
      %v2384 = vpop.f32.mrf.mxu0
      %v2385 = vadd.f32 0.0, %v2384
      %2386 = vmatmul.bf16.gmra.mxu0 %v2259
      %v2387 = vpop.f32.mrf.mxu0
      %v2388 = vadd.f32 0.0, %v2387
      %v2389 = vpop.f32.mrf.mxu0
      %2390 = vdwg.mxu0
      %2391 = vmatpush.bf16.msra.mxu0 0
      %2392 = vmatpush.bf16.msra.mxu0 0
      %2393 = vmatpush.bf16.msra.mxu0 0
      %2394 = vmatpush.bf16.msra.mxu0 0
      %2395 = vmatpush.bf16.msra.mxu0 0
      %2396 = vmatpush.bf16.msra.mxu0 0
      %2397 = vmatpush.bf16.msra.mxu0 %v2368
      %2398 = vmatpush.bf16.msra.mxu0 %v2339
      %2399 = vmatmul.bf16.gmra.mxu0 %v2362
      %v2400 = vpop.f32.mrf.mxu0
      %v2401 = vadd.f32 %v2383, %v2400
      %v2402 = vpop.f32.mrf.mxu0
      %v2403 = vadd.f32 %v2385, %v2402
      %2404 = vmatmul.bf16.gmra.mxu0 %v2365
      %v2405 = vpop.f32.mrf.mxu0
      %v2406 = vadd.f32 %v2388, %v2405
      %v2407 = vpop.f32.mrf.mxu0
      %2408 = vdwg.mxu0
      %2409 = vmatpush.bf16.msra.mxu0 %v2338
      %2410 = vmatpush.bf16.msra.mxu0 %v2336
      %2411 = vmatpush.bf16.msra.mxu0 %v2334
      %2412 = vmatpush.bf16.msra.mxu0 %v2332
      %2413 = vmatpush.bf16.msra.mxu0 %v2330
      %2414 = vmatpush.bf16.msra.mxu0 %v2328
      %2415 = vmatpush.bf16.msra.mxu0 %v2326
      %2416 = vmatpush.bf16.msra.mxu0 %v2324
      %2417 = vmatmul.bf16.gmra.mxu0 %v2260
      %v2418 = vpop.f32.mrf.mxu0
      %v2419 = vadd.f32 0.0, %v2418
      %v2420 = vpop.f32.mrf.mxu0
      %v2421 = vadd.f32 0.0, %v2420
      %2422 = vmatmul.bf16.gmra.mxu0 %v2259
      %v2423 = vpop.f32.mrf.mxu0
      %v2424 = vadd.f32 0.0, %v2423
      %v2425 = vpop.f32.mrf.mxu0
      %2426 = vdwg.mxu0
      %2427 = vmatpush.bf16.msra.mxu0 0
      %2428 = vmatpush.bf16.msra.mxu0 0
      %2429 = vmatpush.bf16.msra.mxu0 0
      %2430 = vmatpush.bf16.msra.mxu0 0
      %2431 = vmatpush.bf16.msra.mxu0 0
      %2432 = vmatpush.bf16.msra.mxu0 0
      %2433 = vmatpush.bf16.msra.mxu0 %v2371
      %2434 = vmatpush.bf16.msra.mxu0 %v2340
      %2435 = vmatmul.bf16.gmra.mxu0 %v2362
      %v2436 = vpop.f32.mrf.mxu0
      %v2437 = vadd.f32 %v2419, %v2436
      %v2438 = vpop.f32.mrf.mxu0
      %v2439 = vadd.f32 %v2421, %v2438
      %2440 = vmatmul.bf16.gmra.mxu0 %v2365
      %v2441 = vpop.f32.mrf.mxu0
      %v2442 = vadd.f32 %v2424, %v2441
      %v2443 = vpop.f32.mrf.mxu0
      %2444 = vdwg.mxu0
      %v2445 = vadd.f32 %v2215, %v2401
      %v2446 = vadd.f32 %v2216, %v2437
      %v2447 = vadd.f32 %v2217, %v2403
      %v2448 = vadd.f32 %v2218, %v2439
      %v2449 = vadd.f32 %v2219, %v2406
      %v2450 = vadd.f32 %v2220, %v2442
      %v2451 = vld [vmem:[#allocation2] sm:$0x80]
      %v2452 = vld [vmem:[#allocation2 + $0x8] sm:$0x80]
      %v2453 = vld [vmem:[#allocation2 + $0x30] sm:$0x3]
      %v2454 = vld [vmem:[#allocation2 + $0x38] sm:$0x3]
      %v2455 = vpack.c.bf16 %v2223, %v2451
      %v2456 = vpack.c.bf16 %v2224, %v2452
      %v2457 = vpack.c.bf16 %v2453, %v2225
      %v2458 = vpack.c.bf16 %v2454, %v2226
      %s2459 = scalar_lea.vmem %s1, 1064
      %v2460 = vld [vmem:[%s2459] sm:$0xff]
      %v2461 = vld [vmem:[%s2459 + $0x8] sm:$0xff]
      %v2462 = vld [vmem:[%s2459 + $0x10] sm:$0xff]
      %v2463 = vld [vmem:[%s2459 + $0x18] sm:$0xff]
      %v2464 = vld [vmem:[%s2459 + $0x20] sm:$0xff]
      %v2465 = vld [vmem:[%s2459 + $0x28] sm:$0xff]
      %v2466 = vld [vmem:[%s2459 + $0x30] sm:$0xff]
      %v2467 = vld [vmem:[%s2459 + $0x38] sm:$0xff]
      %v2468 = vld [vmem:[%s2459 + $0x40] sm:$0xff]
      %v2469 = vld [vmem:[%s2459 + $0x48] sm:$0xff]
      %v2470 = vld [vmem:[%s2459 + $0x50] sm:$0xff]
      %v2471 = vld [vmem:[%s2459 + $0x58] sm:$0xff]
      %v2472 = vld [vmem:[%s2459 + $0x60] sm:$0xff]
      %v2473 = vld [vmem:[%s2459 + $0x68] sm:$0xff]
      %v2474 = vld [vmem:[%s2459 + $0x70] sm:$0xff]
      %v2475 = vld [vmem:[%s2459 + $0x78] sm:$0xff]
      %v2476 = vld [vmem:[%s2459 + $0x80] sm:$0xff]
      %v2477 = vld [vmem:[%s2459 + $0x88] sm:$0xff]
      %v2478 = vld [vmem:[%s2459 + $0x90] sm:$0x77]
      %vm2479 = vsmask.f32 4352
      %v2481 = vshrl.u32 %v2455, 16
      %v2483 = vrot.slane %v2481, 3
      %v2484 = vshll.u32 %v2455, 16
      %v2486 = vrot.slane %v2484, 4
      %v2487 = vor.u32 %v2483, %v2486
      %v2489 = vshrl.u32 %v2457, 16
      %v2491 = vrot.slane %v2489, 3
      %v2492 = vshll.u32 %v2457, 16
      %v2494 = vrot.slane %v2492, 4
      %v2495 = vor.u32 %v2491, %v2494
      %v2496 = vsel %vm2479, %v2487, %v2495
      %v2498 = vshrl.u32 %v2456, 16
      %v2500 = vrot.slane %v2498, 3
      %v2501 = vshll.u32 %v2456, 16
      %v2503 = vrot.slane %v2501, 4
      %v2504 = vor.u32 %v2500, %v2503
      %v2506 = vshrl.u32 %v2458, 16
      %v2508 = vrot.slane %v2506, 3
      %v2509 = vshll.u32 %v2458, 16
      %v2511 = vrot.slane %v2509, 4
      %v2512 = vor.u32 %v2508, %v2511
      %v2513 = vsel %vm2479, %v2504, %v2512
      %v2535 = vunpack.c.l.b16 %v2460
      %v2536 = vunpack.c.h.b16 %v2460
      %v2537 = vunpack.c.l.b16 %v2461
      %v2538 = vunpack.c.h.b16 %v2461
      %v2539 = vunpack.c.l.b16 %v2462
      %v2540 = vunpack.c.h.b16 %v2462
      %v2541 = vunpack.c.l.b16 %v2463
      %v2542 = vunpack.c.h.b16 %v2463
      %v2543 = vunpack.c.l.b16 %v2464
      %v2544 = vunpack.c.h.b16 %v2464
      %v2545 = vunpack.c.l.b16 %v2465
      %v2546 = vunpack.c.h.b16 %v2465
      %v2547 = vunpack.c.l.b16 %v2466
      %v2548 = vunpack.c.h.b16 %v2466
      %v2549 = vunpack.c.l.b16 %v2467
      %v2550 = vunpack.c.h.b16 %v2467
      %v2551 = vunpack.c.l.b16 %v2468
      %v2552 = vunpack.c.h.b16 %v2468
      %v2553 = vunpack.c.l.b16 %v2469
      %v2554 = vunpack.c.h.b16 %v2469
      %v2555 = vunpack.c.l.b16 %v2470
      %v2556 = vunpack.c.h.b16 %v2470
      %v2557 = vunpack.c.l.b16 %v2471
      %v2558 = vunpack.c.h.b16 %v2471
      %v2559 = vunpack.c.l.b16 %v2472
      %v2560 = vunpack.c.h.b16 %v2472
      %v2561 = vunpack.c.l.b16 %v2473
      %v2562 = vunpack.c.h.b16 %v2473
      %v2563 = vunpack.c.l.b16 %v2474
      %v2564 = vunpack.c.h.b16 %v2474
      %v2565 = vunpack.c.l.b16 %v2475
      %v2566 = vunpack.c.h.b16 %v2475
      %v2567 = vunpack.c.l.b16 %v2476
      %v2568 = vunpack.c.h.b16 %v2476
      %v2569 = vunpack.c.l.b16 %v2477
      %v2570 = vunpack.c.h.b16 %v2477
      %v2571 = vunpack.c.l.b16 %v2478
      %v2572 = vunpack.c.h.b16 %v2478
      %v2573 = vpack.c.b16 %v2537, %v2535
      %v2574 = vpack.c.b16 %v2538, %v2536
      %v2575 = vpack.c.b16 %v2541, %v2539
      %v2576 = vpack.c.b16 %v2542, %v2540
      %v2577 = vpack.c.b16 %v2545, %v2543
      %v2578 = vpack.c.b16 %v2546, %v2544
      %v2579 = vpack.c.b16 %v2549, %v2547
      %v2580 = vpack.c.b16 %v2550, %v2548
      %v2581 = vpack.c.b16 %v2553, %v2551
      %v2582 = vpack.c.b16 %v2554, %v2552
      %v2583 = vpack.c.b16 %v2557, %v2555
      %v2584 = vpack.c.b16 %v2558, %v2556
      %v2585 = vpack.c.b16 %v2561, %v2559
      %v2586 = vpack.c.b16 %v2562, %v2560
      %v2587 = vpack.c.b16 %v2565, %v2563
      %v2588 = vpack.c.b16 %v2566, %v2564
      %v2589 = vpack.c.b16 %v2569, %v2567
      %v2590 = vpack.c.b16 %v2570, %v2568
      %v2591 = vpack.c.b16 %v2571, %v2571
      %v2592 = vpack.c.b16 %v2572, %v2572
      %v2612 = vsel %vm1004, %v2513, 0
      %v2615 = vsel %vm1004, %v2512, 0
      %v2618 = vsel %vm1011, %v2591, 0
      %v2621 = vsel %vm1011, %v2592, 0
      %2623 = vmatpush.bf16.msra.mxu0 %v2587
      %2624 = vmatpush.bf16.msra.mxu0 %v2585
      %2625 = vmatpush.bf16.msra.mxu0 %v2583
      %2626 = vmatpush.bf16.msra.mxu0 %v2581
      %2627 = vmatpush.bf16.msra.mxu0 %v2579
      %2628 = vmatpush.bf16.msra.mxu0 %v2577
      %2629 = vmatpush.bf16.msra.mxu0 %v2575
      %2630 = vmatpush.bf16.msra.mxu0 %v2573
      %2631 = vmatmul.bf16.gmra.mxu0 %v2496
      %v2632 = vpop.f32.mrf.mxu0
      %v2633 = vadd.f32 0.0, %v2632
      %v2634 = vpop.f32.mrf.mxu0
      %v2635 = vadd.f32 0.0, %v2634
      %2636 = vmatmul.bf16.gmra.mxu0 %v2495
      %v2637 = vpop.f32.mrf.mxu0
      %v2638 = vadd.f32 0.0, %v2637
      %v2639 = vpop.f32.mrf.mxu0
      %2640 = vdwg.mxu0
      %2641 = vmatpush.bf16.msra.mxu0 0
      %2642 = vmatpush.bf16.msra.mxu0 0
      %2643 = vmatpush.bf16.msra.mxu0 0
      %2644 = vmatpush.bf16.msra.mxu0 0
      %2645 = vmatpush.bf16.msra.mxu0 0
      %2646 = vmatpush.bf16.msra.mxu0 0
      %2647 = vmatpush.bf16.msra.mxu0 %v2618
      %2648 = vmatpush.bf16.msra.mxu0 %v2589
      %2649 = vmatmul.bf16.gmra.mxu0 %v2612
      %v2650 = vpop.f32.mrf.mxu0
      %v2651 = vadd.f32 %v2633, %v2650
      %v2652 = vpop.f32.mrf.mxu0
      %v2653 = vadd.f32 %v2635, %v2652
      %2654 = vmatmul.bf16.gmra.mxu0 %v2615
      %v2655 = vpop.f32.mrf.mxu0
      %v2656 = vadd.f32 %v2638, %v2655
      %v2657 = vpop.f32.mrf.mxu0
      %2658 = vdwg.mxu0
      %2659 = vmatpush.bf16.msra.mxu0 %v2588
      %2660 = vmatpush.bf16.msra.mxu0 %v2586
      %2661 = vmatpush.bf16.msra.mxu0 %v2584
      %2662 = vmatpush.bf16.msra.mxu0 %v2582
      %2663 = vmatpush.bf16.msra.mxu0 %v2580
      %2664 = vmatpush.bf16.msra.mxu0 %v2578
      %2665 = vmatpush.bf16.msra.mxu0 %v2576
      %2666 = vmatpush.bf16.msra.mxu0 %v2574
      %2667 = vmatmul.bf16.gmra.mxu0 %v2496
      %v2668 = vpop.f32.mrf.mxu0
      %v2669 = vadd.f32 0.0, %v2668
      %v2670 = vpop.f32.mrf.mxu0
      %v2671 = vadd.f32 0.0, %v2670
      %2672 = vmatmul.bf16.gmra.mxu0 %v2495
      %v2673 = vpop.f32.mrf.mxu0
      %v2674 = vadd.f32 0.0, %v2673
      %v2675 = vpop.f32.mrf.mxu0
      %2676 = vdwg.mxu0
      %2677 = vmatpush.bf16.msra.mxu0 0
      %2678 = vmatpush.bf16.msra.mxu0 0
      %2679 = vmatpush.bf16.msra.mxu0 0
      %2680 = vmatpush.bf16.msra.mxu0 0
      %2681 = vmatpush.bf16.msra.mxu0 0
      %2682 = vmatpush.bf16.msra.mxu0 0
      %2683 = vmatpush.bf16.msra.mxu0 %v2621
      %2684 = vmatpush.bf16.msra.mxu0 %v2590
      %2685 = vmatmul.bf16.gmra.mxu0 %v2612
      %v2686 = vpop.f32.mrf.mxu0
      %v2687 = vadd.f32 %v2669, %v2686
      %v2688 = vpop.f32.mrf.mxu0
      %v2689 = vadd.f32 %v2671, %v2688
      %2690 = vmatmul.bf16.gmra.mxu0 %v2615
      %v2691 = vpop.f32.mrf.mxu0
      %v2692 = vadd.f32 %v2674, %v2691
      %v2693 = vpop.f32.mrf.mxu0
      %2694 = vdwg.mxu0
      %v2695 = vadd.f32 %v2445, %v2651
      %v2696 = vadd.f32 %v2446, %v2687
      %v2697 = vadd.f32 %v2447, %v2653
      %v2698 = vadd.f32 %v2448, %v2689
      %v2699 = vadd.f32 %v2449, %v2656
      %v2700 = vadd.f32 %v2450, %v2692
      %v2701 = vld [vmem:[%s2] ss:$4 sm:$0x3]
      %v2703 = vperm.slane %v2701, 0
      %v2704 = vperm.slane %v2701, 1
      %v2707 = vmul.f32 %v2695, %v2703
      %v2708 = vmul.f32 %v2696, %v2704
      %v2709 = vmul.f32 %v2697, %v2703
      %v2710 = vmul.f32 %v2698, %v2704
      %v2711 = vmul.f32 %v2699, %v2703
      %v2712 = vmul.f32 %v2700, %v2704
      %v2713 = vld [vmem:[%s3] ss:$4 sm:$0x3]
      %v2715 = vperm.slane %v2713, 0
      %v2716 = vperm.slane %v2713, 1
      %v2719 = vadd.f32 %v2707, %v2715
      %v2720 = vadd.f32 %v2708, %v2716
      %v2721 = vadd.f32 %v2709, %v2715
      %v2722 = vadd.f32 %v2710, %v2716
      %v2723 = vadd.f32 %v2711, %v2715
      %v2724 = vadd.f32 %v2712, %v2716
      %v2725 = vmax.f32 %v2719, 0.0
      %v2726 = vmax.f32 %v2720, 0.0
      %v2727 = vmax.f32 %v2721, 0.0
      %v2728 = vmax.f32 %v2722, 0.0
      %v2729 = vmax.f32 %v2723, 0.0
      %v2730 = vmax.f32 %v2724, 0.0
      %v2737 = vrot.slane %v2725, 5
      %v2738 = vrot.slane %v2726, 5
      %v2739 = vrot.slane %v2727, 5
      %v2740 = vsel %vm1011, %v2737, %v2739
      %v2741 = vrot.slane %v2728, 5
      %v2742 = vsel %vm1011, %v2738, %v2741
      %v2743 = vrot.slane %v2729, 5
      %v2744 = vsel %vm1011, %v2739, %v2743
      %v2745 = vrot.slane %v2730, 5
      %v2746 = vsel %vm1011, %v2741, %v2745
      %2753 = vst [vmem:[#allocation2] sm:$0xf8] %v2737
      %vm2754 = vcmask 179203
      %2755 = vst.msk [vmem:[#allocation2 + $0x8] sm:$0xf8] %vm2754, %v2738
      %2756 = vst [vmem:[#allocation2 + $0x10] sm:$0xff] %v2740
      %2757 = vst.msk [vmem:[#allocation2 + $0x18] sm:$0xff] %vm1004, %v2742
      %2758 = vst [vmem:[#allocation2 + $0x20] sm:$0x3f] %v2744
      %2759 = vst.msk [vmem:[#allocation2 + $0x28] sm:$0x3f] %vm219, %v2746
      %v2760 = vld [vmem:[#allocation2] sm:$0xff]
      %v2761 = vld [vmem:[#allocation2 + $0x8] sm:$0xff]
      %v2762 = vld [vmem:[#allocation2 + $0x10] sm:$0xff]
      %v2763 = vld [vmem:[#allocation2 + $0x18] sm:$0xff]
      %v2764 = vld [vmem:[#allocation2 + $0x20] sm:$0x7]
      %v2765 = vld [vmem:[#allocation2 + $0x28] sm:$0x7]
      %v2766 = vpack.c.bf16 %v2762, %v2760
      %v2767 = vpack.c.bf16 %v2763, %v2761
      %v2768 = vpack.c.bf16 %v2764, %v2764
      %v2769 = vpack.c.bf16 %v2765, %v2765
      %s2770 = scalar_lea.vmem %s1, 1216
      %v2771 = vld [vmem:[%s2770] sm:$0xff]
      %v2772 = vld [vmem:[%s2770 + $0x8] sm:$0xff]
      %v2773 = vld [vmem:[%s2770 + $0x10] sm:$0xff]
      %v2774 = vld [vmem:[%s2770 + $0x18] sm:$0xff]
      %v2775 = vld [vmem:[%s2770 + $0x20] sm:$0xff]
      %v2776 = vld [vmem:[%s2770 + $0x28] sm:$0xff]
      %v2777 = vld [vmem:[%s2770 + $0x30] sm:$0xff]
      %v2778 = vld [vmem:[%s2770 + $0x38] sm:$0xff]
      %v2779 = vld [vmem:[%s2770 + $0x40] sm:$0xff]
      %v2780 = vld [vmem:[%s2770 + $0x48] sm:$0xff]
      %v2781 = vld [vmem:[%s2770 + $0x50] sm:$0xff]
      %v2782 = vld [vmem:[%s2770 + $0x58] sm:$0xff]
      %v2783 = vld [vmem:[%s2770 + $0x60] sm:$0xff]
      %v2784 = vld [vmem:[%s2770 + $0x68] sm:$0xff]
      %v2785 = vld [vmem:[%s2770 + $0x70] sm:$0xff]
      %v2786 = vld [vmem:[%s2770 + $0x78] sm:$0xff]
      %v2787 = vld [vmem:[%s2770 + $0x80] sm:$0xff]
      %v2788 = vld [vmem:[%s2770 + $0x88] sm:$0xff]
      %v2789 = vld [vmem:[%s2770 + $0x90] sm:$0x77]
      %v2790 = vld [vmem:[#allocation2] sm:$0xfe]
      %v2791 = vld [vmem:[#allocation2 + $0x8] sm:$0xfe]
      %v2792 = vld [vmem:[#allocation2 + $0x20] sm:$0xf]
      %v2793 = vld [vmem:[#allocation2 + $0x28] sm:$0xf]
      %v2794 = vpack.c.bf16 %v2762, %v2790
      %v2795 = vpack.c.bf16 %v2763, %v2791
      %v2796 = vpack.c.bf16 %v2792, %v2792
      %v2797 = vpack.c.bf16 %v2793, %v2793
      %s2798 = scalar_lea.vmem %s1, 1368
      %v2799 = vld [vmem:[%s2798] sm:$0xff]
      %v2800 = vld [vmem:[%s2798 + $0x8] sm:$0xff]
      %v2801 = vld [vmem:[%s2798 + $0x10] sm:$0xff]
      %v2802 = vld [vmem:[%s2798 + $0x18] sm:$0xff]
      %v2803 = vld [vmem:[%s2798 + $0x20] sm:$0xff]
      %v2804 = vld [vmem:[%s2798 + $0x28] sm:$0xff]
      %v2805 = vld [vmem:[%s2798 + $0x30] sm:$0xff]
      %v2806 = vld [vmem:[%s2798 + $0x38] sm:$0xff]
      %v2807 = vld [vmem:[%s2798 + $0x40] sm:$0xff]
      %v2808 = vld [vmem:[%s2798 + $0x48] sm:$0xff]
      %v2809 = vld [vmem:[%s2798 + $0x50] sm:$0xff]
      %v2810 = vld [vmem:[%s2798 + $0x58] sm:$0xff]
      %v2811 = vld [vmem:[%s2798 + $0x60] sm:$0xff]
      %v2812 = vld [vmem:[%s2798 + $0x68] sm:$0xff]
      %v2813 = vld [vmem:[%s2798 + $0x70] sm:$0xff]
      %v2814 = vld [vmem:[%s2798 + $0x78] sm:$0xff]
      %v2815 = vld [vmem:[%s2798 + $0x80] sm:$0xff]
      %v2816 = vld [vmem:[%s2798 + $0x88] sm:$0xff]
      %v2817 = vld [vmem:[%s2798 + $0x90] sm:$0x77]
      %v2819 = vshrl.u32 %v2794, 16
      %v2821 = vshll.u32 %v2794, 16
      %v2823 = vrot.slane %v2821, 1
      %v2824 = vor.u32 %v2819, %v2823
      %v2826 = vshll.u32 %v2796, 16
      %v2828 = vrot.slane %v2826, 1
      %v2829 = vsel %vm876, %v2824, %v2828
      %v2831 = vshrl.u32 %v2795, 16
      %v2833 = vshll.u32 %v2795, 16
      %v2835 = vrot.slane %v2833, 1
      %v2836 = vor.u32 %v2831, %v2835
      %v2838 = vshll.u32 %v2797, 16
      %v2840 = vrot.slane %v2838, 1
      %v2841 = vsel %vm876, %v2836, %v2840
      %v2842 = vshrl.u32 %v2796, 16
      %v2844 = vor.u32 %v2842, %v2828
      %v2845 = vshrl.u32 %v2797, 16
      %v2847 = vor.u32 %v2845, %v2840
      %v2869 = vunpack.c.l.b16 %v2799
      %v2870 = vunpack.c.h.b16 %v2799
      %v2871 = vunpack.c.l.b16 %v2800
      %v2872 = vunpack.c.h.b16 %v2800
      %v2873 = vunpack.c.l.b16 %v2801
      %v2874 = vunpack.c.h.b16 %v2801
      %v2875 = vunpack.c.l.b16 %v2802
      %v2876 = vunpack.c.h.b16 %v2802
      %v2877 = vunpack.c.l.b16 %v2803
      %v2878 = vunpack.c.h.b16 %v2803
      %v2879 = vunpack.c.l.b16 %v2804
      %v2880 = vunpack.c.h.b16 %v2804
      %v2881 = vunpack.c.l.b16 %v2805
      %v2882 = vunpack.c.h.b16 %v2805
      %v2883 = vunpack.c.l.b16 %v2806
      %v2884 = vunpack.c.h.b16 %v2806
      %v2885 = vunpack.c.l.b16 %v2807
      %v2886 = vunpack.c.h.b16 %v2807
      %v2887 = vunpack.c.l.b16 %v2808
      %v2888 = vunpack.c.h.b16 %v2808
      %v2889 = vunpack.c.l.b16 %v2809
      %v2890 = vunpack.c.h.b16 %v2809
      %v2891 = vunpack.c.l.b16 %v2810
      %v2892 = vunpack.c.h.b16 %v2810
      %v2893 = vunpack.c.l.b16 %v2811
      %v2894 = vunpack.c.h.b16 %v2811
      %v2895 = vunpack.c.l.b16 %v2812
      %v2896 = vunpack.c.h.b16 %v2812
      %v2897 = vunpack.c.l.b16 %v2813
      %v2898 = vunpack.c.h.b16 %v2813
      %v2899 = vunpack.c.l.b16 %v2814
      %v2900 = vunpack.c.h.b16 %v2814
      %v2901 = vunpack.c.l.b16 %v2815
      %v2902 = vunpack.c.h.b16 %v2815
      %v2903 = vunpack.c.l.b16 %v2816
      %v2904 = vunpack.c.h.b16 %v2816
      %v2905 = vunpack.c.l.b16 %v2817
      %v2906 = vunpack.c.h.b16 %v2817
      %v2907 = vpack.c.b16 %v2871, %v2869
      %v2908 = vpack.c.b16 %v2872, %v2870
      %v2909 = vpack.c.b16 %v2875, %v2873
      %v2910 = vpack.c.b16 %v2876, %v2874
      %v2911 = vpack.c.b16 %v2879, %v2877
      %v2912 = vpack.c.b16 %v2880, %v2878
      %v2913 = vpack.c.b16 %v2883, %v2881
      %v2914 = vpack.c.b16 %v2884, %v2882
      %v2915 = vpack.c.b16 %v2887, %v2885
      %v2916 = vpack.c.b16 %v2888, %v2886
      %v2917 = vpack.c.b16 %v2891, %v2889
      %v2918 = vpack.c.b16 %v2892, %v2890
      %v2919 = vpack.c.b16 %v2895, %v2893
      %v2920 = vpack.c.b16 %v2896, %v2894
      %v2921 = vpack.c.b16 %v2899, %v2897
      %v2922 = vpack.c.b16 %v2900, %v2898
      %v2923 = vpack.c.b16 %v2903, %v2901
      %v2924 = vpack.c.b16 %v2904, %v2902
      %v2925 = vpack.c.b16 %v2905, %v2905
      %v2926 = vpack.c.b16 %v2906, %v2906
      %v2946 = vsel %vm1004, %v2841, 0
      %v2949 = vsel %vm1004, %v2847, 0
      %v2952 = vsel %vm1011, %v2925, 0
      %v2955 = vsel %vm1011, %v2926, 0
      %2957 = vmatpush.bf16.msra.mxu0 %v2921
      %2958 = vmatpush.bf16.msra.mxu0 %v2919
      %2959 = vmatpush.bf16.msra.mxu0 %v2917
      %2960 = vmatpush.bf16.msra.mxu0 %v2915
      %2961 = vmatpush.bf16.msra.mxu0 %v2913
      %2962 = vmatpush.bf16.msra.mxu0 %v2911
      %2963 = vmatpush.bf16.msra.mxu0 %v2909
      %2964 = vmatpush.bf16.msra.mxu0 %v2907
      %2965 = vmatmul.bf16.gmra.mxu0 %v2829
      %v2966 = vpop.f32.mrf.mxu0
      %v2967 = vadd.f32 0.0, %v2966
      %v2968 = vpop.f32.mrf.mxu0
      %v2969 = vadd.f32 0.0, %v2968
      %2970 = vmatmul.bf16.gmra.mxu0 %v2844
      %v2971 = vpop.f32.mrf.mxu0
      %v2972 = vadd.f32 0.0, %v2971
      %v2973 = vpop.f32.mrf.mxu0
      %2974 = vdwg.mxu0
      %2975 = vmatpush.bf16.msra.mxu0 0
      %2976 = vmatpush.bf16.msra.mxu0 0
      %2977 = vmatpush.bf16.msra.mxu0 0
      %2978 = vmatpush.bf16.msra.mxu0 0
      %2979 = vmatpush.bf16.msra.mxu0 0
      %2980 = vmatpush.bf16.msra.mxu0 0
      %2981 = vmatpush.bf16.msra.mxu0 %v2952
      %2982 = vmatpush.bf16.msra.mxu0 %v2923
      %2983 = vmatmul.bf16.gmra.mxu0 %v2946
      %v2984 = vpop.f32.mrf.mxu0
      %v2985 = vadd.f32 %v2967, %v2984
      %v2986 = vpop.f32.mrf.mxu0
      %v2987 = vadd.f32 %v2969, %v2986
      %2988 = vmatmul.bf16.gmra.mxu0 %v2949
      %v2989 = vpop.f32.mrf.mxu0
      %v2990 = vadd.f32 %v2972, %v2989
      %v2991 = vpop.f32.mrf.mxu0
      %2992 = vdwg.mxu0
      %2993 = vmatpush.bf16.msra.mxu0 %v2922
      %2994 = vmatpush.bf16.msra.mxu0 %v2920
      %2995 = vmatpush.bf16.msra.mxu0 %v2918
      %2996 = vmatpush.bf16.msra.mxu0 %v2916
      %2997 = vmatpush.bf16.msra.mxu0 %v2914
      %2998 = vmatpush.bf16.msra.mxu0 %v2912
      %2999 = vmatpush.bf16.msra.mxu0 %v2910
      %3000 = vmatpush.bf16.msra.mxu0 %v2908
      %3001 = vmatmul.bf16.gmra.mxu0 %v2829
      %v3002 = vpop.f32.mrf.mxu0
      %v3003 = vadd.f32 0.0, %v3002
      %v3004 = vpop.f32.mrf.mxu0
      %v3005 = vadd.f32 0.0, %v3004
      %3006 = vmatmul.bf16.gmra.mxu0 %v2844
      %v3007 = vpop.f32.mrf.mxu0
      %v3008 = vadd.f32 0.0, %v3007
      %v3009 = vpop.f32.mrf.mxu0
      %3010 = vdwg.mxu0
      %3011 = vmatpush.bf16.msra.mxu0 0
      %3012 = vmatpush.bf16.msra.mxu0 0
      %3013 = vmatpush.bf16.msra.mxu0 0
      %3014 = vmatpush.bf16.msra.mxu0 0
      %3015 = vmatpush.bf16.msra.mxu0 0
      %3016 = vmatpush.bf16.msra.mxu0 0
      %3017 = vmatpush.bf16.msra.mxu0 %v2955
      %3018 = vmatpush.bf16.msra.mxu0 %v2924
      %3019 = vmatmul.bf16.gmra.mxu0 %v2946
      %v3020 = vpop.f32.mrf.mxu0
      %v3021 = vadd.f32 %v3003, %v3020
      %v3022 = vpop.f32.mrf.mxu0
      %v3023 = vadd.f32 %v3005, %v3022
      %3024 = vmatmul.bf16.gmra.mxu0 %v2949
      %v3025 = vpop.f32.mrf.mxu0
      %v3026 = vadd.f32 %v3008, %v3025
      %v3027 = vpop.f32.mrf.mxu0
      %3028 = vdwg.mxu0
      %v3048 = vunpack.c.l.b16 %v2771
      %v3049 = vunpack.c.h.b16 %v2771
      %v3050 = vunpack.c.l.b16 %v2772
      %v3051 = vunpack.c.h.b16 %v2772
      %v3052 = vunpack.c.l.b16 %v2773
      %v3053 = vunpack.c.h.b16 %v2773
      %v3054 = vunpack.c.l.b16 %v2774
      %v3055 = vunpack.c.h.b16 %v2774
      %v3056 = vunpack.c.l.b16 %v2775
      %v3057 = vunpack.c.h.b16 %v2775
      %v3058 = vunpack.c.l.b16 %v2776
      %v3059 = vunpack.c.h.b16 %v2776
      %v3060 = vunpack.c.l.b16 %v2777
      %v3061 = vunpack.c.h.b16 %v2777
      %v3062 = vunpack.c.l.b16 %v2778
      %v3063 = vunpack.c.h.b16 %v2778
      %v3064 = vunpack.c.l.b16 %v2779
      %v3065 = vunpack.c.h.b16 %v2779
      %v3066 = vunpack.c.l.b16 %v2780
      %v3067 = vunpack.c.h.b16 %v2780
      %v3068 = vunpack.c.l.b16 %v2781
      %v3069 = vunpack.c.h.b16 %v2781
      %v3070 = vunpack.c.l.b16 %v2782
      %v3071 = vunpack.c.h.b16 %v2782
      %v3072 = vunpack.c.l.b16 %v2783
      %v3073 = vunpack.c.h.b16 %v2783
      %v3074 = vunpack.c.l.b16 %v2784
      %v3075 = vunpack.c.h.b16 %v2784
      %v3076 = vunpack.c.l.b16 %v2785
      %v3077 = vunpack.c.h.b16 %v2785
      %v3078 = vunpack.c.l.b16 %v2786
      %v3079 = vunpack.c.h.b16 %v2786
      %v3080 = vunpack.c.l.b16 %v2787
      %v3081 = vunpack.c.h.b16 %v2787
      %v3082 = vunpack.c.l.b16 %v2788
      %v3083 = vunpack.c.h.b16 %v2788
      %v3084 = vunpack.c.l.b16 %v2789
      %v3085 = vunpack.c.h.b16 %v2789
      %v3086 = vpack.c.b16 %v3050, %v3048
      %v3087 = vpack.c.b16 %v3051, %v3049
      %v3088 = vpack.c.b16 %v3054, %v3052
      %v3089 = vpack.c.b16 %v3055, %v3053
      %v3090 = vpack.c.b16 %v3058, %v3056
      %v3091 = vpack.c.b16 %v3059, %v3057
      %v3092 = vpack.c.b16 %v3062, %v3060
      %v3093 = vpack.c.b16 %v3063, %v3061
      %v3094 = vpack.c.b16 %v3066, %v3064
      %v3095 = vpack.c.b16 %v3067, %v3065
      %v3096 = vpack.c.b16 %v3070, %v3068
      %v3097 = vpack.c.b16 %v3071, %v3069
      %v3098 = vpack.c.b16 %v3074, %v3072
      %v3099 = vpack.c.b16 %v3075, %v3073
      %v3100 = vpack.c.b16 %v3078, %v3076
      %v3101 = vpack.c.b16 %v3079, %v3077
      %v3102 = vpack.c.b16 %v3082, %v3080
      %v3103 = vpack.c.b16 %v3083, %v3081
      %v3104 = vpack.c.b16 %v3084, %v3084
      %v3105 = vpack.c.b16 %v3085, %v3085
      %v3125 = vsel %vm1004, %v2767, 0
      %v3128 = vsel %vm1004, %v2769, 0
      %v3131 = vsel %vm1011, %v3104, 0
      %v3134 = vsel %vm1011, %v3105, 0
      %3136 = vmatpush.bf16.msra.mxu0 %v3100
      %3137 = vmatpush.bf16.msra.mxu0 %v3098
      %3138 = vmatpush.bf16.msra.mxu0 %v3096
      %3139 = vmatpush.bf16.msra.mxu0 %v3094
      %3140 = vmatpush.bf16.msra.mxu0 %v3092
      %3141 = vmatpush.bf16.msra.mxu0 %v3090
      %3142 = vmatpush.bf16.msra.mxu0 %v3088
      %3143 = vmatpush.bf16.msra.mxu0 %v3086
      %3144 = vmatmul.bf16.gmra.mxu0 %v2766
      %v3145 = vpop.f32.mrf.mxu0
      %v3146 = vadd.f32 %v2985, %v3145
      %v3147 = vpop.f32.mrf.mxu0
      %v3148 = vadd.f32 %v2987, %v3147
      %3149 = vmatmul.bf16.gmra.mxu0 %v2768
      %v3150 = vpop.f32.mrf.mxu0
      %v3151 = vadd.f32 %v2990, %v3150
      %v3152 = vpop.f32.mrf.mxu0
      %3153 = vdwg.mxu0
      %3154 = vmatpush.bf16.msra.mxu0 0
      %3155 = vmatpush.bf16.msra.mxu0 0
      %3156 = vmatpush.bf16.msra.mxu0 0
      %3157 = vmatpush.bf16.msra.mxu0 0
      %3158 = vmatpush.bf16.msra.mxu0 0
      %3159 = vmatpush.bf16.msra.mxu0 0
      %3160 = vmatpush.bf16.msra.mxu0 %v3131
      %3161 = vmatpush.bf16.msra.mxu0 %v3102
      %3162 = vmatmul.bf16.gmra.mxu0 %v3125
      %v3163 = vpop.f32.mrf.mxu0
      %v3164 = vadd.f32 %v3146, %v3163
      %v3165 = vpop.f32.mrf.mxu0
      %v3166 = vadd.f32 %v3148, %v3165
      %3167 = vmatmul.bf16.gmra.mxu0 %v3128
      %v3168 = vpop.f32.mrf.mxu0
      %v3169 = vadd.f32 %v3151, %v3168
      %v3170 = vpop.f32.mrf.mxu0
      %3171 = vdwg.mxu0
      %3172 = vmatpush.bf16.msra.mxu0 %v3101
      %3173 = vmatpush.bf16.msra.mxu0 %v3099
      %3174 = vmatpush.bf16.msra.mxu0 %v3097
      %3175 = vmatpush.bf16.msra.mxu0 %v3095
      %3176 = vmatpush.bf16.msra.mxu0 %v3093
      %3177 = vmatpush.bf16.msra.mxu0 %v3091
      %3178 = vmatpush.bf16.msra.mxu0 %v3089
      %3179 = vmatpush.bf16.msra.mxu0 %v3087
      %3180 = vmatmul.bf16.gmra.mxu0 %v2766
      %v3181 = vpop.f32.mrf.mxu0
      %v3182 = vadd.f32 %v3021, %v3181
      %v3183 = vpop.f32.mrf.mxu0
      %v3184 = vadd.f32 %v3023, %v3183
      %3185 = vmatmul.bf16.gmra.mxu0 %v2768
      %v3186 = vpop.f32.mrf.mxu0
      %v3187 = vadd.f32 %v3026, %v3186
      %v3188 = vpop.f32.mrf.mxu0
      %3189 = vdwg.mxu0
      %3190 = vmatpush.bf16.msra.mxu0 0
      %3191 = vmatpush.bf16.msra.mxu0 0
      %3192 = vmatpush.bf16.msra.mxu0 0
      %3193 = vmatpush.bf16.msra.mxu0 0
      %3194 = vmatpush.bf16.msra.mxu0 0
      %3195 = vmatpush.bf16.msra.mxu0 0
      %3196 = vmatpush.bf16.msra.mxu0 %v3134
      %3197 = vmatpush.bf16.msra.mxu0 %v3103
      %3198 = vmatmul.bf16.gmra.mxu0 %v3125
      %v3199 = vpop.f32.mrf.mxu0
      %v3200 = vadd.f32 %v3182, %v3199
      %v3201 = vpop.f32.mrf.mxu0
      %v3202 = vadd.f32 %v3184, %v3201
      %3203 = vmatmul.bf16.gmra.mxu0 %v3128
      %v3204 = vpop.f32.mrf.mxu0
      %v3205 = vadd.f32 %v3187, %v3204
      %v3206 = vpop.f32.mrf.mxu0
      %3207 = vdwg.mxu0
      %v3208 = vld [vmem:[#allocation2] sm:$0xfc]
      %v3209 = vld [vmem:[#allocation2 + $0x8] sm:$0xfc]
      %v3210 = vld [vmem:[#allocation2 + $0x20] sm:$0x1f]
      %v3211 = vld [vmem:[#allocation2 + $0x28] sm:$0x1f]
      %v3212 = vpack.c.bf16 %v2762, %v3208
      %v3213 = vpack.c.bf16 %v2763, %v3209
      %v3214 = vpack.c.bf16 %v3210, %v3210
      %v3215 = vpack.c.bf16 %v3211, %v3211
      %s3216 = scalar_lea.vmem %s1, 1520
      %v3217 = vld [vmem:[%s3216] sm:$0xff]
      %v3218 = vld [vmem:[%s3216 + $0x8] sm:$0xff]
      %v3219 = vld [vmem:[%s3216 + $0x10] sm:$0xff]
      %v3220 = vld [vmem:[%s3216 + $0x18] sm:$0xff]
      %v3221 = vld [vmem:[%s3216 + $0x20] sm:$0xff]
      %v3222 = vld [vmem:[%s3216 + $0x28] sm:$0xff]
      %v3223 = vld [vmem:[%s3216 + $0x30] sm:$0xff]
      %v3224 = vld [vmem:[%s3216 + $0x38] sm:$0xff]
      %v3225 = vld [vmem:[%s3216 + $0x40] sm:$0xff]
      %v3226 = vld [vmem:[%s3216 + $0x48] sm:$0xff]
      %v3227 = vld [vmem:[%s3216 + $0x50] sm:$0xff]
      %v3228 = vld [vmem:[%s3216 + $0x58] sm:$0xff]
      %v3229 = vld [vmem:[%s3216 + $0x60] sm:$0xff]
      %v3230 = vld [vmem:[%s3216 + $0x68] sm:$0xff]
      %v3231 = vld [vmem:[%s3216 + $0x70] sm:$0xff]
      %v3232 = vld [vmem:[%s3216 + $0x78] sm:$0xff]
      %v3233 = vld [vmem:[%s3216 + $0x80] sm:$0xff]
      %v3234 = vld [vmem:[%s3216 + $0x88] sm:$0xff]
      %v3235 = vld [vmem:[%s3216 + $0x90] sm:$0x77]
      %v3240 = vrot.slane %v3212, 1
      %v3241 = vrot.slane %v3214, 1
      %v3242 = vsel %vm1301, %v3240, %v3241
      %v3243 = vrot.slane %v3213, 1
      %v3244 = vrot.slane %v3215, 1
      %v3245 = vsel %vm1301, %v3243, %v3244
      %v3267 = vunpack.c.l.b16 %v3217
      %v3268 = vunpack.c.h.b16 %v3217
      %v3269 = vunpack.c.l.b16 %v3218
      %v3270 = vunpack.c.h.b16 %v3218
      %v3271 = vunpack.c.l.b16 %v3219
      %v3272 = vunpack.c.h.b16 %v3219
      %v3273 = vunpack.c.l.b16 %v3220
      %v3274 = vunpack.c.h.b16 %v3220
      %v3275 = vunpack.c.l.b16 %v3221
      %v3276 = vunpack.c.h.b16 %v3221
      %v3277 = vunpack.c.l.b16 %v3222
      %v3278 = vunpack.c.h.b16 %v3222
      %v3279 = vunpack.c.l.b16 %v3223
      %v3280 = vunpack.c.h.b16 %v3223
      %v3281 = vunpack.c.l.b16 %v3224
      %v3282 = vunpack.c.h.b16 %v3224
      %v3283 = vunpack.c.l.b16 %v3225
      %v3284 = vunpack.c.h.b16 %v3225
      %v3285 = vunpack.c.l.b16 %v3226
      %v3286 = vunpack.c.h.b16 %v3226
      %v3287 = vunpack.c.l.b16 %v3227
      %v3288 = vunpack.c.h.b16 %v3227
      %v3289 = vunpack.c.l.b16 %v3228
      %v3290 = vunpack.c.h.b16 %v3228
      %v3291 = vunpack.c.l.b16 %v3229
      %v3292 = vunpack.c.h.b16 %v3229
      %v3293 = vunpack.c.l.b16 %v3230
      %v3294 = vunpack.c.h.b16 %v3230
      %v3295 = vunpack.c.l.b16 %v3231
      %v3296 = vunpack.c.h.b16 %v3231
      %v3297 = vunpack.c.l.b16 %v3232
      %v3298 = vunpack.c.h.b16 %v3232
      %v3299 = vunpack.c.l.b16 %v3233
      %v3300 = vunpack.c.h.b16 %v3233
      %v3301 = vunpack.c.l.b16 %v3234
      %v3302 = vunpack.c.h.b16 %v3234
      %v3303 = vunpack.c.l.b16 %v3235
      %v3304 = vunpack.c.h.b16 %v3235
      %v3305 = vpack.c.b16 %v3269, %v3267
      %v3306 = vpack.c.b16 %v3270, %v3268
      %v3307 = vpack.c.b16 %v3273, %v3271
      %v3308 = vpack.c.b16 %v3274, %v3272
      %v3309 = vpack.c.b16 %v3277, %v3275
      %v3310 = vpack.c.b16 %v3278, %v3276
      %v3311 = vpack.c.b16 %v3281, %v3279
      %v3312 = vpack.c.b16 %v3282, %v3280
      %v3313 = vpack.c.b16 %v3285, %v3283
      %v3314 = vpack.c.b16 %v3286, %v3284
      %v3315 = vpack.c.b16 %v3289, %v3287
      %v3316 = vpack.c.b16 %v3290, %v3288
      %v3317 = vpack.c.b16 %v3293, %v3291
      %v3318 = vpack.c.b16 %v3294, %v3292
      %v3319 = vpack.c.b16 %v3297, %v3295
      %v3320 = vpack.c.b16 %v3298, %v3296
      %v3321 = vpack.c.b16 %v3301, %v3299
      %v3322 = vpack.c.b16 %v3302, %v3300
      %v3323 = vpack.c.b16 %v3303, %v3303
      %v3324 = vpack.c.b16 %v3304, %v3304
      %v3344 = vsel %vm1004, %v3245, 0
      %v3347 = vsel %vm1004, %v3244, 0
      %v3350 = vsel %vm1011, %v3323, 0
      %v3353 = vsel %vm1011, %v3324, 0
      %3355 = vmatpush.bf16.msra.mxu0 %v3319
      %3356 = vmatpush.bf16.msra.mxu0 %v3317
      %3357 = vmatpush.bf16.msra.mxu0 %v3315
      %3358 = vmatpush.bf16.msra.mxu0 %v3313
      %3359 = vmatpush.bf16.msra.mxu0 %v3311
      %3360 = vmatpush.bf16.msra.mxu0 %v3309
      %3361 = vmatpush.bf16.msra.mxu0 %v3307
      %3362 = vmatpush.bf16.msra.mxu0 %v3305
      %3363 = vmatmul.bf16.gmra.mxu0 %v3242
      %v3364 = vpop.f32.mrf.mxu0
      %v3365 = vadd.f32 0.0, %v3364
      %v3366 = vpop.f32.mrf.mxu0
      %v3367 = vadd.f32 0.0, %v3366
      %3368 = vmatmul.bf16.gmra.mxu0 %v3241
      %v3369 = vpop.f32.mrf.mxu0
      %v3370 = vadd.f32 0.0, %v3369
      %v3371 = vpop.f32.mrf.mxu0
      %3372 = vdwg.mxu0
      %3373 = vmatpush.bf16.msra.mxu0 0
      %3374 = vmatpush.bf16.msra.mxu0 0
      %3375 = vmatpush.bf16.msra.mxu0 0
      %3376 = vmatpush.bf16.msra.mxu0 0
      %3377 = vmatpush.bf16.msra.mxu0 0
      %3378 = vmatpush.bf16.msra.mxu0 0
      %3379 = vmatpush.bf16.msra.mxu0 %v3350
      %3380 = vmatpush.bf16.msra.mxu0 %v3321
      %3381 = vmatmul.bf16.gmra.mxu0 %v3344
      %v3382 = vpop.f32.mrf.mxu0
      %v3383 = vadd.f32 %v3365, %v3382
      %v3384 = vpop.f32.mrf.mxu0
      %v3385 = vadd.f32 %v3367, %v3384
      %3386 = vmatmul.bf16.gmra.mxu0 %v3347
      %v3387 = vpop.f32.mrf.mxu0
      %v3388 = vadd.f32 %v3370, %v3387
      %v3389 = vpop.f32.mrf.mxu0
      %3390 = vdwg.mxu0
      %3391 = vmatpush.bf16.msra.mxu0 %v3320
      %3392 = vmatpush.bf16.msra.mxu0 %v3318
      %3393 = vmatpush.bf16.msra.mxu0 %v3316
      %3394 = vmatpush.bf16.msra.mxu0 %v3314
      %3395 = vmatpush.bf16.msra.mxu0 %v3312
      %3396 = vmatpush.bf16.msra.mxu0 %v3310
      %3397 = vmatpush.bf16.msra.mxu0 %v3308
      %3398 = vmatpush.bf16.msra.mxu0 %v3306
      %3399 = vmatmul.bf16.gmra.mxu0 %v3242
      %v3400 = vpop.f32.mrf.mxu0
      %v3401 = vadd.f32 0.0, %v3400
      %v3402 = vpop.f32.mrf.mxu0
      %v3403 = vadd.f32 0.0, %v3402
      %3404 = vmatmul.bf16.gmra.mxu0 %v3241
      %v3405 = vpop.f32.mrf.mxu0
      %v3406 = vadd.f32 0.0, %v3405
      %v3407 = vpop.f32.mrf.mxu0
      %3408 = vdwg.mxu0
      %3409 = vmatpush.bf16.msra.mxu0 0
      %3410 = vmatpush.bf16.msra.mxu0 0
      %3411 = vmatpush.bf16.msra.mxu0 0
      %3412 = vmatpush.bf16.msra.mxu0 0
      %3413 = vmatpush.bf16.msra.mxu0 0
      %3414 = vmatpush.bf16.msra.mxu0 0
      %3415 = vmatpush.bf16.msra.mxu0 %v3353
      %3416 = vmatpush.bf16.msra.mxu0 %v3322
      %3417 = vmatmul.bf16.gmra.mxu0 %v3344
      %v3418 = vpop.f32.mrf.mxu0
      %v3419 = vadd.f32 %v3401, %v3418
      %v3420 = vpop.f32.mrf.mxu0
      %v3421 = vadd.f32 %v3403, %v3420
      %3422 = vmatmul.bf16.gmra.mxu0 %v3347
      %v3423 = vpop.f32.mrf.mxu0
      %v3424 = vadd.f32 %v3406, %v3423
      %v3425 = vpop.f32.mrf.mxu0
      %3426 = vdwg.mxu0
      %v3427 = vadd.f32 %v3164, %v3383
      %v3428 = vadd.f32 %v3200, %v3419
      %v3429 = vadd.f32 %v3166, %v3385
      %v3430 = vadd.f32 %v3202, %v3421
      %v3431 = vadd.f32 %v3169, %v3388
      %v3432 = vadd.f32 %v3205, %v3424
      %v3433 = vld [vmem:[#allocation2] sm:$0xf8]
      %v3434 = vld [vmem:[#allocation2 + $0x8] sm:$0xf8]
      %v3435 = vld [vmem:[#allocation2 + $0x20] sm:$0x3f]
      %v3436 = vld [vmem:[#allocation2 + $0x28] sm:$0x3f]
      %v3437 = vpack.c.bf16 %v2762, %v3433
      %v3438 = vpack.c.bf16 %v2763, %v3434
      %v3439 = vpack.c.bf16 %v3435, %v3435
      %v3440 = vpack.c.bf16 %v3436, %v3436
      %s3441 = scalar_lea.vmem %s1, 1672
      %v3442 = vld [vmem:[%s3441] sm:$0xff]
      %v3443 = vld [vmem:[%s3441 + $0x8] sm:$0xff]
      %v3444 = vld [vmem:[%s3441 + $0x10] sm:$0xff]
      %v3445 = vld [vmem:[%s3441 + $0x18] sm:$0xff]
      %v3446 = vld [vmem:[%s3441 + $0x20] sm:$0xff]
      %v3447 = vld [vmem:[%s3441 + $0x28] sm:$0xff]
      %v3448 = vld [vmem:[%s3441 + $0x30] sm:$0xff]
      %v3449 = vld [vmem:[%s3441 + $0x38] sm:$0xff]
      %v3450 = vld [vmem:[%s3441 + $0x40] sm:$0xff]
      %v3451 = vld [vmem:[%s3441 + $0x48] sm:$0xff]
      %v3452 = vld [vmem:[%s3441 + $0x50] sm:$0xff]
      %v3453 = vld [vmem:[%s3441 + $0x58] sm:$0xff]
      %v3454 = vld [vmem:[%s3441 + $0x60] sm:$0xff]
      %v3455 = vld [vmem:[%s3441 + $0x68] sm:$0xff]
      %v3456 = vld [vmem:[%s3441 + $0x70] sm:$0xff]
      %v3457 = vld [vmem:[%s3441 + $0x78] sm:$0xff]
      %v3458 = vld [vmem:[%s3441 + $0x80] sm:$0xff]
      %v3459 = vld [vmem:[%s3441 + $0x88] sm:$0xff]
      %v3460 = vld [vmem:[%s3441 + $0x90] sm:$0x77]
      %v3462 = vshrl.u32 %v3437, 16
      %v3464 = vrot.slane %v3462, 1
      %v3465 = vshll.u32 %v3437, 16
      %v3467 = vrot.slane %v3465, 2
      %v3468 = vor.u32 %v3464, %v3467
      %v3470 = vshrl.u32 %v3439, 16
      %v3472 = vrot.slane %v3470, 1
      %v3473 = vshll.u32 %v3439, 16
      %v3475 = vrot.slane %v3473, 2
      %v3476 = vor.u32 %v3472, %v3475
      %v3477 = vsel %vm1523, %v3468, %v3476
      %v3479 = vshrl.u32 %v3438, 16
      %v3481 = vrot.slane %v3479, 1
      %v3482 = vshll.u32 %v3438, 16
      %v3484 = vrot.slane %v3482, 2
      %v3485 = vor.u32 %v3481, %v3484
      %v3487 = vshrl.u32 %v3440, 16
      %v3489 = vrot.slane %v3487, 1
      %v3490 = vshll.u32 %v3440, 16
      %v3492 = vrot.slane %v3490, 2
      %v3493 = vor.u32 %v3489, %v3492
      %v3494 = vsel %vm1523, %v3485, %v3493
      %v3516 = vunpack.c.l.b16 %v3442
      %v3517 = vunpack.c.h.b16 %v3442
      %v3518 = vunpack.c.l.b16 %v3443
      %v3519 = vunpack.c.h.b16 %v3443
      %v3520 = vunpack.c.l.b16 %v3444
      %v3521 = vunpack.c.h.b16 %v3444
      %v3522 = vunpack.c.l.b16 %v3445
      %v3523 = vunpack.c.h.b16 %v3445
      %v3524 = vunpack.c.l.b16 %v3446
      %v3525 = vunpack.c.h.b16 %v3446
      %v3526 = vunpack.c.l.b16 %v3447
      %v3527 = vunpack.c.h.b16 %v3447
      %v3528 = vunpack.c.l.b16 %v3448
      %v3529 = vunpack.c.h.b16 %v3448
      %v3530 = vunpack.c.l.b16 %v3449
      %v3531 = vunpack.c.h.b16 %v3449
      %v3532 = vunpack.c.l.b16 %v3450
      %v3533 = vunpack.c.h.b16 %v3450
      %v3534 = vunpack.c.l.b16 %v3451
      %v3535 = vunpack.c.h.b16 %v3451
      %v3536 = vunpack.c.l.b16 %v3452
      %v3537 = vunpack.c.h.b16 %v3452
      %v3538 = vunpack.c.l.b16 %v3453
      %v3539 = vunpack.c.h.b16 %v3453
      %v3540 = vunpack.c.l.b16 %v3454
      %v3541 = vunpack.c.h.b16 %v3454
      %v3542 = vunpack.c.l.b16 %v3455
      %v3543 = vunpack.c.h.b16 %v3455
      %v3544 = vunpack.c.l.b16 %v3456
      %v3545 = vunpack.c.h.b16 %v3456
      %v3546 = vunpack.c.l.b16 %v3457
      %v3547 = vunpack.c.h.b16 %v3457
      %v3548 = vunpack.c.l.b16 %v3458
      %v3549 = vunpack.c.h.b16 %v3458
      %v3550 = vunpack.c.l.b16 %v3459
      %v3551 = vunpack.c.h.b16 %v3459
      %v3552 = vunpack.c.l.b16 %v3460
      %v3553 = vunpack.c.h.b16 %v3460
      %v3554 = vpack.c.b16 %v3518, %v3516
      %v3555 = vpack.c.b16 %v3519, %v3517
      %v3556 = vpack.c.b16 %v3522, %v3520
      %v3557 = vpack.c.b16 %v3523, %v3521
      %v3558 = vpack.c.b16 %v3526, %v3524
      %v3559 = vpack.c.b16 %v3527, %v3525
      %v3560 = vpack.c.b16 %v3530, %v3528
      %v3561 = vpack.c.b16 %v3531, %v3529
      %v3562 = vpack.c.b16 %v3534, %v3532
      %v3563 = vpack.c.b16 %v3535, %v3533
      %v3564 = vpack.c.b16 %v3538, %v3536
      %v3565 = vpack.c.b16 %v3539, %v3537
      %v3566 = vpack.c.b16 %v3542, %v3540
      %v3567 = vpack.c.b16 %v3543, %v3541
      %v3568 = vpack.c.b16 %v3546, %v3544
      %v3569 = vpack.c.b16 %v3547, %v3545
      %v3570 = vpack.c.b16 %v3550, %v3548
      %v3571 = vpack.c.b16 %v3551, %v3549
      %v3572 = vpack.c.b16 %v3552, %v3552
      %v3573 = vpack.c.b16 %v3553, %v3553
      %v3593 = vsel %vm1004, %v3494, 0
      %v3596 = vsel %vm1004, %v3493, 0
      %v3599 = vsel %vm1011, %v3572, 0
      %v3602 = vsel %vm1011, %v3573, 0
      %3604 = vmatpush.bf16.msra.mxu0 %v3568
      %3605 = vmatpush.bf16.msra.mxu0 %v3566
      %3606 = vmatpush.bf16.msra.mxu0 %v3564
      %3607 = vmatpush.bf16.msra.mxu0 %v3562
      %3608 = vmatpush.bf16.msra.mxu0 %v3560
      %3609 = vmatpush.bf16.msra.mxu0 %v3558
      %3610 = vmatpush.bf16.msra.mxu0 %v3556
      %3611 = vmatpush.bf16.msra.mxu0 %v3554
      %3612 = vmatmul.bf16.gmra.mxu0 %v3477
      %v3613 = vpop.f32.mrf.mxu0
      %v3614 = vadd.f32 0.0, %v3613
      %v3615 = vpop.f32.mrf.mxu0
      %v3616 = vadd.f32 0.0, %v3615
      %3617 = vmatmul.bf16.gmra.mxu0 %v3476
      %v3618 = vpop.f32.mrf.mxu0
      %v3619 = vadd.f32 0.0, %v3618
      %v3620 = vpop.f32.mrf.mxu0
      %3621 = vdwg.mxu0
      %3622 = vmatpush.bf16.msra.mxu0 0
      %3623 = vmatpush.bf16.msra.mxu0 0
      %3624 = vmatpush.bf16.msra.mxu0 0
      %3625 = vmatpush.bf16.msra.mxu0 0
      %3626 = vmatpush.bf16.msra.mxu0 0
      %3627 = vmatpush.bf16.msra.mxu0 0
      %3628 = vmatpush.bf16.msra.mxu0 %v3599
      %3629 = vmatpush.bf16.msra.mxu0 %v3570
      %3630 = vmatmul.bf16.gmra.mxu0 %v3593
      %v3631 = vpop.f32.mrf.mxu0
      %v3632 = vadd.f32 %v3614, %v3631
      %v3633 = vpop.f32.mrf.mxu0
      %v3634 = vadd.f32 %v3616, %v3633
      %3635 = vmatmul.bf16.gmra.mxu0 %v3596
      %v3636 = vpop.f32.mrf.mxu0
      %v3637 = vadd.f32 %v3619, %v3636
      %v3638 = vpop.f32.mrf.mxu0
      %3639 = vdwg.mxu0
      %3640 = vmatpush.bf16.msra.mxu0 %v3569
      %3641 = vmatpush.bf16.msra.mxu0 %v3567
      %3642 = vmatpush.bf16.msra.mxu0 %v3565
      %3643 = vmatpush.bf16.msra.mxu0 %v3563
      %3644 = vmatpush.bf16.msra.mxu0 %v3561
      %3645 = vmatpush.bf16.msra.mxu0 %v3559
      %3646 = vmatpush.bf16.msra.mxu0 %v3557
      %3647 = vmatpush.bf16.msra.mxu0 %v3555
      %3648 = vmatmul.bf16.gmra.mxu0 %v3477
      %v3649 = vpop.f32.mrf.mxu0
      %v3650 = vadd.f32 0.0, %v3649
      %v3651 = vpop.f32.mrf.mxu0
      %v3652 = vadd.f32 0.0, %v3651
      %3653 = vmatmul.bf16.gmra.mxu0 %v3476
      %v3654 = vpop.f32.mrf.mxu0
      %v3655 = vadd.f32 0.0, %v3654
      %v3656 = vpop.f32.mrf.mxu0
      %3657 = vdwg.mxu0
      %3658 = vmatpush.bf16.msra.mxu0 0
      %3659 = vmatpush.bf16.msra.mxu0 0
      %3660 = vmatpush.bf16.msra.mxu0 0
      %3661 = vmatpush.bf16.msra.mxu0 0
      %3662 = vmatpush.bf16.msra.mxu0 0
      %3663 = vmatpush.bf16.msra.mxu0 0
      %3664 = vmatpush.bf16.msra.mxu0 %v3602
      %3665 = vmatpush.bf16.msra.mxu0 %v3571
      %3666 = vmatmul.bf16.gmra.mxu0 %v3593
      %v3667 = vpop.f32.mrf.mxu0
      %v3668 = vadd.f32 %v3650, %v3667
      %v3669 = vpop.f32.mrf.mxu0
      %v3670 = vadd.f32 %v3652, %v3669
      %3671 = vmatmul.bf16.gmra.mxu0 %v3596
      %v3672 = vpop.f32.mrf.mxu0
      %v3673 = vadd.f32 %v3655, %v3672
      %v3674 = vpop.f32.mrf.mxu0
      %3675 = vdwg.mxu0
      %v3676 = vadd.f32 %v3427, %v3632
      %v3677 = vadd.f32 %v3428, %v3668
      %v3678 = vadd.f32 %v3429, %v3634
      %v3679 = vadd.f32 %v3430, %v3670
      %v3680 = vadd.f32 %v3431, %v3637
      %v3681 = vadd.f32 %v3432, %v3673
      %v3682 = vld [vmem:[#allocation2] sm:$0xf0]
      %v3683 = vld [vmem:[#allocation2 + $0x8] sm:$0xf0]
      %v3684 = vld [vmem:[#allocation2 + $0x20] sm:$0x7f]
      %v3685 = vld [vmem:[#allocation2 + $0x28] sm:$0x7f]
      %v3686 = vpack.c.bf16 %v2762, %v3682
      %v3687 = vpack.c.bf16 %v2763, %v3683
      %v3688 = vpack.c.bf16 %v3684, %v3684
      %v3689 = vpack.c.bf16 %v3685, %v3685
      %s3690 = scalar_lea.vmem %s1, 1824
      %v3691 = vld [vmem:[%s3690] sm:$0xff]
      %v3692 = vld [vmem:[%s3690 + $0x8] sm:$0xff]
      %v3693 = vld [vmem:[%s3690 + $0x10] sm:$0xff]
      %v3694 = vld [vmem:[%s3690 + $0x18] sm:$0xff]
      %v3695 = vld [vmem:[%s3690 + $0x20] sm:$0xff]
      %v3696 = vld [vmem:[%s3690 + $0x28] sm:$0xff]
      %v3697 = vld [vmem:[%s3690 + $0x30] sm:$0xff]
      %v3698 = vld [vmem:[%s3690 + $0x38] sm:$0xff]
      %v3699 = vld [vmem:[%s3690 + $0x40] sm:$0xff]
      %v3700 = vld [vmem:[%s3690 + $0x48] sm:$0xff]
      %v3701 = vld [vmem:[%s3690 + $0x50] sm:$0xff]
      %v3702 = vld [vmem:[%s3690 + $0x58] sm:$0xff]
      %v3703 = vld [vmem:[%s3690 + $0x60] sm:$0xff]
      %v3704 = vld [vmem:[%s3690 + $0x68] sm:$0xff]
      %v3705 = vld [vmem:[%s3690 + $0x70] sm:$0xff]
      %v3706 = vld [vmem:[%s3690 + $0x78] sm:$0xff]
      %v3707 = vld [vmem:[%s3690 + $0x80] sm:$0xff]
      %v3708 = vld [vmem:[%s3690 + $0x88] sm:$0xff]
      %v3709 = vld [vmem:[%s3690 + $0x90] sm:$0x77]
      %v3714 = vrot.slane %v3686, 2
      %v3715 = vrot.slane %v3688, 2
      %v3716 = vsel %vm1777, %v3714, %v3715
      %v3717 = vrot.slane %v3687, 2
      %v3718 = vrot.slane %v3689, 2
      %v3719 = vsel %vm1777, %v3717, %v3718
      %v3741 = vunpack.c.l.b16 %v3691
      %v3742 = vunpack.c.h.b16 %v3691
      %v3743 = vunpack.c.l.b16 %v3692
      %v3744 = vunpack.c.h.b16 %v3692
      %v3745 = vunpack.c.l.b16 %v3693
      %v3746 = vunpack.c.h.b16 %v3693
      %v3747 = vunpack.c.l.b16 %v3694
      %v3748 = vunpack.c.h.b16 %v3694
      %v3749 = vunpack.c.l.b16 %v3695
      %v3750 = vunpack.c.h.b16 %v3695
      %v3751 = vunpack.c.l.b16 %v3696
      %v3752 = vunpack.c.h.b16 %v3696
      %v3753 = vunpack.c.l.b16 %v3697
      %v3754 = vunpack.c.h.b16 %v3697
      %v3755 = vunpack.c.l.b16 %v3698
      %v3756 = vunpack.c.h.b16 %v3698
      %v3757 = vunpack.c.l.b16 %v3699
      %v3758 = vunpack.c.h.b16 %v3699
      %v3759 = vunpack.c.l.b16 %v3700
      %v3760 = vunpack.c.h.b16 %v3700
      %v3761 = vunpack.c.l.b16 %v3701
      %v3762 = vunpack.c.h.b16 %v3701
      %v3763 = vunpack.c.l.b16 %v3702
      %v3764 = vunpack.c.h.b16 %v3702
      %v3765 = vunpack.c.l.b16 %v3703
      %v3766 = vunpack.c.h.b16 %v3703
      %v3767 = vunpack.c.l.b16 %v3704
      %v3768 = vunpack.c.h.b16 %v3704
      %v3769 = vunpack.c.l.b16 %v3705
      %v3770 = vunpack.c.h.b16 %v3705
      %v3771 = vunpack.c.l.b16 %v3706
      %v3772 = vunpack.c.h.b16 %v3706
      %v3773 = vunpack.c.l.b16 %v3707
      %v3774 = vunpack.c.h.b16 %v3707
      %v3775 = vunpack.c.l.b16 %v3708
      %v3776 = vunpack.c.h.b16 %v3708
      %v3777 = vunpack.c.l.b16 %v3709
      %v3778 = vunpack.c.h.b16 %v3709
      %v3779 = vpack.c.b16 %v3743, %v3741
      %v3780 = vpack.c.b16 %v3744, %v3742
      %v3781 = vpack.c.b16 %v3747, %v3745
      %v3782 = vpack.c.b16 %v3748, %v3746
      %v3783 = vpack.c.b16 %v3751, %v3749
      %v3784 = vpack.c.b16 %v3752, %v3750
      %v3785 = vpack.c.b16 %v3755, %v3753
      %v3786 = vpack.c.b16 %v3756, %v3754
      %v3787 = vpack.c.b16 %v3759, %v3757
      %v3788 = vpack.c.b16 %v3760, %v3758
      %v3789 = vpack.c.b16 %v3763, %v3761
      %v3790 = vpack.c.b16 %v3764, %v3762
      %v3791 = vpack.c.b16 %v3767, %v3765
      %v3792 = vpack.c.b16 %v3768, %v3766
      %v3793 = vpack.c.b16 %v3771, %v3769
      %v3794 = vpack.c.b16 %v3772, %v3770
      %v3795 = vpack.c.b16 %v3775, %v3773
      %v3796 = vpack.c.b16 %v3776, %v3774
      %v3797 = vpack.c.b16 %v3777, %v3777
      %v3798 = vpack.c.b16 %v3778, %v3778
      %v3818 = vsel %vm1004, %v3719, 0
      %v3821 = vsel %vm1004, %v3718, 0
      %v3824 = vsel %vm1011, %v3797, 0
      %v3827 = vsel %vm1011, %v3798, 0
      %3829 = vmatpush.bf16.msra.mxu0 %v3793
      %3830 = vmatpush.bf16.msra.mxu0 %v3791
      %3831 = vmatpush.bf16.msra.mxu0 %v3789
      %3832 = vmatpush.bf16.msra.mxu0 %v3787
      %3833 = vmatpush.bf16.msra.mxu0 %v3785
      %3834 = vmatpush.bf16.msra.mxu0 %v3783
      %3835 = vmatpush.bf16.msra.mxu0 %v3781
      %3836 = vmatpush.bf16.msra.mxu0 %v3779
      %3837 = vmatmul.bf16.gmra.mxu0 %v3716
      %v3838 = vpop.f32.mrf.mxu0
      %v3839 = vadd.f32 0.0, %v3838
      %v3840 = vpop.f32.mrf.mxu0
      %v3841 = vadd.f32 0.0, %v3840
      %3842 = vmatmul.bf16.gmra.mxu0 %v3715
      %v3843 = vpop.f32.mrf.mxu0
      %v3844 = vadd.f32 0.0, %v3843
      %v3845 = vpop.f32.mrf.mxu0
      %3846 = vdwg.mxu0
      %3847 = vmatpush.bf16.msra.mxu0 0
      %3848 = vmatpush.bf16.msra.mxu0 0
      %3849 = vmatpush.bf16.msra.mxu0 0
      %3850 = vmatpush.bf16.msra.mxu0 0
      %3851 = vmatpush.bf16.msra.mxu0 0
      %3852 = vmatpush.bf16.msra.mxu0 0
      %3853 = vmatpush.bf16.msra.mxu0 %v3824
      %3854 = vmatpush.bf16.msra.mxu0 %v3795
      %3855 = vmatmul.bf16.gmra.mxu0 %v3818
      %v3856 = vpop.f32.mrf.mxu0
      %v3857 = vadd.f32 %v3839, %v3856
      %v3858 = vpop.f32.mrf.mxu0
      %v3859 = vadd.f32 %v3841, %v3858
      %3860 = vmatmul.bf16.gmra.mxu0 %v3821
      %v3861 = vpop.f32.mrf.mxu0
      %v3862 = vadd.f32 %v3844, %v3861
      %v3863 = vpop.f32.mrf.mxu0
      %3864 = vdwg.mxu0
      %3865 = vmatpush.bf16.msra.mxu0 %v3794
      %3866 = vmatpush.bf16.msra.mxu0 %v3792
      %3867 = vmatpush.bf16.msra.mxu0 %v3790
      %3868 = vmatpush.bf16.msra.mxu0 %v3788
      %3869 = vmatpush.bf16.msra.mxu0 %v3786
      %3870 = vmatpush.bf16.msra.mxu0 %v3784
      %3871 = vmatpush.bf16.msra.mxu0 %v3782
      %3872 = vmatpush.bf16.msra.mxu0 %v3780
      %3873 = vmatmul.bf16.gmra.mxu0 %v3716
      %v3874 = vpop.f32.mrf.mxu0
      %v3875 = vadd.f32 0.0, %v3874
      %v3876 = vpop.f32.mrf.mxu0
      %v3877 = vadd.f32 0.0, %v3876
      %3878 = vmatmul.bf16.gmra.mxu0 %v3715
      %v3879 = vpop.f32.mrf.mxu0
      %v3880 = vadd.f32 0.0, %v3879
      %v3881 = vpop.f32.mrf.mxu0
      %3882 = vdwg.mxu0
      %3883 = vmatpush.bf16.msra.mxu0 0
      %3884 = vmatpush.bf16.msra.mxu0 0
      %3885 = vmatpush.bf16.msra.mxu0 0
      %3886 = vmatpush.bf16.msra.mxu0 0
      %3887 = vmatpush.bf16.msra.mxu0 0
      %3888 = vmatpush.bf16.msra.mxu0 0
      %3889 = vmatpush.bf16.msra.mxu0 %v3827
      %3890 = vmatpush.bf16.msra.mxu0 %v3796
      %3891 = vmatmul.bf16.gmra.mxu0 %v3818
      %v3892 = vpop.f32.mrf.mxu0
      %v3893 = vadd.f32 %v3875, %v3892
      %v3894 = vpop.f32.mrf.mxu0
      %v3895 = vadd.f32 %v3877, %v3894
      %3896 = vmatmul.bf16.gmra.mxu0 %v3821
      %v3897 = vpop.f32.mrf.mxu0
      %v3898 = vadd.f32 %v3880, %v3897
      %v3899 = vpop.f32.mrf.mxu0
      %3900 = vdwg.mxu0
      %v3901 = vadd.f32 %v3676, %v3857
      %v3902 = vadd.f32 %v3677, %v3893
      %v3903 = vadd.f32 %v3678, %v3859
      %v3904 = vadd.f32 %v3679, %v3895
      %v3905 = vadd.f32 %v3680, %v3862
      %v3906 = vadd.f32 %v3681, %v3898
      %v3907 = vld [vmem:[#allocation2] sm:$0xe0]
      %v3908 = vld [vmem:[#allocation2 + $0x8] sm:$0xe0]
      %v3909 = vld [vmem:[#allocation2 + $0x20] sm:$0xff]
      %v3910 = vld [vmem:[#allocation2 + $0x28] sm:$0xff]
      %v3911 = vpack.c.bf16 %v2762, %v3907
      %v3912 = vpack.c.bf16 %v2763, %v3908
      %v3913 = vpack.c.bf16 %v3909, %v3909
      %v3914 = vpack.c.bf16 %v3910, %v3910
      %s3915 = scalar_lea.vmem %s1, 1976
      %v3916 = vld [vmem:[%s3915] sm:$0xff]
      %v3917 = vld [vmem:[%s3915 + $0x8] sm:$0xff]
      %v3918 = vld [vmem:[%s3915 + $0x10] sm:$0xff]
      %v3919 = vld [vmem:[%s3915 + $0x18] sm:$0xff]
      %v3920 = vld [vmem:[%s3915 + $0x20] sm:$0xff]
      %v3921 = vld [vmem:[%s3915 + $0x28] sm:$0xff]
      %v3922 = vld [vmem:[%s3915 + $0x30] sm:$0xff]
      %v3923 = vld [vmem:[%s3915 + $0x38] sm:$0xff]
      %v3924 = vld [vmem:[%s3915 + $0x40] sm:$0xff]
      %v3925 = vld [vmem:[%s3915 + $0x48] sm:$0xff]
      %v3926 = vld [vmem:[%s3915 + $0x50] sm:$0xff]
      %v3927 = vld [vmem:[%s3915 + $0x58] sm:$0xff]
      %v3928 = vld [vmem:[%s3915 + $0x60] sm:$0xff]
      %v3929 = vld [vmem:[%s3915 + $0x68] sm:$0xff]
      %v3930 = vld [vmem:[%s3915 + $0x70] sm:$0xff]
      %v3931 = vld [vmem:[%s3915 + $0x78] sm:$0xff]
      %v3932 = vld [vmem:[%s3915 + $0x80] sm:$0xff]
      %v3933 = vld [vmem:[%s3915 + $0x88] sm:$0xff]
      %v3934 = vld [vmem:[%s3915 + $0x90] sm:$0x77]
      %v3936 = vshrl.u32 %v3911, 16
      %v3938 = vrot.slane %v3936, 2
      %v3939 = vshll.u32 %v3911, 16
      %v3941 = vrot.slane %v3939, 3
      %v3942 = vor.u32 %v3938, %v3941
      %v3944 = vshrl.u32 %v3913, 16
      %v3946 = vrot.slane %v3944, 2
      %v3947 = vshll.u32 %v3913, 16
      %v3949 = vrot.slane %v3947, 3
      %v3950 = vor.u32 %v3946, %v3949
      %v3951 = vsel %vm1999, %v3942, %v3950
      %v3953 = vshrl.u32 %v3912, 16
      %v3955 = vrot.slane %v3953, 2
      %v3956 = vshll.u32 %v3912, 16
      %v3958 = vrot.slane %v3956, 3
      %v3959 = vor.u32 %v3955, %v3958
      %v3961 = vshrl.u32 %v3914, 16
      %v3963 = vrot.slane %v3961, 2
      %v3964 = vshll.u32 %v3914, 16
      %v3966 = vrot.slane %v3964, 3
      %v3967 = vor.u32 %v3963, %v3966
      %v3968 = vsel %vm1999, %v3959, %v3967
      %v3990 = vunpack.c.l.b16 %v3916
      %v3991 = vunpack.c.h.b16 %v3916
      %v3992 = vunpack.c.l.b16 %v3917
      %v3993 = vunpack.c.h.b16 %v3917
      %v3994 = vunpack.c.l.b16 %v3918
      %v3995 = vunpack.c.h.b16 %v3918
      %v3996 = vunpack.c.l.b16 %v3919
      %v3997 = vunpack.c.h.b16 %v3919
      %v3998 = vunpack.c.l.b16 %v3920
      %v3999 = vunpack.c.h.b16 %v3920
      %v4000 = vunpack.c.l.b16 %v3921
      %v4001 = vunpack.c.h.b16 %v3921
      %v4002 = vunpack.c.l.b16 %v3922
      %v4003 = vunpack.c.h.b16 %v3922
      %v4004 = vunpack.c.l.b16 %v3923
      %v4005 = vunpack.c.h.b16 %v3923
      %v4006 = vunpack.c.l.b16 %v3924
      %v4007 = vunpack.c.h.b16 %v3924
      %v4008 = vunpack.c.l.b16 %v3925
      %v4009 = vunpack.c.h.b16 %v3925
      %v4010 = vunpack.c.l.b16 %v3926
      %v4011 = vunpack.c.h.b16 %v3926
      %v4012 = vunpack.c.l.b16 %v3927
      %v4013 = vunpack.c.h.b16 %v3927
      %v4014 = vunpack.c.l.b16 %v3928
      %v4015 = vunpack.c.h.b16 %v3928
      %v4016 = vunpack.c.l.b16 %v3929
      %v4017 = vunpack.c.h.b16 %v3929
      %v4018 = vunpack.c.l.b16 %v3930
      %v4019 = vunpack.c.h.b16 %v3930
      %v4020 = vunpack.c.l.b16 %v3931
      %v4021 = vunpack.c.h.b16 %v3931
      %v4022 = vunpack.c.l.b16 %v3932
      %v4023 = vunpack.c.h.b16 %v3932
      %v4024 = vunpack.c.l.b16 %v3933
      %v4025 = vunpack.c.h.b16 %v3933
      %v4026 = vunpack.c.l.b16 %v3934
      %v4027 = vunpack.c.h.b16 %v3934
      %v4028 = vpack.c.b16 %v3992, %v3990
      %v4029 = vpack.c.b16 %v3993, %v3991
      %v4030 = vpack.c.b16 %v3996, %v3994
      %v4031 = vpack.c.b16 %v3997, %v3995
      %v4032 = vpack.c.b16 %v4000, %v3998
      %v4033 = vpack.c.b16 %v4001, %v3999
      %v4034 = vpack.c.b16 %v4004, %v4002
      %v4035 = vpack.c.b16 %v4005, %v4003
      %v4036 = vpack.c.b16 %v4008, %v4006
      %v4037 = vpack.c.b16 %v4009, %v4007
      %v4038 = vpack.c.b16 %v4012, %v4010
      %v4039 = vpack.c.b16 %v4013, %v4011
      %v4040 = vpack.c.b16 %v4016, %v4014
      %v4041 = vpack.c.b16 %v4017, %v4015
      %v4042 = vpack.c.b16 %v4020, %v4018
      %v4043 = vpack.c.b16 %v4021, %v4019
      %v4044 = vpack.c.b16 %v4024, %v4022
      %v4045 = vpack.c.b16 %v4025, %v4023
      %v4046 = vpack.c.b16 %v4026, %v4026
      %v4047 = vpack.c.b16 %v4027, %v4027
      %v4067 = vsel %vm1004, %v3968, 0
      %v4070 = vsel %vm1004, %v3967, 0
      %v4073 = vsel %vm1011, %v4046, 0
      %v4076 = vsel %vm1011, %v4047, 0
      %4078 = vmatpush.bf16.msra.mxu0 %v4042
      %4079 = vmatpush.bf16.msra.mxu0 %v4040
      %4080 = vmatpush.bf16.msra.mxu0 %v4038
      %4081 = vmatpush.bf16.msra.mxu0 %v4036
      %4082 = vmatpush.bf16.msra.mxu0 %v4034
      %4083 = vmatpush.bf16.msra.mxu0 %v4032
      %4084 = vmatpush.bf16.msra.mxu0 %v4030
      %4085 = vmatpush.bf16.msra.mxu0 %v4028
      %4086 = vmatmul.bf16.gmra.mxu0 %v3951
      %v4087 = vpop.f32.mrf.mxu0
      %v4088 = vadd.f32 0.0, %v4087
      %v4089 = vpop.f32.mrf.mxu0
      %v4090 = vadd.f32 0.0, %v4089
      %4091 = vmatmul.bf16.gmra.mxu0 %v3950
      %v4092 = vpop.f32.mrf.mxu0
      %v4093 = vadd.f32 0.0, %v4092
      %v4094 = vpop.f32.mrf.mxu0
      %4095 = vdwg.mxu0
      %4096 = vmatpush.bf16.msra.mxu0 0
      %4097 = vmatpush.bf16.msra.mxu0 0
      %4098 = vmatpush.bf16.msra.mxu0 0
      %4099 = vmatpush.bf16.msra.mxu0 0
      %4100 = vmatpush.bf16.msra.mxu0 0
      %4101 = vmatpush.bf16.msra.mxu0 0
      %4102 = vmatpush.bf16.msra.mxu0 %v4073
      %4103 = vmatpush.bf16.msra.mxu0 %v4044
      %4104 = vmatmul.bf16.gmra.mxu0 %v4067
      %v4105 = vpop.f32.mrf.mxu0
      %v4106 = vadd.f32 %v4088, %v4105
      %v4107 = vpop.f32.mrf.mxu0
      %v4108 = vadd.f32 %v4090, %v4107
      %4109 = vmatmul.bf16.gmra.mxu0 %v4070
      %v4110 = vpop.f32.mrf.mxu0
      %v4111 = vadd.f32 %v4093, %v4110
      %v4112 = vpop.f32.mrf.mxu0
      %4113 = vdwg.mxu0
      %4114 = vmatpush.bf16.msra.mxu0 %v4043
      %4115 = vmatpush.bf16.msra.mxu0 %v4041
      %4116 = vmatpush.bf16.msra.mxu0 %v4039
      %4117 = vmatpush.bf16.msra.mxu0 %v4037
      %4118 = vmatpush.bf16.msra.mxu0 %v4035
      %4119 = vmatpush.bf16.msra.mxu0 %v4033
      %4120 = vmatpush.bf16.msra.mxu0 %v4031
      %4121 = vmatpush.bf16.msra.mxu0 %v4029
      %4122 = vmatmul.bf16.gmra.mxu0 %v3951
      %v4123 = vpop.f32.mrf.mxu0
      %v4124 = vadd.f32 0.0, %v4123
      %v4125 = vpop.f32.mrf.mxu0
      %v4126 = vadd.f32 0.0, %v4125
      %4127 = vmatmul.bf16.gmra.mxu0 %v3950
      %v4128 = vpop.f32.mrf.mxu0
      %v4129 = vadd.f32 0.0, %v4128
      %v4130 = vpop.f32.mrf.mxu0
      %4131 = vdwg.mxu0
      %4132 = vmatpush.bf16.msra.mxu0 0
      %4133 = vmatpush.bf16.msra.mxu0 0
      %4134 = vmatpush.bf16.msra.mxu0 0
      %4135 = vmatpush.bf16.msra.mxu0 0
      %4136 = vmatpush.bf16.msra.mxu0 0
      %4137 = vmatpush.bf16.msra.mxu0 0
      %4138 = vmatpush.bf16.msra.mxu0 %v4076
      %4139 = vmatpush.bf16.msra.mxu0 %v4045
      %4140 = vmatmul.bf16.gmra.mxu0 %v4067
      %v4141 = vpop.f32.mrf.mxu0
      %v4142 = vadd.f32 %v4124, %v4141
      %v4143 = vpop.f32.mrf.mxu0
      %v4144 = vadd.f32 %v4126, %v4143
      %4145 = vmatmul.bf16.gmra.mxu0 %v4070
      %v4146 = vpop.f32.mrf.mxu0
      %v4147 = vadd.f32 %v4129, %v4146
      %v4148 = vpop.f32.mrf.mxu0
      %4149 = vdwg.mxu0
      %v4150 = vadd.f32 %v3901, %v4106
      %v4151 = vadd.f32 %v3902, %v4142
      %v4152 = vadd.f32 %v3903, %v4108
      %v4153 = vadd.f32 %v3904, %v4144
      %v4154 = vadd.f32 %v3905, %v4111
      %v4155 = vadd.f32 %v3906, %v4147
      %v4156 = vld [vmem:[#allocation2] sm:$0xc0]
      %v4157 = vld [vmem:[#allocation2 + $0x8] sm:$0xc0]
      %v4158 = vld [vmem:[#allocation2 + $0x10] sm:$0xff]
      %v4159 = vld [vmem:[#allocation2 + $0x18] sm:$0xff]
      %v4160 = vld [vmem:[#allocation2 + $0x20] sm:$0xff]
      %v4161 = vld [vmem:[#allocation2 + $0x28] sm:$0xff]
      %v4162 = vld [vmem:[#allocation2 + $0x30] sm:$0x1]
      %v4163 = vld [vmem:[#allocation2 + $0x38] sm:$0x1]
      %v4164 = vpack.c.bf16 %v4158, %v4156
      %v4165 = vpack.c.bf16 %v4159, %v4157
      %v4166 = vpack.c.bf16 %v4162, %v4160
      %v4167 = vpack.c.bf16 %v4163, %v4161
      %s4168 = scalar_lea.vmem %s1, 2128
      %v4169 = vld [vmem:[%s4168] sm:$0xff]
      %v4170 = vld [vmem:[%s4168 + $0x8] sm:$0xff]
      %v4171 = vld [vmem:[%s4168 + $0x10] sm:$0xff]
      %v4172 = vld [vmem:[%s4168 + $0x18] sm:$0xff]
      %v4173 = vld [vmem:[%s4168 + $0x20] sm:$0xff]
      %v4174 = vld [vmem:[%s4168 + $0x28] sm:$0xff]
      %v4175 = vld [vmem:[%s4168 + $0x30] sm:$0xff]
      %v4176 = vld [vmem:[%s4168 + $0x38] sm:$0xff]
      %v4177 = vld [vmem:[%s4168 + $0x40] sm:$0xff]
      %v4178 = vld [vmem:[%s4168 + $0x48] sm:$0xff]
      %v4179 = vld [vmem:[%s4168 + $0x50] sm:$0xff]
      %v4180 = vld [vmem:[%s4168 + $0x58] sm:$0xff]
      %v4181 = vld [vmem:[%s4168 + $0x60] sm:$0xff]
      %v4182 = vld [vmem:[%s4168 + $0x68] sm:$0xff]
      %v4183 = vld [vmem:[%s4168 + $0x70] sm:$0xff]
      %v4184 = vld [vmem:[%s4168 + $0x78] sm:$0xff]
      %v4185 = vld [vmem:[%s4168 + $0x80] sm:$0xff]
      %v4186 = vld [vmem:[%s4168 + $0x88] sm:$0xff]
      %v4187 = vld [vmem:[%s4168 + $0x90] sm:$0x77]
      %v4192 = vrot.slane %v4164, 3
      %v4193 = vrot.slane %v4166, 3
      %v4194 = vsel %vm2257, %v4192, %v4193
      %v4195 = vrot.slane %v4165, 3
      %v4196 = vrot.slane %v4167, 3
      %v4197 = vsel %vm2257, %v4195, %v4196
      %v4219 = vunpack.c.l.b16 %v4169
      %v4220 = vunpack.c.h.b16 %v4169
      %v4221 = vunpack.c.l.b16 %v4170
      %v4222 = vunpack.c.h.b16 %v4170
      %v4223 = vunpack.c.l.b16 %v4171
      %v4224 = vunpack.c.h.b16 %v4171
      %v4225 = vunpack.c.l.b16 %v4172
      %v4226 = vunpack.c.h.b16 %v4172
      %v4227 = vunpack.c.l.b16 %v4173
      %v4228 = vunpack.c.h.b16 %v4173
      %v4229 = vunpack.c.l.b16 %v4174
      %v4230 = vunpack.c.h.b16 %v4174
      %v4231 = vunpack.c.l.b16 %v4175
      %v4232 = vunpack.c.h.b16 %v4175
      %v4233 = vunpack.c.l.b16 %v4176
      %v4234 = vunpack.c.h.b16 %v4176
      %v4235 = vunpack.c.l.b16 %v4177
      %v4236 = vunpack.c.h.b16 %v4177
      %v4237 = vunpack.c.l.b16 %v4178
      %v4238 = vunpack.c.h.b16 %v4178
      %v4239 = vunpack.c.l.b16 %v4179
      %v4240 = vunpack.c.h.b16 %v4179
      %v4241 = vunpack.c.l.b16 %v4180
      %v4242 = vunpack.c.h.b16 %v4180
      %v4243 = vunpack.c.l.b16 %v4181
      %v4244 = vunpack.c.h.b16 %v4181
      %v4245 = vunpack.c.l.b16 %v4182
      %v4246 = vunpack.c.h.b16 %v4182
      %v4247 = vunpack.c.l.b16 %v4183
      %v4248 = vunpack.c.h.b16 %v4183
      %v4249 = vunpack.c.l.b16 %v4184
      %v4250 = vunpack.c.h.b16 %v4184
      %v4251 = vunpack.c.l.b16 %v4185
      %v4252 = vunpack.c.h.b16 %v4185
      %v4253 = vunpack.c.l.b16 %v4186
      %v4254 = vunpack.c.h.b16 %v4186
      %v4255 = vunpack.c.l.b16 %v4187
      %v4256 = vunpack.c.h.b16 %v4187
      %v4257 = vpack.c.b16 %v4221, %v4219
      %v4258 = vpack.c.b16 %v4222, %v4220
      %v4259 = vpack.c.b16 %v4225, %v4223
      %v4260 = vpack.c.b16 %v4226, %v4224
      %v4261 = vpack.c.b16 %v4229, %v4227
      %v4262 = vpack.c.b16 %v4230, %v4228
      %v4263 = vpack.c.b16 %v4233, %v4231
      %v4264 = vpack.c.b16 %v4234, %v4232
      %v4265 = vpack.c.b16 %v4237, %v4235
      %v4266 = vpack.c.b16 %v4238, %v4236
      %v4267 = vpack.c.b16 %v4241, %v4239
      %v4268 = vpack.c.b16 %v4242, %v4240
      %v4269 = vpack.c.b16 %v4245, %v4243
      %v4270 = vpack.c.b16 %v4246, %v4244
      %v4271 = vpack.c.b16 %v4249, %v4247
      %v4272 = vpack.c.b16 %v4250, %v4248
      %v4273 = vpack.c.b16 %v4253, %v4251
      %v4274 = vpack.c.b16 %v4254, %v4252
      %v4275 = vpack.c.b16 %v4255, %v4255
      %v4276 = vpack.c.b16 %v4256, %v4256
      %v4296 = vsel %vm1004, %v4197, 0
      %v4299 = vsel %vm1004, %v4196, 0
      %v4302 = vsel %vm1011, %v4275, 0
      %v4305 = vsel %vm1011, %v4276, 0
      %4307 = vmatpush.bf16.msra.mxu0 %v4271
      %4308 = vmatpush.bf16.msra.mxu0 %v4269
      %4309 = vmatpush.bf16.msra.mxu0 %v4267
      %4310 = vmatpush.bf16.msra.mxu0 %v4265
      %4311 = vmatpush.bf16.msra.mxu0 %v4263
      %4312 = vmatpush.bf16.msra.mxu0 %v4261
      %4313 = vmatpush.bf16.msra.mxu0 %v4259
      %4314 = vmatpush.bf16.msra.mxu0 %v4257
      %4315 = vmatmul.bf16.gmra.mxu0 %v4194
      %v4316 = vpop.f32.mrf.mxu0
      %v4317 = vadd.f32 0.0, %v4316
      %v4318 = vpop.f32.mrf.mxu0
      %v4319 = vadd.f32 0.0, %v4318
      %4320 = vmatmul.bf16.gmra.mxu0 %v4193
      %v4321 = vpop.f32.mrf.mxu0
      %v4322 = vadd.f32 0.0, %v4321
      %v4323 = vpop.f32.mrf.mxu0
      %4324 = vdwg.mxu0
      %4325 = vmatpush.bf16.msra.mxu0 0
      %4326 = vmatpush.bf16.msra.mxu0 0
      %4327 = vmatpush.bf16.msra.mxu0 0
      %4328 = vmatpush.bf16.msra.mxu0 0
      %4329 = vmatpush.bf16.msra.mxu0 0
      %4330 = vmatpush.bf16.msra.mxu0 0
      %4331 = vmatpush.bf16.msra.mxu0 %v4302
      %4332 = vmatpush.bf16.msra.mxu0 %v4273
      %4333 = vmatmul.bf16.gmra.mxu0 %v4296
      %v4334 = vpop.f32.mrf.mxu0
      %v4335 = vadd.f32 %v4317, %v4334
      %v4336 = vpop.f32.mrf.mxu0
      %v4337 = vadd.f32 %v4319, %v4336
      %4338 = vmatmul.bf16.gmra.mxu0 %v4299
      %v4339 = vpop.f32.mrf.mxu0
      %v4340 = vadd.f32 %v4322, %v4339
      %v4341 = vpop.f32.mrf.mxu0
      %4342 = vdwg.mxu0
      %4343 = vmatpush.bf16.msra.mxu0 %v4272
      %4344 = vmatpush.bf16.msra.mxu0 %v4270
      %4345 = vmatpush.bf16.msra.mxu0 %v4268
      %4346 = vmatpush.bf16.msra.mxu0 %v4266
      %4347 = vmatpush.bf16.msra.mxu0 %v4264
      %4348 = vmatpush.bf16.msra.mxu0 %v4262
      %4349 = vmatpush.bf16.msra.mxu0 %v4260
      %4350 = vmatpush.bf16.msra.mxu0 %v4258
      %4351 = vmatmul.bf16.gmra.mxu0 %v4194
      %v4352 = vpop.f32.mrf.mxu0
      %v4353 = vadd.f32 0.0, %v4352
      %v4354 = vpop.f32.mrf.mxu0
      %v4355 = vadd.f32 0.0, %v4354
      %4356 = vmatmul.bf16.gmra.mxu0 %v4193
      %v4357 = vpop.f32.mrf.mxu0
      %v4358 = vadd.f32 0.0, %v4357
      %v4359 = vpop.f32.mrf.mxu0
      %4360 = vdwg.mxu0
      %4361 = vmatpush.bf16.msra.mxu0 0
      %4362 = vmatpush.bf16.msra.mxu0 0
      %4363 = vmatpush.bf16.msra.mxu0 0
      %4364 = vmatpush.bf16.msra.mxu0 0
      %4365 = vmatpush.bf16.msra.mxu0 0
      %4366 = vmatpush.bf16.msra.mxu0 0
      %4367 = vmatpush.bf16.msra.mxu0 %v4305
      %4368 = vmatpush.bf16.msra.mxu0 %v4274
      %4369 = vmatmul.bf16.gmra.mxu0 %v4296
      %v4370 = vpop.f32.mrf.mxu0
      %v4371 = vadd.f32 %v4353, %v4370
      %v4372 = vpop.f32.mrf.mxu0
      %v4373 = vadd.f32 %v4355, %v4372
      %4374 = vmatmul.bf16.gmra.mxu0 %v4299
      %v4375 = vpop.f32.mrf.mxu0
      %v4376 = vadd.f32 %v4358, %v4375
      %v4377 = vpop.f32.mrf.mxu0
      %4378 = vdwg.mxu0
      %v4379 = vadd.f32 %v4150, %v4335
      %v4380 = vadd.f32 %v4151, %v4371
      %v4381 = vadd.f32 %v4152, %v4337
      %v4382 = vadd.f32 %v4153, %v4373
      %v4383 = vadd.f32 %v4154, %v4340
      %v4384 = vadd.f32 %v4155, %v4376
      %v4385 = vld [vmem:[#allocation2] sm:$0x80]
      %v4386 = vld [vmem:[#allocation2 + $0x8] sm:$0x80]
      %v4387 = vld [vmem:[#allocation2 + $0x30] sm:$0x3]
      %v4388 = vld [vmem:[#allocation2 + $0x38] sm:$0x3]
      %v4389 = vpack.c.bf16 %v4158, %v4385
      %v4390 = vpack.c.bf16 %v4159, %v4386
      %v4391 = vpack.c.bf16 %v4387, %v4160
      %v4392 = vpack.c.bf16 %v4388, %v4161
      %s4393 = scalar_lea.vmem %s1, 2280
      %v4394 = vld [vmem:[%s4393] sm:$0xff]
      %v4395 = vld [vmem:[%s4393 + $0x8] sm:$0xff]
      %v4396 = vld [vmem:[%s4393 + $0x10] sm:$0xff]
      %v4397 = vld [vmem:[%s4393 + $0x18] sm:$0xff]
      %v4398 = vld [vmem:[%s4393 + $0x20] sm:$0xff]
      %v4399 = vld [vmem:[%s4393 + $0x28] sm:$0xff]
      %v4400 = vld [vmem:[%s4393 + $0x30] sm:$0xff]
      %v4401 = vld [vmem:[%s4393 + $0x38] sm:$0xff]
      %v4402 = vld [vmem:[%s4393 + $0x40] sm:$0xff]
      %v4403 = vld [vmem:[%s4393 + $0x48] sm:$0xff]
      %v4404 = vld [vmem:[%s4393 + $0x50] sm:$0xff]
      %v4405 = vld [vmem:[%s4393 + $0x58] sm:$0xff]
      %v4406 = vld [vmem:[%s4393 + $0x60] sm:$0xff]
      %v4407 = vld [vmem:[%s4393 + $0x68] sm:$0xff]
      %v4408 = vld [vmem:[%s4393 + $0x70] sm:$0xff]
      %v4409 = vld [vmem:[%s4393 + $0x78] sm:$0xff]
      %v4410 = vld [vmem:[%s4393 + $0x80] sm:$0xff]
      %v4411 = vld [vmem:[%s4393 + $0x88] sm:$0xff]
      %v4412 = vld [vmem:[%s4393 + $0x90] sm:$0x77]
      %v4414 = vshrl.u32 %v4389, 16
      %v4416 = vrot.slane %v4414, 3
      %v4417 = vshll.u32 %v4389, 16
      %v4419 = vrot.slane %v4417, 4
      %v4420 = vor.u32 %v4416, %v4419
      %v4422 = vshrl.u32 %v4391, 16
      %v4424 = vrot.slane %v4422, 3
      %v4425 = vshll.u32 %v4391, 16
      %v4427 = vrot.slane %v4425, 4
      %v4428 = vor.u32 %v4424, %v4427
      %v4429 = vsel %vm2479, %v4420, %v4428
      %v4431 = vshrl.u32 %v4390, 16
      %v4433 = vrot.slane %v4431, 3
      %v4434 = vshll.u32 %v4390, 16
      %v4436 = vrot.slane %v4434, 4
      %v4437 = vor.u32 %v4433, %v4436
      %v4439 = vshrl.u32 %v4392, 16
      %v4441 = vrot.slane %v4439, 3
      %v4442 = vshll.u32 %v4392, 16
      %v4444 = vrot.slane %v4442, 4
      %v4445 = vor.u32 %v4441, %v4444
      %v4446 = vsel %vm2479, %v4437, %v4445
      %v4468 = vunpack.c.l.b16 %v4394
      %v4469 = vunpack.c.h.b16 %v4394
      %v4470 = vunpack.c.l.b16 %v4395
      %v4471 = vunpack.c.h.b16 %v4395
      %v4472 = vunpack.c.l.b16 %v4396
      %v4473 = vunpack.c.h.b16 %v4396
      %v4474 = vunpack.c.l.b16 %v4397
      %v4475 = vunpack.c.h.b16 %v4397
      %v4476 = vunpack.c.l.b16 %v4398
      %v4477 = vunpack.c.h.b16 %v4398
      %v4478 = vunpack.c.l.b16 %v4399
      %v4479 = vunpack.c.h.b16 %v4399
      %v4480 = vunpack.c.l.b16 %v4400
      %v4481 = vunpack.c.h.b16 %v4400
      %v4482 = vunpack.c.l.b16 %v4401
      %v4483 = vunpack.c.h.b16 %v4401
      %v4484 = vunpack.c.l.b16 %v4402
      %v4485 = vunpack.c.h.b16 %v4402
      %v4486 = vunpack.c.l.b16 %v4403
      %v4487 = vunpack.c.h.b16 %v4403
      %v4488 = vunpack.c.l.b16 %v4404
      %v4489 = vunpack.c.h.b16 %v4404
      %v4490 = vunpack.c.l.b16 %v4405
      %v4491 = vunpack.c.h.b16 %v4405
      %v4492 = vunpack.c.l.b16 %v4406
      %v4493 = vunpack.c.h.b16 %v4406
      %v4494 = vunpack.c.l.b16 %v4407
      %v4495 = vunpack.c.h.b16 %v4407
      %v4496 = vunpack.c.l.b16 %v4408
      %v4497 = vunpack.c.h.b16 %v4408
      %v4498 = vunpack.c.l.b16 %v4409
      %v4499 = vunpack.c.h.b16 %v4409
      %v4500 = vunpack.c.l.b16 %v4410
      %v4501 = vunpack.c.h.b16 %v4410
      %v4502 = vunpack.c.l.b16 %v4411
      %v4503 = vunpack.c.h.b16 %v4411
      %v4504 = vunpack.c.l.b16 %v4412
      %v4505 = vunpack.c.h.b16 %v4412
      %v4506 = vpack.c.b16 %v4470, %v4468
      %v4507 = vpack.c.b16 %v4471, %v4469
      %v4508 = vpack.c.b16 %v4474, %v4472
      %v4509 = vpack.c.b16 %v4475, %v4473
      %v4510 = vpack.c.b16 %v4478, %v4476
      %v4511 = vpack.c.b16 %v4479, %v4477
      %v4512 = vpack.c.b16 %v4482, %v4480
      %v4513 = vpack.c.b16 %v4483, %v4481
      %v4514 = vpack.c.b16 %v4486, %v4484
      %v4515 = vpack.c.b16 %v4487, %v4485
      %v4516 = vpack.c.b16 %v4490, %v4488
      %v4517 = vpack.c.b16 %v4491, %v4489
      %v4518 = vpack.c.b16 %v4494, %v4492
      %v4519 = vpack.c.b16 %v4495, %v4493
      %v4520 = vpack.c.b16 %v4498, %v4496
      %v4521 = vpack.c.b16 %v4499, %v4497
      %v4522 = vpack.c.b16 %v4502, %v4500
      %v4523 = vpack.c.b16 %v4503, %v4501
      %v4524 = vpack.c.b16 %v4504, %v4504
      %v4525 = vpack.c.b16 %v4505, %v4505
      %v4545 = vsel %vm1004, %v4446, 0
      %v4548 = vsel %vm1004, %v4445, 0
      %v4551 = vsel %vm1011, %v4524, 0
      %v4554 = vsel %vm1011, %v4525, 0
      %4556 = vmatpush.bf16.msra.mxu0 %v4520
      %4557 = vmatpush.bf16.msra.mxu0 %v4518
      %4558 = vmatpush.bf16.msra.mxu0 %v4516
      %4559 = vmatpush.bf16.msra.mxu0 %v4514
      %4560 = vmatpush.bf16.msra.mxu0 %v4512
      %4561 = vmatpush.bf16.msra.mxu0 %v4510
      %4562 = vmatpush.bf16.msra.mxu0 %v4508
      %4563 = vmatpush.bf16.msra.mxu0 %v4506
      %4564 = vmatmul.bf16.gmra.mxu0 %v4429
      %v4565 = vpop.f32.mrf.mxu0
      %v4566 = vadd.f32 0.0, %v4565
      %v4567 = vpop.f32.mrf.mxu0
      %v4568 = vadd.f32 0.0, %v4567
      %4569 = vmatmul.bf16.gmra.mxu0 %v4428
      %v4570 = vpop.f32.mrf.mxu0
      %v4571 = vadd.f32 0.0, %v4570
      %v4572 = vpop.f32.mrf.mxu0
      %4573 = vdwg.mxu0
      %4574 = vmatpush.bf16.msra.mxu0 0
      %4575 = vmatpush.bf16.msra.mxu0 0
      %4576 = vmatpush.bf16.msra.mxu0 0
      %4577 = vmatpush.bf16.msra.mxu0 0
      %4578 = vmatpush.bf16.msra.mxu0 0
      %4579 = vmatpush.bf16.msra.mxu0 0
      %4580 = vmatpush.bf16.msra.mxu0 %v4551
      %4581 = vmatpush.bf16.msra.mxu0 %v4522
      %4582 = vmatmul.bf16.gmra.mxu0 %v4545
      %v4583 = vpop.f32.mrf.mxu0
      %v4584 = vadd.f32 %v4566, %v4583
      %v4585 = vpop.f32.mrf.mxu0
      %v4586 = vadd.f32 %v4568, %v4585
      %4587 = vmatmul.bf16.gmra.mxu0 %v4548
      %v4588 = vpop.f32.mrf.mxu0
      %v4589 = vadd.f32 %v4571, %v4588
      %v4590 = vpop.f32.mrf.mxu0
      %4591 = vdwg.mxu0
      %4592 = vmatpush.bf16.msra.mxu0 %v4521
      %4593 = vmatpush.bf16.msra.mxu0 %v4519
      %4594 = vmatpush.bf16.msra.mxu0 %v4517
      %4595 = vmatpush.bf16.msra.mxu0 %v4515
      %4596 = vmatpush.bf16.msra.mxu0 %v4513
      %4597 = vmatpush.bf16.msra.mxu0 %v4511
      %4598 = vmatpush.bf16.msra.mxu0 %v4509
      %4599 = vmatpush.bf16.msra.mxu0 %v4507
      %4600 = vmatmul.bf16.gmra.mxu0 %v4429
      %v4601 = vpop.f32.mrf.mxu0
      %v4602 = vadd.f32 0.0, %v4601
      %v4603 = vpop.f32.mrf.mxu0
      %v4604 = vadd.f32 0.0, %v4603
      %4605 = vmatmul.bf16.gmra.mxu0 %v4428
      %v4606 = vpop.f32.mrf.mxu0
      %v4607 = vadd.f32 0.0, %v4606
      %v4608 = vpop.f32.mrf.mxu0
      %4609 = vdwg.mxu0
      %4610 = vmatpush.bf16.msra.mxu0 0
      %4611 = vmatpush.bf16.msra.mxu0 0
      %4612 = vmatpush.bf16.msra.mxu0 0
      %4613 = vmatpush.bf16.msra.mxu0 0
      %4614 = vmatpush.bf16.msra.mxu0 0
      %4615 = vmatpush.bf16.msra.mxu0 0
      %4616 = vmatpush.bf16.msra.mxu0 %v4554
      %4617 = vmatpush.bf16.msra.mxu0 %v4523
      %4618 = vmatmul.bf16.gmra.mxu0 %v4545
      %v4619 = vpop.f32.mrf.mxu0
      %v4620 = vadd.f32 %v4602, %v4619
      %v4621 = vpop.f32.mrf.mxu0
      %v4622 = vadd.f32 %v4604, %v4621
      %4623 = vmatmul.bf16.gmra.mxu0 %v4548
      %v4624 = vpop.f32.mrf.mxu0
      %v4625 = vadd.f32 %v4607, %v4624
      %v4626 = vpop.f32.mrf.mxu0
      %4627 = vdwg.mxu0
      %v4628 = vadd.f32 %v4379, %v4584
      %v4629 = vadd.f32 %v4380, %v4620
      %v4630 = vadd.f32 %v4381, %v4586
      %v4631 = vadd.f32 %v4382, %v4622
      %v4632 = vadd.f32 %v4383, %v4589
      %v4633 = vadd.f32 %v4384, %v4625
      %s4634 = scalar_lea.vmem %s2, 1
      %v4635 = vld [vmem:[%s4634] ss:$4 sm:$0x3]
      %v4637 = vperm.slane %v4635, 0
      %v4638 = vperm.slane %v4635, 1
      %v4641 = vmul.f32 %v4628, %v4637
      %v4642 = vmul.f32 %v4629, %v4638
      %v4643 = vmul.f32 %v4630, %v4637
      %v4644 = vmul.f32 %v4631, %v4638
      %v4645 = vmul.f32 %v4632, %v4637
      %v4646 = vmul.f32 %v4633, %v4638
      %s4647 = scalar_lea.vmem %s3, 1
      %v4648 = vld [vmem:[%s4647] ss:$4 sm:$0x3]
      %v4650 = vperm.slane %v4648, 0
      %v4651 = vperm.slane %v4648, 1
      %v4654 = vadd.f32 %v4641, %v4650
      %v4655 = vadd.f32 %v4642, %v4651
      %v4656 = vadd.f32 %v4643, %v4650
      %v4657 = vadd.f32 %v4644, %v4651
      %v4658 = vadd.f32 %v4645, %v4650
      %v4659 = vadd.f32 %v4646, %v4651
      %v4660 = vmax.f32 %v4654, 0.0
      %v4661 = vmax.f32 %v4655, 0.0
      %v4662 = vmax.f32 %v4656, 0.0
      %v4663 = vmax.f32 %v4657, 0.0
      %v4664 = vmax.f32 %v4658, 0.0
      %v4665 = vmax.f32 %v4659, 0.0
      %v4672 = vrot.slane %v4660, 5
      %v4673 = vrot.slane %v4661, 5
      %v4674 = vrot.slane %v4662, 5
      %v4675 = vsel %vm1011, %v4672, %v4674
      %v4676 = vrot.slane %v4663, 5
      %v4677 = vsel %vm1011, %v4673, %v4676
      %v4678 = vrot.slane %v4664, 5
      %v4679 = vsel %vm1011, %v4674, %v4678
      %v4680 = vrot.slane %v4665, 5
      %v4681 = vsel %vm1011, %v4676, %v4680
      %4688 = vst [vmem:[#allocation2] sm:$0xf8] %v4672
      %4689 = vst.msk [vmem:[#allocation2 + $0x8] sm:$0xf8] %vm2754, %v4673
      %4690 = vst [vmem:[#allocation2 + $0x10] sm:$0xff] %v4675
      %4691 = vst.msk [vmem:[#allocation2 + $0x18] sm:$0xff] %vm1004, %v4677
      %4692 = vst [vmem:[#allocation2 + $0x20] sm:$0x3f] %v4679
      %4693 = vst.msk [vmem:[#allocation2 + $0x28] sm:$0x3f] %vm219, %v4681
      %v4694 = vld [vmem:[#allocation2] sm:$0xff]
      %v4695 = vld [vmem:[#allocation2 + $0x8] sm:$0xff]
      %v4696 = vld [vmem:[#allocation2 + $0x10] sm:$0xff]
      %v4697 = vld [vmem:[#allocation2 + $0x18] sm:$0xff]
      %v4698 = vld [vmem:[#allocation2 + $0x20] sm:$0x7]
      %v4699 = vld [vmem:[#allocation2 + $0x28] sm:$0x7]
      %v4700 = vpack.c.bf16 %v4696, %v4694
      %v4701 = vpack.c.bf16 %v4697, %v4695
      %v4702 = vpack.c.bf16 %v4698, %v4698
      %v4703 = vpack.c.bf16 %v4699, %v4699
      %s4704 = scalar_lea.vmem %s1, 2432
      %v4705 = vld [vmem:[%s4704] sm:$0xff]
      %v4706 = vld [vmem:[%s4704 + $0x8] sm:$0xff]
      %v4707 = vld [vmem:[%s4704 + $0x10] sm:$0xff]
      %v4708 = vld [vmem:[%s4704 + $0x18] sm:$0xff]
      %v4709 = vld [vmem:[%s4704 + $0x20] sm:$0xff]
      %v4710 = vld [vmem:[%s4704 + $0x28] sm:$0xff]
      %v4711 = vld [vmem:[%s4704 + $0x30] sm:$0xff]
      %v4712 = vld [vmem:[%s4704 + $0x38] sm:$0xff]
      %v4713 = vld [vmem:[%s4704 + $0x40] sm:$0xff]
      %v4714 = vld [vmem:[%s4704 + $0x48] sm:$0xff]
      %v4715 = vld [vmem:[%s4704 + $0x50] sm:$0xff]
      %v4716 = vld [vmem:[%s4704 + $0x58] sm:$0xff]
      %v4717 = vld [vmem:[%s4704 + $0x60] sm:$0xff]
      %v4718 = vld [vmem:[%s4704 + $0x68] sm:$0xff]
      %v4719 = vld [vmem:[%s4704 + $0x70] sm:$0xff]
      %v4720 = vld [vmem:[%s4704 + $0x78] sm:$0xff]
      %v4721 = vld [vmem:[%s4704 + $0x80] sm:$0xff]
      %v4722 = vld [vmem:[%s4704 + $0x88] sm:$0xff]
      %v4723 = vld [vmem:[%s4704 + $0x90] sm:$0x77]
      %v4724 = vld [vmem:[#allocation2] sm:$0xfe]
      %v4725 = vld [vmem:[#allocation2 + $0x8] sm:$0xfe]
      %v4726 = vld [vmem:[#allocation2 + $0x20] sm:$0xf]
      %v4727 = vld [vmem:[#allocation2 + $0x28] sm:$0xf]
      %v4728 = vpack.c.bf16 %v4696, %v4724
      %v4729 = vpack.c.bf16 %v4697, %v4725
      %v4730 = vpack.c.bf16 %v4726, %v4726
      %v4731 = vpack.c.bf16 %v4727, %v4727
      %s4732 = scalar_lea.vmem %s1, 2584
      %v4733 = vld [vmem:[%s4732] sm:$0xff]
      %v4734 = vld [vmem:[%s4732 + $0x8] sm:$0xff]
      %v4735 = vld [vmem:[%s4732 + $0x10] sm:$0xff]
      %v4736 = vld [vmem:[%s4732 + $0x18] sm:$0xff]
      %v4737 = vld [vmem:[%s4732 + $0x20] sm:$0xff]
      %v4738 = vld [vmem:[%s4732 + $0x28] sm:$0xff]
      %v4739 = vld [vmem:[%s4732 + $0x30] sm:$0xff]
      %v4740 = vld [vmem:[%s4732 + $0x38] sm:$0xff]
      %v4741 = vld [vmem:[%s4732 + $0x40] sm:$0xff]
      %v4742 = vld [vmem:[%s4732 + $0x48] sm:$0xff]
      %v4743 = vld [vmem:[%s4732 + $0x50] sm:$0xff]
      %v4744 = vld [vmem:[%s4732 + $0x58] sm:$0xff]
      %v4745 = vld [vmem:[%s4732 + $0x60] sm:$0xff]
      %v4746 = vld [vmem:[%s4732 + $0x68] sm:$0xff]
      %v4747 = vld [vmem:[%s4732 + $0x70] sm:$0xff]
      %v4748 = vld [vmem:[%s4732 + $0x78] sm:$0xff]
      %v4749 = vld [vmem:[%s4732 + $0x80] sm:$0xff]
      %v4750 = vld [vmem:[%s4732 + $0x88] sm:$0xff]
      %v4751 = vld [vmem:[%s4732 + $0x90] sm:$0x77]
      %v4753 = vshrl.u32 %v4728, 16
      %v4755 = vshll.u32 %v4728, 16
      %v4757 = vrot.slane %v4755, 1
      %v4758 = vor.u32 %v4753, %v4757
      %v4760 = vshll.u32 %v4730, 16
      %v4762 = vrot.slane %v4760, 1
      %v4763 = vsel %vm876, %v4758, %v4762
      %v4765 = vshrl.u32 %v4729, 16
      %v4767 = vshll.u32 %v4729, 16
      %v4769 = vrot.slane %v4767, 1
      %v4770 = vor.u32 %v4765, %v4769
      %v4772 = vshll.u32 %v4731, 16
      %v4774 = vrot.slane %v4772, 1
      %v4775 = vsel %vm876, %v4770, %v4774
      %v4776 = vshrl.u32 %v4730, 16
      %v4778 = vor.u32 %v4776, %v4762
      %v4779 = vshrl.u32 %v4731, 16
      %v4781 = vor.u32 %v4779, %v4774
      %v4803 = vunpack.c.l.b16 %v4733
      %v4804 = vunpack.c.h.b16 %v4733
      %v4805 = vunpack.c.l.b16 %v4734
      %v4806 = vunpack.c.h.b16 %v4734
      %v4807 = vunpack.c.l.b16 %v4735
      %v4808 = vunpack.c.h.b16 %v4735
      %v4809 = vunpack.c.l.b16 %v4736
      %v4810 = vunpack.c.h.b16 %v4736
      %v4811 = vunpack.c.l.b16 %v4737
      %v4812 = vunpack.c.h.b16 %v4737
      %v4813 = vunpack.c.l.b16 %v4738
      %v4814 = vunpack.c.h.b16 %v4738
      %v4815 = vunpack.c.l.b16 %v4739
      %v4816 = vunpack.c.h.b16 %v4739
      %v4817 = vunpack.c.l.b16 %v4740
      %v4818 = vunpack.c.h.b16 %v4740
      %v4819 = vunpack.c.l.b16 %v4741
      %v4820 = vunpack.c.h.b16 %v4741
      %v4821 = vunpack.c.l.b16 %v4742
      %v4822 = vunpack.c.h.b16 %v4742
      %v4823 = vunpack.c.l.b16 %v4743
      %v4824 = vunpack.c.h.b16 %v4743
      %v4825 = vunpack.c.l.b16 %v4744
      %v4826 = vunpack.c.h.b16 %v4744
      %v4827 = vunpack.c.l.b16 %v4745
      %v4828 = vunpack.c.h.b16 %v4745
      %v4829 = vunpack.c.l.b16 %v4746
      %v4830 = vunpack.c.h.b16 %v4746
      %v4831 = vunpack.c.l.b16 %v4747
      %v4832 = vunpack.c.h.b16 %v4747
      %v4833 = vunpack.c.l.b16 %v4748
      %v4834 = vunpack.c.h.b16 %v4748
      %v4835 = vunpack.c.l.b16 %v4749
      %v4836 = vunpack.c.h.b16 %v4749
      %v4837 = vunpack.c.l.b16 %v4750
      %v4838 = vunpack.c.h.b16 %v4750
      %v4839 = vunpack.c.l.b16 %v4751
      %v4840 = vunpack.c.h.b16 %v4751
      %v4841 = vpack.c.b16 %v4805, %v4803
      %v4842 = vpack.c.b16 %v4806, %v4804
      %v4843 = vpack.c.b16 %v4809, %v4807
      %v4844 = vpack.c.b16 %v4810, %v4808
      %v4845 = vpack.c.b16 %v4813, %v4811
      %v4846 = vpack.c.b16 %v4814, %v4812
      %v4847 = vpack.c.b16 %v4817, %v4815
      %v4848 = vpack.c.b16 %v4818, %v4816
      %v4849 = vpack.c.b16 %v4821, %v4819
      %v4850 = vpack.c.b16 %v4822, %v4820
      %v4851 = vpack.c.b16 %v4825, %v4823
      %v4852 = vpack.c.b16 %v4826, %v4824
      %v4853 = vpack.c.b16 %v4829, %v4827
      %v4854 = vpack.c.b16 %v4830, %v4828
      %v4855 = vpack.c.b16 %v4833, %v4831
      %v4856 = vpack.c.b16 %v4834, %v4832
      %v4857 = vpack.c.b16 %v4837, %v4835
      %v4858 = vpack.c.b16 %v4838, %v4836
      %v4859 = vpack.c.b16 %v4839, %v4839
      %v4860 = vpack.c.b16 %v4840, %v4840
      %v4880 = vsel %vm1004, %v4775, 0
      %v4883 = vsel %vm1004, %v4781, 0
      %v4886 = vsel %vm1011, %v4859, 0
      %v4889 = vsel %vm1011, %v4860, 0
      %4891 = vmatpush.bf16.msra.mxu0 %v4855
      %4892 = vmatpush.bf16.msra.mxu0 %v4853
      %4893 = vmatpush.bf16.msra.mxu0 %v4851
      %4894 = vmatpush.bf16.msra.mxu0 %v4849
      %4895 = vmatpush.bf16.msra.mxu0 %v4847
      %4896 = vmatpush.bf16.msra.mxu0 %v4845
      %4897 = vmatpush.bf16.msra.mxu0 %v4843
      %4898 = vmatpush.bf16.msra.mxu0 %v4841
      %4899 = vmatmul.bf16.gmra.mxu0 %v4763
      %v4900 = vpop.f32.mrf.mxu0
      %v4901 = vadd.f32 0.0, %v4900
      %v4902 = vpop.f32.mrf.mxu0
      %v4903 = vadd.f32 0.0, %v4902
      %4904 = vmatmul.bf16.gmra.mxu0 %v4778
      %v4905 = vpop.f32.mrf.mxu0
      %v4906 = vadd.f32 0.0, %v4905
      %v4907 = vpop.f32.mrf.mxu0
      %4908 = vdwg.mxu0
      %4909 = vmatpush.bf16.msra.mxu0 0
      %4910 = vmatpush.bf16.msra.mxu0 0
      %4911 = vmatpush.bf16.msra.mxu0 0
      %4912 = vmatpush.bf16.msra.mxu0 0
      %4913 = vmatpush.bf16.msra.mxu0 0
      %4914 = vmatpush.bf16.msra.mxu0 0
      %4915 = vmatpush.bf16.msra.mxu0 %v4886
      %4916 = vmatpush.bf16.msra.mxu0 %v4857
      %4917 = vmatmul.bf16.gmra.mxu0 %v4880
      %v4918 = vpop.f32.mrf.mxu0
      %v4919 = vadd.f32 %v4901, %v4918
      %v4920 = vpop.f32.mrf.mxu0
      %v4921 = vadd.f32 %v4903, %v4920
      %4922 = vmatmul.bf16.gmra.mxu0 %v4883
      %v4923 = vpop.f32.mrf.mxu0
      %v4924 = vadd.f32 %v4906, %v4923
      %v4925 = vpop.f32.mrf.mxu0
      %4926 = vdwg.mxu0
      %4927 = vmatpush.bf16.msra.mxu0 %v4856
      %4928 = vmatpush.bf16.msra.mxu0 %v4854
      %4929 = vmatpush.bf16.msra.mxu0 %v4852
      %4930 = vmatpush.bf16.msra.mxu0 %v4850
      %4931 = vmatpush.bf16.msra.mxu0 %v4848
      %4932 = vmatpush.bf16.msra.mxu0 %v4846
      %4933 = vmatpush.bf16.msra.mxu0 %v4844
      %4934 = vmatpush.bf16.msra.mxu0 %v4842
      %4935 = vmatmul.bf16.gmra.mxu0 %v4763
      %v4936 = vpop.f32.mrf.mxu0
      %v4937 = vadd.f32 0.0, %v4936
      %v4938 = vpop.f32.mrf.mxu0
      %v4939 = vadd.f32 0.0, %v4938
      %4940 = vmatmul.bf16.gmra.mxu0 %v4778
      %v4941 = vpop.f32.mrf.mxu0
      %v4942 = vadd.f32 0.0, %v4941
      %v4943 = vpop.f32.mrf.mxu0
      %4944 = vdwg.mxu0
      %4945 = vmatpush.bf16.msra.mxu0 0
      %4946 = vmatpush.bf16.msra.mxu0 0
      %4947 = vmatpush.bf16.msra.mxu0 0
      %4948 = vmatpush.bf16.msra.mxu0 0
      %4949 = vmatpush.bf16.msra.mxu0 0
      %4950 = vmatpush.bf16.msra.mxu0 0
      %4951 = vmatpush.bf16.msra.mxu0 %v4889
      %4952 = vmatpush.bf16.msra.mxu0 %v4858
      %4953 = vmatmul.bf16.gmra.mxu0 %v4880
      %v4954 = vpop.f32.mrf.mxu0
      %v4955 = vadd.f32 %v4937, %v4954
      %v4956 = vpop.f32.mrf.mxu0
      %v4957 = vadd.f32 %v4939, %v4956
      %4958 = vmatmul.bf16.gmra.mxu0 %v4883
      %v4959 = vpop.f32.mrf.mxu0
      %v4960 = vadd.f32 %v4942, %v4959
      %v4961 = vpop.f32.mrf.mxu0
      %4962 = vdwg.mxu0
      %v4982 = vunpack.c.l.b16 %v4705
      %v4983 = vunpack.c.h.b16 %v4705
      %v4984 = vunpack.c.l.b16 %v4706
      %v4985 = vunpack.c.h.b16 %v4706
      %v4986 = vunpack.c.l.b16 %v4707
      %v4987 = vunpack.c.h.b16 %v4707
      %v4988 = vunpack.c.l.b16 %v4708
      %v4989 = vunpack.c.h.b16 %v4708
      %v4990 = vunpack.c.l.b16 %v4709
      %v4991 = vunpack.c.h.b16 %v4709
      %v4992 = vunpack.c.l.b16 %v4710
      %v4993 = vunpack.c.h.b16 %v4710
      %v4994 = vunpack.c.l.b16 %v4711
      %v4995 = vunpack.c.h.b16 %v4711
      %v4996 = vunpack.c.l.b16 %v4712
      %v4997 = vunpack.c.h.b16 %v4712
      %v4998 = vunpack.c.l.b16 %v4713
      %v4999 = vunpack.c.h.b16 %v4713
      %v5000 = vunpack.c.l.b16 %v4714
      %v5001 = vunpack.c.h.b16 %v4714
      %v5002 = vunpack.c.l.b16 %v4715
      %v5003 = vunpack.c.h.b16 %v4715
      %v5004 = vunpack.c.l.b16 %v4716
      %v5005 = vunpack.c.h.b16 %v4716
      %v5006 = vunpack.c.l.b16 %v4717
      %v5007 = vunpack.c.h.b16 %v4717
      %v5008 = vunpack.c.l.b16 %v4718
      %v5009 = vunpack.c.h.b16 %v4718
      %v5010 = vunpack.c.l.b16 %v4719
      %v5011 = vunpack.c.h.b16 %v4719
      %v5012 = vunpack.c.l.b16 %v4720
      %v5013 = vunpack.c.h.b16 %v4720
      %v5014 = vunpack.c.l.b16 %v4721
      %v5015 = vunpack.c.h.b16 %v4721
      %v5016 = vunpack.c.l.b16 %v4722
      %v5017 = vunpack.c.h.b16 %v4722
      %v5018 = vunpack.c.l.b16 %v4723
      %v5019 = vunpack.c.h.b16 %v4723
      %v5020 = vpack.c.b16 %v4984, %v4982
      %v5021 = vpack.c.b16 %v4985, %v4983
      %v5022 = vpack.c.b16 %v4988, %v4986
      %v5023 = vpack.c.b16 %v4989, %v4987
      %v5024 = vpack.c.b16 %v4992, %v4990
      %v5025 = vpack.c.b16 %v4993, %v4991
      %v5026 = vpack.c.b16 %v4996, %v4994
      %v5027 = vpack.c.b16 %v4997, %v4995
      %v5028 = vpack.c.b16 %v5000, %v4998
      %v5029 = vpack.c.b16 %v5001, %v4999
      %v5030 = vpack.c.b16 %v5004, %v5002
      %v5031 = vpack.c.b16 %v5005, %v5003
      %v5032 = vpack.c.b16 %v5008, %v5006
      %v5033 = vpack.c.b16 %v5009, %v5007
      %v5034 = vpack.c.b16 %v5012, %v5010
      %v5035 = vpack.c.b16 %v5013, %v5011
      %v5036 = vpack.c.b16 %v5016, %v5014
      %v5037 = vpack.c.b16 %v5017, %v5015
      %v5038 = vpack.c.b16 %v5018, %v5018
      %v5039 = vpack.c.b16 %v5019, %v5019
      %v5059 = vsel %vm1004, %v4701, 0
      %v5062 = vsel %vm1004, %v4703, 0
      %v5065 = vsel %vm1011, %v5038, 0
      %v5068 = vsel %vm1011, %v5039, 0
      %5070 = vmatpush.bf16.msra.mxu0 %v5034
      %5071 = vmatpush.bf16.msra.mxu0 %v5032
      %5072 = vmatpush.bf16.msra.mxu0 %v5030
      %5073 = vmatpush.bf16.msra.mxu0 %v5028
      %5074 = vmatpush.bf16.msra.mxu0 %v5026
      %5075 = vmatpush.bf16.msra.mxu0 %v5024
      %5076 = vmatpush.bf16.msra.mxu0 %v5022
      %5077 = vmatpush.bf16.msra.mxu0 %v5020
      %5078 = vmatmul.bf16.gmra.mxu0 %v4700
      %v5079 = vpop.f32.mrf.mxu0
      %v5080 = vadd.f32 %v4919, %v5079
      %v5081 = vpop.f32.mrf.mxu0
      %v5082 = vadd.f32 %v4921, %v5081
      %5083 = vmatmul.bf16.gmra.mxu0 %v4702
      %v5084 = vpop.f32.mrf.mxu0
      %v5085 = vadd.f32 %v4924, %v5084
      %v5086 = vpop.f32.mrf.mxu0
      %5087 = vdwg.mxu0
      %5088 = vmatpush.bf16.msra.mxu0 0
      %5089 = vmatpush.bf16.msra.mxu0 0
      %5090 = vmatpush.bf16.msra.mxu0 0
      %5091 = vmatpush.bf16.msra.mxu0 0
      %5092 = vmatpush.bf16.msra.mxu0 0
      %5093 = vmatpush.bf16.msra.mxu0 0
      %5094 = vmatpush.bf16.msra.mxu0 %v5065
      %5095 = vmatpush.bf16.msra.mxu0 %v5036
      %5096 = vmatmul.bf16.gmra.mxu0 %v5059
      %v5097 = vpop.f32.mrf.mxu0
      %v5098 = vadd.f32 %v5080, %v5097
      %v5099 = vpop.f32.mrf.mxu0
      %v5100 = vadd.f32 %v5082, %v5099
      %5101 = vmatmul.bf16.gmra.mxu0 %v5062
      %v5102 = vpop.f32.mrf.mxu0
      %v5103 = vadd.f32 %v5085, %v5102
      %v5104 = vpop.f32.mrf.mxu0
      %5105 = vdwg.mxu0
      %5106 = vmatpush.bf16.msra.mxu0 %v5035
      %5107 = vmatpush.bf16.msra.mxu0 %v5033
      %5108 = vmatpush.bf16.msra.mxu0 %v5031
      %5109 = vmatpush.bf16.msra.mxu0 %v5029
      %5110 = vmatpush.bf16.msra.mxu0 %v5027
      %5111 = vmatpush.bf16.msra.mxu0 %v5025
      %5112 = vmatpush.bf16.msra.mxu0 %v5023
      %5113 = vmatpush.bf16.msra.mxu0 %v5021
      %5114 = vmatmul.bf16.gmra.mxu0 %v4700
      %v5115 = vpop.f32.mrf.mxu0
      %v5116 = vadd.f32 %v4955, %v5115
      %v5117 = vpop.f32.mrf.mxu0
      %v5118 = vadd.f32 %v4957, %v5117
      %5119 = vmatmul.bf16.gmra.mxu0 %v4702
      %v5120 = vpop.f32.mrf.mxu0
      %v5121 = vadd.f32 %v4960, %v5120
      %v5122 = vpop.f32.mrf.mxu0
      %5123 = vdwg.mxu0
      %5124 = vmatpush.bf16.msra.mxu0 0
      %5125 = vmatpush.bf16.msra.mxu0 0
      %5126 = vmatpush.bf16.msra.mxu0 0
      %5127 = vmatpush.bf16.msra.mxu0 0
      %5128 = vmatpush.bf16.msra.mxu0 0
      %5129 = vmatpush.bf16.msra.mxu0 0
      %5130 = vmatpush.bf16.msra.mxu0 %v5068
      %5131 = vmatpush.bf16.msra.mxu0 %v5037
      %5132 = vmatmul.bf16.gmra.mxu0 %v5059
      %v5133 = vpop.f32.mrf.mxu0
      %v5134 = vadd.f32 %v5116, %v5133
      %v5135 = vpop.f32.mrf.mxu0
      %v5136 = vadd.f32 %v5118, %v5135
      %5137 = vmatmul.bf16.gmra.mxu0 %v5062
      %v5138 = vpop.f32.mrf.mxu0
      %v5139 = vadd.f32 %v5121, %v5138
      %v5140 = vpop.f32.mrf.mxu0
      %5141 = vdwg.mxu0
      %v5142 = vld [vmem:[#allocation2] sm:$0xfc]
      %v5143 = vld [vmem:[#allocation2 + $0x8] sm:$0xfc]
      %v5144 = vld [vmem:[#allocation2 + $0x20] sm:$0x1f]
      %v5145 = vld [vmem:[#allocation2 + $0x28] sm:$0x1f]
      %v5146 = vpack.c.bf16 %v4696, %v5142
      %v5147 = vpack.c.bf16 %v4697, %v5143
      %v5148 = vpack.c.bf16 %v5144, %v5144
      %v5149 = vpack.c.bf16 %v5145, %v5145
      %s5150 = scalar_lea.vmem %s1, 2736
      %v5151 = vld [vmem:[%s5150] sm:$0xff]
      %v5152 = vld [vmem:[%s5150 + $0x8] sm:$0xff]
      %v5153 = vld [vmem:[%s5150 + $0x10] sm:$0xff]
      %v5154 = vld [vmem:[%s5150 + $0x18] sm:$0xff]
      %v5155 = vld [vmem:[%s5150 + $0x20] sm:$0xff]
      %v5156 = vld [vmem:[%s5150 + $0x28] sm:$0xff]
      %v5157 = vld [vmem:[%s5150 + $0x30] sm:$0xff]
      %v5158 = vld [vmem:[%s5150 + $0x38] sm:$0xff]
      %v5159 = vld [vmem:[%s5150 + $0x40] sm:$0xff]
      %v5160 = vld [vmem:[%s5150 + $0x48] sm:$0xff]
      %v5161 = vld [vmem:[%s5150 + $0x50] sm:$0xff]
      %v5162 = vld [vmem:[%s5150 + $0x58] sm:$0xff]
      %v5163 = vld [vmem:[%s5150 + $0x60] sm:$0xff]
      %v5164 = vld [vmem:[%s5150 + $0x68] sm:$0xff]
      %v5165 = vld [vmem:[%s5150 + $0x70] sm:$0xff]
      %v5166 = vld [vmem:[%s5150 + $0x78] sm:$0xff]
      %v5167 = vld [vmem:[%s5150 + $0x80] sm:$0xff]
      %v5168 = vld [vmem:[%s5150 + $0x88] sm:$0xff]
      %v5169 = vld [vmem:[%s5150 + $0x90] sm:$0x77]
      %v5174 = vrot.slane %v5146, 1
      %v5175 = vrot.slane %v5148, 1
      %v5176 = vsel %vm1301, %v5174, %v5175
      %v5177 = vrot.slane %v5147, 1
      %v5178 = vrot.slane %v5149, 1
      %v5179 = vsel %vm1301, %v5177, %v5178
      %v5201 = vunpack.c.l.b16 %v5151
      %v5202 = vunpack.c.h.b16 %v5151
      %v5203 = vunpack.c.l.b16 %v5152
      %v5204 = vunpack.c.h.b16 %v5152
      %v5205 = vunpack.c.l.b16 %v5153
      %v5206 = vunpack.c.h.b16 %v5153
      %v5207 = vunpack.c.l.b16 %v5154
      %v5208 = vunpack.c.h.b16 %v5154
      %v5209 = vunpack.c.l.b16 %v5155
      %v5210 = vunpack.c.h.b16 %v5155
      %v5211 = vunpack.c.l.b16 %v5156
      %v5212 = vunpack.c.h.b16 %v5156
      %v5213 = vunpack.c.l.b16 %v5157
      %v5214 = vunpack.c.h.b16 %v5157
      %v5215 = vunpack.c.l.b16 %v5158
      %v5216 = vunpack.c.h.b16 %v5158
      %v5217 = vunpack.c.l.b16 %v5159
      %v5218 = vunpack.c.h.b16 %v5159
      %v5219 = vunpack.c.l.b16 %v5160
      %v5220 = vunpack.c.h.b16 %v5160
      %v5221 = vunpack.c.l.b16 %v5161
      %v5222 = vunpack.c.h.b16 %v5161
      %v5223 = vunpack.c.l.b16 %v5162
      %v5224 = vunpack.c.h.b16 %v5162
      %v5225 = vunpack.c.l.b16 %v5163
      %v5226 = vunpack.c.h.b16 %v5163
      %v5227 = vunpack.c.l.b16 %v5164
      %v5228 = vunpack.c.h.b16 %v5164
      %v5229 = vunpack.c.l.b16 %v5165
      %v5230 = vunpack.c.h.b16 %v5165
      %v5231 = vunpack.c.l.b16 %v5166
      %v5232 = vunpack.c.h.b16 %v5166
      %v5233 = vunpack.c.l.b16 %v5167
      %v5234 = vunpack.c.h.b16 %v5167
      %v5235 = vunpack.c.l.b16 %v5168
      %v5236 = vunpack.c.h.b16 %v5168
      %v5237 = vunpack.c.l.b16 %v5169
      %v5238 = vunpack.c.h.b16 %v5169
      %v5239 = vpack.c.b16 %v5203, %v5201
      %v5240 = vpack.c.b16 %v5204, %v5202
      %v5241 = vpack.c.b16 %v5207, %v5205
      %v5242 = vpack.c.b16 %v5208, %v5206
      %v5243 = vpack.c.b16 %v5211, %v5209
      %v5244 = vpack.c.b16 %v5212, %v5210
      %v5245 = vpack.c.b16 %v5215, %v5213
      %v5246 = vpack.c.b16 %v5216, %v5214
      %v5247 = vpack.c.b16 %v5219, %v5217
      %v5248 = vpack.c.b16 %v5220, %v5218
      %v5249 = vpack.c.b16 %v5223, %v5221
      %v5250 = vpack.c.b16 %v5224, %v5222
      %v5251 = vpack.c.b16 %v5227, %v5225
      %v5252 = vpack.c.b16 %v5228, %v5226
      %v5253 = vpack.c.b16 %v5231, %v5229
      %v5254 = vpack.c.b16 %v5232, %v5230
      %v5255 = vpack.c.b16 %v5235, %v5233
      %v5256 = vpack.c.b16 %v5236, %v5234
      %v5257 = vpack.c.b16 %v5237, %v5237
      %v5258 = vpack.c.b16 %v5238, %v5238
      %v5278 = vsel %vm1004, %v5179, 0
      %v5281 = vsel %vm1004, %v5178, 0
      %v5284 = vsel %vm1011, %v5257, 0
      %v5287 = vsel %vm1011, %v5258, 0
      %5289 = vmatpush.bf16.msra.mxu0 %v5253
      %5290 = vmatpush.bf16.msra.mxu0 %v5251
      %5291 = vmatpush.bf16.msra.mxu0 %v5249
      %5292 = vmatpush.bf16.msra.mxu0 %v5247
      %5293 = vmatpush.bf16.msra.mxu0 %v5245
      %5294 = vmatpush.bf16.msra.mxu0 %v5243
      %5295 = vmatpush.bf16.msra.mxu0 %v5241
      %5296 = vmatpush.bf16.msra.mxu0 %v5239
      %5297 = vmatmul.bf16.gmra.mxu0 %v5176
      %v5298 = vpop.f32.mrf.mxu0
      %v5299 = vadd.f32 0.0, %v5298
      %v5300 = vpop.f32.mrf.mxu0
      %v5301 = vadd.f32 0.0, %v5300
      %5302 = vmatmul.bf16.gmra.mxu0 %v5175
      %v5303 = vpop.f32.mrf.mxu0
      %v5304 = vadd.f32 0.0, %v5303
      %v5305 = vpop.f32.mrf.mxu0
      %5306 = vdwg.mxu0
      %5307 = vmatpush.bf16.msra.mxu0 0
      %5308 = vmatpush.bf16.msra.mxu0 0
      %5309 = vmatpush.bf16.msra.mxu0 0
      %5310 = vmatpush.bf16.msra.mxu0 0
      %5311 = vmatpush.bf16.msra.mxu0 0
      %5312 = vmatpush.bf16.msra.mxu0 0
      %5313 = vmatpush.bf16.msra.mxu0 %v5284
      %5314 = vmatpush.bf16.msra.mxu0 %v5255
      %5315 = vmatmul.bf16.gmra.mxu0 %v5278
      %v5316 = vpop.f32.mrf.mxu0
      %v5317 = vadd.f32 %v5299, %v5316
      %v5318 = vpop.f32.mrf.mxu0
      %v5319 = vadd.f32 %v5301, %v5318
      %5320 = vmatmul.bf16.gmra.mxu0 %v5281
      %v5321 = vpop.f32.mrf.mxu0
      %v5322 = vadd.f32 %v5304, %v5321
      %v5323 = vpop.f32.mrf.mxu0
      %5324 = vdwg.mxu0
      %5325 = vmatpush.bf16.msra.mxu0 %v5254
      %5326 = vmatpush.bf16.msra.mxu0 %v5252
      %5327 = vmatpush.bf16.msra.mxu0 %v5250
      %5328 = vmatpush.bf16.msra.mxu0 %v5248
      %5329 = vmatpush.bf16.msra.mxu0 %v5246
      %5330 = vmatpush.bf16.msra.mxu0 %v5244
      %5331 = vmatpush.bf16.msra.mxu0 %v5242
      %5332 = vmatpush.bf16.msra.mxu0 %v5240
      %5333 = vmatmul.bf16.gmra.mxu0 %v5176
      %v5334 = vpop.f32.mrf.mxu0
      %v5335 = vadd.f32 0.0, %v5334
      %v5336 = vpop.f32.mrf.mxu0
      %v5337 = vadd.f32 0.0, %v5336
      %5338 = vmatmul.bf16.gmra.mxu0 %v5175
      %v5339 = vpop.f32.mrf.mxu0
      %v5340 = vadd.f32 0.0, %v5339
      %v5341 = vpop.f32.mrf.mxu0
      %5342 = vdwg.mxu0
      %5343 = vmatpush.bf16.msra.mxu0 0
      %5344 = vmatpush.bf16.msra.mxu0 0
      %5345 = vmatpush.bf16.msra.mxu0 0
      %5346 = vmatpush.bf16.msra.mxu0 0
      %5347 = vmatpush.bf16.msra.mxu0 0
      %5348 = vmatpush.bf16.msra.mxu0 0
      %5349 = vmatpush.bf16.msra.mxu0 %v5287
      %5350 = vmatpush.bf16.msra.mxu0 %v5256
      %5351 = vmatmul.bf16.gmra.mxu0 %v5278
      %v5352 = vpop.f32.mrf.mxu0
      %v5353 = vadd.f32 %v5335, %v5352
      %v5354 = vpop.f32.mrf.mxu0
      %v5355 = vadd.f32 %v5337, %v5354
      %5356 = vmatmul.bf16.gmra.mxu0 %v5281
      %v5357 = vpop.f32.mrf.mxu0
      %v5358 = vadd.f32 %v5340, %v5357
      %v5359 = vpop.f32.mrf.mxu0
      %5360 = vdwg.mxu0
      %v5361 = vadd.f32 %v5098, %v5317
      %v5362 = vadd.f32 %v5134, %v5353
      %v5363 = vadd.f32 %v5100, %v5319
      %v5364 = vadd.f32 %v5136, %v5355
      %v5365 = vadd.f32 %v5103, %v5322
      %v5366 = vadd.f32 %v5139, %v5358
      %v5367 = vld [vmem:[#allocation2] sm:$0xf8]
      %v5368 = vld [vmem:[#allocation2 + $0x8] sm:$0xf8]
      %v5369 = vld [vmem:[#allocation2 + $0x20] sm:$0x3f]
      %v5370 = vld [vmem:[#allocation2 + $0x28] sm:$0x3f]
      %v5371 = vpack.c.bf16 %v4696, %v5367
      %v5372 = vpack.c.bf16 %v4697, %v5368
      %v5373 = vpack.c.bf16 %v5369, %v5369
      %v5374 = vpack.c.bf16 %v5370, %v5370
      %s5375 = scalar_lea.vmem %s1, 2888
      %v5376 = vld [vmem:[%s5375] sm:$0xff]
      %v5377 = vld [vmem:[%s5375 + $0x8] sm:$0xff]
      %v5378 = vld [vmem:[%s5375 + $0x10] sm:$0xff]
      %v5379 = vld [vmem:[%s5375 + $0x18] sm:$0xff]
      %v5380 = vld [vmem:[%s5375 + $0x20] sm:$0xff]
      %v5381 = vld [vmem:[%s5375 + $0x28] sm:$0xff]
      %v5382 = vld [vmem:[%s5375 + $0x30] sm:$0xff]
      %v5383 = vld [vmem:[%s5375 + $0x38] sm:$0xff]
      %v5384 = vld [vmem:[%s5375 + $0x40] sm:$0xff]
      %v5385 = vld [vmem:[%s5375 + $0x48] sm:$0xff]
      %v5386 = vld [vmem:[%s5375 + $0x50] sm:$0xff]
      %v5387 = vld [vmem:[%s5375 + $0x58] sm:$0xff]
      %v5388 = vld [vmem:[%s5375 + $0x60] sm:$0xff]
      %v5389 = vld [vmem:[%s5375 + $0x68] sm:$0xff]
      %v5390 = vld [vmem:[%s5375 + $0x70] sm:$0xff]
      %v5391 = vld [vmem:[%s5375 + $0x78] sm:$0xff]
      %v5392 = vld [vmem:[%s5375 + $0x80] sm:$0xff]
      %v5393 = vld [vmem:[%s5375 + $0x88] sm:$0xff]
      %v5394 = vld [vmem:[%s5375 + $0x90] sm:$0x77]
      %v5396 = vshrl.u32 %v5371, 16
      %v5398 = vrot.slane %v5396, 1
      %v5399 = vshll.u32 %v5371, 16
      %v5401 = vrot.slane %v5399, 2
      %v5402 = vor.u32 %v5398, %v5401
      %v5404 = vshrl.u32 %v5373, 16
      %v5406 = vrot.slane %v5404, 1
      %v5407 = vshll.u32 %v5373, 16
      %v5409 = vrot.slane %v5407, 2
      %v5410 = vor.u32 %v5406, %v5409
      %v5411 = vsel %vm1523, %v5402, %v5410
      %v5413 = vshrl.u32 %v5372, 16
      %v5415 = vrot.slane %v5413, 1
      %v5416 = vshll.u32 %v5372, 16
      %v5418 = vrot.slane %v5416, 2
      %v5419 = vor.u32 %v5415, %v5418
      %v5421 = vshrl.u32 %v5374, 16
      %v5423 = vrot.slane %v5421, 1
      %v5424 = vshll.u32 %v5374, 16
      %v5426 = vrot.slane %v5424, 2
      %v5427 = vor.u32 %v5423, %v5426
      %v5428 = vsel %vm1523, %v5419, %v5427
      %v5450 = vunpack.c.l.b16 %v5376
      %v5451 = vunpack.c.h.b16 %v5376
      %v5452 = vunpack.c.l.b16 %v5377
      %v5453 = vunpack.c.h.b16 %v5377
      %v5454 = vunpack.c.l.b16 %v5378
      %v5455 = vunpack.c.h.b16 %v5378
      %v5456 = vunpack.c.l.b16 %v5379
      %v5457 = vunpack.c.h.b16 %v5379
      %v5458 = vunpack.c.l.b16 %v5380
      %v5459 = vunpack.c.h.b16 %v5380
      %v5460 = vunpack.c.l.b16 %v5381
      %v5461 = vunpack.c.h.b16 %v5381
      %v5462 = vunpack.c.l.b16 %v5382
      %v5463 = vunpack.c.h.b16 %v5382
      %v5464 = vunpack.c.l.b16 %v5383
      %v5465 = vunpack.c.h.b16 %v5383
      %v5466 = vunpack.c.l.b16 %v5384
      %v5467 = vunpack.c.h.b16 %v5384
      %v5468 = vunpack.c.l.b16 %v5385
      %v5469 = vunpack.c.h.b16 %v5385
      %v5470 = vunpack.c.l.b16 %v5386
      %v5471 = vunpack.c.h.b16 %v5386
      %v5472 = vunpack.c.l.b16 %v5387
      %v5473 = vunpack.c.h.b16 %v5387
      %v5474 = vunpack.c.l.b16 %v5388
      %v5475 = vunpack.c.h.b16 %v5388
      %v5476 = vunpack.c.l.b16 %v5389
      %v5477 = vunpack.c.h.b16 %v5389
      %v5478 = vunpack.c.l.b16 %v5390
      %v5479 = vunpack.c.h.b16 %v5390
      %v5480 = vunpack.c.l.b16 %v5391
      %v5481 = vunpack.c.h.b16 %v5391
      %v5482 = vunpack.c.l.b16 %v5392
      %v5483 = vunpack.c.h.b16 %v5392
      %v5484 = vunpack.c.l.b16 %v5393
      %v5485 = vunpack.c.h.b16 %v5393
      %v5486 = vunpack.c.l.b16 %v5394
      %v5487 = vunpack.c.h.b16 %v5394
      %v5488 = vpack.c.b16 %v5452, %v5450
      %v5489 = vpack.c.b16 %v5453, %v5451
      %v5490 = vpack.c.b16 %v5456, %v5454
      %v5491 = vpack.c.b16 %v5457, %v5455
      %v5492 = vpack.c.b16 %v5460, %v5458
      %v5493 = vpack.c.b16 %v5461, %v5459
      %v5494 = vpack.c.b16 %v5464, %v5462
      %v5495 = vpack.c.b16 %v5465, %v5463
      %v5496 = vpack.c.b16 %v5468, %v5466
      %v5497 = vpack.c.b16 %v5469, %v5467
      %v5498 = vpack.c.b16 %v5472, %v5470
      %v5499 = vpack.c.b16 %v5473, %v5471
      %v5500 = vpack.c.b16 %v5476, %v5474
      %v5501 = vpack.c.b16 %v5477, %v5475
      %v5502 = vpack.c.b16 %v5480, %v5478
      %v5503 = vpack.c.b16 %v5481, %v5479
      %v5504 = vpack.c.b16 %v5484, %v5482
      %v5505 = vpack.c.b16 %v5485, %v5483
      %v5506 = vpack.c.b16 %v5486, %v5486
      %v5507 = vpack.c.b16 %v5487, %v5487
      %v5527 = vsel %vm1004, %v5428, 0
      %v5530 = vsel %vm1004, %v5427, 0
      %v5533 = vsel %vm1011, %v5506, 0
      %v5536 = vsel %vm1011, %v5507, 0
      %5538 = vmatpush.bf16.msra.mxu0 %v5502
      %5539 = vmatpush.bf16.msra.mxu0 %v5500
      %5540 = vmatpush.bf16.msra.mxu0 %v5498
      %5541 = vmatpush.bf16.msra.mxu0 %v5496
      %5542 = vmatpush.bf16.msra.mxu0 %v5494
      %5543 = vmatpush.bf16.msra.mxu0 %v5492
      %5544 = vmatpush.bf16.msra.mxu0 %v5490
      %5545 = vmatpush.bf16.msra.mxu0 %v5488
      %5546 = vmatmul.bf16.gmra.mxu0 %v5411
      %v5547 = vpop.f32.mrf.mxu0
      %v5548 = vadd.f32 0.0, %v5547
      %v5549 = vpop.f32.mrf.mxu0
      %v5550 = vadd.f32 0.0, %v5549
      %5551 = vmatmul.bf16.gmra.mxu0 %v5410
      %v5552 = vpop.f32.mrf.mxu0
      %v5553 = vadd.f32 0.0, %v5552
      %v5554 = vpop.f32.mrf.mxu0
      %5555 = vdwg.mxu0
      %5556 = vmatpush.bf16.msra.mxu0 0
      %5557 = vmatpush.bf16.msra.mxu0 0
      %5558 = vmatpush.bf16.msra.mxu0 0
      %5559 = vmatpush.bf16.msra.mxu0 0
      %5560 = vmatpush.bf16.msra.mxu0 0
      %5561 = vmatpush.bf16.msra.mxu0 0
      %5562 = vmatpush.bf16.msra.mxu0 %v5533
      %5563 = vmatpush.bf16.msra.mxu0 %v5504
      %5564 = vmatmul.bf16.gmra.mxu0 %v5527
      %v5565 = vpop.f32.mrf.mxu0
      %v5566 = vadd.f32 %v5548, %v5565
      %v5567 = vpop.f32.mrf.mxu0
      %v5568 = vadd.f32 %v5550, %v5567
      %5569 = vmatmul.bf16.gmra.mxu0 %v5530
      %v5570 = vpop.f32.mrf.mxu0
      %v5571 = vadd.f32 %v5553, %v5570
      %v5572 = vpop.f32.mrf.mxu0
      %5573 = vdwg.mxu0
      %5574 = vmatpush.bf16.msra.mxu0 %v5503
      %5575 = vmatpush.bf16.msra.mxu0 %v5501
      %5576 = vmatpush.bf16.msra.mxu0 %v5499
      %5577 = vmatpush.bf16.msra.mxu0 %v5497
      %5578 = vmatpush.bf16.msra.mxu0 %v5495
      %5579 = vmatpush.bf16.msra.mxu0 %v5493
      %5580 = vmatpush.bf16.msra.mxu0 %v5491
      %5581 = vmatpush.bf16.msra.mxu0 %v5489
      %5582 = vmatmul.bf16.gmra.mxu0 %v5411
      %v5583 = vpop.f32.mrf.mxu0
      %v5584 = vadd.f32 0.0, %v5583
      %v5585 = vpop.f32.mrf.mxu0
      %v5586 = vadd.f32 0.0, %v5585
      %5587 = vmatmul.bf16.gmra.mxu0 %v5410
      %v5588 = vpop.f32.mrf.mxu0
      %v5589 = vadd.f32 0.0, %v5588
      %v5590 = vpop.f32.mrf.mxu0
      %5591 = vdwg.mxu0
      %5592 = vmatpush.bf16.msra.mxu0 0
      %5593 = vmatpush.bf16.msra.mxu0 0
      %5594 = vmatpush.bf16.msra.mxu0 0
      %5595 = vmatpush.bf16.msra.mxu0 0
      %5596 = vmatpush.bf16.msra.mxu0 0
      %5597 = vmatpush.bf16.msra.mxu0 0
      %5598 = vmatpush.bf16.msra.mxu0 %v5536
      %5599 = vmatpush.bf16.msra.mxu0 %v5505
      %5600 = vmatmul.bf16.gmra.mxu0 %v5527
      %v5601 = vpop.f32.mrf.mxu0
      %v5602 = vadd.f32 %v5584, %v5601
      %v5603 = vpop.f32.mrf.mxu0
      %v5604 = vadd.f32 %v5586, %v5603
      %5605 = vmatmul.bf16.gmra.mxu0 %v5530
      %v5606 = vpop.f32.mrf.mxu0
      %v5607 = vadd.f32 %v5589, %v5606
      %v5608 = vpop.f32.mrf.mxu0
      %5609 = vdwg.mxu0
      %v5610 = vadd.f32 %v5361, %v5566
      %v5611 = vadd.f32 %v5362, %v5602
      %v5612 = vadd.f32 %v5363, %v5568
      %v5613 = vadd.f32 %v5364, %v5604
      %v5614 = vadd.f32 %v5365, %v5571
      %v5615 = vadd.f32 %v5366, %v5607
      %v5616 = vld [vmem:[#allocation2] sm:$0xf0]
      %v5617 = vld [vmem:[#allocation2 + $0x8] sm:$0xf0]
      %v5618 = vld [vmem:[#allocation2 + $0x20] sm:$0x7f]
      %v5619 = vld [vmem:[#allocation2 + $0x28] sm:$0x7f]
      %v5620 = vpack.c.bf16 %v4696, %v5616
      %v5621 = vpack.c.bf16 %v4697, %v5617
      %v5622 = vpack.c.bf16 %v5618, %v5618
      %v5623 = vpack.c.bf16 %v5619, %v5619
      %s5624 = scalar_lea.vmem %s1, 3040
      %v5625 = vld [vmem:[%s5624] sm:$0xff]
      %v5626 = vld [vmem:[%s5624 + $0x8] sm:$0xff]
      %v5627 = vld [vmem:[%s5624 + $0x10] sm:$0xff]
      %v5628 = vld [vmem:[%s5624 + $0x18] sm:$0xff]
      %v5629 = vld [vmem:[%s5624 + $0x20] sm:$0xff]
      %v5630 = vld [vmem:[%s5624 + $0x28] sm:$0xff]
      %v5631 = vld [vmem:[%s5624 + $0x30] sm:$0xff]
      %v5632 = vld [vmem:[%s5624 + $0x38] sm:$0xff]
      %v5633 = vld [vmem:[%s5624 + $0x40] sm:$0xff]
      %v5634 = vld [vmem:[%s5624 + $0x48] sm:$0xff]
      %v5635 = vld [vmem:[%s5624 + $0x50] sm:$0xff]
      %v5636 = vld [vmem:[%s5624 + $0x58] sm:$0xff]
      %v5637 = vld [vmem:[%s5624 + $0x60] sm:$0xff]
      %v5638 = vld [vmem:[%s5624 + $0x68] sm:$0xff]
      %v5639 = vld [vmem:[%s5624 + $0x70] sm:$0xff]
      %v5640 = vld [vmem:[%s5624 + $0x78] sm:$0xff]
      %v5641 = vld [vmem:[%s5624 + $0x80] sm:$0xff]
      %v5642 = vld [vmem:[%s5624 + $0x88] sm:$0xff]
      %v5643 = vld [vmem:[%s5624 + $0x90] sm:$0x77]
      %v5648 = vrot.slane %v5620, 2
      %v5649 = vrot.slane %v5622, 2
      %v5650 = vsel %vm1777, %v5648, %v5649
      %v5651 = vrot.slane %v5621, 2
      %v5652 = vrot.slane %v5623, 2
      %v5653 = vsel %vm1777, %v5651, %v5652
      %v5675 = vunpack.c.l.b16 %v5625
      %v5676 = vunpack.c.h.b16 %v5625
      %v5677 = vunpack.c.l.b16 %v5626
      %v5678 = vunpack.c.h.b16 %v5626
      %v5679 = vunpack.c.l.b16 %v5627
      %v5680 = vunpack.c.h.b16 %v5627
      %v5681 = vunpack.c.l.b16 %v5628
      %v5682 = vunpack.c.h.b16 %v5628
      %v5683 = vunpack.c.l.b16 %v5629
      %v5684 = vunpack.c.h.b16 %v5629
      %v5685 = vunpack.c.l.b16 %v5630
      %v5686 = vunpack.c.h.b16 %v5630
      %v5687 = vunpack.c.l.b16 %v5631
      %v5688 = vunpack.c.h.b16 %v5631
      %v5689 = vunpack.c.l.b16 %v5632
      %v5690 = vunpack.c.h.b16 %v5632
      %v5691 = vunpack.c.l.b16 %v5633
      %v5692 = vunpack.c.h.b16 %v5633
      %v5693 = vunpack.c.l.b16 %v5634
      %v5694 = vunpack.c.h.b16 %v5634
      %v5695 = vunpack.c.l.b16 %v5635
      %v5696 = vunpack.c.h.b16 %v5635
      %v5697 = vunpack.c.l.b16 %v5636
      %v5698 = vunpack.c.h.b16 %v5636
      %v5699 = vunpack.c.l.b16 %v5637
      %v5700 = vunpack.c.h.b16 %v5637
      %v5701 = vunpack.c.l.b16 %v5638
      %v5702 = vunpack.c.h.b16 %v5638
      %v5703 = vunpack.c.l.b16 %v5639
      %v5704 = vunpack.c.h.b16 %v5639
      %v5705 = vunpack.c.l.b16 %v5640
      %v5706 = vunpack.c.h.b16 %v5640
      %v5707 = vunpack.c.l.b16 %v5641
      %v5708 = vunpack.c.h.b16 %v5641
      %v5709 = vunpack.c.l.b16 %v5642
      %v5710 = vunpack.c.h.b16 %v5642
      %v5711 = vunpack.c.l.b16 %v5643
      %v5712 = vunpack.c.h.b16 %v5643
      %v5713 = vpack.c.b16 %v5677, %v5675
      %v5714 = vpack.c.b16 %v5678, %v5676
      %v5715 = vpack.c.b16 %v5681, %v5679
      %v5716 = vpack.c.b16 %v5682, %v5680
      %v5717 = vpack.c.b16 %v5685, %v5683
      %v5718 = vpack.c.b16 %v5686, %v5684
      %v5719 = vpack.c.b16 %v5689, %v5687
      %v5720 = vpack.c.b16 %v5690, %v5688
      %v5721 = vpack.c.b16 %v5693, %v5691
      %v5722 = vpack.c.b16 %v5694, %v5692
      %v5723 = vpack.c.b16 %v5697, %v5695
      %v5724 = vpack.c.b16 %v5698, %v5696
      %v5725 = vpack.c.b16 %v5701, %v5699
      %v5726 = vpack.c.b16 %v5702, %v5700
      %v5727 = vpack.c.b16 %v5705, %v5703
      %v5728 = vpack.c.b16 %v5706, %v5704
      %v5729 = vpack.c.b16 %v5709, %v5707
      %v5730 = vpack.c.b16 %v5710, %v5708
      %v5731 = vpack.c.b16 %v5711, %v5711
      %v5732 = vpack.c.b16 %v5712, %v5712
      %v5752 = vsel %vm1004, %v5653, 0
      %v5755 = vsel %vm1004, %v5652, 0
      %v5758 = vsel %vm1011, %v5731, 0
      %v5761 = vsel %vm1011, %v5732, 0
      %5763 = vmatpush.bf16.msra.mxu0 %v5727
      %5764 = vmatpush.bf16.msra.mxu0 %v5725
      %5765 = vmatpush.bf16.msra.mxu0 %v5723
      %5766 = vmatpush.bf16.msra.mxu0 %v5721
      %5767 = vmatpush.bf16.msra.mxu0 %v5719
      %5768 = vmatpush.bf16.msra.mxu0 %v5717
      %5769 = vmatpush.bf16.msra.mxu0 %v5715
      %5770 = vmatpush.bf16.msra.mxu0 %v5713
      %5771 = vmatmul.bf16.gmra.mxu0 %v5650
      %v5772 = vpop.f32.mrf.mxu0
      %v5773 = vadd.f32 0.0, %v5772
      %v5774 = vpop.f32.mrf.mxu0
      %v5775 = vadd.f32 0.0, %v5774
      %5776 = vmatmul.bf16.gmra.mxu0 %v5649
      %v5777 = vpop.f32.mrf.mxu0
      %v5778 = vadd.f32 0.0, %v5777
      %v5779 = vpop.f32.mrf.mxu0
      %5780 = vdwg.mxu0
      %5781 = vmatpush.bf16.msra.mxu0 0
      %5782 = vmatpush.bf16.msra.mxu0 0
      %5783 = vmatpush.bf16.msra.mxu0 0
      %5784 = vmatpush.bf16.msra.mxu0 0
      %5785 = vmatpush.bf16.msra.mxu0 0
      %5786 = vmatpush.bf16.msra.mxu0 0
      %5787 = vmatpush.bf16.msra.mxu0 %v5758
      %5788 = vmatpush.bf16.msra.mxu0 %v5729
      %5789 = vmatmul.bf16.gmra.mxu0 %v5752
      %v5790 = vpop.f32.mrf.mxu0
      %v5791 = vadd.f32 %v5773, %v5790
      %v5792 = vpop.f32.mrf.mxu0
      %v5793 = vadd.f32 %v5775, %v5792
      %5794 = vmatmul.bf16.gmra.mxu0 %v5755
      %v5795 = vpop.f32.mrf.mxu0
      %v5796 = vadd.f32 %v5778, %v5795
      %v5797 = vpop.f32.mrf.mxu0
      %5798 = vdwg.mxu0
      %5799 = vmatpush.bf16.msra.mxu0 %v5728
      %5800 = vmatpush.bf16.msra.mxu0 %v5726
      %5801 = vmatpush.bf16.msra.mxu0 %v5724
      %5802 = vmatpush.bf16.msra.mxu0 %v5722
      %5803 = vmatpush.bf16.msra.mxu0 %v5720
      %5804 = vmatpush.bf16.msra.mxu0 %v5718
      %5805 = vmatpush.bf16.msra.mxu0 %v5716
      %5806 = vmatpush.bf16.msra.mxu0 %v5714
      %5807 = vmatmul.bf16.gmra.mxu0 %v5650
      %v5808 = vpop.f32.mrf.mxu0
      %v5809 = vadd.f32 0.0, %v5808
      %v5810 = vpop.f32.mrf.mxu0
      %v5811 = vadd.f32 0.0, %v5810
      %5812 = vmatmul.bf16.gmra.mxu0 %v5649
      %v5813 = vpop.f32.mrf.mxu0
      %v5814 = vadd.f32 0.0, %v5813
      %v5815 = vpop.f32.mrf.mxu0
      %5816 = vdwg.mxu0
      %5817 = vmatpush.bf16.msra.mxu0 0
      %5818 = vmatpush.bf16.msra.mxu0 0
      %5819 = vmatpush.bf16.msra.mxu0 0
      %5820 = vmatpush.bf16.msra.mxu0 0
      %5821 = vmatpush.bf16.msra.mxu0 0
      %5822 = vmatpush.bf16.msra.mxu0 0
      %5823 = vmatpush.bf16.msra.mxu0 %v5761
      %5824 = vmatpush.bf16.msra.mxu0 %v5730
      %5825 = vmatmul.bf16.gmra.mxu0 %v5752
      %v5826 = vpop.f32.mrf.mxu0
      %v5827 = vadd.f32 %v5809, %v5826
      %v5828 = vpop.f32.mrf.mxu0
      %v5829 = vadd.f32 %v5811, %v5828
      %5830 = vmatmul.bf16.gmra.mxu0 %v5755
      %v5831 = vpop.f32.mrf.mxu0
      %v5832 = vadd.f32 %v5814, %v5831
      %v5833 = vpop.f32.mrf.mxu0
      %5834 = vdwg.mxu0
      %v5835 = vadd.f32 %v5610, %v5791
      %v5836 = vadd.f32 %v5611, %v5827
      %v5837 = vadd.f32 %v5612, %v5793
      %v5838 = vadd.f32 %v5613, %v5829
      %v5839 = vadd.f32 %v5614, %v5796
      %v5840 = vadd.f32 %v5615, %v5832
      %v5841 = vld [vmem:[#allocation2] sm:$0xe0]
      %v5842 = vld [vmem:[#allocation2 + $0x8] sm:$0xe0]
      %v5843 = vld [vmem:[#allocation2 + $0x20] sm:$0xff]
      %v5844 = vld [vmem:[#allocation2 + $0x28] sm:$0xff]
      %v5845 = vpack.c.bf16 %v4696, %v5841
      %v5846 = vpack.c.bf16 %v4697, %v5842
      %v5847 = vpack.c.bf16 %v5843, %v5843
      %v5848 = vpack.c.bf16 %v5844, %v5844
      %s5849 = scalar_lea.vmem %s1, 3192
      %v5850 = vld [vmem:[%s5849] sm:$0xff]
      %v5851 = vld [vmem:[%s5849 + $0x8] sm:$0xff]
      %v5852 = vld [vmem:[%s5849 + $0x10] sm:$0xff]
      %v5853 = vld [vmem:[%s5849 + $0x18] sm:$0xff]
      %v5854 = vld [vmem:[%s5849 + $0x20] sm:$0xff]
      %v5855 = vld [vmem:[%s5849 + $0x28] sm:$0xff]
      %v5856 = vld [vmem:[%s5849 + $0x30] sm:$0xff]
      %v5857 = vld [vmem:[%s5849 + $0x38] sm:$0xff]
      %v5858 = vld [vmem:[%s5849 + $0x40] sm:$0xff]
      %v5859 = vld [vmem:[%s5849 + $0x48] sm:$0xff]
      %v5860 = vld [vmem:[%s5849 + $0x50] sm:$0xff]
      %v5861 = vld [vmem:[%s5849 + $0x58] sm:$0xff]
      %v5862 = vld [vmem:[%s5849 + $0x60] sm:$0xff]
      %v5863 = vld [vmem:[%s5849 + $0x68] sm:$0xff]
      %v5864 = vld [vmem:[%s5849 + $0x70] sm:$0xff]
      %v5865 = vld [vmem:[%s5849 + $0x78] sm:$0xff]
      %v5866 = vld [vmem:[%s5849 + $0x80] sm:$0xff]
      %v5867 = vld [vmem:[%s5849 + $0x88] sm:$0xff]
      %v5868 = vld [vmem:[%s5849 + $0x90] sm:$0x77]
      %v5870 = vshrl.u32 %v5845, 16
      %v5872 = vrot.slane %v5870, 2
      %v5873 = vshll.u32 %v5845, 16
      %v5875 = vrot.slane %v5873, 3
      %v5876 = vor.u32 %v5872, %v5875
      %v5878 = vshrl.u32 %v5847, 16
      %v5880 = vrot.slane %v5878, 2
      %v5881 = vshll.u32 %v5847, 16
      %v5883 = vrot.slane %v5881, 3
      %v5884 = vor.u32 %v5880, %v5883
      %v5885 = vsel %vm1999, %v5876, %v5884
      %v5887 = vshrl.u32 %v5846, 16
      %v5889 = vrot.slane %v5887, 2
      %v5890 = vshll.u32 %v5846, 16
      %v5892 = vrot.slane %v5890, 3
      %v5893 = vor.u32 %v5889, %v5892
      %v5895 = vshrl.u32 %v5848, 16
      %v5897 = vrot.slane %v5895, 2
      %v5898 = vshll.u32 %v5848, 16
      %v5900 = vrot.slane %v5898, 3
      %v5901 = vor.u32 %v5897, %v5900
      %v5902 = vsel %vm1999, %v5893, %v5901
      %v5924 = vunpack.c.l.b16 %v5850
      %v5925 = vunpack.c.h.b16 %v5850
      %v5926 = vunpack.c.l.b16 %v5851
      %v5927 = vunpack.c.h.b16 %v5851
      %v5928 = vunpack.c.l.b16 %v5852
      %v5929 = vunpack.c.h.b16 %v5852
      %v5930 = vunpack.c.l.b16 %v5853
      %v5931 = vunpack.c.h.b16 %v5853
      %v5932 = vunpack.c.l.b16 %v5854
      %v5933 = vunpack.c.h.b16 %v5854
      %v5934 = vunpack.c.l.b16 %v5855
      %v5935 = vunpack.c.h.b16 %v5855
      %v5936 = vunpack.c.l.b16 %v5856
      %v5937 = vunpack.c.h.b16 %v5856
      %v5938 = vunpack.c.l.b16 %v5857
      %v5939 = vunpack.c.h.b16 %v5857
      %v5940 = vunpack.c.l.b16 %v5858
      %v5941 = vunpack.c.h.b16 %v5858
      %v5942 = vunpack.c.l.b16 %v5859
      %v5943 = vunpack.c.h.b16 %v5859
      %v5944 = vunpack.c.l.b16 %v5860
      %v5945 = vunpack.c.h.b16 %v5860
      %v5946 = vunpack.c.l.b16 %v5861
      %v5947 = vunpack.c.h.b16 %v5861
      %v5948 = vunpack.c.l.b16 %v5862
      %v5949 = vunpack.c.h.b16 %v5862
      %v5950 = vunpack.c.l.b16 %v5863
      %v5951 = vunpack.c.h.b16 %v5863
      %v5952 = vunpack.c.l.b16 %v5864
      %v5953 = vunpack.c.h.b16 %v5864
      %v5954 = vunpack.c.l.b16 %v5865
      %v5955 = vunpack.c.h.b16 %v5865
      %v5956 = vunpack.c.l.b16 %v5866
      %v5957 = vunpack.c.h.b16 %v5866
      %v5958 = vunpack.c.l.b16 %v5867
      %v5959 = vunpack.c.h.b16 %v5867
      %v5960 = vunpack.c.l.b16 %v5868
      %v5961 = vunpack.c.h.b16 %v5868
      %v5962 = vpack.c.b16 %v5926, %v5924
      %v5963 = vpack.c.b16 %v5927, %v5925
      %v5964 = vpack.c.b16 %v5930, %v5928
      %v5965 = vpack.c.b16 %v5931, %v5929
      %v5966 = vpack.c.b16 %v5934, %v5932
      %v5967 = vpack.c.b16 %v5935, %v5933
      %v5968 = vpack.c.b16 %v5938, %v5936
      %v5969 = vpack.c.b16 %v5939, %v5937
      %v5970 = vpack.c.b16 %v5942, %v5940
      %v5971 = vpack.c.b16 %v5943, %v5941
      %v5972 = vpack.c.b16 %v5946, %v5944
      %v5973 = vpack.c.b16 %v5947, %v5945
      %v5974 = vpack.c.b16 %v5950, %v5948
      %v5975 = vpack.c.b16 %v5951, %v5949
      %v5976 = vpack.c.b16 %v5954, %v5952
      %v5977 = vpack.c.b16 %v5955, %v5953
      %v5978 = vpack.c.b16 %v5958, %v5956
      %v5979 = vpack.c.b16 %v5959, %v5957
      %v5980 = vpack.c.b16 %v5960, %v5960
      %v5981 = vpack.c.b16 %v5961, %v5961
      %v6001 = vsel %vm1004, %v5902, 0
      %v6004 = vsel %vm1004, %v5901, 0
      %v6007 = vsel %vm1011, %v5980, 0
      %v6010 = vsel %vm1011, %v5981, 0
      %6012 = vmatpush.bf16.msra.mxu0 %v5976
      %6013 = vmatpush.bf16.msra.mxu0 %v5974
      %6014 = vmatpush.bf16.msra.mxu0 %v5972
      %6015 = vmatpush.bf16.msra.mxu0 %v5970
      %6016 = vmatpush.bf16.msra.mxu0 %v5968
      %6017 = vmatpush.bf16.msra.mxu0 %v5966
      %6018 = vmatpush.bf16.msra.mxu0 %v5964
      %6019 = vmatpush.bf16.msra.mxu0 %v5962
      %6020 = vmatmul.bf16.gmra.mxu0 %v5885
      %v6021 = vpop.f32.mrf.mxu0
      %v6022 = vadd.f32 0.0, %v6021
      %v6023 = vpop.f32.mrf.mxu0
      %v6024 = vadd.f32 0.0, %v6023
      %6025 = vmatmul.bf16.gmra.mxu0 %v5884
      %v6026 = vpop.f32.mrf.mxu0
      %v6027 = vadd.f32 0.0, %v6026
      %v6028 = vpop.f32.mrf.mxu0
      %6029 = vdwg.mxu0
      %6030 = vmatpush.bf16.msra.mxu0 0
      %6031 = vmatpush.bf16.msra.mxu0 0
      %6032 = vmatpush.bf16.msra.mxu0 0
      %6033 = vmatpush.bf16.msra.mxu0 0
      %6034 = vmatpush.bf16.msra.mxu0 0
      %6035 = vmatpush.bf16.msra.mxu0 0
      %6036 = vmatpush.bf16.msra.mxu0 %v6007
      %6037 = vmatpush.bf16.msra.mxu0 %v5978
      %6038 = vmatmul.bf16.gmra.mxu0 %v6001
      %v6039 = vpop.f32.mrf.mxu0
      %v6040 = vadd.f32 %v6022, %v6039
      %v6041 = vpop.f32.mrf.mxu0
      %v6042 = vadd.f32 %v6024, %v6041
      %6043 = vmatmul.bf16.gmra.mxu0 %v6004
      %v6044 = vpop.f32.mrf.mxu0
      %v6045 = vadd.f32 %v6027, %v6044
      %v6046 = vpop.f32.mrf.mxu0
      %6047 = vdwg.mxu0
      %6048 = vmatpush.bf16.msra.mxu0 %v5977
      %6049 = vmatpush.bf16.msra.mxu0 %v5975
      %6050 = vmatpush.bf16.msra.mxu0 %v5973
      %6051 = vmatpush.bf16.msra.mxu0 %v5971
      %6052 = vmatpush.bf16.msra.mxu0 %v5969
      %6053 = vmatpush.bf16.msra.mxu0 %v5967
      %6054 = vmatpush.bf16.msra.mxu0 %v5965
      %6055 = vmatpush.bf16.msra.mxu0 %v5963
      %6056 = vmatmul.bf16.gmra.mxu0 %v5885
      %v6057 = vpop.f32.mrf.mxu0
      %v6058 = vadd.f32 0.0, %v6057
      %v6059 = vpop.f32.mrf.mxu0
      %v6060 = vadd.f32 0.0, %v6059
      %6061 = vmatmul.bf16.gmra.mxu0 %v5884
      %v6062 = vpop.f32.mrf.mxu0
      %v6063 = vadd.f32 0.0, %v6062
      %v6064 = vpop.f32.mrf.mxu0
      %6065 = vdwg.mxu0
      %6066 = vmatpush.bf16.msra.mxu0 0
      %6067 = vmatpush.bf16.msra.mxu0 0
      %6068 = vmatpush.bf16.msra.mxu0 0
      %6069 = vmatpush.bf16.msra.mxu0 0
      %6070 = vmatpush.bf16.msra.mxu0 0
      %6071 = vmatpush.bf16.msra.mxu0 0
      %6072 = vmatpush.bf16.msra.mxu0 %v6010
      %6073 = vmatpush.bf16.msra.mxu0 %v5979
      %6074 = vmatmul.bf16.gmra.mxu0 %v6001
      %v6075 = vpop.f32.mrf.mxu0
      %v6076 = vadd.f32 %v6058, %v6075
      %v6077 = vpop.f32.mrf.mxu0
      %v6078 = vadd.f32 %v6060, %v6077
      %6079 = vmatmul.bf16.gmra.mxu0 %v6004
      %v6080 = vpop.f32.mrf.mxu0
      %v6081 = vadd.f32 %v6063, %v6080
      %v6082 = vpop.f32.mrf.mxu0
      %6083 = vdwg.mxu0
      %v6084 = vadd.f32 %v5835, %v6040
      %v6085 = vadd.f32 %v5836, %v6076
      %v6086 = vadd.f32 %v5837, %v6042
      %v6087 = vadd.f32 %v5838, %v6078
      %v6088 = vadd.f32 %v5839, %v6045
      %v6089 = vadd.f32 %v5840, %v6081
      %v6090 = vld [vmem:[#allocation2] sm:$0xc0]
      %v6091 = vld [vmem:[#allocation2 + $0x8] sm:$0xc0]
      %v6092 = vld [vmem:[#allocation2 + $0x10] sm:$0xff]
      %v6093 = vld [vmem:[#allocation2 + $0x18] sm:$0xff]
      %v6094 = vld [vmem:[#allocation2 + $0x20] sm:$0xff]
      %v6095 = vld [vmem:[#allocation2 + $0x28] sm:$0xff]
      %v6096 = vld [vmem:[#allocation2 + $0x30] sm:$0x1]
      %v6097 = vld [vmem:[#allocation2 + $0x38] sm:$0x1]
      %v6098 = vpack.c.bf16 %v6092, %v6090
      %v6099 = vpack.c.bf16 %v6093, %v6091
      %v6100 = vpack.c.bf16 %v6096, %v6094
      %v6101 = vpack.c.bf16 %v6097, %v6095
      %s6102 = scalar_lea.vmem %s1, 3344
      %v6103 = vld [vmem:[%s6102] sm:$0xff]
      %v6104 = vld [vmem:[%s6102 + $0x8] sm:$0xff]
      %v6105 = vld [vmem:[%s6102 + $0x10] sm:$0xff]
      %v6106 = vld [vmem:[%s6102 + $0x18] sm:$0xff]
      %v6107 = vld [vmem:[%s6102 + $0x20] sm:$0xff]
      %v6108 = vld [vmem:[%s6102 + $0x28] sm:$0xff]
      %v6109 = vld [vmem:[%s6102 + $0x30] sm:$0xff]
      %v6110 = vld [vmem:[%s6102 + $0x38] sm:$0xff]
      %v6111 = vld [vmem:[%s6102 + $0x40] sm:$0xff]
      %v6112 = vld [vmem:[%s6102 + $0x48] sm:$0xff]
      %v6113 = vld [vmem:[%s6102 + $0x50] sm:$0xff]
      %v6114 = vld [vmem:[%s6102 + $0x58] sm:$0xff]
      %v6115 = vld [vmem:[%s6102 + $0x60] sm:$0xff]
      %v6116 = vld [vmem:[%s6102 + $0x68] sm:$0xff]
      %v6117 = vld [vmem:[%s6102 + $0x70] sm:$0xff]
      %v6118 = vld [vmem:[%s6102 + $0x78] sm:$0xff]
      %v6119 = vld [vmem:[%s6102 + $0x80] sm:$0xff]
      %v6120 = vld [vmem:[%s6102 + $0x88] sm:$0xff]
      %v6121 = vld [vmem:[%s6102 + $0x90] sm:$0x77]
      %v6126 = vrot.slane %v6098, 3
      %v6127 = vrot.slane %v6100, 3
      %v6128 = vsel %vm2257, %v6126, %v6127
      %v6129 = vrot.slane %v6099, 3
      %v6130 = vrot.slane %v6101, 3
      %v6131 = vsel %vm2257, %v6129, %v6130
      %v6153 = vunpack.c.l.b16 %v6103
      %v6154 = vunpack.c.h.b16 %v6103
      %v6155 = vunpack.c.l.b16 %v6104
      %v6156 = vunpack.c.h.b16 %v6104
      %v6157 = vunpack.c.l.b16 %v6105
      %v6158 = vunpack.c.h.b16 %v6105
      %v6159 = vunpack.c.l.b16 %v6106
      %v6160 = vunpack.c.h.b16 %v6106
      %v6161 = vunpack.c.l.b16 %v6107
      %v6162 = vunpack.c.h.b16 %v6107
      %v6163 = vunpack.c.l.b16 %v6108
      %v6164 = vunpack.c.h.b16 %v6108
      %v6165 = vunpack.c.l.b16 %v6109
      %v6166 = vunpack.c.h.b16 %v6109
      %v6167 = vunpack.c.l.b16 %v6110
      %v6168 = vunpack.c.h.b16 %v6110
      %v6169 = vunpack.c.l.b16 %v6111
      %v6170 = vunpack.c.h.b16 %v6111
      %v6171 = vunpack.c.l.b16 %v6112
      %v6172 = vunpack.c.h.b16 %v6112
      %v6173 = vunpack.c.l.b16 %v6113
      %v6174 = vunpack.c.h.b16 %v6113
      %v6175 = vunpack.c.l.b16 %v6114
      %v6176 = vunpack.c.h.b16 %v6114
      %v6177 = vunpack.c.l.b16 %v6115
      %v6178 = vunpack.c.h.b16 %v6115
      %v6179 = vunpack.c.l.b16 %v6116
      %v6180 = vunpack.c.h.b16 %v6116
      %v6181 = vunpack.c.l.b16 %v6117
      %v6182 = vunpack.c.h.b16 %v6117
      %v6183 = vunpack.c.l.b16 %v6118
      %v6184 = vunpack.c.h.b16 %v6118
      %v6185 = vunpack.c.l.b16 %v6119
      %v6186 = vunpack.c.h.b16 %v6119
      %v6187 = vunpack.c.l.b16 %v6120
      %v6188 = vunpack.c.h.b16 %v6120
      %v6189 = vunpack.c.l.b16 %v6121
      %v6190 = vunpack.c.h.b16 %v6121
      %v6191 = vpack.c.b16 %v6155, %v6153
      %v6192 = vpack.c.b16 %v6156, %v6154
      %v6193 = vpack.c.b16 %v6159, %v6157
      %v6194 = vpack.c.b16 %v6160, %v6158
      %v6195 = vpack.c.b16 %v6163, %v6161
      %v6196 = vpack.c.b16 %v6164, %v6162
      %v6197 = vpack.c.b16 %v6167, %v6165
      %v6198 = vpack.c.b16 %v6168, %v6166
      %v6199 = vpack.c.b16 %v6171, %v6169
      %v6200 = vpack.c.b16 %v6172, %v6170
      %v6201 = vpack.c.b16 %v6175, %v6173
      %v6202 = vpack.c.b16 %v6176, %v6174
      %v6203 = vpack.c.b16 %v6179, %v6177
      %v6204 = vpack.c.b16 %v6180, %v6178
      %v6205 = vpack.c.b16 %v6183, %v6181
      %v6206 = vpack.c.b16 %v6184, %v6182
      %v6207 = vpack.c.b16 %v6187, %v6185
      %v6208 = vpack.c.b16 %v6188, %v6186
      %v6209 = vpack.c.b16 %v6189, %v6189
      %v6210 = vpack.c.b16 %v6190, %v6190
      %v6230 = vsel %vm1004, %v6131, 0
      %v6233 = vsel %vm1004, %v6130, 0
      %v6236 = vsel %vm1011, %v6209, 0
      %v6239 = vsel %vm1011, %v6210, 0
      %6241 = vmatpush.bf16.msra.mxu0 %v6205
      %6242 = vmatpush.bf16.msra.mxu0 %v6203
      %6243 = vmatpush.bf16.msra.mxu0 %v6201
      %6244 = vmatpush.bf16.msra.mxu0 %v6199
      %6245 = vmatpush.bf16.msra.mxu0 %v6197
      %6246 = vmatpush.bf16.msra.mxu0 %v6195
      %6247 = vmatpush.bf16.msra.mxu0 %v6193
      %6248 = vmatpush.bf16.msra.mxu0 %v6191
      %6249 = vmatmul.bf16.gmra.mxu0 %v6128
      %v6250 = vpop.f32.mrf.mxu0
      %v6251 = vadd.f32 0.0, %v6250
      %v6252 = vpop.f32.mrf.mxu0
      %v6253 = vadd.f32 0.0, %v6252
      %6254 = vmatmul.bf16.gmra.mxu0 %v6127
      %v6255 = vpop.f32.mrf.mxu0
      %v6256 = vadd.f32 0.0, %v6255
      %v6257 = vpop.f32.mrf.mxu0
      %6258 = vdwg.mxu0
      %6259 = vmatpush.bf16.msra.mxu0 0
      %6260 = vmatpush.bf16.msra.mxu0 0
      %6261 = vmatpush.bf16.msra.mxu0 0
      %6262 = vmatpush.bf16.msra.mxu0 0
      %6263 = vmatpush.bf16.msra.mxu0 0
      %6264 = vmatpush.bf16.msra.mxu0 0
      %6265 = vmatpush.bf16.msra.mxu0 %v6236
      %6266 = vmatpush.bf16.msra.mxu0 %v6207
      %6267 = vmatmul.bf16.gmra.mxu0 %v6230
      %v6268 = vpop.f32.mrf.mxu0
      %v6269 = vadd.f32 %v6251, %v6268
      %v6270 = vpop.f32.mrf.mxu0
      %v6271 = vadd.f32 %v6253, %v6270
      %6272 = vmatmul.bf16.gmra.mxu0 %v6233
      %v6273 = vpop.f32.mrf.mxu0
      %v6274 = vadd.f32 %v6256, %v6273
      %v6275 = vpop.f32.mrf.mxu0
      %6276 = vdwg.mxu0
      %6277 = vmatpush.bf16.msra.mxu0 %v6206
      %6278 = vmatpush.bf16.msra.mxu0 %v6204
      %6279 = vmatpush.bf16.msra.mxu0 %v6202
      %6280 = vmatpush.bf16.msra.mxu0 %v6200
      %6281 = vmatpush.bf16.msra.mxu0 %v6198
      %6282 = vmatpush.bf16.msra.mxu0 %v6196
      %6283 = vmatpush.bf16.msra.mxu0 %v6194
      %6284 = vmatpush.bf16.msra.mxu0 %v6192
      %6285 = vmatmul.bf16.gmra.mxu0 %v6128
      %v6286 = vpop.f32.mrf.mxu0
      %v6287 = vadd.f32 0.0, %v6286
      %v6288 = vpop.f32.mrf.mxu0
      %v6289 = vadd.f32 0.0, %v6288
      %6290 = vmatmul.bf16.gmra.mxu0 %v6127
      %v6291 = vpop.f32.mrf.mxu0
      %v6292 = vadd.f32 0.0, %v6291
      %v6293 = vpop.f32.mrf.mxu0
      %6294 = vdwg.mxu0
      %6295 = vmatpush.bf16.msra.mxu0 0
      %6296 = vmatpush.bf16.msra.mxu0 0
      %6297 = vmatpush.bf16.msra.mxu0 0
      %6298 = vmatpush.bf16.msra.mxu0 0
      %6299 = vmatpush.bf16.msra.mxu0 0
      %6300 = vmatpush.bf16.msra.mxu0 0
      %6301 = vmatpush.bf16.msra.mxu0 %v6239
      %6302 = vmatpush.bf16.msra.mxu0 %v6208
      %6303 = vmatmul.bf16.gmra.mxu0 %v6230
      %v6304 = vpop.f32.mrf.mxu0
      %v6305 = vadd.f32 %v6287, %v6304
      %v6306 = vpop.f32.mrf.mxu0
      %v6307 = vadd.f32 %v6289, %v6306
      %6308 = vmatmul.bf16.gmra.mxu0 %v6233
      %v6309 = vpop.f32.mrf.mxu0
      %v6310 = vadd.f32 %v6292, %v6309
      %v6311 = vpop.f32.mrf.mxu0
      %6312 = vdwg.mxu0
      %v6313 = vadd.f32 %v6084, %v6269
      %v6314 = vadd.f32 %v6085, %v6305
      %v6315 = vadd.f32 %v6086, %v6271
      %v6316 = vadd.f32 %v6087, %v6307
      %v6317 = vadd.f32 %v6088, %v6274
      %v6318 = vadd.f32 %v6089, %v6310
      %v6319 = vld [vmem:[#allocation2] sm:$0x80]
      %v6320 = vld [vmem:[#allocation2 + $0x8] sm:$0x80]
      %v6321 = vld [vmem:[#allocation2 + $0x30] sm:$0x3]
      %v6322 = vld [vmem:[#allocation2 + $0x38] sm:$0x3]
      %v6323 = vpack.c.bf16 %v6092, %v6319
      %v6324 = vpack.c.bf16 %v6093, %v6320
      %v6325 = vpack.c.bf16 %v6321, %v6094
      %v6326 = vpack.c.bf16 %v6322, %v6095
      %s6327 = scalar_lea.vmem %s1, 3496
      %v6328 = vld [vmem:[%s6327] sm:$0xff]
      %v6329 = vld [vmem:[%s6327 + $0x8] sm:$0xff]
      %v6330 = vld [vmem:[%s6327 + $0x10] sm:$0xff]
      %v6331 = vld [vmem:[%s6327 + $0x18] sm:$0xff]
      %v6332 = vld [vmem:[%s6327 + $0x20] sm:$0xff]
      %v6333 = vld [vmem:[%s6327 + $0x28] sm:$0xff]
      %v6334 = vld [vmem:[%s6327 + $0x30] sm:$0xff]
      %v6335 = vld [vmem:[%s6327 + $0x38] sm:$0xff]
      %v6336 = vld [vmem:[%s6327 + $0x40] sm:$0xff]
      %v6337 = vld [vmem:[%s6327 + $0x48] sm:$0xff]
      %v6338 = vld [vmem:[%s6327 + $0x50] sm:$0xff]
      %v6339 = vld [vmem:[%s6327 + $0x58] sm:$0xff]
      %v6340 = vld [vmem:[%s6327 + $0x60] sm:$0xff]
      %v6341 = vld [vmem:[%s6327 + $0x68] sm:$0xff]
      %v6342 = vld [vmem:[%s6327 + $0x70] sm:$0xff]
      %v6343 = vld [vmem:[%s6327 + $0x78] sm:$0xff]
      %v6344 = vld [vmem:[%s6327 + $0x80] sm:$0xff]
      %v6345 = vld [vmem:[%s6327 + $0x88] sm:$0xff]
      %v6346 = vld [vmem:[%s6327 + $0x90] sm:$0x77]
      %v6348 = vshrl.u32 %v6323, 16
      %v6350 = vrot.slane %v6348, 3
      %v6351 = vshll.u32 %v6323, 16
      %v6353 = vrot.slane %v6351, 4
      %v6354 = vor.u32 %v6350, %v6353
      %v6356 = vshrl.u32 %v6325, 16
      %v6358 = vrot.slane %v6356, 3
      %v6359 = vshll.u32 %v6325, 16
      %v6361 = vrot.slane %v6359, 4
      %v6362 = vor.u32 %v6358, %v6361
      %v6363 = vsel %vm2479, %v6354, %v6362
      %v6365 = vshrl.u32 %v6324, 16
      %v6367 = vrot.slane %v6365, 3
      %v6368 = vshll.u32 %v6324, 16
      %v6370 = vrot.slane %v6368, 4
      %v6371 = vor.u32 %v6367, %v6370
      %v6373 = vshrl.u32 %v6326, 16
      %v6375 = vrot.slane %v6373, 3
      %v6376 = vshll.u32 %v6326, 16
      %v6378 = vrot.slane %v6376, 4
      %v6379 = vor.u32 %v6375, %v6378
      %v6380 = vsel %vm2479, %v6371, %v6379
      %v6402 = vunpack.c.l.b16 %v6328
      %v6403 = vunpack.c.h.b16 %v6328
      %v6404 = vunpack.c.l.b16 %v6329
      %v6405 = vunpack.c.h.b16 %v6329
      %v6406 = vunpack.c.l.b16 %v6330
      %v6407 = vunpack.c.h.b16 %v6330
      %v6408 = vunpack.c.l.b16 %v6331
      %v6409 = vunpack.c.h.b16 %v6331
      %v6410 = vunpack.c.l.b16 %v6332
      %v6411 = vunpack.c.h.b16 %v6332
      %v6412 = vunpack.c.l.b16 %v6333
      %v6413 = vunpack.c.h.b16 %v6333
      %v6414 = vunpack.c.l.b16 %v6334
      %v6415 = vunpack.c.h.b16 %v6334
      %v6416 = vunpack.c.l.b16 %v6335
      %v6417 = vunpack.c.h.b16 %v6335
      %v6418 = vunpack.c.l.b16 %v6336
      %v6419 = vunpack.c.h.b16 %v6336
      %v6420 = vunpack.c.l.b16 %v6337
      %v6421 = vunpack.c.h.b16 %v6337
      %v6422 = vunpack.c.l.b16 %v6338
      %v6423 = vunpack.c.h.b16 %v6338
      %v6424 = vunpack.c.l.b16 %v6339
      %v6425 = vunpack.c.h.b16 %v6339
      %v6426 = vunpack.c.l.b16 %v6340
      %v6427 = vunpack.c.h.b16 %v6340
      %v6428 = vunpack.c.l.b16 %v6341
      %v6429 = vunpack.c.h.b16 %v6341
      %v6430 = vunpack.c.l.b16 %v6342
      %v6431 = vunpack.c.h.b16 %v6342
      %v6432 = vunpack.c.l.b16 %v6343
      %v6433 = vunpack.c.h.b16 %v6343
      %v6434 = vunpack.c.l.b16 %v6344
      %v6435 = vunpack.c.h.b16 %v6344
      %v6436 = vunpack.c.l.b16 %v6345
      %v6437 = vunpack.c.h.b16 %v6345
      %v6438 = vunpack.c.l.b16 %v6346
      %v6439 = vunpack.c.h.b16 %v6346
      %v6440 = vpack.c.b16 %v6404, %v6402
      %v6441 = vpack.c.b16 %v6405, %v6403
      %v6442 = vpack.c.b16 %v6408, %v6406
      %v6443 = vpack.c.b16 %v6409, %v6407
      %v6444 = vpack.c.b16 %v6412, %v6410
      %v6445 = vpack.c.b16 %v6413, %v6411
      %v6446 = vpack.c.b16 %v6416, %v6414
      %v6447 = vpack.c.b16 %v6417, %v6415
      %v6448 = vpack.c.b16 %v6420, %v6418
      %v6449 = vpack.c.b16 %v6421, %v6419
      %v6450 = vpack.c.b16 %v6424, %v6422
      %v6451 = vpack.c.b16 %v6425, %v6423
      %v6452 = vpack.c.b16 %v6428, %v6426
      %v6453 = vpack.c.b16 %v6429, %v6427
      %v6454 = vpack.c.b16 %v6432, %v6430
      %v6455 = vpack.c.b16 %v6433, %v6431
      %v6456 = vpack.c.b16 %v6436, %v6434
      %v6457 = vpack.c.b16 %v6437, %v6435
      %v6458 = vpack.c.b16 %v6438, %v6438
      %v6459 = vpack.c.b16 %v6439, %v6439
      %v6479 = vsel %vm1004, %v6380, 0
      %v6482 = vsel %vm1004, %v6379, 0
      %v6485 = vsel %vm1011, %v6458, 0
      %v6488 = vsel %vm1011, %v6459, 0
      %6490 = vmatpush.bf16.msra.mxu0 %v6454
      %6491 = vmatpush.bf16.msra.mxu0 %v6452
      %6492 = vmatpush.bf16.msra.mxu0 %v6450
      %6493 = vmatpush.bf16.msra.mxu0 %v6448
      %6494 = vmatpush.bf16.msra.mxu0 %v6446
      %6495 = vmatpush.bf16.msra.mxu0 %v6444
      %6496 = vmatpush.bf16.msra.mxu0 %v6442
      %6497 = vmatpush.bf16.msra.mxu0 %v6440
      %6498 = vmatmul.bf16.gmra.mxu0 %v6363
      %v6499 = vpop.f32.mrf.mxu0
      %v6500 = vadd.f32 0.0, %v6499
      %v6501 = vpop.f32.mrf.mxu0
      %v6502 = vadd.f32 0.0, %v6501
      %6503 = vmatmul.bf16.gmra.mxu0 %v6362
      %v6504 = vpop.f32.mrf.mxu0
      %v6505 = vadd.f32 0.0, %v6504
      %v6506 = vpop.f32.mrf.mxu0
      %6507 = vdwg.mxu0
      %6508 = vmatpush.bf16.msra.mxu0 0
      %6509 = vmatpush.bf16.msra.mxu0 0
      %6510 = vmatpush.bf16.msra.mxu0 0
      %6511 = vmatpush.bf16.msra.mxu0 0
      %6512 = vmatpush.bf16.msra.mxu0 0
      %6513 = vmatpush.bf16.msra.mxu0 0
      %6514 = vmatpush.bf16.msra.mxu0 %v6485
      %6515 = vmatpush.bf16.msra.mxu0 %v6456
      %6516 = vmatmul.bf16.gmra.mxu0 %v6479
      %v6517 = vpop.f32.mrf.mxu0
      %v6518 = vadd.f32 %v6500, %v6517
      %v6519 = vpop.f32.mrf.mxu0
      %v6520 = vadd.f32 %v6502, %v6519
      %6521 = vmatmul.bf16.gmra.mxu0 %v6482
      %v6522 = vpop.f32.mrf.mxu0
      %v6523 = vadd.f32 %v6505, %v6522
      %v6524 = vpop.f32.mrf.mxu0
      %6525 = vdwg.mxu0
      %6526 = vmatpush.bf16.msra.mxu0 %v6455
      %6527 = vmatpush.bf16.msra.mxu0 %v6453
      %6528 = vmatpush.bf16.msra.mxu0 %v6451
      %6529 = vmatpush.bf16.msra.mxu0 %v6449
      %6530 = vmatpush.bf16.msra.mxu0 %v6447
      %6531 = vmatpush.bf16.msra.mxu0 %v6445
      %6532 = vmatpush.bf16.msra.mxu0 %v6443
      %6533 = vmatpush.bf16.msra.mxu0 %v6441
      %6534 = vmatmul.bf16.gmra.mxu0 %v6363
      %v6535 = vpop.f32.mrf.mxu0
      %v6536 = vadd.f32 0.0, %v6535
      %v6537 = vpop.f32.mrf.mxu0
      %v6538 = vadd.f32 0.0, %v6537
      %6539 = vmatmul.bf16.gmra.mxu0 %v6362
      %v6540 = vpop.f32.mrf.mxu0
      %v6541 = vadd.f32 0.0, %v6540
      %v6542 = vpop.f32.mrf.mxu0
      %6543 = vdwg.mxu0
      %6544 = vmatpush.bf16.msra.mxu0 0
      %6545 = vmatpush.bf16.msra.mxu0 0
      %6546 = vmatpush.bf16.msra.mxu0 0
      %6547 = vmatpush.bf16.msra.mxu0 0
      %6548 = vmatpush.bf16.msra.mxu0 0
      %6549 = vmatpush.bf16.msra.mxu0 0
      %6550 = vmatpush.bf16.msra.mxu0 %v6488
      %6551 = vmatpush.bf16.msra.mxu0 %v6457
      %6552 = vmatmul.bf16.gmra.mxu0 %v6479
      %v6553 = vpop.f32.mrf.mxu0
      %v6554 = vadd.f32 %v6536, %v6553
      %v6555 = vpop.f32.mrf.mxu0
      %v6556 = vadd.f32 %v6538, %v6555
      %6557 = vmatmul.bf16.gmra.mxu0 %v6482
      %v6558 = vpop.f32.mrf.mxu0
      %v6559 = vadd.f32 %v6541, %v6558
      %v6560 = vpop.f32.mrf.mxu0
      %6561 = vdwg.mxu0
      %v6562 = vadd.f32 %v6313, %v6518
      %v6563 = vadd.f32 %v6314, %v6554
      %v6564 = vadd.f32 %v6315, %v6520
      %v6565 = vadd.f32 %v6316, %v6556
      %v6566 = vadd.f32 %v6317, %v6523
      %v6567 = vadd.f32 %v6318, %v6559
      %s6568 = scalar_lea.vmem %s2, 2
      %v6569 = vld [vmem:[%s6568] ss:$4 sm:$0x3]
      %v6571 = vperm.slane %v6569, 0
      %v6572 = vperm.slane %v6569, 1
      %v6575 = vmul.f32 %v6562, %v6571
      %v6576 = vmul.f32 %v6563, %v6572
      %v6577 = vmul.f32 %v6564, %v6571
      %v6578 = vmul.f32 %v6565, %v6572
      %v6579 = vmul.f32 %v6566, %v6571
      %v6580 = vmul.f32 %v6567, %v6572
      %s6581 = scalar_lea.vmem %s3, 2
      %v6582 = vld [vmem:[%s6581] ss:$4 sm:$0x3]
      %v6584 = vperm.slane %v6582, 0
      %v6585 = vperm.slane %v6582, 1
      %v6588 = vadd.f32 %v6575, %v6584
      %v6589 = vadd.f32 %v6576, %v6585
      %v6590 = vadd.f32 %v6577, %v6584
      %v6591 = vadd.f32 %v6578, %v6585
      %v6592 = vadd.f32 %v6579, %v6584
      %v6593 = vadd.f32 %v6580, %v6585
      %v6594 = vmax.f32 %v6588, 0.0
      %v6595 = vmax.f32 %v6589, 0.0
      %v6596 = vmax.f32 %v6590, 0.0
      %v6597 = vmax.f32 %v6591, 0.0
      %v6598 = vmax.f32 %v6592, 0.0
      %v6599 = vmax.f32 %v6593, 0.0
      %vm6600 = vcmask 1043456
      %v6601 = vsel %vm6600, %v6594, -inf
      %v6602 = vrot.slane %v6601, 4
      %v6603 = vmax.f32 %v6601, %v6602
      %v6604 = vrot.slane %v6603, 2
      %v6605 = vmax.f32 %v6603, %v6604
      %v6606 = vrot.slane %v6605, 1
      %v6607 = vmax.f32 %v6605, %v6606
      %vm6608 = vcmask 175104
      %v6609 = vsel %vm6608, %v6595, -inf
      %v6610 = vrot.slane %v6609, 4
      %v6611 = vmax.f32 %v6609, %v6610
      %v6612 = vrot.slane %v6611, 2
      %v6613 = vmax.f32 %v6611, %v6612
      %v6614 = vrot.slane %v6613, 1
      %v6615 = vmax.f32 %v6613, %v6614
      %vm6616 = vcmask 1047556
      %v6617 = vsel %vm6616, %v6594, -inf
      %v6618 = vrot.slane %v6617, 4
      %v6619 = vmax.f32 %v6617, %v6618
      %v6620 = vrot.slane %v6619, 2
      %v6621 = vmax.f32 %v6619, %v6620
      %v6622 = vrot.slane %v6621, 1
      %v6623 = vmax.f32 %v6621, %v6622
      %vm6624 = vcmask 179204
      %v6625 = vsel %vm6624, %v6595, -inf
      %v6626 = vrot.slane %v6625, 4
      %v6627 = vmax.f32 %v6625, %v6626
      %v6628 = vrot.slane %v6627, 2
      %v6629 = vmax.f32 %v6627, %v6628
      %v6630 = vrot.slane %v6629, 1
      %v6631 = vmax.f32 %v6629, %v6630
      %v6632 = vsel %vm6600, %v6596, -inf
      %v6633 = vrot.slane %v6632, 4
      %v6634 = vmax.f32 %v6632, %v6633
      %v6635 = vrot.slane %v6634, 2
      %v6636 = vmax.f32 %v6634, %v6635
      %v6637 = vrot.slane %v6636, 1
      %v6638 = vmax.f32 %v6636, %v6637
      %v6639 = vsel %vm6608, %v6597, -inf
      %v6640 = vrot.slane %v6639, 4
      %v6641 = vmax.f32 %v6639, %v6640
      %v6642 = vrot.slane %v6641, 2
      %v6643 = vmax.f32 %v6641, %v6642
      %v6644 = vrot.slane %v6643, 1
      %v6645 = vmax.f32 %v6643, %v6644
      %v6646 = vsel %vm6616, %v6596, -inf
      %v6647 = vrot.slane %v6646, 4
      %v6648 = vmax.f32 %v6646, %v6647
      %v6649 = vrot.slane %v6648, 2
      %v6650 = vmax.f32 %v6648, %v6649
      %v6651 = vrot.slane %v6650, 1
      %v6652 = vmax.f32 %v6650, %v6651
      %v6653 = vsel %vm6624, %v6597, -inf
      %v6654 = vrot.slane %v6653, 4
      %v6655 = vmax.f32 %v6653, %v6654
      %v6656 = vrot.slane %v6655, 2
      %v6657 = vmax.f32 %v6655, %v6656
      %v6658 = vrot.slane %v6657, 1
      %v6659 = vmax.f32 %v6657, %v6658
      %v6660 = vsel %vm1011, %v6598, -inf
      %v6661 = vrot.slane %v6660, 4
      %v6662 = vmax.f32 %v6660, %v6661
      %v6663 = vrot.slane %v6662, 2
      %v6664 = vmax.f32 %v6662, %v6663
      %v6665 = vrot.slane %v6664, 1
      %v6666 = vmax.f32 %v6664, %v6665
      %v6667 = vsel %vm200, %v6599, -inf
      %v6668 = vrot.slane %v6667, 4
      %v6669 = vmax.f32 %v6667, %v6668
      %v6670 = vrot.slane %v6669, 2
      %v6671 = vmax.f32 %v6669, %v6670
      %v6672 = vrot.slane %v6671, 1
      %v6673 = vmax.f32 %v6671, %v6672
      %v6674 = vsel %vm230, %v6607, %v6623
      %v6675 = vsel %vm230, %v6615, %v6631
      %vm6676 = vcmask 1041408
      %v6677 = vsel %vm6676, %v6674, %v6638
      %v6678 = vsel %vm6676, %v6675, %v6645
      %v6679 = vsel %vm1011, %v6677, %v6652
      %v6680 = vsel %vm1011, %v6678, %v6659
      %v6681 = vsel %vm6600, %v6679, %v6666
      %v6682 = vsel %vm6600, %v6680, %v6673
      %6683 = vst [vmem:[%s197] sm:$0x1f] %v6681
      %6684 = vst.msk [vmem:[%s197 + $0x8] sm:$0x1f] %vm802, %v6682
      %p6685 = scmp.lt.s32.totalorder %s15, 1
      %s6686 = scalar_select %p6685, %s15, 1
      %s6687 = smul.addr %s6686, 2
      %s6688 = smul.addr %s6687, 8
      %s6689 = scalar_lea.vmem %s4, %s6688
      // Predicated region
      $region37: #{_lambda_.4} parent=35 // pred_check
        %p6690 = pneg %p122
      $region38: #{_lambda_.4} parent=35 // pred_check_branch
        %6692 = sbr.rel (%p6690) target = $region40
      $region39: #{_lambda_.4} parent=35 // pred_region
        _
      $region40: #{_lambda_.4} parent=35 // pred_fallthru
        _
    $region36: #{_lambda_.4} parent=5 // pred_fallthru
      _
    %p6693 = scmp.le.s32.totalorder 2, %s10
    // Predicated region
    $region41: #{_lambda_.4} parent=5 // pred_check
      %p6694 = pneg %p6693
    $region42: #{_lambda_.4} parent=5 // pred_check_branch
      %6696 = sbr.rel (%p6694) target = $region44
    $region43: #{_lambda_.4} parent=5 // pred_region
      %s6697 = ssub.s32 %s10, 2
      // Predicated region
      $region45: #{_lambda_.4} parent=43 // pred_check
        %p6698 = pneg %p128
      $region46: #{_lambda_.4} parent=43 // pred_check_branch
        %6700 = sbr.rel (%p6698) target = $region48
      $region47: #{_lambda_.4} parent=43 // pred_region
        %p6701 = scmp.lt.s32.totalorder %s16, 1
        %s6702 = scalar_select %p6701, %s16, 1
        %s6703 = smul.addr %s6702, 2
        %s6704 = smul.addr %s6703, 8
        %s6705 = scalar_lea.vmem %s4, %s6704
      $region48: #{_lambda_.4} parent=43 // pred_fallthru
        _
    $region44: #{_lambda_.4} parent=5 // pred_fallthru
      _
  $region6: #{_lambda_.4} parent=0 // loop_footer
    %s14 = sadd.s32 1, %s10
  $region7: #{_lambda_.4} parent=0 // loop_footer_branch
    %9 = sbr.rel target = $region3
  $region8: #{_lambda_.4} parent=0 // loop_exit
    _

</llo_original>
